<compile_context>
chip_gen: v7x
topology: tpu7x:2x2x1
jax: 0.10.0
libtpu: 0.0.40
codegen_flags: <defaults>
</compile_context>

<pallas_src>
import functools

import jax
import jax.numpy as jnp
from jax.experimental import pallas as pl
from jax.experimental.pallas import tpu as pltpu


def _round_up(x, m):
    return (x + m - 1) // m * m


# ----------------------------------------------------------------------------
# Pallas kernel: fused 4-layer GEMM chain; activations stay in VMEM
# ----------------------------------------------------------------------------
def _fused_cnn_kernel(x_ref, *refs, relu_flags, compute_dtype):
    *wb_refs, o_ref = refs
    h = x_ref[...]                                       # (TB, in_dim) bf16
    n_layers = len(relu_flags)
    for l in range(n_layers):
        t_ref = wb_refs[2 * l]                           # (in_dim_l, out_dim_l) bf16
        b_ref = wb_refs[2 * l + 1]                       # (1, out_dim_l) f32
        acc = jnp.dot(h, t_ref[...], preferred_element_type=jnp.float32)
        acc = acc + b_ref[...]                           # f32 epilogue (v5e-safe)
        if relu_flags[l]:
            acc = jnp.maximum(acc, 0.0)
        h = acc.astype(compute_dtype) if l + 1 < n_layers else acc
    o_ref[...] = h.astype(o_ref.dtype)


# ----------------------------------------------------------------------------
# Parameters (deterministic synthetic init, PyTorch-default-like scaling)
# ----------------------------------------------------------------------------
def init_params(key):
    # (Cout, Cin, stride, relu) per layer, mirroring BasicCNN.__init__
    cfg = [(32, 3, 2, True), (32, 32, 2, True), (32, 32, 1, True), (32, 32, 1, False)]
    params = []
    for i, (cout, cin, stride, relu) in enumerate(cfg):
        kw_key, kb_key = jax.random.split(jax.random.fold_in(key, i))
        bound = 1.0 / jnp.sqrt(cin * 9.0)
        w = jax.random.uniform(kw_key, (cout, cin, 3, 3), jnp.float32, -bound, bound)
        b = jax.random.uniform(kb_key, (cout,), jnp.float32, -bound, bound)
        params.append(dict(w=w, b=b, stride=stride, relu=relu))
    return params


def pack_params(params, H, W, *, cin=3, compute_dtype=jnp.bfloat16):
    """One-time weight repacking: lower each conv to its dense Toeplitz matrix
    over the flattened NHWC activation for the fixed input spatial size."""
    layers = []
    h, w, c = H, W, cin
    for layer in params:
        wgt = layer["w"].astype(jnp.float32)             # (cout, c, 3, 3)
        bias = layer["b"].astype(jnp.float32)            # (cout,)
        s = layer["stride"]
        cout = wgt.shape[0]
        ho = (h + 2 - 3) // s + 1
        wo = (w + 2 - 3) // s + 1
        in_dim = h * w * c
        # Row j of the Toeplitz matrix = conv response of the j-th NHWC basis image
        # (conv is linear in its input).
        basis = jnp.eye(in_dim, dtype=jnp.float32).reshape(in_dim, h, w, c)
        basis = jnp.transpose(basis, (0, 3, 1, 2))       # -> NCHW basis images
        resp = jax.lax.conv_general_dilated(
            basis, wgt, window_strides=(s, s), padding=((1, 1), (1, 1)),
            dimension_numbers=("NCHW", "OIHW", "NCHW"))  # (in_dim, cout, ho, wo)
        T = jnp.transpose(resp, (0, 2, 3, 1)).reshape(in_dim, ho * wo * cout)
        b_row = jnp.tile(bias, ho * wo).reshape(1, ho * wo * cout)
        layers.append(dict(T=T.astype(compute_dtype), b=b_row, relu=layer["relu"]))
        h, w, c = ho, wo, cout
    return dict(layers=layers, hw_in=(H, W), cin=cin,
                hw_out=(h, w), cout=c, dtype=compute_dtype)


# ----------------------------------------------------------------------------
# Forward pass (matches BasicCNN.forward semantics, NCHW in / NCHW out)
# ----------------------------------------------------------------------------
def basic_cnn_forward(packed, inputs, *, batch_tile=128):
    reshaped = inputs.ndim == 5
    x = inputs.reshape((-1,) + inputs.shape[-3:]) if reshaped else inputs  # (B,C,H,W)
    B, C, H, W = x.shape
    assert (H, W) == packed["hw_in"] and C == packed["cin"], "weights packed for a different input shape"

    layers = packed["layers"]
    in_dim = layers[0]["T"].shape[0]
    out_dim = layers[-1]["T"].shape[1]
    Ho, Wo = packed["hw_out"]
    Cout = packed["cout"]

    # NCHW -> NHWC -> one flat row per image; bf16 halves the activation DMA bytes.
    xf = jnp.transpose(x, (0, 2, 3, 1)).reshape(B, in_dim).astype(packed["dtype"])

    TB = min(batch_tile, _round_up(B, 8))
    B_pad = _round_up(B, TB)
    if B_pad != B:
        xf = jnp.pad(xf, ((0, B_pad - B), (0, 0)))

    in_specs = [pl.BlockSpec((TB, in_dim), lambda i: (i, 0))]
    args = [xf]
    for layer in layers:
        in_specs.append(pl.BlockSpec(layer["T"].shape, lambda i: (0, 0)))
        in_specs.append(pl.BlockSpec(layer["b"].shape, lambda i: (0, 0)))
        args.extend([layer["T"], layer["b"]])

    flops = 2 * B_pad * sum(l["T"].shape[0] * l["T"].shape[1] for l in layers)
    bytes_accessed = (xf.size * xf.dtype.itemsize
                      + B_pad * out_dim * 4
                      + sum(l["T"].size * l["T"].dtype.itemsize
                            + l["b"].size * 4 for l in layers))

    kernel = functools.partial(
        _fused_cnn_kernel,
        relu_flags=tuple(l["relu"] for l in layers),
        compute_dtype=packed["dtype"])

    out = pl.pallas_call(
        kernel,
        out_shape=jax.ShapeDtypeStruct((B_pad, out_dim), jnp.float32),
        grid=(B_pad // TB,),
        in_specs=in_specs,
        out_specs=pl.BlockSpec((TB, out_dim), lambda i: (i, 0)),
        compiler_params=pltpu.CompilerParams(
            dimension_semantics=("parallel",),           # megacore-shardable on v7x
            vmem_limit_bytes=48 * 1024 * 1024),
        cost_estimate=pl.CostEstimate(flops=int(flops), transcendentals=0,
                                      bytes_accessed=int(bytes_accessed)),
    )(*args)

    out = out[:B].reshape(B, Ho, Wo, Cout)
    out = jnp.transpose(out, (0, 3, 1, 2))               # NHWC -> NCHW
    if reshaped:
        out = out.reshape((inputs.shape[0], inputs.shape[1], Cout, Ho, Wo))
    return out


# ----------------------------------------------------------------------------
# Pure-JAX reference (for correctness check)
# ----------------------------------------------------------------------------
def _reference_forward(params, inputs):
    reshaped = inputs.ndim == 5
    x = inputs.reshape((-1,) + inputs.shape[-3:]) if reshaped else inputs
    h = x.astype(jnp.float32)
    for layer in params:
        h = jax.lax.conv_general_dilated(
            h, layer["w"],
            window_strides=(layer["stride"], layer["stride"]),
            padding=((1, 1), (1, 1)),
            dimension_numbers=("NCHW", "OIHW", "NCHW"),
        ) + layer["b"][None, :, None, None]
        if layer["relu"]:
            h = jnp.maximum(h, 0.0)
    if reshaped:
        C, H, W = h.shape[-3:]
        h = h.reshape((inputs.shape[0], inputs.shape[1], C, H, W))
    return h


if __name__ == "__main__":
    key = jax.random.PRNGKey(0)
    params = init_params(jax.random.fold_in(key, 1))

    # One-time weight repacking for 16x16 inputs (offline, outside the hot path).
    packed = pack_params(params, 16, 16)
    fwd = jax.jit(functools.partial(basic_cnn_forward, packed))

    # 4-D NCHW input (3 input channels, as the module requires)
    x4 = jax.random.normal(jax.random.fold_in(key, 2), (2, 3, 16, 16), jnp.float32)
    out4 = jax.block_until_ready(fwd(x4))
    ref4 = jax.block_until_ready(_reference_forward(params, x4))
    assert out4.shape == (2, 32, 4, 4), out4.shape
    # bf16 MXU inputs with f32 accumulation -> small relative error vs f32 reference
    assert jnp.allclose(out4, ref4, atol=3e-2, rtol=3e-2), \
        float(jnp.max(jnp.abs(out4 - ref4)))

    # 5-D (B, T, C, H, W) path of BasicCNN.forward
    x5 = jax.random.normal(jax.random.fold_in(key, 3), (2, 4, 3, 16, 16), jnp.float32)
    out5 = jax.block_until_ready(fwd(x5))
    ref5 = jax.block_until_ready(_reference_forward(params, x5))
    assert out5.shape == (2, 4, 32, 4, 4), out5.shape
    assert jnp.allclose(out5, ref5, atol=3e-2, rtol=3e-2), \
        float(jnp.max(jnp.abs(out5 - ref5)))

    print("KERNEL_OK")
</pallas_src>

<mosaic_0001>
module attributes {stable_mosaic.version = 11 : i64} {
  func.func @_fused_cnn_kernel(%arg0: i32, %arg1: memref<8x768xbf16, #tpu.memory_space<vmem>>, %arg2: memref<768x2048xbf16, #tpu.memory_space<vmem>>, %arg3: memref<1x2048xf32, #tpu.memory_space<vmem>>, %arg4: memref<2048x512xbf16, #tpu.memory_space<vmem>>, %arg5: memref<1x512xf32, #tpu.memory_space<vmem>>, %arg6: memref<512x512xbf16, #tpu.memory_space<vmem>>, %arg7: memref<1x512xf32, #tpu.memory_space<vmem>>, %arg8: memref<512x512xbf16, #tpu.memory_space<vmem>>, %arg9: memref<1x512xf32, #tpu.memory_space<vmem>>, %arg10: memref<8x512xf32, #tpu.memory_space<vmem>>) attributes {dimension_semantics = [#tpu.dimension_semantics<parallel>], iteration_bounds = array<i64: 1>, scalar_prefetch = 0 : i64, scratch_operands = 0 : i64, tpu.core_type = #tpu.core_type<tc>, window_params = [{transform_indices = @transform_0, window_bounds = array<i64: 8, 768>}, {pipeline_mode = #tpu.pipeline_mode<synchronous>, transform_indices = @transform_1, window_bounds = array<i64: 768, 2048>}, {pipeline_mode = #tpu.pipeline_mode<synchronous>, transform_indices = @transform_2, window_bounds = array<i64: 1, 2048>}, {pipeline_mode = #tpu.pipeline_mode<synchronous>, transform_indices = @transform_3, window_bounds = array<i64: 2048, 512>}, {pipeline_mode = #tpu.pipeline_mode<synchronous>, transform_indices = @transform_4, window_bounds = array<i64: 1, 512>}, {pipeline_mode = #tpu.pipeline_mode<synchronous>, transform_indices = @transform_5, window_bounds = array<i64: 512, 512>}, {pipeline_mode = #tpu.pipeline_mode<synchronous>, transform_indices = @transform_6, window_bounds = array<i64: 1, 512>}, {pipeline_mode = #tpu.pipeline_mode<synchronous>, transform_indices = @transform_7, window_bounds = array<i64: 512, 512>}, {pipeline_mode = #tpu.pipeline_mode<synchronous>, transform_indices = @transform_8, window_bounds = array<i64: 1, 512>}, {transform_indices = @transform_9, window_bounds = array<i64: 8, 512>}]} {
    %c0 = arith.constant 0 : index
    %c0_0 = arith.constant 0 : index
    %0 = vector.load %arg1[%c0, %c0_0] : memref<8x768xbf16, #tpu.memory_space<vmem>>, vector<8x768xbf16>
    %c0_1 = arith.constant 0 : index
    %c0_2 = arith.constant 0 : index
    %1 = vector.load %arg2[%c0_1, %c0_2] : memref<768x2048xbf16, #tpu.memory_space<vmem>>, vector<768x2048xbf16>
    %cst = arith.constant dense<0.000000e+00> : vector<8x2048xf32>
    %2 = tpu.matmul %0, %1, %cst {dimension_numbers = #tpu.dot_dimension_numbers<[1], [0], [0], [1], [0, 0, 1, 1], [], []>} : vector<8x768xbf16>, vector<768x2048xbf16>, vector<8x2048xf32> -> vector<8x2048xf32>
    %c0_3 = arith.constant 0 : index
    %c0_4 = arith.constant 0 : index
    %3 = vector.load %arg3[%c0_3, %c0_4] : memref<1x2048xf32, #tpu.memory_space<vmem>>, vector<1x2048xf32>
    %4 = vector.broadcast %3 : vector<1x2048xf32> to vector<8x2048xf32>
    %5 = arith.addf %2, %4 : vector<8x2048xf32>
    %cst_5 = arith.constant 0.000000e+00 : f32
    %6 = vector.broadcast %cst_5 : f32 to vector<8x2048xf32>
    %7 = arith.maximumf %5, %6 : vector<8x2048xf32>
    %8 = arith.truncf %7 : vector<8x2048xf32> to vector<8x2048xbf16>
    %c0_6 = arith.constant 0 : index
    %c0_7 = arith.constant 0 : index
    %9 = vector.load %arg4[%c0_6, %c0_7] : memref<2048x512xbf16, #tpu.memory_space<vmem>>, vector<2048x512xbf16>
    %cst_8 = arith.constant dense<0.000000e+00> : vector<8x512xf32>
    %10 = tpu.matmul %8, %9, %cst_8 {dimension_numbers = #tpu.dot_dimension_numbers<[1], [0], [0], [1], [0, 0, 1, 1], [], []>} : vector<8x2048xbf16>, vector<2048x512xbf16>, vector<8x512xf32> -> vector<8x512xf32>
    %c0_9 = arith.constant 0 : index
    %c0_10 = arith.constant 0 : index
    %11 = vector.load %arg5[%c0_9, %c0_10] : memref<1x512xf32, #tpu.memory_space<vmem>>, vector<1x512xf32>
    %12 = vector.broadcast %11 : vector<1x512xf32> to vector<8x512xf32>
    %13 = arith.addf %10, %12 : vector<8x512xf32>
    %cst_11 = arith.constant 0.000000e+00 : f32
    %14 = vector.broadcast %cst_11 : f32 to vector<8x512xf32>
    %15 = arith.maximumf %13, %14 : vector<8x512xf32>
    %16 = arith.truncf %15 : vector<8x512xf32> to vector<8x512xbf16>
    %c0_12 = arith.constant 0 : index
    %c0_13 = arith.constant 0 : index
    %17 = vector.load %arg6[%c0_12, %c0_13] : memref<512x512xbf16, #tpu.memory_space<vmem>>, vector<512x512xbf16>
    %cst_14 = arith.constant dense<0.000000e+00> : vector<8x512xf32>
    %18 = tpu.matmul %16, %17, %cst_14 {dimension_numbers = #tpu.dot_dimension_numbers<[1], [0], [0], [1], [0, 0, 1, 1], [], []>} : vector<8x512xbf16>, vector<512x512xbf16>, vector<8x512xf32> -> vector<8x512xf32>
    %c0_15 = arith.constant 0 : index
    %c0_16 = arith.constant 0 : index
    %19 = vector.load %arg7[%c0_15, %c0_16] : memref<1x512xf32, #tpu.memory_space<vmem>>, vector<1x512xf32>
    %20 = vector.broadcast %19 : vector<1x512xf32> to vector<8x512xf32>
    %21 = arith.addf %18, %20 : vector<8x512xf32>
    %cst_17 = arith.constant 0.000000e+00 : f32
    %22 = vector.broadcast %cst_17 : f32 to vector<8x512xf32>
    %23 = arith.maximumf %21, %22 : vector<8x512xf32>
    %24 = arith.truncf %23 : vector<8x512xf32> to vector<8x512xbf16>
    %c0_18 = arith.constant 0 : index
    %c0_19 = arith.constant 0 : index
    %25 = vector.load %arg8[%c0_18, %c0_19] : memref<512x512xbf16, #tpu.memory_space<vmem>>, vector<512x512xbf16>
    %cst_20 = arith.constant dense<0.000000e+00> : vector<8x512xf32>
    %26 = tpu.matmul %24, %25, %cst_20 {dimension_numbers = #tpu.dot_dimension_numbers<[1], [0], [0], [1], [0, 0, 1, 1], [], []>} : vector<8x512xbf16>, vector<512x512xbf16>, vector<8x512xf32> -> vector<8x512xf32>
    %c0_21 = arith.constant 0 : index
    %c0_22 = arith.constant 0 : index
    %27 = vector.load %arg9[%c0_21, %c0_22] : memref<1x512xf32, #tpu.memory_space<vmem>>, vector<1x512xf32>
    %28 = vector.broadcast %27 : vector<1x512xf32> to vector<8x512xf32>
    %29 = arith.addf %26, %28 : vector<8x512xf32>
    %c0_23 = arith.constant 0 : index
    %c0_24 = arith.constant 0 : index
    %30 = vector.load %arg10[%c0_23, %c0_24] : memref<8x512xf32, #tpu.memory_space<vmem>>, vector<8x512xf32>
    tpu.vector_store %arg10[%c0_23, %c0_24], %29 {strides = array<i32>} : memref<8x512xf32, #tpu.memory_space<vmem>>, vector<8x512xf32>,
    return
  }
  func.func @transform_0(%arg0: i32) -> (i32, i32) {
    %c0_i32 = arith.constant 0 : i32
    %c0_i32_0 = arith.constant 0 : i32
    return %arg0, %c0_i32 : i32, i32
  }
  func.func @transform_1(%arg0: i32) -> (i32, i32) {
    %c0_i32 = arith.constant 0 : i32
    %c0_i32_0 = arith.constant 0 : i32
    %c0_i32_1 = arith.constant 0 : i32
    return %c0_i32, %c0_i32_0 : i32, i32
  }
  func.func @transform_2(%arg0: i32) -> (i32, i32) {
    %c0_i32 = arith.constant 0 : i32
    %c0_i32_0 = arith.constant 0 : i32
    %c0_i32_1 = arith.constant 0 : i32
    return %c0_i32, %c0_i32_0 : i32, i32
  }
  func.func @transform_3(%arg0: i32) -> (i32, i32) {
    %c0_i32 = arith.constant 0 : i32
    %c0_i32_0 = arith.constant 0 : i32
    %c0_i32_1 = arith.constant 0 : i32
    return %c0_i32, %c0_i32_0 : i32, i32
  }
  func.func @transform_4(%arg0: i32) -> (i32, i32) {
    %c0_i32 = arith.constant 0 : i32
    %c0_i32_0 = arith.constant 0 : i32
    %c0_i32_1 = arith.constant 0 : i32
    return %c0_i32, %c0_i32_0 : i32, i32
  }
  func.func @transform_5(%arg0: i32) -> (i32, i32) {
    %c0_i32 = arith.constant 0 : i32
    %c0_i32_0 = arith.constant 0 : i32
    %c0_i32_1 = arith.constant 0 : i32
    return %c0_i32, %c0_i32_0 : i32, i32
  }
  func.func @transform_6(%arg0: i32) -> (i32, i32) {
    %c0_i32 = arith.constant 0 : i32
    %c0_i32_0 = arith.constant 0 : i32
    %c0_i32_1 = arith.constant 0 : i32
    return %c0_i32, %c0_i32_0 : i32, i32
  }
  func.func @transform_7(%arg0: i32) -> (i32, i32) {
    %c0_i32 = arith.constant 0 : i32
    %c0_i32_0 = arith.constant 0 : i32
    %c0_i32_1 = arith.constant 0 : i32
    return %c0_i32, %c0_i32_0 : i32, i32
  }
  func.func @transform_8(%arg0: i32) -> (i32, i32) {
    %c0_i32 = arith.constant 0 : i32
    %c0_i32_0 = arith.constant 0 : i32
    %c0_i32_1 = arith.constant 0 : i32
    return %c0_i32, %c0_i32_0 : i32, i32
  }
  func.func @transform_9(%arg0: i32) -> (i32, i32) {
    %c0_i32 = arith.constant 0 : i32
    %c0_i32_0 = arith.constant 0 : i32
    return %arg0, %c0_i32 : i32, i32
  }
}

</mosaic_0001>

<llo_original>
// kernel: basic_cnn_forward.1
$region0: #{basic_cnn_forward.1}
  #allocation0 [shape = 'u32[]', space=smem, size = 0x4, offset = 0x4, fixed_abs, tag = 'smem constant byte address 0x4 - core index']
  #allocation1 [shape = 'u32[144,128]{1,0:T(1,128)}', space=vmem, size = 0x12000, scoped, tag = 'internal scratch']
  %s0 = inlined_call_operand.vmem [shape: bf16[8,768], index: 0, kind: input, shape index: {}]
  %s1 = inlined_call_operand.vmem [shape: bf16[768,2048], index: 1, kind: input, shape index: {}]
  %s2 = inlined_call_operand.vmem [shape: f32[1,2048], index: 2, kind: input, shape index: {}]
  %s3 = inlined_call_operand.vmem [shape: bf16[2048,512], index: 3, kind: input, shape index: {}]
  %s4 = inlined_call_operand.vmem [shape: f32[1,512], index: 4, kind: input, shape index: {}]
  %s5 = inlined_call_operand.vmem [shape: bf16[512,512], index: 5, kind: input, shape index: {}]
  %s6 = inlined_call_operand.vmem [shape: f32[1,512], index: 6, kind: input, shape index: {}]
  %s7 = inlined_call_operand.vmem [shape: bf16[512,512], index: 7, kind: input, shape index: {}]
  %s8 = inlined_call_operand.vmem [shape: f32[1,512], index: 8, kind: input, shape index: {}]
  %s9 = inlined_call_operand.vmem [shape: f32[8,512], index: 9, kind: output, shape index: {}]
  %s10 = sld [smem:[#allocation0]]
  $region46: #{basic_cnn_forward.1} parent=0
    _
  %s12 = ssub.s32 1, %s10
  %s13 = scalar_select 0, %s12, %s10
  // Predicated region
  $region2: #{basic_cnn_forward.1} parent=0 // pred_check
    _
  $region3: #{basic_cnn_forward.1} parent=0 // pred_check_branch
    %15 = sbr.rel (0) target = $region5
  $region4: #{basic_cnn_forward.1} parent=0 // pred_region
    _
  $region5: #{basic_cnn_forward.1} parent=0 // pred_fallthru
    _
  // Predicated region
  $region6: #{basic_cnn_forward.1} parent=0 // pred_check
    _
  $region7: #{basic_cnn_forward.1} parent=0 // pred_check_branch
    %17 = sbr.rel (0) target = $region9
  $region8: #{basic_cnn_forward.1} parent=0 // pred_region
    _
  $region9: #{basic_cnn_forward.1} parent=0 // pred_fallthru
    _
  // Predicated region
  $region10: #{basic_cnn_forward.1} parent=0 // pred_check
    _
  $region11: #{basic_cnn_forward.1} parent=0 // pred_check_branch
    %19 = sbr.rel (0) target = $region13
  $region12: #{basic_cnn_forward.1} parent=0 // pred_region
    _
  $region13: #{basic_cnn_forward.1} parent=0 // pred_fallthru
    _
  // Predicated region
  $region14: #{basic_cnn_forward.1} parent=0 // pred_check
    _
  $region15: #{basic_cnn_forward.1} parent=0 // pred_check_branch
    %21 = sbr.rel (0) target = $region17
  $region16: #{basic_cnn_forward.1} parent=0 // pred_region
    _
  $region17: #{basic_cnn_forward.1} parent=0 // pred_fallthru
    _
  // Predicated region
  $region18: #{basic_cnn_forward.1} parent=0 // pred_check
    _
  $region19: #{basic_cnn_forward.1} parent=0 // pred_check_branch
    %23 = sbr.rel (0) target = $region21
  $region20: #{basic_cnn_forward.1} parent=0 // pred_region
    _
  $region21: #{basic_cnn_forward.1} parent=0 // pred_fallthru
    _
  // Predicated region
  $region22: #{basic_cnn_forward.1} parent=0 // pred_check
    _
  $region23: #{basic_cnn_forward.1} parent=0 // pred_check_branch
    %25 = sbr.rel (0) target = $region25
  $region24: #{basic_cnn_forward.1} parent=0 // pred_region
    _
  $region25: #{basic_cnn_forward.1} parent=0 // pred_fallthru
    _
  // Predicated region
  $region26: #{basic_cnn_forward.1} parent=0 // pred_check
    _
  $region27: #{basic_cnn_forward.1} parent=0 // pred_check_branch
    %27 = sbr.rel (0) target = $region29
  $region28: #{basic_cnn_forward.1} parent=0 // pred_region
    _
  $region29: #{basic_cnn_forward.1} parent=0 // pred_fallthru
    _
  // Predicated region
  $region30: #{basic_cnn_forward.1} parent=0 // pred_check
    _
  $region31: #{basic_cnn_forward.1} parent=0 // pred_check_branch
    %29 = sbr.rel (0) target = $region33
  $region32: #{basic_cnn_forward.1} parent=0 // pred_region
    _
  $region33: #{basic_cnn_forward.1} parent=0 // pred_fallthru
    _
  // Predicated region
  $region34: #{basic_cnn_forward.1} parent=0 // pred_check
    _
  $region35: #{basic_cnn_forward.1} parent=0 // pred_check_branch
    %31 = sbr.rel (0) target = $region37
  $region36: #{basic_cnn_forward.1} parent=0 // pred_region
    _
  $region37: #{basic_cnn_forward.1} parent=0 // pred_fallthru
    _
  %v32 = vld [vmem:[%s0] sm:$0xff]
  %v33 = vld [vmem:[%s0 + $0x8] sm:$0xff]
  %v34 = vld [vmem:[%s0 + $0x10] sm:$0xff]
  %v35 = vld [vmem:[%s1] sm:$0xff]
  %v36 = vld [vmem:[%s1 + $0x8] sm:$0xff]
  %v37 = vld [vmem:[%s1 + $0x10] sm:$0xff]
  %v38 = vld [vmem:[%s1 + $0x18] sm:$0xff]
  %v39 = vld [vmem:[%s1 + $0x20] sm:$0xff]
  %v40 = vld [vmem:[%s1 + $0x28] sm:$0xff]
  %v41 = vld [vmem:[%s1 + $0x30] sm:$0xff]
  %v42 = vld [vmem:[%s1 + $0x38] sm:$0xff]
  %v43 = vld [vmem:[%s1 + $0x40] sm:$0xff]
  %v44 = vld [vmem:[%s1 + $0x48] sm:$0xff]
  %v45 = vld [vmem:[%s1 + $0x50] sm:$0xff]
  %v46 = vld [vmem:[%s1 + $0x58] sm:$0xff]
  %v47 = vld [vmem:[%s1 + $0x60] sm:$0xff]
  %v48 = vld [vmem:[%s1 + $0x68] sm:$0xff]
  %v49 = vld [vmem:[%s1 + $0x70] sm:$0xff]
  %v50 = vld [vmem:[%s1 + $0x78] sm:$0xff]
  %v51 = vld [vmem:[%s1 + $0x80] sm:$0xff]
  %v52 = vld [vmem:[%s1 + $0x88] sm:$0xff]
  %v53 = vld [vmem:[%s1 + $0x90] sm:$0xff]
  %v54 = vld [vmem:[%s1 + $0x98] sm:$0xff]
  %v55 = vld [vmem:[%s1 + $0xa0] sm:$0xff]
  %v56 = vld [vmem:[%s1 + $0xa8] sm:$0xff]
  %v57 = vld [vmem:[%s1 + $0xb0] sm:$0xff]
  %v58 = vld [vmem:[%s1 + $0xb8] sm:$0xff]
  %v59 = vld [vmem:[%s1 + $0xc0] sm:$0xff]
  %v60 = vld [vmem:[%s1 + $0xc8] sm:$0xff]
  %v61 = vld [vmem:[%s1 + $0xd0] sm:$0xff]
  %v62 = vld [vmem:[%s1 + $0xd8] sm:$0xff]
  %v63 = vld [vmem:[%s1 + $0xe0] sm:$0xff]
  %v64 = vld [vmem:[%s1 + $0xe8] sm:$0xff]
  %v65 = vld [vmem:[%s1 + $0xf0] sm:$0xff]
  %v66 = vld [vmem:[%s1 + $0xf8] sm:$0xff]
  %v67 = vld [vmem:[%s1 + $0x100] sm:$0xff]
  %v68 = vld [vmem:[%s1 + $0x108] sm:$0xff]
  %v69 = vld [vmem:[%s1 + $0x110] sm:$0xff]
  %v70 = vld [vmem:[%s1 + $0x118] sm:$0xff]
  %v71 = vld [vmem:[%s1 + $0x120] sm:$0xff]
  %v72 = vld [vmem:[%s1 + $0x128] sm:$0xff]
  %v73 = vld [vmem:[%s1 + $0x130] sm:$0xff]
  %v74 = vld [vmem:[%s1 + $0x138] sm:$0xff]
  %v75 = vld [vmem:[%s1 + $0x140] sm:$0xff]
  %v76 = vld [vmem:[%s1 + $0x148] sm:$0xff]
  %v77 = vld [vmem:[%s1 + $0x150] sm:$0xff]
  %v78 = vld [vmem:[%s1 + $0x158] sm:$0xff]
  %v79 = vld [vmem:[%s1 + $0x160] sm:$0xff]
  %v80 = vld [vmem:[%s1 + $0x168] sm:$0xff]
  %v81 = vld [vmem:[%s1 + $0x170] sm:$0xff]
  %v82 = vld [vmem:[%s1 + $0x178] sm:$0xff]
  %v83 = vld [vmem:[%s1 + $0x180] sm:$0xff]
  %v84 = vld [vmem:[%s1 + $0x188] sm:$0xff]
  %v85 = vld [vmem:[%s1 + $0x190] sm:$0xff]
  %v86 = vld [vmem:[%s1 + $0x198] sm:$0xff]
  %v87 = vld [vmem:[%s1 + $0x1a0] sm:$0xff]
  %v88 = vld [vmem:[%s1 + $0x1a8] sm:$0xff]
  %v89 = vld [vmem:[%s1 + $0x1b0] sm:$0xff]
  %v90 = vld [vmem:[%s1 + $0x1b8] sm:$0xff]
  %v91 = vld [vmem:[%s1 + $0x1c0] sm:$0xff]
  %v92 = vld [vmem:[%s1 + $0x1c8] sm:$0xff]
  %v93 = vld [vmem:[%s1 + $0x1d0] sm:$0xff]
  %v94 = vld [vmem:[%s1 + $0x1d8] sm:$0xff]
  %v95 = vld [vmem:[%s1 + $0x1e0] sm:$0xff]
  %v96 = vld [vmem:[%s1 + $0x1e8] sm:$0xff]
  %v97 = vld [vmem:[%s1 + $0x1f0] sm:$0xff]
  %v98 = vld [vmem:[%s1 + $0x1f8] sm:$0xff]
  %v99 = vld [vmem:[%s1 + $0x200] sm:$0xff]
  %v100 = vld [vmem:[%s1 + $0x208] sm:$0xff]
  %v101 = vld [vmem:[%s1 + $0x210] sm:$0xff]
  %v102 = vld [vmem:[%s1 + $0x218] sm:$0xff]
  %v103 = vld [vmem:[%s1 + $0x220] sm:$0xff]
  %v104 = vld [vmem:[%s1 + $0x228] sm:$0xff]
  %v105 = vld [vmem:[%s1 + $0x230] sm:$0xff]
  %v106 = vld [vmem:[%s1 + $0x238] sm:$0xff]
  %v107 = vld [vmem:[%s1 + $0x240] sm:$0xff]
  %v108 = vld [vmem:[%s1 + $0x248] sm:$0xff]
  %v109 = vld [vmem:[%s1 + $0x250] sm:$0xff]
  %v110 = vld [vmem:[%s1 + $0x258] sm:$0xff]
  %v111 = vld [vmem:[%s1 + $0x260] sm:$0xff]
  %v112 = vld [vmem:[%s1 + $0x268] sm:$0xff]
  %v113 = vld [vmem:[%s1 + $0x270] sm:$0xff]
  %v114 = vld [vmem:[%s1 + $0x278] sm:$0xff]
  %v115 = vld [vmem:[%s1 + $0x280] sm:$0xff]
  %v116 = vld [vmem:[%s1 + $0x288] sm:$0xff]
  %v117 = vld [vmem:[%s1 + $0x290] sm:$0xff]
  %v118 = vld [vmem:[%s1 + $0x298] sm:$0xff]
  %v119 = vld [vmem:[%s1 + $0x2a0] sm:$0xff]
  %v120 = vld [vmem:[%s1 + $0x2a8] sm:$0xff]
  %v121 = vld [vmem:[%s1 + $0x2b0] sm:$0xff]
  %v122 = vld [vmem:[%s1 + $0x2b8] sm:$0xff]
  %v123 = vld [vmem:[%s1 + $0x2c0] sm:$0xff]
  %v124 = vld [vmem:[%s1 + $0x2c8] sm:$0xff]
  %v125 = vld [vmem:[%s1 + $0x2d0] sm:$0xff]
  %v126 = vld [vmem:[%s1 + $0x2d8] sm:$0xff]
  %v127 = vld [vmem:[%s1 + $0x2e0] sm:$0xff]
  %v128 = vld [vmem:[%s1 + $0x2e8] sm:$0xff]
  %v129 = vld [vmem:[%s1 + $0x2f0] sm:$0xff]
  %v130 = vld [vmem:[%s1 + $0x2f8] sm:$0xff]
  %v131 = vld [vmem:[%s1 + $0x300] sm:$0xff]
  %v132 = vld [vmem:[%s1 + $0x308] sm:$0xff]
  %v133 = vld [vmem:[%s1 + $0x310] sm:$0xff]
  %v134 = vld [vmem:[%s1 + $0x318] sm:$0xff]
  %v135 = vld [vmem:[%s1 + $0x320] sm:$0xff]
  %v136 = vld [vmem:[%s1 + $0x328] sm:$0xff]
  %v137 = vld [vmem:[%s1 + $0x330] sm:$0xff]
  %v138 = vld [vmem:[%s1 + $0x338] sm:$0xff]
  %v139 = vld [vmem:[%s1 + $0x340] sm:$0xff]
  %v140 = vld [vmem:[%s1 + $0x348] sm:$0xff]
  %v141 = vld [vmem:[%s1 + $0x350] sm:$0xff]
  %v142 = vld [vmem:[%s1 + $0x358] sm:$0xff]
  %v143 = vld [vmem:[%s1 + $0x360] sm:$0xff]
  %v144 = vld [vmem:[%s1 + $0x368] sm:$0xff]
  %v145 = vld [vmem:[%s1 + $0x370] sm:$0xff]
  %v146 = vld [vmem:[%s1 + $0x378] sm:$0xff]
  %v147 = vld [vmem:[%s1 + $0x380] sm:$0xff]
  %v148 = vld [vmem:[%s1 + $0x388] sm:$0xff]
  %v149 = vld [vmem:[%s1 + $0x390] sm:$0xff]
  %v150 = vld [vmem:[%s1 + $0x398] sm:$0xff]
  %v151 = vld [vmem:[%s1 + $0x3a0] sm:$0xff]
  %v152 = vld [vmem:[%s1 + $0x3a8] sm:$0xff]
  %v153 = vld [vmem:[%s1 + $0x3b0] sm:$0xff]
  %v154 = vld [vmem:[%s1 + $0x3b8] sm:$0xff]
  %v155 = vld [vmem:[%s1 + $0x3c0] sm:$0xff]
  %v156 = vld [vmem:[%s1 + $0x3c8] sm:$0xff]
  %v157 = vld [vmem:[%s1 + $0x3d0] sm:$0xff]
  %v158 = vld [vmem:[%s1 + $0x3d8] sm:$0xff]
  %v159 = vld [vmem:[%s1 + $0x3e0] sm:$0xff]
  %v160 = vld [vmem:[%s1 + $0x3e8] sm:$0xff]
  %v161 = vld [vmem:[%s1 + $0x3f0] sm:$0xff]
  %v162 = vld [vmem:[%s1 + $0x3f8] sm:$0xff]
  %v163 = vld [vmem:[%s1 + $0x400] sm:$0xff]
  %v164 = vld [vmem:[%s1 + $0x408] sm:$0xff]
  %v165 = vld [vmem:[%s1 + $0x410] sm:$0xff]
  %v166 = vld [vmem:[%s1 + $0x418] sm:$0xff]
  %v167 = vld [vmem:[%s1 + $0x420] sm:$0xff]
  %v168 = vld [vmem:[%s1 + $0x428] sm:$0xff]
  %v169 = vld [vmem:[%s1 + $0x430] sm:$0xff]
  %v170 = vld [vmem:[%s1 + $0x438] sm:$0xff]
  %v171 = vld [vmem:[%s1 + $0x440] sm:$0xff]
  %v172 = vld [vmem:[%s1 + $0x448] sm:$0xff]
  %v173 = vld [vmem:[%s1 + $0x450] sm:$0xff]
  %v174 = vld [vmem:[%s1 + $0x458] sm:$0xff]
  %v175 = vld [vmem:[%s1 + $0x460] sm:$0xff]
  %v176 = vld [vmem:[%s1 + $0x468] sm:$0xff]
  %v177 = vld [vmem:[%s1 + $0x470] sm:$0xff]
  %v178 = vld [vmem:[%s1 + $0x478] sm:$0xff]
  %v179 = vld [vmem:[%s1 + $0x480] sm:$0xff]
  %v180 = vld [vmem:[%s1 + $0x488] sm:$0xff]
  %v181 = vld [vmem:[%s1 + $0x490] sm:$0xff]
  %v182 = vld [vmem:[%s1 + $0x498] sm:$0xff]
  %v183 = vld [vmem:[%s1 + $0x4a0] sm:$0xff]
  %v184 = vld [vmem:[%s1 + $0x4a8] sm:$0xff]
  %v185 = vld [vmem:[%s1 + $0x4b0] sm:$0xff]
  %v186 = vld [vmem:[%s1 + $0x4b8] sm:$0xff]
  %v187 = vld [vmem:[%s1 + $0x4c0] sm:$0xff]
  %v188 = vld [vmem:[%s1 + $0x4c8] sm:$0xff]
  %v189 = vld [vmem:[%s1 + $0x4d0] sm:$0xff]
  %v190 = vld [vmem:[%s1 + $0x4d8] sm:$0xff]
  %v191 = vld [vmem:[%s1 + $0x4e0] sm:$0xff]
  %v192 = vld [vmem:[%s1 + $0x4e8] sm:$0xff]
  %v193 = vld [vmem:[%s1 + $0x4f0] sm:$0xff]
  %v194 = vld [vmem:[%s1 + $0x4f8] sm:$0xff]
  %v195 = vld [vmem:[%s1 + $0x500] sm:$0xff]
  %v196 = vld [vmem:[%s1 + $0x508] sm:$0xff]
  %v197 = vld [vmem:[%s1 + $0x510] sm:$0xff]
  %v198 = vld [vmem:[%s1 + $0x518] sm:$0xff]
  %v199 = vld [vmem:[%s1 + $0x520] sm:$0xff]
  %v200 = vld [vmem:[%s1 + $0x528] sm:$0xff]
  %v201 = vld [vmem:[%s1 + $0x530] sm:$0xff]
  %v202 = vld [vmem:[%s1 + $0x538] sm:$0xff]
  %v203 = vld [vmem:[%s1 + $0x540] sm:$0xff]
  %v204 = vld [vmem:[%s1 + $0x548] sm:$0xff]
  %v205 = vld [vmem:[%s1 + $0x550] sm:$0xff]
  %v206 = vld [vmem:[%s1 + $0x558] sm:$0xff]
  %v207 = vld [vmem:[%s1 + $0x560] sm:$0xff]
  %v208 = vld [vmem:[%s1 + $0x568] sm:$0xff]
  %v209 = vld [vmem:[%s1 + $0x570] sm:$0xff]
  %v210 = vld [vmem:[%s1 + $0x578] sm:$0xff]
  %v211 = vld [vmem:[%s1 + $0x580] sm:$0xff]
  %v212 = vld [vmem:[%s1 + $0x588] sm:$0xff]
  %v213 = vld [vmem:[%s1 + $0x590] sm:$0xff]
  %v214 = vld [vmem:[%s1 + $0x598] sm:$0xff]
  %v215 = vld [vmem:[%s1 + $0x5a0] sm:$0xff]
  %v216 = vld [vmem:[%s1 + $0x5a8] sm:$0xff]
  %v217 = vld [vmem:[%s1 + $0x5b0] sm:$0xff]
  %v218 = vld [vmem:[%s1 + $0x5b8] sm:$0xff]
  %v219 = vld [vmem:[%s1 + $0x5c0] sm:$0xff]
  %v220 = vld [vmem:[%s1 + $0x5c8] sm:$0xff]
  %v221 = vld [vmem:[%s1 + $0x5d0] sm:$0xff]
  %v222 = vld [vmem:[%s1 + $0x5d8] sm:$0xff]
  %v223 = vld [vmem:[%s1 + $0x5e0] sm:$0xff]
  %v224 = vld [vmem:[%s1 + $0x5e8] sm:$0xff]
  %v225 = vld [vmem:[%s1 + $0x5f0] sm:$0xff]
  %v226 = vld [vmem:[%s1 + $0x5f8] sm:$0xff]
  %v227 = vld [vmem:[%s1 + $0x600] sm:$0xff]
  %v228 = vld [vmem:[%s1 + $0x608] sm:$0xff]
  %v229 = vld [vmem:[%s1 + $0x610] sm:$0xff]
  %v230 = vld [vmem:[%s1 + $0x618] sm:$0xff]
  %v231 = vld [vmem:[%s1 + $0x620] sm:$0xff]
  %v232 = vld [vmem:[%s1 + $0x628] sm:$0xff]
  %v233 = vld [vmem:[%s1 + $0x630] sm:$0xff]
  %v234 = vld [vmem:[%s1 + $0x638] sm:$0xff]
  %v235 = vld [vmem:[%s1 + $0x640] sm:$0xff]
  %v236 = vld [vmem:[%s1 + $0x648] sm:$0xff]
  %v237 = vld [vmem:[%s1 + $0x650] sm:$0xff]
  %v238 = vld [vmem:[%s1 + $0x658] sm:$0xff]
  %v239 = vld [vmem:[%s1 + $0x660] sm:$0xff]
  %v240 = vld [vmem:[%s1 + $0x668] sm:$0xff]
  %v241 = vld [vmem:[%s1 + $0x670] sm:$0xff]
  %v242 = vld [vmem:[%s1 + $0x678] sm:$0xff]
  %v243 = vld [vmem:[%s1 + $0x680] sm:$0xff]
  %v244 = vld [vmem:[%s1 + $0x688] sm:$0xff]
  %v245 = vld [vmem:[%s1 + $0x690] sm:$0xff]
  %v246 = vld [vmem:[%s1 + $0x698] sm:$0xff]
  %v247 = vld [vmem:[%s1 + $0x6a0] sm:$0xff]
  %v248 = vld [vmem:[%s1 + $0x6a8] sm:$0xff]
  %v249 = vld [vmem:[%s1 + $0x6b0] sm:$0xff]
  %v250 = vld [vmem:[%s1 + $0x6b8] sm:$0xff]
  %v251 = vld [vmem:[%s1 + $0x6c0] sm:$0xff]
  %v252 = vld [vmem:[%s1 + $0x6c8] sm:$0xff]
  %v253 = vld [vmem:[%s1 + $0x6d0] sm:$0xff]
  %v254 = vld [vmem:[%s1 + $0x6d8] sm:$0xff]
  %v255 = vld [vmem:[%s1 + $0x6e0] sm:$0xff]
  %v256 = vld [vmem:[%s1 + $0x6e8] sm:$0xff]
  %v257 = vld [vmem:[%s1 + $0x6f0] sm:$0xff]
  %v258 = vld [vmem:[%s1 + $0x6f8] sm:$0xff]
  %v259 = vld [vmem:[%s1 + $0x700] sm:$0xff]
  %v260 = vld [vmem:[%s1 + $0x708] sm:$0xff]
  %v261 = vld [vmem:[%s1 + $0x710] sm:$0xff]
  %v262 = vld [vmem:[%s1 + $0x718] sm:$0xff]
  %v263 = vld [vmem:[%s1 + $0x720] sm:$0xff]
  %v264 = vld [vmem:[%s1 + $0x728] sm:$0xff]
  %v265 = vld [vmem:[%s1 + $0x730] sm:$0xff]
  %v266 = vld [vmem:[%s1 + $0x738] sm:$0xff]
  %v267 = vld [vmem:[%s1 + $0x740] sm:$0xff]
  %v268 = vld [vmem:[%s1 + $0x748] sm:$0xff]
  %v269 = vld [vmem:[%s1 + $0x750] sm:$0xff]
  %v270 = vld [vmem:[%s1 + $0x758] sm:$0xff]
  %v271 = vld [vmem:[%s1 + $0x760] sm:$0xff]
  %v272 = vld [vmem:[%s1 + $0x768] sm:$0xff]
  %v273 = vld [vmem:[%s1 + $0x770] sm:$0xff]
  %v274 = vld [vmem:[%s1 + $0x778] sm:$0xff]
  %v275 = vld [vmem:[%s1 + $0x780] sm:$0xff]
  %v276 = vld [vmem:[%s1 + $0x788] sm:$0xff]
  %v277 = vld [vmem:[%s1 + $0x790] sm:$0xff]
  %v278 = vld [vmem:[%s1 + $0x798] sm:$0xff]
  %v279 = vld [vmem:[%s1 + $0x7a0] sm:$0xff]
  %v280 = vld [vmem:[%s1 + $0x7a8] sm:$0xff]
  %v281 = vld [vmem:[%s1 + $0x7b0] sm:$0xff]
  %v282 = vld [vmem:[%s1 + $0x7b8] sm:$0xff]
  %v283 = vld [vmem:[%s1 + $0x7c0] sm:$0xff]
  %v284 = vld [vmem:[%s1 + $0x7c8] sm:$0xff]
  %v285 = vld [vmem:[%s1 + $0x7d0] sm:$0xff]
  %v286 = vld [vmem:[%s1 + $0x7d8] sm:$0xff]
  %v287 = vld [vmem:[%s1 + $0x7e0] sm:$0xff]
  %v288 = vld [vmem:[%s1 + $0x7e8] sm:$0xff]
  %v289 = vld [vmem:[%s1 + $0x7f0] sm:$0xff]
  %v290 = vld [vmem:[%s1 + $0x7f8] sm:$0xff]
  %v291 = vld [vmem:[%s1 + $0x800] sm:$0xff]
  %v292 = vld [vmem:[%s1 + $0x808] sm:$0xff]
  %v293 = vld [vmem:[%s1 + $0x810] sm:$0xff]
  %v294 = vld [vmem:[%s1 + $0x818] sm:$0xff]
  %v295 = vld [vmem:[%s1 + $0x820] sm:$0xff]
  %v296 = vld [vmem:[%s1 + $0x828] sm:$0xff]
  %v297 = vld [vmem:[%s1 + $0x830] sm:$0xff]
  %v298 = vld [vmem:[%s1 + $0x838] sm:$0xff]
  %v299 = vld [vmem:[%s1 + $0x840] sm:$0xff]
  %v300 = vld [vmem:[%s1 + $0x848] sm:$0xff]
  %v301 = vld [vmem:[%s1 + $0x850] sm:$0xff]
  %v302 = vld [vmem:[%s1 + $0x858] sm:$0xff]
  %v303 = vld [vmem:[%s1 + $0x860] sm:$0xff]
  %v304 = vld [vmem:[%s1 + $0x868] sm:$0xff]
  %v305 = vld [vmem:[%s1 + $0x870] sm:$0xff]
  %v306 = vld [vmem:[%s1 + $0x878] sm:$0xff]
  %v307 = vld [vmem:[%s1 + $0x880] sm:$0xff]
  %v308 = vld [vmem:[%s1 + $0x888] sm:$0xff]
  %v309 = vld [vmem:[%s1 + $0x890] sm:$0xff]
  %v310 = vld [vmem:[%s1 + $0x898] sm:$0xff]
  %v311 = vld [vmem:[%s1 + $0x8a0] sm:$0xff]
  %v312 = vld [vmem:[%s1 + $0x8a8] sm:$0xff]
  %v313 = vld [vmem:[%s1 + $0x8b0] sm:$0xff]
  %v314 = vld [vmem:[%s1 + $0x8b8] sm:$0xff]
  %v315 = vld [vmem:[%s1 + $0x8c0] sm:$0xff]
  %v316 = vld [vmem:[%s1 + $0x8c8] sm:$0xff]
  %v317 = vld [vmem:[%s1 + $0x8d0] sm:$0xff]
  %v318 = vld [vmem:[%s1 + $0x8d8] sm:$0xff]
  %v319 = vld [vmem:[%s1 + $0x8e0] sm:$0xff]
  %v320 = vld [vmem:[%s1 + $0x8e8] sm:$0xff]
  %v321 = vld [vmem:[%s1 + $0x8f0] sm:$0xff]
  %v322 = vld [vmem:[%s1 + $0x8f8] sm:$0xff]
  %v323 = vld [vmem:[%s1 + $0x900] sm:$0xff]
  %v324 = vld [vmem:[%s1 + $0x908] sm:$0xff]
  %v325 = vld [vmem:[%s1 + $0x910] sm:$0xff]
  %v326 = vld [vmem:[%s1 + $0x918] sm:$0xff]
  %v327 = vld [vmem:[%s1 + $0x920] sm:$0xff]
  %v328 = vld [vmem:[%s1 + $0x928] sm:$0xff]
  %v329 = vld [vmem:[%s1 + $0x930] sm:$0xff]
  %v330 = vld [vmem:[%s1 + $0x938] sm:$0xff]
  %v331 = vld [vmem:[%s1 + $0x940] sm:$0xff]
  %v332 = vld [vmem:[%s1 + $0x948] sm:$0xff]
  %v333 = vld [vmem:[%s1 + $0x950] sm:$0xff]
  %v334 = vld [vmem:[%s1 + $0x958] sm:$0xff]
  %v335 = vld [vmem:[%s1 + $0x960] sm:$0xff]
  %v336 = vld [vmem:[%s1 + $0x968] sm:$0xff]
  %v337 = vld [vmem:[%s1 + $0x970] sm:$0xff]
  %v338 = vld [vmem:[%s1 + $0x978] sm:$0xff]
  %v339 = vld [vmem:[%s1 + $0x980] sm:$0xff]
  %v340 = vld [vmem:[%s1 + $0x988] sm:$0xff]
  %v341 = vld [vmem:[%s1 + $0x990] sm:$0xff]
  %v342 = vld [vmem:[%s1 + $0x998] sm:$0xff]
  %v343 = vld [vmem:[%s1 + $0x9a0] sm:$0xff]
  %v344 = vld [vmem:[%s1 + $0x9a8] sm:$0xff]
  %v345 = vld [vmem:[%s1 + $0x9b0] sm:$0xff]
  %v346 = vld [vmem:[%s1 + $0x9b8] sm:$0xff]
  %v347 = vld [vmem:[%s1 + $0x9c0] sm:$0xff]
  %v348 = vld [vmem:[%s1 + $0x9c8] sm:$0xff]
  %v349 = vld [vmem:[%s1 + $0x9d0] sm:$0xff]
  %v350 = vld [vmem:[%s1 + $0x9d8] sm:$0xff]
  %v351 = vld [vmem:[%s1 + $0x9e0] sm:$0xff]
  %v352 = vld [vmem:[%s1 + $0x9e8] sm:$0xff]
  %v353 = vld [vmem:[%s1 + $0x9f0] sm:$0xff]
  %v354 = vld [vmem:[%s1 + $0x9f8] sm:$0xff]
  %v355 = vld [vmem:[%s1 + $0xa00] sm:$0xff]
  %v356 = vld [vmem:[%s1 + $0xa08] sm:$0xff]
  %v357 = vld [vmem:[%s1 + $0xa10] sm:$0xff]
  %v358 = vld [vmem:[%s1 + $0xa18] sm:$0xff]
  %v359 = vld [vmem:[%s1 + $0xa20] sm:$0xff]
  %v360 = vld [vmem:[%s1 + $0xa28] sm:$0xff]
  %v361 = vld [vmem:[%s1 + $0xa30] sm:$0xff]
  %v362 = vld [vmem:[%s1 + $0xa38] sm:$0xff]
  %v363 = vld [vmem:[%s1 + $0xa40] sm:$0xff]
  %v364 = vld [vmem:[%s1 + $0xa48] sm:$0xff]
  %v365 = vld [vmem:[%s1 + $0xa50] sm:$0xff]
  %v366 = vld [vmem:[%s1 + $0xa58] sm:$0xff]
  %v367 = vld [vmem:[%s1 + $0xa60] sm:$0xff]
  %v368 = vld [vmem:[%s1 + $0xa68] sm:$0xff]
  %v369 = vld [vmem:[%s1 + $0xa70] sm:$0xff]
  %v370 = vld [vmem:[%s1 + $0xa78] sm:$0xff]
  %v371 = vld [vmem:[%s1 + $0xa80] sm:$0xff]
  %v372 = vld [vmem:[%s1 + $0xa88] sm:$0xff]
  %v373 = vld [vmem:[%s1 + $0xa90] sm:$0xff]
  %v374 = vld [vmem:[%s1 + $0xa98] sm:$0xff]
  %v375 = vld [vmem:[%s1 + $0xaa0] sm:$0xff]
  %v376 = vld [vmem:[%s1 + $0xaa8] sm:$0xff]
  %v377 = vld [vmem:[%s1 + $0xab0] sm:$0xff]
  %v378 = vld [vmem:[%s1 + $0xab8] sm:$0xff]
  %v379 = vld [vmem:[%s1 + $0xac0] sm:$0xff]
  %v380 = vld [vmem:[%s1 + $0xac8] sm:$0xff]
  %v381 = vld [vmem:[%s1 + $0xad0] sm:$0xff]
  %v382 = vld [vmem:[%s1 + $0xad8] sm:$0xff]
  %v383 = vld [vmem:[%s1 + $0xae0] sm:$0xff]
  %v384 = vld [vmem:[%s1 + $0xae8] sm:$0xff]
  %v385 = vld [vmem:[%s1 + $0xaf0] sm:$0xff]
  %v386 = vld [vmem:[%s1 + $0xaf8] sm:$0xff]
  %v387 = vld [vmem:[%s1 + $0xb00] sm:$0xff]
  %v388 = vld [vmem:[%s1 + $0xb08] sm:$0xff]
  %v389 = vld [vmem:[%s1 + $0xb10] sm:$0xff]
  %v390 = vld [vmem:[%s1 + $0xb18] sm:$0xff]
  %v391 = vld [vmem:[%s1 + $0xb20] sm:$0xff]
  %v392 = vld [vmem:[%s1 + $0xb28] sm:$0xff]
  %v393 = vld [vmem:[%s1 + $0xb30] sm:$0xff]
  %v394 = vld [vmem:[%s1 + $0xb38] sm:$0xff]
  %v395 = vld [vmem:[%s1 + $0xb40] sm:$0xff]
  %v396 = vld [vmem:[%s1 + $0xb48] sm:$0xff]
  %v397 = vld [vmem:[%s1 + $0xb50] sm:$0xff]
  %v398 = vld [vmem:[%s1 + $0xb58] sm:$0xff]
  %v399 = vld [vmem:[%s1 + $0xb60] sm:$0xff]
  %v400 = vld [vmem:[%s1 + $0xb68] sm:$0xff]
  %v401 = vld [vmem:[%s1 + $0xb70] sm:$0xff]
  %v402 = vld [vmem:[%s1 + $0xb78] sm:$0xff]
  %v403 = vld [vmem:[%s1 + $0xb80] sm:$0xff]
  %v404 = vld [vmem:[%s1 + $0xb88] sm:$0xff]
  %v405 = vld [vmem:[%s1 + $0xb90] sm:$0xff]
  %v406 = vld [vmem:[%s1 + $0xb98] sm:$0xff]
  %v407 = vld [vmem:[%s1 + $0xba0] sm:$0xff]
  %v408 = vld [vmem:[%s1 + $0xba8] sm:$0xff]
  %v409 = vld [vmem:[%s1 + $0xbb0] sm:$0xff]
  %v410 = vld [vmem:[%s1 + $0xbb8] sm:$0xff]
  %v411 = vld [vmem:[%s1 + $0xbc0] sm:$0xff]
  %v412 = vld [vmem:[%s1 + $0xbc8] sm:$0xff]
  %v413 = vld [vmem:[%s1 + $0xbd0] sm:$0xff]
  %v414 = vld [vmem:[%s1 + $0xbd8] sm:$0xff]
  %v415 = vld [vmem:[%s1 + $0xbe0] sm:$0xff]
  %v416 = vld [vmem:[%s1 + $0xbe8] sm:$0xff]
  %v417 = vld [vmem:[%s1 + $0xbf0] sm:$0xff]
  %v418 = vld [vmem:[%s1 + $0xbf8] sm:$0xff]
  %v419 = vld [vmem:[%s1 + $0xc00] sm:$0xff]
  %v420 = vld [vmem:[%s1 + $0xc08] sm:$0xff]
  %v421 = vld [vmem:[%s1 + $0xc10] sm:$0xff]
  %v422 = vld [vmem:[%s1 + $0xc18] sm:$0xff]
  %v423 = vld [vmem:[%s1 + $0xc20] sm:$0xff]
  %v424 = vld [vmem:[%s1 + $0xc28] sm:$0xff]
  %v425 = vld [vmem:[%s1 + $0xc30] sm:$0xff]
  %v426 = vld [vmem:[%s1 + $0xc38] sm:$0xff]
  %v427 = vld [vmem:[%s1 + $0xc40] sm:$0xff]
  %v428 = vld [vmem:[%s1 + $0xc48] sm:$0xff]
  %v429 = vld [vmem:[%s1 + $0xc50] sm:$0xff]
  %v430 = vld [vmem:[%s1 + $0xc58] sm:$0xff]
  %v431 = vld [vmem:[%s1 + $0xc60] sm:$0xff]
  %v432 = vld [vmem:[%s1 + $0xc68] sm:$0xff]
  %v433 = vld [vmem:[%s1 + $0xc70] sm:$0xff]
  %v434 = vld [vmem:[%s1 + $0xc78] sm:$0xff]
  %v435 = vld [vmem:[%s1 + $0xc80] sm:$0xff]
  %v436 = vld [vmem:[%s1 + $0xc88] sm:$0xff]
  %v437 = vld [vmem:[%s1 + $0xc90] sm:$0xff]
  %v438 = vld [vmem:[%s1 + $0xc98] sm:$0xff]
  %v439 = vld [vmem:[%s1 + $0xca0] sm:$0xff]
  %v440 = vld [vmem:[%s1 + $0xca8] sm:$0xff]
  %v441 = vld [vmem:[%s1 + $0xcb0] sm:$0xff]
  %v442 = vld [vmem:[%s1 + $0xcb8] sm:$0xff]
  %v443 = vld [vmem:[%s1 + $0xcc0] sm:$0xff]
  %v444 = vld [vmem:[%s1 + $0xcc8] sm:$0xff]
  %v445 = vld [vmem:[%s1 + $0xcd0] sm:$0xff]
  %v446 = vld [vmem:[%s1 + $0xcd8] sm:$0xff]
  %v447 = vld [vmem:[%s1 + $0xce0] sm:$0xff]
  %v448 = vld [vmem:[%s1 + $0xce8] sm:$0xff]
  %v449 = vld [vmem:[%s1 + $0xcf0] sm:$0xff]
  %v450 = vld [vmem:[%s1 + $0xcf8] sm:$0xff]
  %v451 = vld [vmem:[%s1 + $0xd00] sm:$0xff]
  %v452 = vld [vmem:[%s1 + $0xd08] sm:$0xff]
  %v453 = vld [vmem:[%s1 + $0xd10] sm:$0xff]
  %v454 = vld [vmem:[%s1 + $0xd18] sm:$0xff]
  %v455 = vld [vmem:[%s1 + $0xd20] sm:$0xff]
  %v456 = vld [vmem:[%s1 + $0xd28] sm:$0xff]
  %v457 = vld [vmem:[%s1 + $0xd30] sm:$0xff]
  %v458 = vld [vmem:[%s1 + $0xd38] sm:$0xff]
  %v459 = vld [vmem:[%s1 + $0xd40] sm:$0xff]
  %v460 = vld [vmem:[%s1 + $0xd48] sm:$0xff]
  %v461 = vld [vmem:[%s1 + $0xd50] sm:$0xff]
  %v462 = vld [vmem:[%s1 + $0xd58] sm:$0xff]
  %v463 = vld [vmem:[%s1 + $0xd60] sm:$0xff]
  %v464 = vld [vmem:[%s1 + $0xd68] sm:$0xff]
  %v465 = vld [vmem:[%s1 + $0xd70] sm:$0xff]
  %v466 = vld [vmem:[%s1 + $0xd78] sm:$0xff]
  %v467 = vld [vmem:[%s1 + $0xd80] sm:$0xff]
  %v468 = vld [vmem:[%s1 + $0xd88] sm:$0xff]
  %v469 = vld [vmem:[%s1 + $0xd90] sm:$0xff]
  %v470 = vld [vmem:[%s1 + $0xd98] sm:$0xff]
  %v471 = vld [vmem:[%s1 + $0xda0] sm:$0xff]
  %v472 = vld [vmem:[%s1 + $0xda8] sm:$0xff]
  %v473 = vld [vmem:[%s1 + $0xdb0] sm:$0xff]
  %v474 = vld [vmem:[%s1 + $0xdb8] sm:$0xff]
  %v475 = vld [vmem:[%s1 + $0xdc0] sm:$0xff]
  %v476 = vld [vmem:[%s1 + $0xdc8] sm:$0xff]
  %v477 = vld [vmem:[%s1 + $0xdd0] sm:$0xff]
  %v478 = vld [vmem:[%s1 + $0xdd8] sm:$0xff]
  %v479 = vld [vmem:[%s1 + $0xde0] sm:$0xff]
  %v480 = vld [vmem:[%s1 + $0xde8] sm:$0xff]
  %v481 = vld [vmem:[%s1 + $0xdf0] sm:$0xff]
  %v482 = vld [vmem:[%s1 + $0xdf8] sm:$0xff]
  %v483 = vld [vmem:[%s1 + $0xe00] sm:$0xff]
  %v484 = vld [vmem:[%s1 + $0xe08] sm:$0xff]
  %v485 = vld [vmem:[%s1 + $0xe10] sm:$0xff]
  %v486 = vld [vmem:[%s1 + $0xe18] sm:$0xff]
  %v487 = vld [vmem:[%s1 + $0xe20] sm:$0xff]
  %v488 = vld [vmem:[%s1 + $0xe28] sm:$0xff]
  %v489 = vld [vmem:[%s1 + $0xe30] sm:$0xff]
  %v490 = vld [vmem:[%s1 + $0xe38] sm:$0xff]
  %v491 = vld [vmem:[%s1 + $0xe40] sm:$0xff]
  %v492 = vld [vmem:[%s1 + $0xe48] sm:$0xff]
  %v493 = vld [vmem:[%s1 + $0xe50] sm:$0xff]
  %v494 = vld [vmem:[%s1 + $0xe58] sm:$0xff]
  %v495 = vld [vmem:[%s1 + $0xe60] sm:$0xff]
  %v496 = vld [vmem:[%s1 + $0xe68] sm:$0xff]
  %v497 = vld [vmem:[%s1 + $0xe70] sm:$0xff]
  %v498 = vld [vmem:[%s1 + $0xe78] sm:$0xff]
  %v499 = vld [vmem:[%s1 + $0xe80] sm:$0xff]
  %v500 = vld [vmem:[%s1 + $0xe88] sm:$0xff]
  %v501 = vld [vmem:[%s1 + $0xe90] sm:$0xff]
  %v502 = vld [vmem:[%s1 + $0xe98] sm:$0xff]
  %v503 = vld [vmem:[%s1 + $0xea0] sm:$0xff]
  %v504 = vld [vmem:[%s1 + $0xea8] sm:$0xff]
  %v505 = vld [vmem:[%s1 + $0xeb0] sm:$0xff]
  %v506 = vld [vmem:[%s1 + $0xeb8] sm:$0xff]
  %v507 = vld [vmem:[%s1 + $0xec0] sm:$0xff]
  %v508 = vld [vmem:[%s1 + $0xec8] sm:$0xff]
  %v509 = vld [vmem:[%s1 + $0xed0] sm:$0xff]
  %v510 = vld [vmem:[%s1 + $0xed8] sm:$0xff]
  %v511 = vld [vmem:[%s1 + $0xee0] sm:$0xff]
  %v512 = vld [vmem:[%s1 + $0xee8] sm:$0xff]
  %v513 = vld [vmem:[%s1 + $0xef0] sm:$0xff]
  %v514 = vld [vmem:[%s1 + $0xef8] sm:$0xff]
  %v515 = vld [vmem:[%s1 + $0xf00] sm:$0xff]
  %v516 = vld [vmem:[%s1 + $0xf08] sm:$0xff]
  %v517 = vld [vmem:[%s1 + $0xf10] sm:$0xff]
  %v518 = vld [vmem:[%s1 + $0xf18] sm:$0xff]
  %v519 = vld [vmem:[%s1 + $0xf20] sm:$0xff]
  %v520 = vld [vmem:[%s1 + $0xf28] sm:$0xff]
  %v521 = vld [vmem:[%s1 + $0xf30] sm:$0xff]
  %v522 = vld [vmem:[%s1 + $0xf38] sm:$0xff]
  %v523 = vld [vmem:[%s1 + $0xf40] sm:$0xff]
  %v524 = vld [vmem:[%s1 + $0xf48] sm:$0xff]
  %v525 = vld [vmem:[%s1 + $0xf50] sm:$0xff]
  %v526 = vld [vmem:[%s1 + $0xf58] sm:$0xff]
  %v527 = vld [vmem:[%s1 + $0xf60] sm:$0xff]
  %v528 = vld [vmem:[%s1 + $0xf68] sm:$0xff]
  %v529 = vld [vmem:[%s1 + $0xf70] sm:$0xff]
  %v530 = vld [vmem:[%s1 + $0xf78] sm:$0xff]
  %v531 = vld [vmem:[%s1 + $0xf80] sm:$0xff]
  %v532 = vld [vmem:[%s1 + $0xf88] sm:$0xff]
  %v533 = vld [vmem:[%s1 + $0xf90] sm:$0xff]
  %v534 = vld [vmem:[%s1 + $0xf98] sm:$0xff]
  %v535 = vld [vmem:[%s1 + $0xfa0] sm:$0xff]
  %v536 = vld [vmem:[%s1 + $0xfa8] sm:$0xff]
  %v537 = vld [vmem:[%s1 + $0xfb0] sm:$0xff]
  %v538 = vld [vmem:[%s1 + $0xfb8] sm:$0xff]
  %v539 = vld [vmem:[%s1 + $0xfc0] sm:$0xff]
  %v540 = vld [vmem:[%s1 + $0xfc8] sm:$0xff]
  %v541 = vld [vmem:[%s1 + $0xfd0] sm:$0xff]
  %v542 = vld [vmem:[%s1 + $0xfd8] sm:$0xff]
  %v543 = vld [vmem:[%s1 + $0xfe0] sm:$0xff]
  %v544 = vld [vmem:[%s1 + $0xfe8] sm:$0xff]
  %v545 = vld [vmem:[%s1 + $0xff0] sm:$0xff]
  %v546 = vld [vmem:[%s1 + $0xff8] sm:$0xff]
  %v547 = vld [vmem:[%s1 + $0x1000] sm:$0xff]
  %v548 = vld [vmem:[%s1 + $0x1008] sm:$0xff]
  %v549 = vld [vmem:[%s1 + $0x1010] sm:$0xff]
  %v550 = vld [vmem:[%s1 + $0x1018] sm:$0xff]
  %v551 = vld [vmem:[%s1 + $0x1020] sm:$0xff]
  %v552 = vld [vmem:[%s1 + $0x1028] sm:$0xff]
  %v553 = vld [vmem:[%s1 + $0x1030] sm:$0xff]
  %v554 = vld [vmem:[%s1 + $0x1038] sm:$0xff]
  %v555 = vld [vmem:[%s1 + $0x1040] sm:$0xff]
  %v556 = vld [vmem:[%s1 + $0x1048] sm:$0xff]
  %v557 = vld [vmem:[%s1 + $0x1050] sm:$0xff]
  %v558 = vld [vmem:[%s1 + $0x1058] sm:$0xff]
  %v559 = vld [vmem:[%s1 + $0x1060] sm:$0xff]
  %v560 = vld [vmem:[%s1 + $0x1068] sm:$0xff]
  %v561 = vld [vmem:[%s1 + $0x1070] sm:$0xff]
  %v562 = vld [vmem:[%s1 + $0x1078] sm:$0xff]
  %v563 = vld [vmem:[%s1 + $0x1080] sm:$0xff]
  %v564 = vld [vmem:[%s1 + $0x1088] sm:$0xff]
  %v565 = vld [vmem:[%s1 + $0x1090] sm:$0xff]
  %v566 = vld [vmem:[%s1 + $0x1098] sm:$0xff]
  %v567 = vld [vmem:[%s1 + $0x10a0] sm:$0xff]
  %v568 = vld [vmem:[%s1 + $0x10a8] sm:$0xff]
  %v569 = vld [vmem:[%s1 + $0x10b0] sm:$0xff]
  %v570 = vld [vmem:[%s1 + $0x10b8] sm:$0xff]
  %v571 = vld [vmem:[%s1 + $0x10c0] sm:$0xff]
  %v572 = vld [vmem:[%s1 + $0x10c8] sm:$0xff]
  %v573 = vld [vmem:[%s1 + $0x10d0] sm:$0xff]
  %v574 = vld [vmem:[%s1 + $0x10d8] sm:$0xff]
  %v575 = vld [vmem:[%s1 + $0x10e0] sm:$0xff]
  %v576 = vld [vmem:[%s1 + $0x10e8] sm:$0xff]
  %v577 = vld [vmem:[%s1 + $0x10f0] sm:$0xff]
  %v578 = vld [vmem:[%s1 + $0x10f8] sm:$0xff]
  %v579 = vld [vmem:[%s1 + $0x1100] sm:$0xff]
  %v580 = vld [vmem:[%s1 + $0x1108] sm:$0xff]
  %v581 = vld [vmem:[%s1 + $0x1110] sm:$0xff]
  %v582 = vld [vmem:[%s1 + $0x1118] sm:$0xff]
  %v583 = vld [vmem:[%s1 + $0x1120] sm:$0xff]
  %v584 = vld [vmem:[%s1 + $0x1128] sm:$0xff]
  %v585 = vld [vmem:[%s1 + $0x1130] sm:$0xff]
  %v586 = vld [vmem:[%s1 + $0x1138] sm:$0xff]
  %v587 = vld [vmem:[%s1 + $0x1140] sm:$0xff]
  %v588 = vld [vmem:[%s1 + $0x1148] sm:$0xff]
  %v589 = vld [vmem:[%s1 + $0x1150] sm:$0xff]
  %v590 = vld [vmem:[%s1 + $0x1158] sm:$0xff]
  %v591 = vld [vmem:[%s1 + $0x1160] sm:$0xff]
  %v592 = vld [vmem:[%s1 + $0x1168] sm:$0xff]
  %v593 = vld [vmem:[%s1 + $0x1170] sm:$0xff]
  %v594 = vld [vmem:[%s1 + $0x1178] sm:$0xff]
  %v595 = vld [vmem:[%s1 + $0x1180] sm:$0xff]
  %v596 = vld [vmem:[%s1 + $0x1188] sm:$0xff]
  %v597 = vld [vmem:[%s1 + $0x1190] sm:$0xff]
  %v598 = vld [vmem:[%s1 + $0x1198] sm:$0xff]
  %v599 = vld [vmem:[%s1 + $0x11a0] sm:$0xff]
  %v600 = vld [vmem:[%s1 + $0x11a8] sm:$0xff]
  %v601 = vld [vmem:[%s1 + $0x11b0] sm:$0xff]
  %v602 = vld [vmem:[%s1 + $0x11b8] sm:$0xff]
  %v603 = vld [vmem:[%s1 + $0x11c0] sm:$0xff]
  %v604 = vld [vmem:[%s1 + $0x11c8] sm:$0xff]
  %v605 = vld [vmem:[%s1 + $0x11d0] sm:$0xff]
  %v606 = vld [vmem:[%s1 + $0x11d8] sm:$0xff]
  %v607 = vld [vmem:[%s1 + $0x11e0] sm:$0xff]
  %v608 = vld [vmem:[%s1 + $0x11e8] sm:$0xff]
  %v609 = vld [vmem:[%s1 + $0x11f0] sm:$0xff]
  %v610 = vld [vmem:[%s1 + $0x11f8] sm:$0xff]
  %v611 = vld [vmem:[%s1 + $0x1200] sm:$0xff]
  %v612 = vld [vmem:[%s1 + $0x1208] sm:$0xff]
  %v613 = vld [vmem:[%s1 + $0x1210] sm:$0xff]
  %v614 = vld [vmem:[%s1 + $0x1218] sm:$0xff]
  %v615 = vld [vmem:[%s1 + $0x1220] sm:$0xff]
  %v616 = vld [vmem:[%s1 + $0x1228] sm:$0xff]
  %v617 = vld [vmem:[%s1 + $0x1230] sm:$0xff]
  %v618 = vld [vmem:[%s1 + $0x1238] sm:$0xff]
  %v619 = vld [vmem:[%s1 + $0x1240] sm:$0xff]
  %v620 = vld [vmem:[%s1 + $0x1248] sm:$0xff]
  %v621 = vld [vmem:[%s1 + $0x1250] sm:$0xff]
  %v622 = vld [vmem:[%s1 + $0x1258] sm:$0xff]
  %v623 = vld [vmem:[%s1 + $0x1260] sm:$0xff]
  %v624 = vld [vmem:[%s1 + $0x1268] sm:$0xff]
  %v625 = vld [vmem:[%s1 + $0x1270] sm:$0xff]
  %v626 = vld [vmem:[%s1 + $0x1278] sm:$0xff]
  %v627 = vld [vmem:[%s1 + $0x1280] sm:$0xff]
  %v628 = vld [vmem:[%s1 + $0x1288] sm:$0xff]
  %v629 = vld [vmem:[%s1 + $0x1290] sm:$0xff]
  %v630 = vld [vmem:[%s1 + $0x1298] sm:$0xff]
  %v631 = vld [vmem:[%s1 + $0x12a0] sm:$0xff]
  %v632 = vld [vmem:[%s1 + $0x12a8] sm:$0xff]
  %v633 = vld [vmem:[%s1 + $0x12b0] sm:$0xff]
  %v634 = vld [vmem:[%s1 + $0x12b8] sm:$0xff]
  %v635 = vld [vmem:[%s1 + $0x12c0] sm:$0xff]
  %v636 = vld [vmem:[%s1 + $0x12c8] sm:$0xff]
  %v637 = vld [vmem:[%s1 + $0x12d0] sm:$0xff]
  %v638 = vld [vmem:[%s1 + $0x12d8] sm:$0xff]
  %v639 = vld [vmem:[%s1 + $0x12e0] sm:$0xff]
  %v640 = vld [vmem:[%s1 + $0x12e8] sm:$0xff]
  %v641 = vld [vmem:[%s1 + $0x12f0] sm:$0xff]
  %v642 = vld [vmem:[%s1 + $0x12f8] sm:$0xff]
  %v643 = vld [vmem:[%s1 + $0x1300] sm:$0xff]
  %v644 = vld [vmem:[%s1 + $0x1308] sm:$0xff]
  %v645 = vld [vmem:[%s1 + $0x1310] sm:$0xff]
  %v646 = vld [vmem:[%s1 + $0x1318] sm:$0xff]
  %v647 = vld [vmem:[%s1 + $0x1320] sm:$0xff]
  %v648 = vld [vmem:[%s1 + $0x1328] sm:$0xff]
  %v649 = vld [vmem:[%s1 + $0x1330] sm:$0xff]
  %v650 = vld [vmem:[%s1 + $0x1338] sm:$0xff]
  %v651 = vld [vmem:[%s1 + $0x1340] sm:$0xff]
  %v652 = vld [vmem:[%s1 + $0x1348] sm:$0xff]
  %v653 = vld [vmem:[%s1 + $0x1350] sm:$0xff]
  %v654 = vld [vmem:[%s1 + $0x1358] sm:$0xff]
  %v655 = vld [vmem:[%s1 + $0x1360] sm:$0xff]
  %v656 = vld [vmem:[%s1 + $0x1368] sm:$0xff]
  %v657 = vld [vmem:[%s1 + $0x1370] sm:$0xff]
  %v658 = vld [vmem:[%s1 + $0x1378] sm:$0xff]
  %v659 = vld [vmem:[%s1 + $0x1380] sm:$0xff]
  %v660 = vld [vmem:[%s1 + $0x1388] sm:$0xff]
  %v661 = vld [vmem:[%s1 + $0x1390] sm:$0xff]
  %v662 = vld [vmem:[%s1 + $0x1398] sm:$0xff]
  %v663 = vld [vmem:[%s1 + $0x13a0] sm:$0xff]
  %v664 = vld [vmem:[%s1 + $0x13a8] sm:$0xff]
  %v665 = vld [vmem:[%s1 + $0x13b0] sm:$0xff]
  %v666 = vld [vmem:[%s1 + $0x13b8] sm:$0xff]
  %v667 = vld [vmem:[%s1 + $0x13c0] sm:$0xff]
  %v668 = vld [vmem:[%s1 + $0x13c8] sm:$0xff]
  %v669 = vld [vmem:[%s1 + $0x13d0] sm:$0xff]
  %v670 = vld [vmem:[%s1 + $0x13d8] sm:$0xff]
  %v671 = vld [vmem:[%s1 + $0x13e0] sm:$0xff]
  %v672 = vld [vmem:[%s1 + $0x13e8] sm:$0xff]
  %v673 = vld [vmem:[%s1 + $0x13f0] sm:$0xff]
  %v674 = vld [vmem:[%s1 + $0x13f8] sm:$0xff]
  %v675 = vld [vmem:[%s1 + $0x1400] sm:$0xff]
  %v676 = vld [vmem:[%s1 + $0x1408] sm:$0xff]
  %v677 = vld [vmem:[%s1 + $0x1410] sm:$0xff]
  %v678 = vld [vmem:[%s1 + $0x1418] sm:$0xff]
  %v679 = vld [vmem:[%s1 + $0x1420] sm:$0xff]
  %v680 = vld [vmem:[%s1 + $0x1428] sm:$0xff]
  %v681 = vld [vmem:[%s1 + $0x1430] sm:$0xff]
  %v682 = vld [vmem:[%s1 + $0x1438] sm:$0xff]
  %v683 = vld [vmem:[%s1 + $0x1440] sm:$0xff]
  %v684 = vld [vmem:[%s1 + $0x1448] sm:$0xff]
  %v685 = vld [vmem:[%s1 + $0x1450] sm:$0xff]
  %v686 = vld [vmem:[%s1 + $0x1458] sm:$0xff]
  %v687 = vld [vmem:[%s1 + $0x1460] sm:$0xff]
  %v688 = vld [vmem:[%s1 + $0x1468] sm:$0xff]
  %v689 = vld [vmem:[%s1 + $0x1470] sm:$0xff]
  %v690 = vld [vmem:[%s1 + $0x1478] sm:$0xff]
  %v691 = vld [vmem:[%s1 + $0x1480] sm:$0xff]
  %v692 = vld [vmem:[%s1 + $0x1488] sm:$0xff]
  %v693 = vld [vmem:[%s1 + $0x1490] sm:$0xff]
  %v694 = vld [vmem:[%s1 + $0x1498] sm:$0xff]
  %v695 = vld [vmem:[%s1 + $0x14a0] sm:$0xff]
  %v696 = vld [vmem:[%s1 + $0x14a8] sm:$0xff]
  %v697 = vld [vmem:[%s1 + $0x14b0] sm:$0xff]
  %v698 = vld [vmem:[%s1 + $0x14b8] sm:$0xff]
  %v699 = vld [vmem:[%s1 + $0x14c0] sm:$0xff]
  %v700 = vld [vmem:[%s1 + $0x14c8] sm:$0xff]
  %v701 = vld [vmem:[%s1 + $0x14d0] sm:$0xff]
  %v702 = vld [vmem:[%s1 + $0x14d8] sm:$0xff]
  %v703 = vld [vmem:[%s1 + $0x14e0] sm:$0xff]
  %v704 = vld [vmem:[%s1 + $0x14e8] sm:$0xff]
  %v705 = vld [vmem:[%s1 + $0x14f0] sm:$0xff]
  %v706 = vld [vmem:[%s1 + $0x14f8] sm:$0xff]
  %v707 = vld [vmem:[%s1 + $0x1500] sm:$0xff]
  %v708 = vld [vmem:[%s1 + $0x1508] sm:$0xff]
  %v709 = vld [vmem:[%s1 + $0x1510] sm:$0xff]
  %v710 = vld [vmem:[%s1 + $0x1518] sm:$0xff]
  %v711 = vld [vmem:[%s1 + $0x1520] sm:$0xff]
  %v712 = vld [vmem:[%s1 + $0x1528] sm:$0xff]
  %v713 = vld [vmem:[%s1 + $0x1530] sm:$0xff]
  %v714 = vld [vmem:[%s1 + $0x1538] sm:$0xff]
  %v715 = vld [vmem:[%s1 + $0x1540] sm:$0xff]
  %v716 = vld [vmem:[%s1 + $0x1548] sm:$0xff]
  %v717 = vld [vmem:[%s1 + $0x1550] sm:$0xff]
  %v718 = vld [vmem:[%s1 + $0x1558] sm:$0xff]
  %v719 = vld [vmem:[%s1 + $0x1560] sm:$0xff]
  %v720 = vld [vmem:[%s1 + $0x1568] sm:$0xff]
  %v721 = vld [vmem:[%s1 + $0x1570] sm:$0xff]
  %v722 = vld [vmem:[%s1 + $0x1578] sm:$0xff]
  %v723 = vld [vmem:[%s1 + $0x1580] sm:$0xff]
  %v724 = vld [vmem:[%s1 + $0x1588] sm:$0xff]
  %v725 = vld [vmem:[%s1 + $0x1590] sm:$0xff]
  %v726 = vld [vmem:[%s1 + $0x1598] sm:$0xff]
  %v727 = vld [vmem:[%s1 + $0x15a0] sm:$0xff]
  %v728 = vld [vmem:[%s1 + $0x15a8] sm:$0xff]
  %v729 = vld [vmem:[%s1 + $0x15b0] sm:$0xff]
  %v730 = vld [vmem:[%s1 + $0x15b8] sm:$0xff]
  %v731 = vld [vmem:[%s1 + $0x15c0] sm:$0xff]
  %v732 = vld [vmem:[%s1 + $0x15c8] sm:$0xff]
  %v733 = vld [vmem:[%s1 + $0x15d0] sm:$0xff]
  %v734 = vld [vmem:[%s1 + $0x15d8] sm:$0xff]
  %v735 = vld [vmem:[%s1 + $0x15e0] sm:$0xff]
  %v736 = vld [vmem:[%s1 + $0x15e8] sm:$0xff]
  %v737 = vld [vmem:[%s1 + $0x15f0] sm:$0xff]
  %v738 = vld [vmem:[%s1 + $0x15f8] sm:$0xff]
  %v739 = vld [vmem:[%s1 + $0x1600] sm:$0xff]
  %v740 = vld [vmem:[%s1 + $0x1608] sm:$0xff]
  %v741 = vld [vmem:[%s1 + $0x1610] sm:$0xff]
  %v742 = vld [vmem:[%s1 + $0x1618] sm:$0xff]
  %v743 = vld [vmem:[%s1 + $0x1620] sm:$0xff]
  %v744 = vld [vmem:[%s1 + $0x1628] sm:$0xff]
  %v745 = vld [vmem:[%s1 + $0x1630] sm:$0xff]
  %v746 = vld [vmem:[%s1 + $0x1638] sm:$0xff]
  %v747 = vld [vmem:[%s1 + $0x1640] sm:$0xff]
  %v748 = vld [vmem:[%s1 + $0x1648] sm:$0xff]
  %v749 = vld [vmem:[%s1 + $0x1650] sm:$0xff]
  %v750 = vld [vmem:[%s1 + $0x1658] sm:$0xff]
  %v751 = vld [vmem:[%s1 + $0x1660] sm:$0xff]
  %v752 = vld [vmem:[%s1 + $0x1668] sm:$0xff]
  %v753 = vld [vmem:[%s1 + $0x1670] sm:$0xff]
  %v754 = vld [vmem:[%s1 + $0x1678] sm:$0xff]
  %v755 = vld [vmem:[%s1 + $0x1680] sm:$0xff]
  %v756 = vld [vmem:[%s1 + $0x1688] sm:$0xff]
  %v757 = vld [vmem:[%s1 + $0x1690] sm:$0xff]
  %v758 = vld [vmem:[%s1 + $0x1698] sm:$0xff]
  %v759 = vld [vmem:[%s1 + $0x16a0] sm:$0xff]
  %v760 = vld [vmem:[%s1 + $0x16a8] sm:$0xff]
  %v761 = vld [vmem:[%s1 + $0x16b0] sm:$0xff]
  %v762 = vld [vmem:[%s1 + $0x16b8] sm:$0xff]
  %v763 = vld [vmem:[%s1 + $0x16c0] sm:$0xff]
  %v764 = vld [vmem:[%s1 + $0x16c8] sm:$0xff]
  %v765 = vld [vmem:[%s1 + $0x16d0] sm:$0xff]
  %v766 = vld [vmem:[%s1 + $0x16d8] sm:$0xff]
  %v767 = vld [vmem:[%s1 + $0x16e0] sm:$0xff]
  %v768 = vld [vmem:[%s1 + $0x16e8] sm:$0xff]
  %v769 = vld [vmem:[%s1 + $0x16f0] sm:$0xff]
  %v770 = vld [vmem:[%s1 + $0x16f8] sm:$0xff]
  %v771 = vld [vmem:[%s1 + $0x1700] sm:$0xff]
  %v772 = vld [vmem:[%s1 + $0x1708] sm:$0xff]
  %v773 = vld [vmem:[%s1 + $0x1710] sm:$0xff]
  %v774 = vld [vmem:[%s1 + $0x1718] sm:$0xff]
  %v775 = vld [vmem:[%s1 + $0x1720] sm:$0xff]
  %v776 = vld [vmem:[%s1 + $0x1728] sm:$0xff]
  %v777 = vld [vmem:[%s1 + $0x1730] sm:$0xff]
  %v778 = vld [vmem:[%s1 + $0x1738] sm:$0xff]
  %v779 = vld [vmem:[%s1 + $0x1740] sm:$0xff]
  %v780 = vld [vmem:[%s1 + $0x1748] sm:$0xff]
  %v781 = vld [vmem:[%s1 + $0x1750] sm:$0xff]
  %v782 = vld [vmem:[%s1 + $0x1758] sm:$0xff]
  %v783 = vld [vmem:[%s1 + $0x1760] sm:$0xff]
  %v784 = vld [vmem:[%s1 + $0x1768] sm:$0xff]
  %v785 = vld [vmem:[%s1 + $0x1770] sm:$0xff]
  %v786 = vld [vmem:[%s1 + $0x1778] sm:$0xff]
  %v787 = vld [vmem:[%s1 + $0x1780] sm:$0xff]
  %v788 = vld [vmem:[%s1 + $0x1788] sm:$0xff]
  %v789 = vld [vmem:[%s1 + $0x1790] sm:$0xff]
  %v790 = vld [vmem:[%s1 + $0x1798] sm:$0xff]
  %v791 = vld [vmem:[%s1 + $0x17a0] sm:$0xff]
  %v792 = vld [vmem:[%s1 + $0x17a8] sm:$0xff]
  %v793 = vld [vmem:[%s1 + $0x17b0] sm:$0xff]
  %v794 = vld [vmem:[%s1 + $0x17b8] sm:$0xff]
  %v795 = vld [vmem:[%s1 + $0x17c0] sm:$0xff]
  %v796 = vld [vmem:[%s1 + $0x17c8] sm:$0xff]
  %v797 = vld [vmem:[%s1 + $0x17d0] sm:$0xff]
  %v798 = vld [vmem:[%s1 + $0x17d8] sm:$0xff]
  %v799 = vld [vmem:[%s1 + $0x17e0] sm:$0xff]
  %v800 = vld [vmem:[%s1 + $0x17e8] sm:$0xff]
  %v801 = vld [vmem:[%s1 + $0x17f0] sm:$0xff]
  %v802 = vld [vmem:[%s1 + $0x17f8] sm:$0xff]
  %v803 = vld [vmem:[%s2] sm:$0xff]
  %v804 = vld [vmem:[%s2 + $0x8] sm:$0xff]
  %v807 = vlaneseq
  %v808 = vshrl.u32 %v807, 7
  %v809 = vsub.s32 0, %v808
  %v810 = vrot.slane %v803, %v809
  %v811 = vlaneseq
  %v812 = vshrl.u32 %v811, 7
  %v813 = vsub.s32 1, %v812
  %v814 = vrot.slane %v803, %v813
  %v815 = vlaneseq
  %v816 = vshrl.u32 %v815, 7
  %v817 = vsub.s32 2, %v816
  %v818 = vrot.slane %v803, %v817
  %v819 = vlaneseq
  %v820 = vshrl.u32 %v819, 7
  %v821 = vsub.s32 3, %v820
  %v822 = vrot.slane %v803, %v821
  %v823 = vlaneseq
  %v824 = vshrl.u32 %v823, 7
  %v825 = vsub.s32 4, %v824
  %v826 = vrot.slane %v803, %v825
  %v827 = vlaneseq
  %v828 = vshrl.u32 %v827, 7
  %v829 = vsub.s32 5, %v828
  %v830 = vrot.slane %v803, %v829
  %v831 = vlaneseq
  %v832 = vshrl.u32 %v831, 7
  %v833 = vsub.s32 6, %v832
  %v834 = vrot.slane %v803, %v833
  %v835 = vlaneseq
  %v836 = vshrl.u32 %v835, 7
  %v837 = vsub.s32 7, %v836
  %v838 = vrot.slane %v803, %v837
  %v839 = vlaneseq
  %v840 = vshrl.u32 %v839, 7
  %v841 = vsub.s32 0, %v840
  %v842 = vrot.slane %v804, %v841
  %v843 = vlaneseq
  %v844 = vshrl.u32 %v843, 7
  %v845 = vsub.s32 1, %v844
  %v846 = vrot.slane %v804, %v845
  %v847 = vlaneseq
  %v848 = vshrl.u32 %v847, 7
  %v849 = vsub.s32 2, %v848
  %v850 = vrot.slane %v804, %v849
  %v851 = vlaneseq
  %v852 = vshrl.u32 %v851, 7
  %v853 = vsub.s32 3, %v852
  %v854 = vrot.slane %v804, %v853
  %v855 = vlaneseq
  %v856 = vshrl.u32 %v855, 7
  %v857 = vsub.s32 4, %v856
  %v858 = vrot.slane %v804, %v857
  %v859 = vlaneseq
  %v860 = vshrl.u32 %v859, 7
  %v861 = vsub.s32 5, %v860
  %v862 = vrot.slane %v804, %v861
  %v863 = vlaneseq
  %v864 = vshrl.u32 %v863, 7
  %v865 = vsub.s32 6, %v864
  %v866 = vrot.slane %v804, %v865
  %v867 = vlaneseq
  %v868 = vshrl.u32 %v867, 7
  %v869 = vsub.s32 7, %v868
  %v870 = vrot.slane %v804, %v869
  %v890 = vunpack.c.l.b16 %v32
  %v891 = vunpack.c.h.b16 %v32
  %v892 = vunpack.c.l.b16 %v33
  %v893 = vunpack.c.h.b16 %v33
  %v894 = vunpack.c.l.b16 %v34
  %v895 = vunpack.c.h.b16 %v34
  %v896 = vpack.c.b16 %v890, %v890
  %v897 = vpack.c.b16 %v891, %v891
  %v898 = vpack.c.b16 %v892, %v892
  %v899 = vpack.c.b16 %v893, %v893
  %v900 = vpack.c.b16 %v894, %v894
  %v901 = vpack.c.b16 %v895, %v895
  %v1676 = vunpack.c.l.b16 %v35
  %v1677 = vunpack.c.h.b16 %v35
  %v1678 = vunpack.c.l.b16 %v36
  %v1679 = vunpack.c.h.b16 %v36
  %v1680 = vunpack.c.l.b16 %v37
  %v1681 = vunpack.c.h.b16 %v37
  %v1682 = vunpack.c.l.b16 %v38
  %v1683 = vunpack.c.h.b16 %v38
  %v1684 = vunpack.c.l.b16 %v39
  %v1685 = vunpack.c.h.b16 %v39
  %v1686 = vunpack.c.l.b16 %v40
  %v1687 = vunpack.c.h.b16 %v40
  %v1688 = vunpack.c.l.b16 %v41
  %v1689 = vunpack.c.h.b16 %v41
  %v1690 = vunpack.c.l.b16 %v42
  %v1691 = vunpack.c.h.b16 %v42
  %v1692 = vunpack.c.l.b16 %v43
  %v1693 = vunpack.c.h.b16 %v43
  %v1694 = vunpack.c.l.b16 %v44
  %v1695 = vunpack.c.h.b16 %v44
  %v1696 = vunpack.c.l.b16 %v45
  %v1697 = vunpack.c.h.b16 %v45
  %v1698 = vunpack.c.l.b16 %v46
  %v1699 = vunpack.c.h.b16 %v46
  %v1700 = vunpack.c.l.b16 %v47
  %v1701 = vunpack.c.h.b16 %v47
  %v1702 = vunpack.c.l.b16 %v48
  %v1703 = vunpack.c.h.b16 %v48
  %v1704 = vunpack.c.l.b16 %v49
  %v1705 = vunpack.c.h.b16 %v49
  %v1706 = vunpack.c.l.b16 %v50
  %v1707 = vunpack.c.h.b16 %v50
  %v1708 = vunpack.c.l.b16 %v51
  %v1709 = vunpack.c.h.b16 %v51
  %v1710 = vunpack.c.l.b16 %v52
  %v1711 = vunpack.c.h.b16 %v52
  %v1712 = vunpack.c.l.b16 %v53
  %v1713 = vunpack.c.h.b16 %v53
  %v1714 = vunpack.c.l.b16 %v54
  %v1715 = vunpack.c.h.b16 %v54
  %v1716 = vunpack.c.l.b16 %v55
  %v1717 = vunpack.c.h.b16 %v55
  %v1718 = vunpack.c.l.b16 %v56
  %v1719 = vunpack.c.h.b16 %v56
  %v1720 = vunpack.c.l.b16 %v57
  %v1721 = vunpack.c.h.b16 %v57
  %v1722 = vunpack.c.l.b16 %v58
  %v1723 = vunpack.c.h.b16 %v58
  %v1724 = vunpack.c.l.b16 %v59
  %v1725 = vunpack.c.h.b16 %v59
  %v1726 = vunpack.c.l.b16 %v60
  %v1727 = vunpack.c.h.b16 %v60
  %v1728 = vunpack.c.l.b16 %v61
  %v1729 = vunpack.c.h.b16 %v61
  %v1730 = vunpack.c.l.b16 %v62
  %v1731 = vunpack.c.h.b16 %v62
  %v1732 = vunpack.c.l.b16 %v63
  %v1733 = vunpack.c.h.b16 %v63
  %v1734 = vunpack.c.l.b16 %v64
  %v1735 = vunpack.c.h.b16 %v64
  %v1736 = vunpack.c.l.b16 %v65
  %v1737 = vunpack.c.h.b16 %v65
  %v1738 = vunpack.c.l.b16 %v66
  %v1739 = vunpack.c.h.b16 %v66
  %v1740 = vunpack.c.l.b16 %v67
  %v1741 = vunpack.c.h.b16 %v67
  %v1742 = vunpack.c.l.b16 %v68
  %v1743 = vunpack.c.h.b16 %v68
  %v1744 = vunpack.c.l.b16 %v69
  %v1745 = vunpack.c.h.b16 %v69
  %v1746 = vunpack.c.l.b16 %v70
  %v1747 = vunpack.c.h.b16 %v70
  %v1748 = vunpack.c.l.b16 %v71
  %v1749 = vunpack.c.h.b16 %v71
  %v1750 = vunpack.c.l.b16 %v72
  %v1751 = vunpack.c.h.b16 %v72
  %v1752 = vunpack.c.l.b16 %v73
  %v1753 = vunpack.c.h.b16 %v73
  %v1754 = vunpack.c.l.b16 %v74
  %v1755 = vunpack.c.h.b16 %v74
  %v1756 = vunpack.c.l.b16 %v75
  %v1757 = vunpack.c.h.b16 %v75
  %v1758 = vunpack.c.l.b16 %v76
  %v1759 = vunpack.c.h.b16 %v76
  %v1760 = vunpack.c.l.b16 %v77
  %v1761 = vunpack.c.h.b16 %v77
  %v1762 = vunpack.c.l.b16 %v78
  %v1763 = vunpack.c.h.b16 %v78
  %v1764 = vunpack.c.l.b16 %v79
  %v1765 = vunpack.c.h.b16 %v79
  %v1766 = vunpack.c.l.b16 %v80
  %v1767 = vunpack.c.h.b16 %v80
  %v1768 = vunpack.c.l.b16 %v81
  %v1769 = vunpack.c.h.b16 %v81
  %v1770 = vunpack.c.l.b16 %v82
  %v1771 = vunpack.c.h.b16 %v82
  %v1772 = vunpack.c.l.b16 %v83
  %v1773 = vunpack.c.h.b16 %v83
  %v1774 = vunpack.c.l.b16 %v84
  %v1775 = vunpack.c.h.b16 %v84
  %v1776 = vunpack.c.l.b16 %v85
  %v1777 = vunpack.c.h.b16 %v85
  %v1778 = vunpack.c.l.b16 %v86
  %v1779 = vunpack.c.h.b16 %v86
  %v1780 = vunpack.c.l.b16 %v87
  %v1781 = vunpack.c.h.b16 %v87
  %v1782 = vunpack.c.l.b16 %v88
  %v1783 = vunpack.c.h.b16 %v88
  %v1784 = vunpack.c.l.b16 %v89
  %v1785 = vunpack.c.h.b16 %v89
  %v1786 = vunpack.c.l.b16 %v90
  %v1787 = vunpack.c.h.b16 %v90
  %v1788 = vunpack.c.l.b16 %v91
  %v1789 = vunpack.c.h.b16 %v91
  %v1790 = vunpack.c.l.b16 %v92
  %v1791 = vunpack.c.h.b16 %v92
  %v1792 = vunpack.c.l.b16 %v93
  %v1793 = vunpack.c.h.b16 %v93
  %v1794 = vunpack.c.l.b16 %v94
  %v1795 = vunpack.c.h.b16 %v94
  %v1796 = vunpack.c.l.b16 %v95
  %v1797 = vunpack.c.h.b16 %v95
  %v1798 = vunpack.c.l.b16 %v96
  %v1799 = vunpack.c.h.b16 %v96
  %v1800 = vunpack.c.l.b16 %v97
  %v1801 = vunpack.c.h.b16 %v97
  %v1802 = vunpack.c.l.b16 %v98
  %v1803 = vunpack.c.h.b16 %v98
  %v1804 = vunpack.c.l.b16 %v99
  %v1805 = vunpack.c.h.b16 %v99
  %v1806 = vunpack.c.l.b16 %v100
  %v1807 = vunpack.c.h.b16 %v100
  %v1808 = vunpack.c.l.b16 %v101
  %v1809 = vunpack.c.h.b16 %v101
  %v1810 = vunpack.c.l.b16 %v102
  %v1811 = vunpack.c.h.b16 %v102
  %v1812 = vunpack.c.l.b16 %v103
  %v1813 = vunpack.c.h.b16 %v103
  %v1814 = vunpack.c.l.b16 %v104
  %v1815 = vunpack.c.h.b16 %v104
  %v1816 = vunpack.c.l.b16 %v105
  %v1817 = vunpack.c.h.b16 %v105
  %v1818 = vunpack.c.l.b16 %v106
  %v1819 = vunpack.c.h.b16 %v106
  %v1820 = vunpack.c.l.b16 %v107
  %v1821 = vunpack.c.h.b16 %v107
  %v1822 = vunpack.c.l.b16 %v108
  %v1823 = vunpack.c.h.b16 %v108
  %v1824 = vunpack.c.l.b16 %v109
  %v1825 = vunpack.c.h.b16 %v109
  %v1826 = vunpack.c.l.b16 %v110
  %v1827 = vunpack.c.h.b16 %v110
  %v1828 = vunpack.c.l.b16 %v111
  %v1829 = vunpack.c.h.b16 %v111
  %v1830 = vunpack.c.l.b16 %v112
  %v1831 = vunpack.c.h.b16 %v112
  %v1832 = vunpack.c.l.b16 %v113
  %v1833 = vunpack.c.h.b16 %v113
  %v1834 = vunpack.c.l.b16 %v114
  %v1835 = vunpack.c.h.b16 %v114
  %v1836 = vunpack.c.l.b16 %v115
  %v1837 = vunpack.c.h.b16 %v115
  %v1838 = vunpack.c.l.b16 %v116
  %v1839 = vunpack.c.h.b16 %v116
  %v1840 = vunpack.c.l.b16 %v117
  %v1841 = vunpack.c.h.b16 %v117
  %v1842 = vunpack.c.l.b16 %v118
  %v1843 = vunpack.c.h.b16 %v118
  %v1844 = vunpack.c.l.b16 %v119
  %v1845 = vunpack.c.h.b16 %v119
  %v1846 = vunpack.c.l.b16 %v120
  %v1847 = vunpack.c.h.b16 %v120
  %v1848 = vunpack.c.l.b16 %v121
  %v1849 = vunpack.c.h.b16 %v121
  %v1850 = vunpack.c.l.b16 %v122
  %v1851 = vunpack.c.h.b16 %v122
  %v1852 = vunpack.c.l.b16 %v123
  %v1853 = vunpack.c.h.b16 %v123
  %v1854 = vunpack.c.l.b16 %v124
  %v1855 = vunpack.c.h.b16 %v124
  %v1856 = vunpack.c.l.b16 %v125
  %v1857 = vunpack.c.h.b16 %v125
  %v1858 = vunpack.c.l.b16 %v126
  %v1859 = vunpack.c.h.b16 %v126
  %v1860 = vunpack.c.l.b16 %v127
  %v1861 = vunpack.c.h.b16 %v127
  %v1862 = vunpack.c.l.b16 %v128
  %v1863 = vunpack.c.h.b16 %v128
  %v1864 = vunpack.c.l.b16 %v129
  %v1865 = vunpack.c.h.b16 %v129
  %v1866 = vunpack.c.l.b16 %v130
  %v1867 = vunpack.c.h.b16 %v130
  %v1868 = vunpack.c.l.b16 %v131
  %v1869 = vunpack.c.h.b16 %v131
  %v1870 = vunpack.c.l.b16 %v132
  %v1871 = vunpack.c.h.b16 %v132
  %v1872 = vunpack.c.l.b16 %v133
  %v1873 = vunpack.c.h.b16 %v133
  %v1874 = vunpack.c.l.b16 %v134
  %v1875 = vunpack.c.h.b16 %v134
  %v1876 = vunpack.c.l.b16 %v135
  %v1877 = vunpack.c.h.b16 %v135
  %v1878 = vunpack.c.l.b16 %v136
  %v1879 = vunpack.c.h.b16 %v136
  %v1880 = vunpack.c.l.b16 %v137
  %v1881 = vunpack.c.h.b16 %v137
  %v1882 = vunpack.c.l.b16 %v138
  %v1883 = vunpack.c.h.b16 %v138
  %v1884 = vunpack.c.l.b16 %v139
  %v1885 = vunpack.c.h.b16 %v139
  %v1886 = vunpack.c.l.b16 %v140
  %v1887 = vunpack.c.h.b16 %v140
  %v1888 = vunpack.c.l.b16 %v141
  %v1889 = vunpack.c.h.b16 %v141
  %v1890 = vunpack.c.l.b16 %v142
  %v1891 = vunpack.c.h.b16 %v142
  %v1892 = vunpack.c.l.b16 %v143
  %v1893 = vunpack.c.h.b16 %v143
  %v1894 = vunpack.c.l.b16 %v144
  %v1895 = vunpack.c.h.b16 %v144
  %v1896 = vunpack.c.l.b16 %v145
  %v1897 = vunpack.c.h.b16 %v145
  %v1898 = vunpack.c.l.b16 %v146
  %v1899 = vunpack.c.h.b16 %v146
  %v1900 = vunpack.c.l.b16 %v147
  %v1901 = vunpack.c.h.b16 %v147
  %v1902 = vunpack.c.l.b16 %v148
  %v1903 = vunpack.c.h.b16 %v148
  %v1904 = vunpack.c.l.b16 %v149
  %v1905 = vunpack.c.h.b16 %v149
  %v1906 = vunpack.c.l.b16 %v150
  %v1907 = vunpack.c.h.b16 %v150
  %v1908 = vunpack.c.l.b16 %v151
  %v1909 = vunpack.c.h.b16 %v151
  %v1910 = vunpack.c.l.b16 %v152
  %v1911 = vunpack.c.h.b16 %v152
  %v1912 = vunpack.c.l.b16 %v153
  %v1913 = vunpack.c.h.b16 %v153
  %v1914 = vunpack.c.l.b16 %v154
  %v1915 = vunpack.c.h.b16 %v154
  %v1916 = vunpack.c.l.b16 %v155
  %v1917 = vunpack.c.h.b16 %v155
  %v1918 = vunpack.c.l.b16 %v156
  %v1919 = vunpack.c.h.b16 %v156
  %v1920 = vunpack.c.l.b16 %v157
  %v1921 = vunpack.c.h.b16 %v157
  %v1922 = vunpack.c.l.b16 %v158
  %v1923 = vunpack.c.h.b16 %v158
  %v1924 = vunpack.c.l.b16 %v159
  %v1925 = vunpack.c.h.b16 %v159
  %v1926 = vunpack.c.l.b16 %v160
  %v1927 = vunpack.c.h.b16 %v160
  %v1928 = vunpack.c.l.b16 %v161
  %v1929 = vunpack.c.h.b16 %v161
  %v1930 = vunpack.c.l.b16 %v162
  %v1931 = vunpack.c.h.b16 %v162
  %v1932 = vunpack.c.l.b16 %v163
  %v1933 = vunpack.c.h.b16 %v163
  %v1934 = vunpack.c.l.b16 %v164
  %v1935 = vunpack.c.h.b16 %v164
  %v1936 = vunpack.c.l.b16 %v165
  %v1937 = vunpack.c.h.b16 %v165
  %v1938 = vunpack.c.l.b16 %v166
  %v1939 = vunpack.c.h.b16 %v166
  %v1940 = vunpack.c.l.b16 %v167
  %v1941 = vunpack.c.h.b16 %v167
  %v1942 = vunpack.c.l.b16 %v168
  %v1943 = vunpack.c.h.b16 %v168
  %v1944 = vunpack.c.l.b16 %v169
  %v1945 = vunpack.c.h.b16 %v169
  %v1946 = vunpack.c.l.b16 %v170
  %v1947 = vunpack.c.h.b16 %v170
  %v1948 = vunpack.c.l.b16 %v171
  %v1949 = vunpack.c.h.b16 %v171
  %v1950 = vunpack.c.l.b16 %v172
  %v1951 = vunpack.c.h.b16 %v172
  %v1952 = vunpack.c.l.b16 %v173
  %v1953 = vunpack.c.h.b16 %v173
  %v1954 = vunpack.c.l.b16 %v174
  %v1955 = vunpack.c.h.b16 %v174
  %v1956 = vunpack.c.l.b16 %v175
  %v1957 = vunpack.c.h.b16 %v175
  %v1958 = vunpack.c.l.b16 %v176
  %v1959 = vunpack.c.h.b16 %v176
  %v1960 = vunpack.c.l.b16 %v177
  %v1961 = vunpack.c.h.b16 %v177
  %v1962 = vunpack.c.l.b16 %v178
  %v1963 = vunpack.c.h.b16 %v178
  %v1964 = vunpack.c.l.b16 %v179
  %v1965 = vunpack.c.h.b16 %v179
  %v1966 = vunpack.c.l.b16 %v180
  %v1967 = vunpack.c.h.b16 %v180
  %v1968 = vunpack.c.l.b16 %v181
  %v1969 = vunpack.c.h.b16 %v181
  %v1970 = vunpack.c.l.b16 %v182
  %v1971 = vunpack.c.h.b16 %v182
  %v1972 = vunpack.c.l.b16 %v183
  %v1973 = vunpack.c.h.b16 %v183
  %v1974 = vunpack.c.l.b16 %v184
  %v1975 = vunpack.c.h.b16 %v184
  %v1976 = vunpack.c.l.b16 %v185
  %v1977 = vunpack.c.h.b16 %v185
  %v1978 = vunpack.c.l.b16 %v186
  %v1979 = vunpack.c.h.b16 %v186
  %v1980 = vunpack.c.l.b16 %v187
  %v1981 = vunpack.c.h.b16 %v187
  %v1982 = vunpack.c.l.b16 %v188
  %v1983 = vunpack.c.h.b16 %v188
  %v1984 = vunpack.c.l.b16 %v189
  %v1985 = vunpack.c.h.b16 %v189
  %v1986 = vunpack.c.l.b16 %v190
  %v1987 = vunpack.c.h.b16 %v190
  %v1988 = vunpack.c.l.b16 %v191
  %v1989 = vunpack.c.h.b16 %v191
  %v1990 = vunpack.c.l.b16 %v192
  %v1991 = vunpack.c.h.b16 %v192
  %v1992 = vunpack.c.l.b16 %v193
  %v1993 = vunpack.c.h.b16 %v193
  %v1994 = vunpack.c.l.b16 %v194
  %v1995 = vunpack.c.h.b16 %v194
  %v1996 = vunpack.c.l.b16 %v195
  %v1997 = vunpack.c.h.b16 %v195
  %v1998 = vunpack.c.l.b16 %v196
  %v1999 = vunpack.c.h.b16 %v196
  %v2000 = vunpack.c.l.b16 %v197
  %v2001 = vunpack.c.h.b16 %v197
  %v2002 = vunpack.c.l.b16 %v198
  %v2003 = vunpack.c.h.b16 %v198
  %v2004 = vunpack.c.l.b16 %v199
  %v2005 = vunpack.c.h.b16 %v199
  %v2006 = vunpack.c.l.b16 %v200
  %v2007 = vunpack.c.h.b16 %v200
  %v2008 = vunpack.c.l.b16 %v201
  %v2009 = vunpack.c.h.b16 %v201
  %v2010 = vunpack.c.l.b16 %v202
  %v2011 = vunpack.c.h.b16 %v202
  %v2012 = vunpack.c.l.b16 %v203
  %v2013 = vunpack.c.h.b16 %v203
  %v2014 = vunpack.c.l.b16 %v204
  %v2015 = vunpack.c.h.b16 %v204
  %v2016 = vunpack.c.l.b16 %v205
  %v2017 = vunpack.c.h.b16 %v205
  %v2018 = vunpack.c.l.b16 %v206
  %v2019 = vunpack.c.h.b16 %v206
  %v2020 = vunpack.c.l.b16 %v207
  %v2021 = vunpack.c.h.b16 %v207
  %v2022 = vunpack.c.l.b16 %v208
  %v2023 = vunpack.c.h.b16 %v208
  %v2024 = vunpack.c.l.b16 %v209
  %v2025 = vunpack.c.h.b16 %v209
  %v2026 = vunpack.c.l.b16 %v210
  %v2027 = vunpack.c.h.b16 %v210
  %v2028 = vunpack.c.l.b16 %v211
  %v2029 = vunpack.c.h.b16 %v211
  %v2030 = vunpack.c.l.b16 %v212
  %v2031 = vunpack.c.h.b16 %v212
  %v2032 = vunpack.c.l.b16 %v213
  %v2033 = vunpack.c.h.b16 %v213
  %v2034 = vunpack.c.l.b16 %v214
  %v2035 = vunpack.c.h.b16 %v214
  %v2036 = vunpack.c.l.b16 %v215
  %v2037 = vunpack.c.h.b16 %v215
  %v2038 = vunpack.c.l.b16 %v216
  %v2039 = vunpack.c.h.b16 %v216
  %v2040 = vunpack.c.l.b16 %v217
  %v2041 = vunpack.c.h.b16 %v217
  %v2042 = vunpack.c.l.b16 %v218
  %v2043 = vunpack.c.h.b16 %v218
  %v2044 = vunpack.c.l.b16 %v219
  %v2045 = vunpack.c.h.b16 %v219
  %v2046 = vunpack.c.l.b16 %v220
  %v2047 = vunpack.c.h.b16 %v220
  %v2048 = vunpack.c.l.b16 %v221
  %v2049 = vunpack.c.h.b16 %v221
  %v2050 = vunpack.c.l.b16 %v222
  %v2051 = vunpack.c.h.b16 %v222
  %v2052 = vunpack.c.l.b16 %v223
  %v2053 = vunpack.c.h.b16 %v223
  %v2054 = vunpack.c.l.b16 %v224
  %v2055 = vunpack.c.h.b16 %v224
  %v2056 = vunpack.c.l.b16 %v225
  %v2057 = vunpack.c.h.b16 %v225
  %v2058 = vunpack.c.l.b16 %v226
  %v2059 = vunpack.c.h.b16 %v226
  %v2060 = vunpack.c.l.b16 %v227
  %v2061 = vunpack.c.h.b16 %v227
  %v2062 = vunpack.c.l.b16 %v228
  %v2063 = vunpack.c.h.b16 %v228
  %v2064 = vunpack.c.l.b16 %v229
  %v2065 = vunpack.c.h.b16 %v229
  %v2066 = vunpack.c.l.b16 %v230
  %v2067 = vunpack.c.h.b16 %v230
  %v2068 = vunpack.c.l.b16 %v231
  %v2069 = vunpack.c.h.b16 %v231
  %v2070 = vunpack.c.l.b16 %v232
  %v2071 = vunpack.c.h.b16 %v232
  %v2072 = vunpack.c.l.b16 %v233
  %v2073 = vunpack.c.h.b16 %v233
  %v2074 = vunpack.c.l.b16 %v234
  %v2075 = vunpack.c.h.b16 %v234
  %v2076 = vunpack.c.l.b16 %v235
  %v2077 = vunpack.c.h.b16 %v235
  %v2078 = vunpack.c.l.b16 %v236
  %v2079 = vunpack.c.h.b16 %v236
  %v2080 = vunpack.c.l.b16 %v237
  %v2081 = vunpack.c.h.b16 %v237
  %v2082 = vunpack.c.l.b16 %v238
  %v2083 = vunpack.c.h.b16 %v238
  %v2084 = vunpack.c.l.b16 %v239
  %v2085 = vunpack.c.h.b16 %v239
  %v2086 = vunpack.c.l.b16 %v240
  %v2087 = vunpack.c.h.b16 %v240
  %v2088 = vunpack.c.l.b16 %v241
  %v2089 = vunpack.c.h.b16 %v241
  %v2090 = vunpack.c.l.b16 %v242
  %v2091 = vunpack.c.h.b16 %v242
  %v2092 = vunpack.c.l.b16 %v243
  %v2093 = vunpack.c.h.b16 %v243
  %v2094 = vunpack.c.l.b16 %v244
  %v2095 = vunpack.c.h.b16 %v244
  %v2096 = vunpack.c.l.b16 %v245
  %v2097 = vunpack.c.h.b16 %v245
  %v2098 = vunpack.c.l.b16 %v246
  %v2099 = vunpack.c.h.b16 %v246
  %v2100 = vunpack.c.l.b16 %v247
  %v2101 = vunpack.c.h.b16 %v247
  %v2102 = vunpack.c.l.b16 %v248
  %v2103 = vunpack.c.h.b16 %v248
  %v2104 = vunpack.c.l.b16 %v249
  %v2105 = vunpack.c.h.b16 %v249
  %v2106 = vunpack.c.l.b16 %v250
  %v2107 = vunpack.c.h.b16 %v250
  %v2108 = vunpack.c.l.b16 %v251
  %v2109 = vunpack.c.h.b16 %v251
  %v2110 = vunpack.c.l.b16 %v252
  %v2111 = vunpack.c.h.b16 %v252
  %v2112 = vunpack.c.l.b16 %v253
  %v2113 = vunpack.c.h.b16 %v253
  %v2114 = vunpack.c.l.b16 %v254
  %v2115 = vunpack.c.h.b16 %v254
  %v2116 = vunpack.c.l.b16 %v255
  %v2117 = vunpack.c.h.b16 %v255
  %v2118 = vunpack.c.l.b16 %v256
  %v2119 = vunpack.c.h.b16 %v256
  %v2120 = vunpack.c.l.b16 %v257
  %v2121 = vunpack.c.h.b16 %v257
  %v2122 = vunpack.c.l.b16 %v258
  %v2123 = vunpack.c.h.b16 %v258
  %v2124 = vunpack.c.l.b16 %v259
  %v2125 = vunpack.c.h.b16 %v259
  %v2126 = vunpack.c.l.b16 %v260
  %v2127 = vunpack.c.h.b16 %v260
  %v2128 = vunpack.c.l.b16 %v261
  %v2129 = vunpack.c.h.b16 %v261
  %v2130 = vunpack.c.l.b16 %v262
  %v2131 = vunpack.c.h.b16 %v262
  %v2132 = vunpack.c.l.b16 %v263
  %v2133 = vunpack.c.h.b16 %v263
  %v2134 = vunpack.c.l.b16 %v264
  %v2135 = vunpack.c.h.b16 %v264
  %v2136 = vunpack.c.l.b16 %v265
  %v2137 = vunpack.c.h.b16 %v265
  %v2138 = vunpack.c.l.b16 %v266
  %v2139 = vunpack.c.h.b16 %v266
  %v2140 = vunpack.c.l.b16 %v267
  %v2141 = vunpack.c.h.b16 %v267
  %v2142 = vunpack.c.l.b16 %v268
  %v2143 = vunpack.c.h.b16 %v268
  %v2144 = vunpack.c.l.b16 %v269
  %v2145 = vunpack.c.h.b16 %v269
  %v2146 = vunpack.c.l.b16 %v270
  %v2147 = vunpack.c.h.b16 %v270
  %v2148 = vunpack.c.l.b16 %v271
  %v2149 = vunpack.c.h.b16 %v271
  %v2150 = vunpack.c.l.b16 %v272
  %v2151 = vunpack.c.h.b16 %v272
  %v2152 = vunpack.c.l.b16 %v273
  %v2153 = vunpack.c.h.b16 %v273
  %v2154 = vunpack.c.l.b16 %v274
  %v2155 = vunpack.c.h.b16 %v274
  %v2156 = vunpack.c.l.b16 %v275
  %v2157 = vunpack.c.h.b16 %v275
  %v2158 = vunpack.c.l.b16 %v276
  %v2159 = vunpack.c.h.b16 %v276
  %v2160 = vunpack.c.l.b16 %v277
  %v2161 = vunpack.c.h.b16 %v277
  %v2162 = vunpack.c.l.b16 %v278
  %v2163 = vunpack.c.h.b16 %v278
  %v2164 = vunpack.c.l.b16 %v279
  %v2165 = vunpack.c.h.b16 %v279
  %v2166 = vunpack.c.l.b16 %v280
  %v2167 = vunpack.c.h.b16 %v280
  %v2168 = vunpack.c.l.b16 %v281
  %v2169 = vunpack.c.h.b16 %v281
  %v2170 = vunpack.c.l.b16 %v282
  %v2171 = vunpack.c.h.b16 %v282
  %v2172 = vunpack.c.l.b16 %v283
  %v2173 = vunpack.c.h.b16 %v283
  %v2174 = vunpack.c.l.b16 %v284
  %v2175 = vunpack.c.h.b16 %v284
  %v2176 = vunpack.c.l.b16 %v285
  %v2177 = vunpack.c.h.b16 %v285
  %v2178 = vunpack.c.l.b16 %v286
  %v2179 = vunpack.c.h.b16 %v286
  %v2180 = vunpack.c.l.b16 %v287
  %v2181 = vunpack.c.h.b16 %v287
  %v2182 = vunpack.c.l.b16 %v288
  %v2183 = vunpack.c.h.b16 %v288
  %v2184 = vunpack.c.l.b16 %v289
  %v2185 = vunpack.c.h.b16 %v289
  %v2186 = vunpack.c.l.b16 %v290
  %v2187 = vunpack.c.h.b16 %v290
  %v2188 = vunpack.c.l.b16 %v291
  %v2189 = vunpack.c.h.b16 %v291
  %v2190 = vunpack.c.l.b16 %v292
  %v2191 = vunpack.c.h.b16 %v292
  %v2192 = vunpack.c.l.b16 %v293
  %v2193 = vunpack.c.h.b16 %v293
  %v2194 = vunpack.c.l.b16 %v294
  %v2195 = vunpack.c.h.b16 %v294
  %v2196 = vunpack.c.l.b16 %v295
  %v2197 = vunpack.c.h.b16 %v295
  %v2198 = vunpack.c.l.b16 %v296
  %v2199 = vunpack.c.h.b16 %v296
  %v2200 = vunpack.c.l.b16 %v297
  %v2201 = vunpack.c.h.b16 %v297
  %v2202 = vunpack.c.l.b16 %v298
  %v2203 = vunpack.c.h.b16 %v298
  %v2204 = vunpack.c.l.b16 %v299
  %v2205 = vunpack.c.h.b16 %v299
  %v2206 = vunpack.c.l.b16 %v300
  %v2207 = vunpack.c.h.b16 %v300
  %v2208 = vunpack.c.l.b16 %v301
  %v2209 = vunpack.c.h.b16 %v301
  %v2210 = vunpack.c.l.b16 %v302
  %v2211 = vunpack.c.h.b16 %v302
  %v2212 = vunpack.c.l.b16 %v303
  %v2213 = vunpack.c.h.b16 %v303
  %v2214 = vunpack.c.l.b16 %v304
  %v2215 = vunpack.c.h.b16 %v304
  %v2216 = vunpack.c.l.b16 %v305
  %v2217 = vunpack.c.h.b16 %v305
  %v2218 = vunpack.c.l.b16 %v306
  %v2219 = vunpack.c.h.b16 %v306
  %v2220 = vunpack.c.l.b16 %v307
  %v2221 = vunpack.c.h.b16 %v307
  %v2222 = vunpack.c.l.b16 %v308
  %v2223 = vunpack.c.h.b16 %v308
  %v2224 = vunpack.c.l.b16 %v309
  %v2225 = vunpack.c.h.b16 %v309
  %v2226 = vunpack.c.l.b16 %v310
  %v2227 = vunpack.c.h.b16 %v310
  %v2228 = vunpack.c.l.b16 %v311
  %v2229 = vunpack.c.h.b16 %v311
  %v2230 = vunpack.c.l.b16 %v312
  %v2231 = vunpack.c.h.b16 %v312
  %v2232 = vunpack.c.l.b16 %v313
  %v2233 = vunpack.c.h.b16 %v313
  %v2234 = vunpack.c.l.b16 %v314
  %v2235 = vunpack.c.h.b16 %v314
  %v2236 = vunpack.c.l.b16 %v315
  %v2237 = vunpack.c.h.b16 %v315
  %v2238 = vunpack.c.l.b16 %v316
  %v2239 = vunpack.c.h.b16 %v316
  %v2240 = vunpack.c.l.b16 %v317
  %v2241 = vunpack.c.h.b16 %v317
  %v2242 = vunpack.c.l.b16 %v318
  %v2243 = vunpack.c.h.b16 %v318
  %v2244 = vunpack.c.l.b16 %v319
  %v2245 = vunpack.c.h.b16 %v319
  %v2246 = vunpack.c.l.b16 %v320
  %v2247 = vunpack.c.h.b16 %v320
  %v2248 = vunpack.c.l.b16 %v321
  %v2249 = vunpack.c.h.b16 %v321
  %v2250 = vunpack.c.l.b16 %v322
  %v2251 = vunpack.c.h.b16 %v322
  %v2252 = vunpack.c.l.b16 %v323
  %v2253 = vunpack.c.h.b16 %v323
  %v2254 = vunpack.c.l.b16 %v324
  %v2255 = vunpack.c.h.b16 %v324
  %v2256 = vunpack.c.l.b16 %v325
  %v2257 = vunpack.c.h.b16 %v325
  %v2258 = vunpack.c.l.b16 %v326
  %v2259 = vunpack.c.h.b16 %v326
  %v2260 = vunpack.c.l.b16 %v327
  %v2261 = vunpack.c.h.b16 %v327
  %v2262 = vunpack.c.l.b16 %v328
  %v2263 = vunpack.c.h.b16 %v328
  %v2264 = vunpack.c.l.b16 %v329
  %v2265 = vunpack.c.h.b16 %v329
  %v2266 = vunpack.c.l.b16 %v330
  %v2267 = vunpack.c.h.b16 %v330
  %v2268 = vunpack.c.l.b16 %v331
  %v2269 = vunpack.c.h.b16 %v331
  %v2270 = vunpack.c.l.b16 %v332
  %v2271 = vunpack.c.h.b16 %v332
  %v2272 = vunpack.c.l.b16 %v333
  %v2273 = vunpack.c.h.b16 %v333
  %v2274 = vunpack.c.l.b16 %v334
  %v2275 = vunpack.c.h.b16 %v334
  %v2276 = vunpack.c.l.b16 %v335
  %v2277 = vunpack.c.h.b16 %v335
  %v2278 = vunpack.c.l.b16 %v336
  %v2279 = vunpack.c.h.b16 %v336
  %v2280 = vunpack.c.l.b16 %v337
  %v2281 = vunpack.c.h.b16 %v337
  %v2282 = vunpack.c.l.b16 %v338
  %v2283 = vunpack.c.h.b16 %v338
  %v2284 = vunpack.c.l.b16 %v339
  %v2285 = vunpack.c.h.b16 %v339
  %v2286 = vunpack.c.l.b16 %v340
  %v2287 = vunpack.c.h.b16 %v340
  %v2288 = vunpack.c.l.b16 %v341
  %v2289 = vunpack.c.h.b16 %v341
  %v2290 = vunpack.c.l.b16 %v342
  %v2291 = vunpack.c.h.b16 %v342
  %v2292 = vunpack.c.l.b16 %v343
  %v2293 = vunpack.c.h.b16 %v343
  %v2294 = vunpack.c.l.b16 %v344
  %v2295 = vunpack.c.h.b16 %v344
  %v2296 = vunpack.c.l.b16 %v345
  %v2297 = vunpack.c.h.b16 %v345
  %v2298 = vunpack.c.l.b16 %v346
  %v2299 = vunpack.c.h.b16 %v346
  %v2300 = vunpack.c.l.b16 %v347
  %v2301 = vunpack.c.h.b16 %v347
  %v2302 = vunpack.c.l.b16 %v348
  %v2303 = vunpack.c.h.b16 %v348
  %v2304 = vunpack.c.l.b16 %v349
  %v2305 = vunpack.c.h.b16 %v349
  %v2306 = vunpack.c.l.b16 %v350
  %v2307 = vunpack.c.h.b16 %v350
  %v2308 = vunpack.c.l.b16 %v351
  %v2309 = vunpack.c.h.b16 %v351
  %v2310 = vunpack.c.l.b16 %v352
  %v2311 = vunpack.c.h.b16 %v352
  %v2312 = vunpack.c.l.b16 %v353
  %v2313 = vunpack.c.h.b16 %v353
  %v2314 = vunpack.c.l.b16 %v354
  %v2315 = vunpack.c.h.b16 %v354
  %v2316 = vunpack.c.l.b16 %v355
  %v2317 = vunpack.c.h.b16 %v355
  %v2318 = vunpack.c.l.b16 %v356
  %v2319 = vunpack.c.h.b16 %v356
  %v2320 = vunpack.c.l.b16 %v357
  %v2321 = vunpack.c.h.b16 %v357
  %v2322 = vunpack.c.l.b16 %v358
  %v2323 = vunpack.c.h.b16 %v358
  %v2324 = vunpack.c.l.b16 %v359
  %v2325 = vunpack.c.h.b16 %v359
  %v2326 = vunpack.c.l.b16 %v360
  %v2327 = vunpack.c.h.b16 %v360
  %v2328 = vunpack.c.l.b16 %v361
  %v2329 = vunpack.c.h.b16 %v361
  %v2330 = vunpack.c.l.b16 %v362
  %v2331 = vunpack.c.h.b16 %v362
  %v2332 = vunpack.c.l.b16 %v363
  %v2333 = vunpack.c.h.b16 %v363
  %v2334 = vunpack.c.l.b16 %v364
  %v2335 = vunpack.c.h.b16 %v364
  %v2336 = vunpack.c.l.b16 %v365
  %v2337 = vunpack.c.h.b16 %v365
  %v2338 = vunpack.c.l.b16 %v366
  %v2339 = vunpack.c.h.b16 %v366
  %v2340 = vunpack.c.l.b16 %v367
  %v2341 = vunpack.c.h.b16 %v367
  %v2342 = vunpack.c.l.b16 %v368
  %v2343 = vunpack.c.h.b16 %v368
  %v2344 = vunpack.c.l.b16 %v369
  %v2345 = vunpack.c.h.b16 %v369
  %v2346 = vunpack.c.l.b16 %v370
  %v2347 = vunpack.c.h.b16 %v370
  %v2348 = vunpack.c.l.b16 %v371
  %v2349 = vunpack.c.h.b16 %v371
  %v2350 = vunpack.c.l.b16 %v372
  %v2351 = vunpack.c.h.b16 %v372
  %v2352 = vunpack.c.l.b16 %v373
  %v2353 = vunpack.c.h.b16 %v373
  %v2354 = vunpack.c.l.b16 %v374
  %v2355 = vunpack.c.h.b16 %v374
  %v2356 = vunpack.c.l.b16 %v375
  %v2357 = vunpack.c.h.b16 %v375
  %v2358 = vunpack.c.l.b16 %v376
  %v2359 = vunpack.c.h.b16 %v376
  %v2360 = vunpack.c.l.b16 %v377
  %v2361 = vunpack.c.h.b16 %v377
  %v2362 = vunpack.c.l.b16 %v378
  %v2363 = vunpack.c.h.b16 %v378
  %v2364 = vunpack.c.l.b16 %v379
  %v2365 = vunpack.c.h.b16 %v379
  %v2366 = vunpack.c.l.b16 %v380
  %v2367 = vunpack.c.h.b16 %v380
  %v2368 = vunpack.c.l.b16 %v381
  %v2369 = vunpack.c.h.b16 %v381
  %v2370 = vunpack.c.l.b16 %v382
  %v2371 = vunpack.c.h.b16 %v382
  %v2372 = vunpack.c.l.b16 %v383
  %v2373 = vunpack.c.h.b16 %v383
  %v2374 = vunpack.c.l.b16 %v384
  %v2375 = vunpack.c.h.b16 %v384
  %v2376 = vunpack.c.l.b16 %v385
  %v2377 = vunpack.c.h.b16 %v385
  %v2378 = vunpack.c.l.b16 %v386
  %v2379 = vunpack.c.h.b16 %v386
  %v2380 = vunpack.c.l.b16 %v387
  %v2381 = vunpack.c.h.b16 %v387
  %v2382 = vunpack.c.l.b16 %v388
  %v2383 = vunpack.c.h.b16 %v388
  %v2384 = vunpack.c.l.b16 %v389
  %v2385 = vunpack.c.h.b16 %v389
  %v2386 = vunpack.c.l.b16 %v390
  %v2387 = vunpack.c.h.b16 %v390
  %v2388 = vunpack.c.l.b16 %v391
  %v2389 = vunpack.c.h.b16 %v391
  %v2390 = vunpack.c.l.b16 %v392
  %v2391 = vunpack.c.h.b16 %v392
  %v2392 = vunpack.c.l.b16 %v393
  %v2393 = vunpack.c.h.b16 %v393
  %v2394 = vunpack.c.l.b16 %v394
  %v2395 = vunpack.c.h.b16 %v394
  %v2396 = vunpack.c.l.b16 %v395
  %v2397 = vunpack.c.h.b16 %v395
  %v2398 = vunpack.c.l.b16 %v396
  %v2399 = vunpack.c.h.b16 %v396
  %v2400 = vunpack.c.l.b16 %v397
  %v2401 = vunpack.c.h.b16 %v397
  %v2402 = vunpack.c.l.b16 %v398
  %v2403 = vunpack.c.h.b16 %v398
  %v2404 = vunpack.c.l.b16 %v399
  %v2405 = vunpack.c.h.b16 %v399
  %v2406 = vunpack.c.l.b16 %v400
  %v2407 = vunpack.c.h.b16 %v400
  %v2408 = vunpack.c.l.b16 %v401
  %v2409 = vunpack.c.h.b16 %v401
  %v2410 = vunpack.c.l.b16 %v402
  %v2411 = vunpack.c.h.b16 %v402
  %v2412 = vunpack.c.l.b16 %v403
  %v2413 = vunpack.c.h.b16 %v403
  %v2414 = vunpack.c.l.b16 %v404
  %v2415 = vunpack.c.h.b16 %v404
  %v2416 = vunpack.c.l.b16 %v405
  %v2417 = vunpack.c.h.b16 %v405
  %v2418 = vunpack.c.l.b16 %v406
  %v2419 = vunpack.c.h.b16 %v406
  %v2420 = vunpack.c.l.b16 %v407
  %v2421 = vunpack.c.h.b16 %v407
  %v2422 = vunpack.c.l.b16 %v408
  %v2423 = vunpack.c.h.b16 %v408
  %v2424 = vunpack.c.l.b16 %v409
  %v2425 = vunpack.c.h.b16 %v409
  %v2426 = vunpack.c.l.b16 %v410
  %v2427 = vunpack.c.h.b16 %v410
  %v2428 = vunpack.c.l.b16 %v411
  %v2429 = vunpack.c.h.b16 %v411
  %v2430 = vunpack.c.l.b16 %v412
  %v2431 = vunpack.c.h.b16 %v412
  %v2432 = vunpack.c.l.b16 %v413
  %v2433 = vunpack.c.h.b16 %v413
  %v2434 = vunpack.c.l.b16 %v414
  %v2435 = vunpack.c.h.b16 %v414
  %v2436 = vunpack.c.l.b16 %v415
  %v2437 = vunpack.c.h.b16 %v415
  %v2438 = vunpack.c.l.b16 %v416
  %v2439 = vunpack.c.h.b16 %v416
  %v2440 = vunpack.c.l.b16 %v417
  %v2441 = vunpack.c.h.b16 %v417
  %v2442 = vunpack.c.l.b16 %v418
  %v2443 = vunpack.c.h.b16 %v418
  %v2444 = vunpack.c.l.b16 %v419
  %v2445 = vunpack.c.h.b16 %v419
  %v2446 = vunpack.c.l.b16 %v420
  %v2447 = vunpack.c.h.b16 %v420
  %v2448 = vunpack.c.l.b16 %v421
  %v2449 = vunpack.c.h.b16 %v421
  %v2450 = vunpack.c.l.b16 %v422
  %v2451 = vunpack.c.h.b16 %v422
  %v2452 = vunpack.c.l.b16 %v423
  %v2453 = vunpack.c.h.b16 %v423
  %v2454 = vunpack.c.l.b16 %v424
  %v2455 = vunpack.c.h.b16 %v424
  %v2456 = vunpack.c.l.b16 %v425
  %v2457 = vunpack.c.h.b16 %v425
  %v2458 = vunpack.c.l.b16 %v426
  %v2459 = vunpack.c.h.b16 %v426
  %v2460 = vunpack.c.l.b16 %v427
  %v2461 = vunpack.c.h.b16 %v427
  %v2462 = vunpack.c.l.b16 %v428
  %v2463 = vunpack.c.h.b16 %v428
  %v2464 = vunpack.c.l.b16 %v429
  %v2465 = vunpack.c.h.b16 %v429
  %v2466 = vunpack.c.l.b16 %v430
  %v2467 = vunpack.c.h.b16 %v430
  %v2468 = vunpack.c.l.b16 %v431
  %v2469 = vunpack.c.h.b16 %v431
  %v2470 = vunpack.c.l.b16 %v432
  %v2471 = vunpack.c.h.b16 %v432
  %v2472 = vunpack.c.l.b16 %v433
  %v2473 = vunpack.c.h.b16 %v433
  %v2474 = vunpack.c.l.b16 %v434
  %v2475 = vunpack.c.h.b16 %v434
  %v2476 = vunpack.c.l.b16 %v435
  %v2477 = vunpack.c.h.b16 %v435
  %v2478 = vunpack.c.l.b16 %v436
  %v2479 = vunpack.c.h.b16 %v436
  %v2480 = vunpack.c.l.b16 %v437
  %v2481 = vunpack.c.h.b16 %v437
  %v2482 = vunpack.c.l.b16 %v438
  %v2483 = vunpack.c.h.b16 %v438
  %v2484 = vunpack.c.l.b16 %v439
  %v2485 = vunpack.c.h.b16 %v439
  %v2486 = vunpack.c.l.b16 %v440
  %v2487 = vunpack.c.h.b16 %v440
  %v2488 = vunpack.c.l.b16 %v441
  %v2489 = vunpack.c.h.b16 %v441
  %v2490 = vunpack.c.l.b16 %v442
  %v2491 = vunpack.c.h.b16 %v442
  %v2492 = vunpack.c.l.b16 %v443
  %v2493 = vunpack.c.h.b16 %v443
  %v2494 = vunpack.c.l.b16 %v444
  %v2495 = vunpack.c.h.b16 %v444
  %v2496 = vunpack.c.l.b16 %v445
  %v2497 = vunpack.c.h.b16 %v445
  %v2498 = vunpack.c.l.b16 %v446
  %v2499 = vunpack.c.h.b16 %v446
  %v2500 = vunpack.c.l.b16 %v447
  %v2501 = vunpack.c.h.b16 %v447
  %v2502 = vunpack.c.l.b16 %v448
  %v2503 = vunpack.c.h.b16 %v448
  %v2504 = vunpack.c.l.b16 %v449
  %v2505 = vunpack.c.h.b16 %v449
  %v2506 = vunpack.c.l.b16 %v450
  %v2507 = vunpack.c.h.b16 %v450
  %v2508 = vunpack.c.l.b16 %v451
  %v2509 = vunpack.c.h.b16 %v451
  %v2510 = vunpack.c.l.b16 %v452
  %v2511 = vunpack.c.h.b16 %v452
  %v2512 = vunpack.c.l.b16 %v453
  %v2513 = vunpack.c.h.b16 %v453
  %v2514 = vunpack.c.l.b16 %v454
  %v2515 = vunpack.c.h.b16 %v454
  %v2516 = vunpack.c.l.b16 %v455
  %v2517 = vunpack.c.h.b16 %v455
  %v2518 = vunpack.c.l.b16 %v456
  %v2519 = vunpack.c.h.b16 %v456
  %v2520 = vunpack.c.l.b16 %v457
  %v2521 = vunpack.c.h.b16 %v457
  %v2522 = vunpack.c.l.b16 %v458
  %v2523 = vunpack.c.h.b16 %v458
  %v2524 = vunpack.c.l.b16 %v459
  %v2525 = vunpack.c.h.b16 %v459
  %v2526 = vunpack.c.l.b16 %v460
  %v2527 = vunpack.c.h.b16 %v460
  %v2528 = vunpack.c.l.b16 %v461
  %v2529 = vunpack.c.h.b16 %v461
  %v2530 = vunpack.c.l.b16 %v462
  %v2531 = vunpack.c.h.b16 %v462
  %v2532 = vunpack.c.l.b16 %v463
  %v2533 = vunpack.c.h.b16 %v463
  %v2534 = vunpack.c.l.b16 %v464
  %v2535 = vunpack.c.h.b16 %v464
  %v2536 = vunpack.c.l.b16 %v465
  %v2537 = vunpack.c.h.b16 %v465
  %v2538 = vunpack.c.l.b16 %v466
  %v2539 = vunpack.c.h.b16 %v466
  %v2540 = vunpack.c.l.b16 %v467
  %v2541 = vunpack.c.h.b16 %v467
  %v2542 = vunpack.c.l.b16 %v468
  %v2543 = vunpack.c.h.b16 %v468
  %v2544 = vunpack.c.l.b16 %v469
  %v2545 = vunpack.c.h.b16 %v469
  %v2546 = vunpack.c.l.b16 %v470
  %v2547 = vunpack.c.h.b16 %v470
  %v2548 = vunpack.c.l.b16 %v471
  %v2549 = vunpack.c.h.b16 %v471
  %v2550 = vunpack.c.l.b16 %v472
  %v2551 = vunpack.c.h.b16 %v472
  %v2552 = vunpack.c.l.b16 %v473
  %v2553 = vunpack.c.h.b16 %v473
  %v2554 = vunpack.c.l.b16 %v474
  %v2555 = vunpack.c.h.b16 %v474
  %v2556 = vunpack.c.l.b16 %v475
  %v2557 = vunpack.c.h.b16 %v475
  %v2558 = vunpack.c.l.b16 %v476
  %v2559 = vunpack.c.h.b16 %v476
  %v2560 = vunpack.c.l.b16 %v477
  %v2561 = vunpack.c.h.b16 %v477
  %v2562 = vunpack.c.l.b16 %v478
  %v2563 = vunpack.c.h.b16 %v478
  %v2564 = vunpack.c.l.b16 %v479
  %v2565 = vunpack.c.h.b16 %v479
  %v2566 = vunpack.c.l.b16 %v480
  %v2567 = vunpack.c.h.b16 %v480
  %v2568 = vunpack.c.l.b16 %v481
  %v2569 = vunpack.c.h.b16 %v481
  %v2570 = vunpack.c.l.b16 %v482
  %v2571 = vunpack.c.h.b16 %v482
  %v2572 = vunpack.c.l.b16 %v483
  %v2573 = vunpack.c.h.b16 %v483
  %v2574 = vunpack.c.l.b16 %v484
  %v2575 = vunpack.c.h.b16 %v484
  %v2576 = vunpack.c.l.b16 %v485
  %v2577 = vunpack.c.h.b16 %v485
  %v2578 = vunpack.c.l.b16 %v486
  %v2579 = vunpack.c.h.b16 %v486
  %v2580 = vunpack.c.l.b16 %v487
  %v2581 = vunpack.c.h.b16 %v487
  %v2582 = vunpack.c.l.b16 %v488
  %v2583 = vunpack.c.h.b16 %v488
  %v2584 = vunpack.c.l.b16 %v489
  %v2585 = vunpack.c.h.b16 %v489
  %v2586 = vunpack.c.l.b16 %v490
  %v2587 = vunpack.c.h.b16 %v490
  %v2588 = vunpack.c.l.b16 %v491
  %v2589 = vunpack.c.h.b16 %v491
  %v2590 = vunpack.c.l.b16 %v492
  %v2591 = vunpack.c.h.b16 %v492
  %v2592 = vunpack.c.l.b16 %v493
  %v2593 = vunpack.c.h.b16 %v493
  %v2594 = vunpack.c.l.b16 %v494
  %v2595 = vunpack.c.h.b16 %v494
  %v2596 = vunpack.c.l.b16 %v495
  %v2597 = vunpack.c.h.b16 %v495
  %v2598 = vunpack.c.l.b16 %v496
  %v2599 = vunpack.c.h.b16 %v496
  %v2600 = vunpack.c.l.b16 %v497
  %v2601 = vunpack.c.h.b16 %v497
  %v2602 = vunpack.c.l.b16 %v498
  %v2603 = vunpack.c.h.b16 %v498
  %v2604 = vunpack.c.l.b16 %v499
  %v2605 = vunpack.c.h.b16 %v499
  %v2606 = vunpack.c.l.b16 %v500
  %v2607 = vunpack.c.h.b16 %v500
  %v2608 = vunpack.c.l.b16 %v501
  %v2609 = vunpack.c.h.b16 %v501
  %v2610 = vunpack.c.l.b16 %v502
  %v2611 = vunpack.c.h.b16 %v502
  %v2612 = vunpack.c.l.b16 %v503
  %v2613 = vunpack.c.h.b16 %v503
  %v2614 = vunpack.c.l.b16 %v504
  %v2615 = vunpack.c.h.b16 %v504
  %v2616 = vunpack.c.l.b16 %v505
  %v2617 = vunpack.c.h.b16 %v505
  %v2618 = vunpack.c.l.b16 %v506
  %v2619 = vunpack.c.h.b16 %v506
  %v2620 = vunpack.c.l.b16 %v507
  %v2621 = vunpack.c.h.b16 %v507
  %v2622 = vunpack.c.l.b16 %v508
  %v2623 = vunpack.c.h.b16 %v508
  %v2624 = vunpack.c.l.b16 %v509
  %v2625 = vunpack.c.h.b16 %v509
  %v2626 = vunpack.c.l.b16 %v510
  %v2627 = vunpack.c.h.b16 %v510
  %v2628 = vunpack.c.l.b16 %v511
  %v2629 = vunpack.c.h.b16 %v511
  %v2630 = vunpack.c.l.b16 %v512
  %v2631 = vunpack.c.h.b16 %v512
  %v2632 = vunpack.c.l.b16 %v513
  %v2633 = vunpack.c.h.b16 %v513
  %v2634 = vunpack.c.l.b16 %v514
  %v2635 = vunpack.c.h.b16 %v514
  %v2636 = vunpack.c.l.b16 %v515
  %v2637 = vunpack.c.h.b16 %v515
  %v2638 = vunpack.c.l.b16 %v516
  %v2639 = vunpack.c.h.b16 %v516
  %v2640 = vunpack.c.l.b16 %v517
  %v2641 = vunpack.c.h.b16 %v517
  %v2642 = vunpack.c.l.b16 %v518
  %v2643 = vunpack.c.h.b16 %v518
  %v2644 = vunpack.c.l.b16 %v519
  %v2645 = vunpack.c.h.b16 %v519
  %v2646 = vunpack.c.l.b16 %v520
  %v2647 = vunpack.c.h.b16 %v520
  %v2648 = vunpack.c.l.b16 %v521
  %v2649 = vunpack.c.h.b16 %v521
  %v2650 = vunpack.c.l.b16 %v522
  %v2651 = vunpack.c.h.b16 %v522
  %v2652 = vunpack.c.l.b16 %v523
  %v2653 = vunpack.c.h.b16 %v523
  %v2654 = vunpack.c.l.b16 %v524
  %v2655 = vunpack.c.h.b16 %v524
  %v2656 = vunpack.c.l.b16 %v525
  %v2657 = vunpack.c.h.b16 %v525
  %v2658 = vunpack.c.l.b16 %v526
  %v2659 = vunpack.c.h.b16 %v526
  %v2660 = vunpack.c.l.b16 %v527
  %v2661 = vunpack.c.h.b16 %v527
  %v2662 = vunpack.c.l.b16 %v528
  %v2663 = vunpack.c.h.b16 %v528
  %v2664 = vunpack.c.l.b16 %v529
  %v2665 = vunpack.c.h.b16 %v529
  %v2666 = vunpack.c.l.b16 %v530
  %v2667 = vunpack.c.h.b16 %v530
  %v2668 = vunpack.c.l.b16 %v531
  %v2669 = vunpack.c.h.b16 %v531
  %v2670 = vunpack.c.l.b16 %v532
  %v2671 = vunpack.c.h.b16 %v532
  %v2672 = vunpack.c.l.b16 %v533
  %v2673 = vunpack.c.h.b16 %v533
  %v2674 = vunpack.c.l.b16 %v534
  %v2675 = vunpack.c.h.b16 %v534
  %v2676 = vunpack.c.l.b16 %v535
  %v2677 = vunpack.c.h.b16 %v535
  %v2678 = vunpack.c.l.b16 %v536
  %v2679 = vunpack.c.h.b16 %v536
  %v2680 = vunpack.c.l.b16 %v537
  %v2681 = vunpack.c.h.b16 %v537
  %v2682 = vunpack.c.l.b16 %v538
  %v2683 = vunpack.c.h.b16 %v538
  %v2684 = vunpack.c.l.b16 %v539
  %v2685 = vunpack.c.h.b16 %v539
  %v2686 = vunpack.c.l.b16 %v540
  %v2687 = vunpack.c.h.b16 %v540
  %v2688 = vunpack.c.l.b16 %v541
  %v2689 = vunpack.c.h.b16 %v541
  %v2690 = vunpack.c.l.b16 %v542
  %v2691 = vunpack.c.h.b16 %v542
  %v2692 = vunpack.c.l.b16 %v543
  %v2693 = vunpack.c.h.b16 %v543
  %v2694 = vunpack.c.l.b16 %v544
  %v2695 = vunpack.c.h.b16 %v544
  %v2696 = vunpack.c.l.b16 %v545
  %v2697 = vunpack.c.h.b16 %v545
  %v2698 = vunpack.c.l.b16 %v546
  %v2699 = vunpack.c.h.b16 %v546
  %v2700 = vunpack.c.l.b16 %v547
  %v2701 = vunpack.c.h.b16 %v547
  %v2702 = vunpack.c.l.b16 %v548
  %v2703 = vunpack.c.h.b16 %v548
  %v2704 = vunpack.c.l.b16 %v549
  %v2705 = vunpack.c.h.b16 %v549
  %v2706 = vunpack.c.l.b16 %v550
  %v2707 = vunpack.c.h.b16 %v550
  %v2708 = vunpack.c.l.b16 %v551
  %v2709 = vunpack.c.h.b16 %v551
  %v2710 = vunpack.c.l.b16 %v552
  %v2711 = vunpack.c.h.b16 %v552
  %v2712 = vunpack.c.l.b16 %v553
  %v2713 = vunpack.c.h.b16 %v553
  %v2714 = vunpack.c.l.b16 %v554
  %v2715 = vunpack.c.h.b16 %v554
  %v2716 = vunpack.c.l.b16 %v555
  %v2717 = vunpack.c.h.b16 %v555
  %v2718 = vunpack.c.l.b16 %v556
  %v2719 = vunpack.c.h.b16 %v556
  %v2720 = vunpack.c.l.b16 %v557
  %v2721 = vunpack.c.h.b16 %v557
  %v2722 = vunpack.c.l.b16 %v558
  %v2723 = vunpack.c.h.b16 %v558
  %v2724 = vunpack.c.l.b16 %v559
  %v2725 = vunpack.c.h.b16 %v559
  %v2726 = vunpack.c.l.b16 %v560
  %v2727 = vunpack.c.h.b16 %v560
  %v2728 = vunpack.c.l.b16 %v561
  %v2729 = vunpack.c.h.b16 %v561
  %v2730 = vunpack.c.l.b16 %v562
  %v2731 = vunpack.c.h.b16 %v562
  %v2732 = vunpack.c.l.b16 %v563
  %v2733 = vunpack.c.h.b16 %v563
  %v2734 = vunpack.c.l.b16 %v564
  %v2735 = vunpack.c.h.b16 %v564
  %v2736 = vunpack.c.l.b16 %v565
  %v2737 = vunpack.c.h.b16 %v565
  %v2738 = vunpack.c.l.b16 %v566
  %v2739 = vunpack.c.h.b16 %v566
  %v2740 = vunpack.c.l.b16 %v567
  %v2741 = vunpack.c.h.b16 %v567
  %v2742 = vunpack.c.l.b16 %v568
  %v2743 = vunpack.c.h.b16 %v568
  %v2744 = vunpack.c.l.b16 %v569
  %v2745 = vunpack.c.h.b16 %v569
  %v2746 = vunpack.c.l.b16 %v570
  %v2747 = vunpack.c.h.b16 %v570
  %v2748 = vunpack.c.l.b16 %v571
  %v2749 = vunpack.c.h.b16 %v571
  %v2750 = vunpack.c.l.b16 %v572
  %v2751 = vunpack.c.h.b16 %v572
  %v2752 = vunpack.c.l.b16 %v573
  %v2753 = vunpack.c.h.b16 %v573
  %v2754 = vunpack.c.l.b16 %v574
  %v2755 = vunpack.c.h.b16 %v574
  %v2756 = vunpack.c.l.b16 %v575
  %v2757 = vunpack.c.h.b16 %v575
  %v2758 = vunpack.c.l.b16 %v576
  %v2759 = vunpack.c.h.b16 %v576
  %v2760 = vunpack.c.l.b16 %v577
  %v2761 = vunpack.c.h.b16 %v577
  %v2762 = vunpack.c.l.b16 %v578
  %v2763 = vunpack.c.h.b16 %v578
  %v2764 = vunpack.c.l.b16 %v579
  %v2765 = vunpack.c.h.b16 %v579
  %v2766 = vunpack.c.l.b16 %v580
  %v2767 = vunpack.c.h.b16 %v580
  %v2768 = vunpack.c.l.b16 %v581
  %v2769 = vunpack.c.h.b16 %v581
  %v2770 = vunpack.c.l.b16 %v582
  %v2771 = vunpack.c.h.b16 %v582
  %v2772 = vunpack.c.l.b16 %v583
  %v2773 = vunpack.c.h.b16 %v583
  %v2774 = vunpack.c.l.b16 %v584
  %v2775 = vunpack.c.h.b16 %v584
  %v2776 = vunpack.c.l.b16 %v585
  %v2777 = vunpack.c.h.b16 %v585
  %v2778 = vunpack.c.l.b16 %v586
  %v2779 = vunpack.c.h.b16 %v586
  %v2780 = vunpack.c.l.b16 %v587
  %v2781 = vunpack.c.h.b16 %v587
  %v2782 = vunpack.c.l.b16 %v588
  %v2783 = vunpack.c.h.b16 %v588
  %v2784 = vunpack.c.l.b16 %v589
  %v2785 = vunpack.c.h.b16 %v589
  %v2786 = vunpack.c.l.b16 %v590
  %v2787 = vunpack.c.h.b16 %v590
  %v2788 = vunpack.c.l.b16 %v591
  %v2789 = vunpack.c.h.b16 %v591
  %v2790 = vunpack.c.l.b16 %v592
  %v2791 = vunpack.c.h.b16 %v592
  %v2792 = vunpack.c.l.b16 %v593
  %v2793 = vunpack.c.h.b16 %v593
  %v2794 = vunpack.c.l.b16 %v594
  %v2795 = vunpack.c.h.b16 %v594
  %v2796 = vunpack.c.l.b16 %v595
  %v2797 = vunpack.c.h.b16 %v595
  %v2798 = vunpack.c.l.b16 %v596
  %v2799 = vunpack.c.h.b16 %v596
  %v2800 = vunpack.c.l.b16 %v597
  %v2801 = vunpack.c.h.b16 %v597
  %v2802 = vunpack.c.l.b16 %v598
  %v2803 = vunpack.c.h.b16 %v598
  %v2804 = vunpack.c.l.b16 %v599
  %v2805 = vunpack.c.h.b16 %v599
  %v2806 = vunpack.c.l.b16 %v600
  %v2807 = vunpack.c.h.b16 %v600
  %v2808 = vunpack.c.l.b16 %v601
  %v2809 = vunpack.c.h.b16 %v601
  %v2810 = vunpack.c.l.b16 %v602
  %v2811 = vunpack.c.h.b16 %v602
  %v2812 = vunpack.c.l.b16 %v603
  %v2813 = vunpack.c.h.b16 %v603
  %v2814 = vunpack.c.l.b16 %v604
  %v2815 = vunpack.c.h.b16 %v604
  %v2816 = vunpack.c.l.b16 %v605
  %v2817 = vunpack.c.h.b16 %v605
  %v2818 = vunpack.c.l.b16 %v606
  %v2819 = vunpack.c.h.b16 %v606
  %v2820 = vunpack.c.l.b16 %v607
  %v2821 = vunpack.c.h.b16 %v607
  %v2822 = vunpack.c.l.b16 %v608
  %v2823 = vunpack.c.h.b16 %v608
  %v2824 = vunpack.c.l.b16 %v609
  %v2825 = vunpack.c.h.b16 %v609
  %v2826 = vunpack.c.l.b16 %v610
  %v2827 = vunpack.c.h.b16 %v610
  %v2828 = vunpack.c.l.b16 %v611
  %v2829 = vunpack.c.h.b16 %v611
  %v2830 = vunpack.c.l.b16 %v612
  %v2831 = vunpack.c.h.b16 %v612
  %v2832 = vunpack.c.l.b16 %v613
  %v2833 = vunpack.c.h.b16 %v613
  %v2834 = vunpack.c.l.b16 %v614
  %v2835 = vunpack.c.h.b16 %v614
  %v2836 = vunpack.c.l.b16 %v615
  %v2837 = vunpack.c.h.b16 %v615
  %v2838 = vunpack.c.l.b16 %v616
  %v2839 = vunpack.c.h.b16 %v616
  %v2840 = vunpack.c.l.b16 %v617
  %v2841 = vunpack.c.h.b16 %v617
  %v2842 = vunpack.c.l.b16 %v618
  %v2843 = vunpack.c.h.b16 %v618
  %v2844 = vunpack.c.l.b16 %v619
  %v2845 = vunpack.c.h.b16 %v619
  %v2846 = vunpack.c.l.b16 %v620
  %v2847 = vunpack.c.h.b16 %v620
  %v2848 = vunpack.c.l.b16 %v621
  %v2849 = vunpack.c.h.b16 %v621
  %v2850 = vunpack.c.l.b16 %v622
  %v2851 = vunpack.c.h.b16 %v622
  %v2852 = vunpack.c.l.b16 %v623
  %v2853 = vunpack.c.h.b16 %v623
  %v2854 = vunpack.c.l.b16 %v624
  %v2855 = vunpack.c.h.b16 %v624
  %v2856 = vunpack.c.l.b16 %v625
  %v2857 = vunpack.c.h.b16 %v625
  %v2858 = vunpack.c.l.b16 %v626
  %v2859 = vunpack.c.h.b16 %v626
  %v2860 = vunpack.c.l.b16 %v627
  %v2861 = vunpack.c.h.b16 %v627
  %v2862 = vunpack.c.l.b16 %v628
  %v2863 = vunpack.c.h.b16 %v628
  %v2864 = vunpack.c.l.b16 %v629
  %v2865 = vunpack.c.h.b16 %v629
  %v2866 = vunpack.c.l.b16 %v630
  %v2867 = vunpack.c.h.b16 %v630
  %v2868 = vunpack.c.l.b16 %v631
  %v2869 = vunpack.c.h.b16 %v631
  %v2870 = vunpack.c.l.b16 %v632
  %v2871 = vunpack.c.h.b16 %v632
  %v2872 = vunpack.c.l.b16 %v633
  %v2873 = vunpack.c.h.b16 %v633
  %v2874 = vunpack.c.l.b16 %v634
  %v2875 = vunpack.c.h.b16 %v634
  %v2876 = vunpack.c.l.b16 %v635
  %v2877 = vunpack.c.h.b16 %v635
  %v2878 = vunpack.c.l.b16 %v636
  %v2879 = vunpack.c.h.b16 %v636
  %v2880 = vunpack.c.l.b16 %v637
  %v2881 = vunpack.c.h.b16 %v637
  %v2882 = vunpack.c.l.b16 %v638
  %v2883 = vunpack.c.h.b16 %v638
  %v2884 = vunpack.c.l.b16 %v639
  %v2885 = vunpack.c.h.b16 %v639
  %v2886 = vunpack.c.l.b16 %v640
  %v2887 = vunpack.c.h.b16 %v640
  %v2888 = vunpack.c.l.b16 %v641
  %v2889 = vunpack.c.h.b16 %v641
  %v2890 = vunpack.c.l.b16 %v642
  %v2891 = vunpack.c.h.b16 %v642
  %v2892 = vunpack.c.l.b16 %v643
  %v2893 = vunpack.c.h.b16 %v643
  %v2894 = vunpack.c.l.b16 %v644
  %v2895 = vunpack.c.h.b16 %v644
  %v2896 = vunpack.c.l.b16 %v645
  %v2897 = vunpack.c.h.b16 %v645
  %v2898 = vunpack.c.l.b16 %v646
  %v2899 = vunpack.c.h.b16 %v646
  %v2900 = vunpack.c.l.b16 %v647
  %v2901 = vunpack.c.h.b16 %v647
  %v2902 = vunpack.c.l.b16 %v648
  %v2903 = vunpack.c.h.b16 %v648
  %v2904 = vunpack.c.l.b16 %v649
  %v2905 = vunpack.c.h.b16 %v649
  %v2906 = vunpack.c.l.b16 %v650
  %v2907 = vunpack.c.h.b16 %v650
  %v2908 = vunpack.c.l.b16 %v651
  %v2909 = vunpack.c.h.b16 %v651
  %v2910 = vunpack.c.l.b16 %v652
  %v2911 = vunpack.c.h.b16 %v652
  %v2912 = vunpack.c.l.b16 %v653
  %v2913 = vunpack.c.h.b16 %v653
  %v2914 = vunpack.c.l.b16 %v654
  %v2915 = vunpack.c.h.b16 %v654
  %v2916 = vunpack.c.l.b16 %v655
  %v2917 = vunpack.c.h.b16 %v655
  %v2918 = vunpack.c.l.b16 %v656
  %v2919 = vunpack.c.h.b16 %v656
  %v2920 = vunpack.c.l.b16 %v657
  %v2921 = vunpack.c.h.b16 %v657
  %v2922 = vunpack.c.l.b16 %v658
  %v2923 = vunpack.c.h.b16 %v658
  %v2924 = vunpack.c.l.b16 %v659
  %v2925 = vunpack.c.h.b16 %v659
  %v2926 = vunpack.c.l.b16 %v660
  %v2927 = vunpack.c.h.b16 %v660
  %v2928 = vunpack.c.l.b16 %v661
  %v2929 = vunpack.c.h.b16 %v661
  %v2930 = vunpack.c.l.b16 %v662
  %v2931 = vunpack.c.h.b16 %v662
  %v2932 = vunpack.c.l.b16 %v663
  %v2933 = vunpack.c.h.b16 %v663
  %v2934 = vunpack.c.l.b16 %v664
  %v2935 = vunpack.c.h.b16 %v664
  %v2936 = vunpack.c.l.b16 %v665
  %v2937 = vunpack.c.h.b16 %v665
  %v2938 = vunpack.c.l.b16 %v666
  %v2939 = vunpack.c.h.b16 %v666
  %v2940 = vunpack.c.l.b16 %v667
  %v2941 = vunpack.c.h.b16 %v667
  %v2942 = vunpack.c.l.b16 %v668
  %v2943 = vunpack.c.h.b16 %v668
  %v2944 = vunpack.c.l.b16 %v669
  %v2945 = vunpack.c.h.b16 %v669
  %v2946 = vunpack.c.l.b16 %v670
  %v2947 = vunpack.c.h.b16 %v670
  %v2948 = vunpack.c.l.b16 %v671
  %v2949 = vunpack.c.h.b16 %v671
  %v2950 = vunpack.c.l.b16 %v672
  %v2951 = vunpack.c.h.b16 %v672
  %v2952 = vunpack.c.l.b16 %v673
  %v2953 = vunpack.c.h.b16 %v673
  %v2954 = vunpack.c.l.b16 %v674
  %v2955 = vunpack.c.h.b16 %v674
  %v2956 = vunpack.c.l.b16 %v675
  %v2957 = vunpack.c.h.b16 %v675
  %v2958 = vunpack.c.l.b16 %v676
  %v2959 = vunpack.c.h.b16 %v676
  %v2960 = vunpack.c.l.b16 %v677
  %v2961 = vunpack.c.h.b16 %v677
  %v2962 = vunpack.c.l.b16 %v678
  %v2963 = vunpack.c.h.b16 %v678
  %v2964 = vunpack.c.l.b16 %v679
  %v2965 = vunpack.c.h.b16 %v679
  %v2966 = vunpack.c.l.b16 %v680
  %v2967 = vunpack.c.h.b16 %v680
  %v2968 = vunpack.c.l.b16 %v681
  %v2969 = vunpack.c.h.b16 %v681
  %v2970 = vunpack.c.l.b16 %v682
  %v2971 = vunpack.c.h.b16 %v682
  %v2972 = vunpack.c.l.b16 %v683
  %v2973 = vunpack.c.h.b16 %v683
  %v2974 = vunpack.c.l.b16 %v684
  %v2975 = vunpack.c.h.b16 %v684
  %v2976 = vunpack.c.l.b16 %v685
  %v2977 = vunpack.c.h.b16 %v685
  %v2978 = vunpack.c.l.b16 %v686
  %v2979 = vunpack.c.h.b16 %v686
  %v2980 = vunpack.c.l.b16 %v687
  %v2981 = vunpack.c.h.b16 %v687
  %v2982 = vunpack.c.l.b16 %v688
  %v2983 = vunpack.c.h.b16 %v688
  %v2984 = vunpack.c.l.b16 %v689
  %v2985 = vunpack.c.h.b16 %v689
  %v2986 = vunpack.c.l.b16 %v690
  %v2987 = vunpack.c.h.b16 %v690
  %v2988 = vunpack.c.l.b16 %v691
  %v2989 = vunpack.c.h.b16 %v691
  %v2990 = vunpack.c.l.b16 %v692
  %v2991 = vunpack.c.h.b16 %v692
  %v2992 = vunpack.c.l.b16 %v693
  %v2993 = vunpack.c.h.b16 %v693
  %v2994 = vunpack.c.l.b16 %v694
  %v2995 = vunpack.c.h.b16 %v694
  %v2996 = vunpack.c.l.b16 %v695
  %v2997 = vunpack.c.h.b16 %v695
  %v2998 = vunpack.c.l.b16 %v696
  %v2999 = vunpack.c.h.b16 %v696
  %v3000 = vunpack.c.l.b16 %v697
  %v3001 = vunpack.c.h.b16 %v697
  %v3002 = vunpack.c.l.b16 %v698
  %v3003 = vunpack.c.h.b16 %v698
  %v3004 = vunpack.c.l.b16 %v699
  %v3005 = vunpack.c.h.b16 %v699
  %v3006 = vunpack.c.l.b16 %v700
  %v3007 = vunpack.c.h.b16 %v700
  %v3008 = vunpack.c.l.b16 %v701
  %v3009 = vunpack.c.h.b16 %v701
  %v3010 = vunpack.c.l.b16 %v702
  %v3011 = vunpack.c.h.b16 %v702
  %v3012 = vunpack.c.l.b16 %v703
  %v3013 = vunpack.c.h.b16 %v703
  %v3014 = vunpack.c.l.b16 %v704
  %v3015 = vunpack.c.h.b16 %v704
  %v3016 = vunpack.c.l.b16 %v705
  %v3017 = vunpack.c.h.b16 %v705
  %v3018 = vunpack.c.l.b16 %v706
  %v3019 = vunpack.c.h.b16 %v706
  %v3020 = vunpack.c.l.b16 %v707
  %v3021 = vunpack.c.h.b16 %v707
  %v3022 = vunpack.c.l.b16 %v708
  %v3023 = vunpack.c.h.b16 %v708
  %v3024 = vunpack.c.l.b16 %v709
  %v3025 = vunpack.c.h.b16 %v709
  %v3026 = vunpack.c.l.b16 %v710
  %v3027 = vunpack.c.h.b16 %v710
  %v3028 = vunpack.c.l.b16 %v711
  %v3029 = vunpack.c.h.b16 %v711
  %v3030 = vunpack.c.l.b16 %v712
  %v3031 = vunpack.c.h.b16 %v712
  %v3032 = vunpack.c.l.b16 %v713
  %v3033 = vunpack.c.h.b16 %v713
  %v3034 = vunpack.c.l.b16 %v714
  %v3035 = vunpack.c.h.b16 %v714
  %v3036 = vunpack.c.l.b16 %v715
  %v3037 = vunpack.c.h.b16 %v715
  %v3038 = vunpack.c.l.b16 %v716
  %v3039 = vunpack.c.h.b16 %v716
  %v3040 = vunpack.c.l.b16 %v717
  %v3041 = vunpack.c.h.b16 %v717
  %v3042 = vunpack.c.l.b16 %v718
  %v3043 = vunpack.c.h.b16 %v718
  %v3044 = vunpack.c.l.b16 %v719
  %v3045 = vunpack.c.h.b16 %v719
  %v3046 = vunpack.c.l.b16 %v720
  %v3047 = vunpack.c.h.b16 %v720
  %v3048 = vunpack.c.l.b16 %v721
  %v3049 = vunpack.c.h.b16 %v721
  %v3050 = vunpack.c.l.b16 %v722
  %v3051 = vunpack.c.h.b16 %v722
  %v3052 = vunpack.c.l.b16 %v723
  %v3053 = vunpack.c.h.b16 %v723
  %v3054 = vunpack.c.l.b16 %v724
  %v3055 = vunpack.c.h.b16 %v724
  %v3056 = vunpack.c.l.b16 %v725
  %v3057 = vunpack.c.h.b16 %v725
  %v3058 = vunpack.c.l.b16 %v726
  %v3059 = vunpack.c.h.b16 %v726
  %v3060 = vunpack.c.l.b16 %v727
  %v3061 = vunpack.c.h.b16 %v727
  %v3062 = vunpack.c.l.b16 %v728
  %v3063 = vunpack.c.h.b16 %v728
  %v3064 = vunpack.c.l.b16 %v729
  %v3065 = vunpack.c.h.b16 %v729
  %v3066 = vunpack.c.l.b16 %v730
  %v3067 = vunpack.c.h.b16 %v730
  %v3068 = vunpack.c.l.b16 %v731
  %v3069 = vunpack.c.h.b16 %v731
  %v3070 = vunpack.c.l.b16 %v732
  %v3071 = vunpack.c.h.b16 %v732
  %v3072 = vunpack.c.l.b16 %v733
  %v3073 = vunpack.c.h.b16 %v733
  %v3074 = vunpack.c.l.b16 %v734
  %v3075 = vunpack.c.h.b16 %v734
  %v3076 = vunpack.c.l.b16 %v735
  %v3077 = vunpack.c.h.b16 %v735
  %v3078 = vunpack.c.l.b16 %v736
  %v3079 = vunpack.c.h.b16 %v736
  %v3080 = vunpack.c.l.b16 %v737
  %v3081 = vunpack.c.h.b16 %v737
  %v3082 = vunpack.c.l.b16 %v738
  %v3083 = vunpack.c.h.b16 %v738
  %v3084 = vunpack.c.l.b16 %v739
  %v3085 = vunpack.c.h.b16 %v739
  %v3086 = vunpack.c.l.b16 %v740
  %v3087 = vunpack.c.h.b16 %v740
  %v3088 = vunpack.c.l.b16 %v741
  %v3089 = vunpack.c.h.b16 %v741
  %v3090 = vunpack.c.l.b16 %v742
  %v3091 = vunpack.c.h.b16 %v742
  %v3092 = vunpack.c.l.b16 %v743
  %v3093 = vunpack.c.h.b16 %v743
  %v3094 = vunpack.c.l.b16 %v744
  %v3095 = vunpack.c.h.b16 %v744
  %v3096 = vunpack.c.l.b16 %v745
  %v3097 = vunpack.c.h.b16 %v745
  %v3098 = vunpack.c.l.b16 %v746
  %v3099 = vunpack.c.h.b16 %v746
  %v3100 = vunpack.c.l.b16 %v747
  %v3101 = vunpack.c.h.b16 %v747
  %v3102 = vunpack.c.l.b16 %v748
  %v3103 = vunpack.c.h.b16 %v748
  %v3104 = vunpack.c.l.b16 %v749
  %v3105 = vunpack.c.h.b16 %v749
  %v3106 = vunpack.c.l.b16 %v750
  %v3107 = vunpack.c.h.b16 %v750
  %v3108 = vunpack.c.l.b16 %v751
  %v3109 = vunpack.c.h.b16 %v751
  %v3110 = vunpack.c.l.b16 %v752
  %v3111 = vunpack.c.h.b16 %v752
  %v3112 = vunpack.c.l.b16 %v753
  %v3113 = vunpack.c.h.b16 %v753
  %v3114 = vunpack.c.l.b16 %v754
  %v3115 = vunpack.c.h.b16 %v754
  %v3116 = vunpack.c.l.b16 %v755
  %v3117 = vunpack.c.h.b16 %v755
  %v3118 = vunpack.c.l.b16 %v756
  %v3119 = vunpack.c.h.b16 %v756
  %v3120 = vunpack.c.l.b16 %v757
  %v3121 = vunpack.c.h.b16 %v757
  %v3122 = vunpack.c.l.b16 %v758
  %v3123 = vunpack.c.h.b16 %v758
  %v3124 = vunpack.c.l.b16 %v759
  %v3125 = vunpack.c.h.b16 %v759
  %v3126 = vunpack.c.l.b16 %v760
  %v3127 = vunpack.c.h.b16 %v760
  %v3128 = vunpack.c.l.b16 %v761
  %v3129 = vunpack.c.h.b16 %v761
  %v3130 = vunpack.c.l.b16 %v762
  %v3131 = vunpack.c.h.b16 %v762
  %v3132 = vunpack.c.l.b16 %v763
  %v3133 = vunpack.c.h.b16 %v763
  %v3134 = vunpack.c.l.b16 %v764
  %v3135 = vunpack.c.h.b16 %v764
  %v3136 = vunpack.c.l.b16 %v765
  %v3137 = vunpack.c.h.b16 %v765
  %v3138 = vunpack.c.l.b16 %v766
  %v3139 = vunpack.c.h.b16 %v766
  %v3140 = vunpack.c.l.b16 %v767
  %v3141 = vunpack.c.h.b16 %v767
  %v3142 = vunpack.c.l.b16 %v768
  %v3143 = vunpack.c.h.b16 %v768
  %v3144 = vunpack.c.l.b16 %v769
  %v3145 = vunpack.c.h.b16 %v769
  %v3146 = vunpack.c.l.b16 %v770
  %v3147 = vunpack.c.h.b16 %v770
  %v3148 = vunpack.c.l.b16 %v771
  %v3149 = vunpack.c.h.b16 %v771
  %v3150 = vunpack.c.l.b16 %v772
  %v3151 = vunpack.c.h.b16 %v772
  %v3152 = vunpack.c.l.b16 %v773
  %v3153 = vunpack.c.h.b16 %v773
  %v3154 = vunpack.c.l.b16 %v774
  %v3155 = vunpack.c.h.b16 %v774
  %v3156 = vunpack.c.l.b16 %v775
  %v3157 = vunpack.c.h.b16 %v775
  %v3158 = vunpack.c.l.b16 %v776
  %v3159 = vunpack.c.h.b16 %v776
  %v3160 = vunpack.c.l.b16 %v777
  %v3161 = vunpack.c.h.b16 %v777
  %v3162 = vunpack.c.l.b16 %v778
  %v3163 = vunpack.c.h.b16 %v778
  %v3164 = vunpack.c.l.b16 %v779
  %v3165 = vunpack.c.h.b16 %v779
  %v3166 = vunpack.c.l.b16 %v780
  %v3167 = vunpack.c.h.b16 %v780
  %v3168 = vunpack.c.l.b16 %v781
  %v3169 = vunpack.c.h.b16 %v781
  %v3170 = vunpack.c.l.b16 %v782
  %v3171 = vunpack.c.h.b16 %v782
  %v3172 = vunpack.c.l.b16 %v783
  %v3173 = vunpack.c.h.b16 %v783
  %v3174 = vunpack.c.l.b16 %v784
  %v3175 = vunpack.c.h.b16 %v784
  %v3176 = vunpack.c.l.b16 %v785
  %v3177 = vunpack.c.h.b16 %v785
  %v3178 = vunpack.c.l.b16 %v786
  %v3179 = vunpack.c.h.b16 %v786
  %v3180 = vunpack.c.l.b16 %v787
  %v3181 = vunpack.c.h.b16 %v787
  %v3182 = vunpack.c.l.b16 %v788
  %v3183 = vunpack.c.h.b16 %v788
  %v3184 = vunpack.c.l.b16 %v789
  %v3185 = vunpack.c.h.b16 %v789
  %v3186 = vunpack.c.l.b16 %v790
  %v3187 = vunpack.c.h.b16 %v790
  %v3188 = vunpack.c.l.b16 %v791
  %v3189 = vunpack.c.h.b16 %v791
  %v3190 = vunpack.c.l.b16 %v792
  %v3191 = vunpack.c.h.b16 %v792
  %v3192 = vunpack.c.l.b16 %v793
  %v3193 = vunpack.c.h.b16 %v793
  %v3194 = vunpack.c.l.b16 %v794
  %v3195 = vunpack.c.h.b16 %v794
  %v3196 = vunpack.c.l.b16 %v795
  %v3197 = vunpack.c.h.b16 %v795
  %v3198 = vunpack.c.l.b16 %v796
  %v3199 = vunpack.c.h.b16 %v796
  %v3200 = vunpack.c.l.b16 %v797
  %v3201 = vunpack.c.h.b16 %v797
  %v3202 = vunpack.c.l.b16 %v798
  %v3203 = vunpack.c.h.b16 %v798
  %v3204 = vunpack.c.l.b16 %v799
  %v3205 = vunpack.c.h.b16 %v799
  %v3206 = vunpack.c.l.b16 %v800
  %v3207 = vunpack.c.h.b16 %v800
  %v3208 = vunpack.c.l.b16 %v801
  %v3209 = vunpack.c.h.b16 %v801
  %v3210 = vunpack.c.l.b16 %v802
  %v3211 = vunpack.c.h.b16 %v802
  %v3212 = vpack.c.b16 %v1692, %v1676
  %v3213 = vpack.c.b16 %v1693, %v1677
  %v3214 = vpack.c.b16 %v1694, %v1678
  %v3215 = vpack.c.b16 %v1695, %v1679
  %v3216 = vpack.c.b16 %v1696, %v1680
  %v3217 = vpack.c.b16 %v1697, %v1681
  %v3218 = vpack.c.b16 %v1698, %v1682
  %v3219 = vpack.c.b16 %v1699, %v1683
  %v3220 = vpack.c.b16 %v1700, %v1684
  %v3221 = vpack.c.b16 %v1701, %v1685
  %v3222 = vpack.c.b16 %v1702, %v1686
  %v3223 = vpack.c.b16 %v1703, %v1687
  %v3224 = vpack.c.b16 %v1704, %v1688
  %v3225 = vpack.c.b16 %v1705, %v1689
  %v3226 = vpack.c.b16 %v1706, %v1690
  %v3227 = vpack.c.b16 %v1707, %v1691
  %v3228 = vpack.c.b16 %v1724, %v1708
  %v3229 = vpack.c.b16 %v1725, %v1709
  %v3230 = vpack.c.b16 %v1726, %v1710
  %v3231 = vpack.c.b16 %v1727, %v1711
  %v3232 = vpack.c.b16 %v1728, %v1712
  %v3233 = vpack.c.b16 %v1729, %v1713
  %v3234 = vpack.c.b16 %v1730, %v1714
  %v3235 = vpack.c.b16 %v1731, %v1715
  %v3236 = vpack.c.b16 %v1732, %v1716
  %v3237 = vpack.c.b16 %v1733, %v1717
  %v3238 = vpack.c.b16 %v1734, %v1718
  %v3239 = vpack.c.b16 %v1735, %v1719
  %v3240 = vpack.c.b16 %v1736, %v1720
  %v3241 = vpack.c.b16 %v1737, %v1721
  %v3242 = vpack.c.b16 %v1738, %v1722
  %v3243 = vpack.c.b16 %v1739, %v1723
  %v3244 = vpack.c.b16 %v1756, %v1740
  %v3245 = vpack.c.b16 %v1757, %v1741
  %v3246 = vpack.c.b16 %v1758, %v1742
  %v3247 = vpack.c.b16 %v1759, %v1743
  %v3248 = vpack.c.b16 %v1760, %v1744
  %v3249 = vpack.c.b16 %v1761, %v1745
  %v3250 = vpack.c.b16 %v1762, %v1746
  %v3251 = vpack.c.b16 %v1763, %v1747
  %v3252 = vpack.c.b16 %v1764, %v1748
  %v3253 = vpack.c.b16 %v1765, %v1749
  %v3254 = vpack.c.b16 %v1766, %v1750
  %v3255 = vpack.c.b16 %v1767, %v1751
  %v3256 = vpack.c.b16 %v1768, %v1752
  %v3257 = vpack.c.b16 %v1769, %v1753
  %v3258 = vpack.c.b16 %v1770, %v1754
  %v3259 = vpack.c.b16 %v1771, %v1755
  %v3260 = vpack.c.b16 %v1788, %v1772
  %v3261 = vpack.c.b16 %v1789, %v1773
  %v3262 = vpack.c.b16 %v1790, %v1774
  %v3263 = vpack.c.b16 %v1791, %v1775
  %v3264 = vpack.c.b16 %v1792, %v1776
  %v3265 = vpack.c.b16 %v1793, %v1777
  %v3266 = vpack.c.b16 %v1794, %v1778
  %v3267 = vpack.c.b16 %v1795, %v1779
  %v3268 = vpack.c.b16 %v1796, %v1780
  %v3269 = vpack.c.b16 %v1797, %v1781
  %v3270 = vpack.c.b16 %v1798, %v1782
  %v3271 = vpack.c.b16 %v1799, %v1783
  %v3272 = vpack.c.b16 %v1800, %v1784
  %v3273 = vpack.c.b16 %v1801, %v1785
  %v3274 = vpack.c.b16 %v1802, %v1786
  %v3275 = vpack.c.b16 %v1803, %v1787
  %v3276 = vpack.c.b16 %v1820, %v1804
  %v3277 = vpack.c.b16 %v1821, %v1805
  %v3278 = vpack.c.b16 %v1822, %v1806
  %v3279 = vpack.c.b16 %v1823, %v1807
  %v3280 = vpack.c.b16 %v1824, %v1808
  %v3281 = vpack.c.b16 %v1825, %v1809
  %v3282 = vpack.c.b16 %v1826, %v1810
  %v3283 = vpack.c.b16 %v1827, %v1811
  %v3284 = vpack.c.b16 %v1828, %v1812
  %v3285 = vpack.c.b16 %v1829, %v1813
  %v3286 = vpack.c.b16 %v1830, %v1814
  %v3287 = vpack.c.b16 %v1831, %v1815
  %v3288 = vpack.c.b16 %v1832, %v1816
  %v3289 = vpack.c.b16 %v1833, %v1817
  %v3290 = vpack.c.b16 %v1834, %v1818
  %v3291 = vpack.c.b16 %v1835, %v1819
  %v3292 = vpack.c.b16 %v1852, %v1836
  %v3293 = vpack.c.b16 %v1853, %v1837
  %v3294 = vpack.c.b16 %v1854, %v1838
  %v3295 = vpack.c.b16 %v1855, %v1839
  %v3296 = vpack.c.b16 %v1856, %v1840
  %v3297 = vpack.c.b16 %v1857, %v1841
  %v3298 = vpack.c.b16 %v1858, %v1842
  %v3299 = vpack.c.b16 %v1859, %v1843
  %v3300 = vpack.c.b16 %v1860, %v1844
  %v3301 = vpack.c.b16 %v1861, %v1845
  %v3302 = vpack.c.b16 %v1862, %v1846
  %v3303 = vpack.c.b16 %v1863, %v1847
  %v3304 = vpack.c.b16 %v1864, %v1848
  %v3305 = vpack.c.b16 %v1865, %v1849
  %v3306 = vpack.c.b16 %v1866, %v1850
  %v3307 = vpack.c.b16 %v1867, %v1851
  %v3308 = vpack.c.b16 %v1884, %v1868
  %v3309 = vpack.c.b16 %v1885, %v1869
  %v3310 = vpack.c.b16 %v1886, %v1870
  %v3311 = vpack.c.b16 %v1887, %v1871
  %v3312 = vpack.c.b16 %v1888, %v1872
  %v3313 = vpack.c.b16 %v1889, %v1873
  %v3314 = vpack.c.b16 %v1890, %v1874
  %v3315 = vpack.c.b16 %v1891, %v1875
  %v3316 = vpack.c.b16 %v1892, %v1876
  %v3317 = vpack.c.b16 %v1893, %v1877
  %v3318 = vpack.c.b16 %v1894, %v1878
  %v3319 = vpack.c.b16 %v1895, %v1879
  %v3320 = vpack.c.b16 %v1896, %v1880
  %v3321 = vpack.c.b16 %v1897, %v1881
  %v3322 = vpack.c.b16 %v1898, %v1882
  %v3323 = vpack.c.b16 %v1899, %v1883
  %v3324 = vpack.c.b16 %v1916, %v1900
  %v3325 = vpack.c.b16 %v1917, %v1901
  %v3326 = vpack.c.b16 %v1918, %v1902
  %v3327 = vpack.c.b16 %v1919, %v1903
  %v3328 = vpack.c.b16 %v1920, %v1904
  %v3329 = vpack.c.b16 %v1921, %v1905
  %v3330 = vpack.c.b16 %v1922, %v1906
  %v3331 = vpack.c.b16 %v1923, %v1907
  %v3332 = vpack.c.b16 %v1924, %v1908
  %v3333 = vpack.c.b16 %v1925, %v1909
  %v3334 = vpack.c.b16 %v1926, %v1910
  %v3335 = vpack.c.b16 %v1927, %v1911
  %v3336 = vpack.c.b16 %v1928, %v1912
  %v3337 = vpack.c.b16 %v1929, %v1913
  %v3338 = vpack.c.b16 %v1930, %v1914
  %v3339 = vpack.c.b16 %v1931, %v1915
  %v3340 = vpack.c.b16 %v1948, %v1932
  %v3341 = vpack.c.b16 %v1949, %v1933
  %v3342 = vpack.c.b16 %v1950, %v1934
  %v3343 = vpack.c.b16 %v1951, %v1935
  %v3344 = vpack.c.b16 %v1952, %v1936
  %v3345 = vpack.c.b16 %v1953, %v1937
  %v3346 = vpack.c.b16 %v1954, %v1938
  %v3347 = vpack.c.b16 %v1955, %v1939
  %v3348 = vpack.c.b16 %v1956, %v1940
  %v3349 = vpack.c.b16 %v1957, %v1941
  %v3350 = vpack.c.b16 %v1958, %v1942
  %v3351 = vpack.c.b16 %v1959, %v1943
  %v3352 = vpack.c.b16 %v1960, %v1944
  %v3353 = vpack.c.b16 %v1961, %v1945
  %v3354 = vpack.c.b16 %v1962, %v1946
  %v3355 = vpack.c.b16 %v1963, %v1947
  %v3356 = vpack.c.b16 %v1980, %v1964
  %v3357 = vpack.c.b16 %v1981, %v1965
  %v3358 = vpack.c.b16 %v1982, %v1966
  %v3359 = vpack.c.b16 %v1983, %v1967
  %v3360 = vpack.c.b16 %v1984, %v1968
  %v3361 = vpack.c.b16 %v1985, %v1969
  %v3362 = vpack.c.b16 %v1986, %v1970
  %v3363 = vpack.c.b16 %v1987, %v1971
  %v3364 = vpack.c.b16 %v1988, %v1972
  %v3365 = vpack.c.b16 %v1989, %v1973
  %v3366 = vpack.c.b16 %v1990, %v1974
  %v3367 = vpack.c.b16 %v1991, %v1975
  %v3368 = vpack.c.b16 %v1992, %v1976
  %v3369 = vpack.c.b16 %v1993, %v1977
  %v3370 = vpack.c.b16 %v1994, %v1978
  %v3371 = vpack.c.b16 %v1995, %v1979
  %v3372 = vpack.c.b16 %v2012, %v1996
  %v3373 = vpack.c.b16 %v2013, %v1997
  %v3374 = vpack.c.b16 %v2014, %v1998
  %v3375 = vpack.c.b16 %v2015, %v1999
  %v3376 = vpack.c.b16 %v2016, %v2000
  %v3377 = vpack.c.b16 %v2017, %v2001
  %v3378 = vpack.c.b16 %v2018, %v2002
  %v3379 = vpack.c.b16 %v2019, %v2003
  %v3380 = vpack.c.b16 %v2020, %v2004
  %v3381 = vpack.c.b16 %v2021, %v2005
  %v3382 = vpack.c.b16 %v2022, %v2006
  %v3383 = vpack.c.b16 %v2023, %v2007
  %v3384 = vpack.c.b16 %v2024, %v2008
  %v3385 = vpack.c.b16 %v2025, %v2009
  %v3386 = vpack.c.b16 %v2026, %v2010
  %v3387 = vpack.c.b16 %v2027, %v2011
  %v3388 = vpack.c.b16 %v2044, %v2028
  %v3389 = vpack.c.b16 %v2045, %v2029
  %v3390 = vpack.c.b16 %v2046, %v2030
  %v3391 = vpack.c.b16 %v2047, %v2031
  %v3392 = vpack.c.b16 %v2048, %v2032
  %v3393 = vpack.c.b16 %v2049, %v2033
  %v3394 = vpack.c.b16 %v2050, %v2034
  %v3395 = vpack.c.b16 %v2051, %v2035
  %v3396 = vpack.c.b16 %v2052, %v2036
  %v3397 = vpack.c.b16 %v2053, %v2037
  %v3398 = vpack.c.b16 %v2054, %v2038
  %v3399 = vpack.c.b16 %v2055, %v2039
  %v3400 = vpack.c.b16 %v2056, %v2040
  %v3401 = vpack.c.b16 %v2057, %v2041
  %v3402 = vpack.c.b16 %v2058, %v2042
  %v3403 = vpack.c.b16 %v2059, %v2043
  %v3404 = vpack.c.b16 %v2076, %v2060
  %v3405 = vpack.c.b16 %v2077, %v2061
  %v3406 = vpack.c.b16 %v2078, %v2062
  %v3407 = vpack.c.b16 %v2079, %v2063
  %v3408 = vpack.c.b16 %v2080, %v2064
  %v3409 = vpack.c.b16 %v2081, %v2065
  %v3410 = vpack.c.b16 %v2082, %v2066
  %v3411 = vpack.c.b16 %v2083, %v2067
  %v3412 = vpack.c.b16 %v2084, %v2068
  %v3413 = vpack.c.b16 %v2085, %v2069
  %v3414 = vpack.c.b16 %v2086, %v2070
  %v3415 = vpack.c.b16 %v2087, %v2071
  %v3416 = vpack.c.b16 %v2088, %v2072
  %v3417 = vpack.c.b16 %v2089, %v2073
  %v3418 = vpack.c.b16 %v2090, %v2074
  %v3419 = vpack.c.b16 %v2091, %v2075
  %v3420 = vpack.c.b16 %v2108, %v2092
  %v3421 = vpack.c.b16 %v2109, %v2093
  %v3422 = vpack.c.b16 %v2110, %v2094
  %v3423 = vpack.c.b16 %v2111, %v2095
  %v3424 = vpack.c.b16 %v2112, %v2096
  %v3425 = vpack.c.b16 %v2113, %v2097
  %v3426 = vpack.c.b16 %v2114, %v2098
  %v3427 = vpack.c.b16 %v2115, %v2099
  %v3428 = vpack.c.b16 %v2116, %v2100
  %v3429 = vpack.c.b16 %v2117, %v2101
  %v3430 = vpack.c.b16 %v2118, %v2102
  %v3431 = vpack.c.b16 %v2119, %v2103
  %v3432 = vpack.c.b16 %v2120, %v2104
  %v3433 = vpack.c.b16 %v2121, %v2105
  %v3434 = vpack.c.b16 %v2122, %v2106
  %v3435 = vpack.c.b16 %v2123, %v2107
  %v3436 = vpack.c.b16 %v2140, %v2124
  %v3437 = vpack.c.b16 %v2141, %v2125
  %v3438 = vpack.c.b16 %v2142, %v2126
  %v3439 = vpack.c.b16 %v2143, %v2127
  %v3440 = vpack.c.b16 %v2144, %v2128
  %v3441 = vpack.c.b16 %v2145, %v2129
  %v3442 = vpack.c.b16 %v2146, %v2130
  %v3443 = vpack.c.b16 %v2147, %v2131
  %v3444 = vpack.c.b16 %v2148, %v2132
  %v3445 = vpack.c.b16 %v2149, %v2133
  %v3446 = vpack.c.b16 %v2150, %v2134
  %v3447 = vpack.c.b16 %v2151, %v2135
  %v3448 = vpack.c.b16 %v2152, %v2136
  %v3449 = vpack.c.b16 %v2153, %v2137
  %v3450 = vpack.c.b16 %v2154, %v2138
  %v3451 = vpack.c.b16 %v2155, %v2139
  %v3452 = vpack.c.b16 %v2172, %v2156
  %v3453 = vpack.c.b16 %v2173, %v2157
  %v3454 = vpack.c.b16 %v2174, %v2158
  %v3455 = vpack.c.b16 %v2175, %v2159
  %v3456 = vpack.c.b16 %v2176, %v2160
  %v3457 = vpack.c.b16 %v2177, %v2161
  %v3458 = vpack.c.b16 %v2178, %v2162
  %v3459 = vpack.c.b16 %v2179, %v2163
  %v3460 = vpack.c.b16 %v2180, %v2164
  %v3461 = vpack.c.b16 %v2181, %v2165
  %v3462 = vpack.c.b16 %v2182, %v2166
  %v3463 = vpack.c.b16 %v2183, %v2167
  %v3464 = vpack.c.b16 %v2184, %v2168
  %v3465 = vpack.c.b16 %v2185, %v2169
  %v3466 = vpack.c.b16 %v2186, %v2170
  %v3467 = vpack.c.b16 %v2187, %v2171
  %v3468 = vpack.c.b16 %v2204, %v2188
  %v3469 = vpack.c.b16 %v2205, %v2189
  %v3470 = vpack.c.b16 %v2206, %v2190
  %v3471 = vpack.c.b16 %v2207, %v2191
  %v3472 = vpack.c.b16 %v2208, %v2192
  %v3473 = vpack.c.b16 %v2209, %v2193
  %v3474 = vpack.c.b16 %v2210, %v2194
  %v3475 = vpack.c.b16 %v2211, %v2195
  %v3476 = vpack.c.b16 %v2212, %v2196
  %v3477 = vpack.c.b16 %v2213, %v2197
  %v3478 = vpack.c.b16 %v2214, %v2198
  %v3479 = vpack.c.b16 %v2215, %v2199
  %v3480 = vpack.c.b16 %v2216, %v2200
  %v3481 = vpack.c.b16 %v2217, %v2201
  %v3482 = vpack.c.b16 %v2218, %v2202
  %v3483 = vpack.c.b16 %v2219, %v2203
  %v3484 = vpack.c.b16 %v2236, %v2220
  %v3485 = vpack.c.b16 %v2237, %v2221
  %v3486 = vpack.c.b16 %v2238, %v2222
  %v3487 = vpack.c.b16 %v2239, %v2223
  %v3488 = vpack.c.b16 %v2240, %v2224
  %v3489 = vpack.c.b16 %v2241, %v2225
  %v3490 = vpack.c.b16 %v2242, %v2226
  %v3491 = vpack.c.b16 %v2243, %v2227
  %v3492 = vpack.c.b16 %v2244, %v2228
  %v3493 = vpack.c.b16 %v2245, %v2229
  %v3494 = vpack.c.b16 %v2246, %v2230
  %v3495 = vpack.c.b16 %v2247, %v2231
  %v3496 = vpack.c.b16 %v2248, %v2232
  %v3497 = vpack.c.b16 %v2249, %v2233
  %v3498 = vpack.c.b16 %v2250, %v2234
  %v3499 = vpack.c.b16 %v2251, %v2235
  %v3500 = vpack.c.b16 %v2268, %v2252
  %v3501 = vpack.c.b16 %v2269, %v2253
  %v3502 = vpack.c.b16 %v2270, %v2254
  %v3503 = vpack.c.b16 %v2271, %v2255
  %v3504 = vpack.c.b16 %v2272, %v2256
  %v3505 = vpack.c.b16 %v2273, %v2257
  %v3506 = vpack.c.b16 %v2274, %v2258
  %v3507 = vpack.c.b16 %v2275, %v2259
  %v3508 = vpack.c.b16 %v2276, %v2260
  %v3509 = vpack.c.b16 %v2277, %v2261
  %v3510 = vpack.c.b16 %v2278, %v2262
  %v3511 = vpack.c.b16 %v2279, %v2263
  %v3512 = vpack.c.b16 %v2280, %v2264
  %v3513 = vpack.c.b16 %v2281, %v2265
  %v3514 = vpack.c.b16 %v2282, %v2266
  %v3515 = vpack.c.b16 %v2283, %v2267
  %v3516 = vpack.c.b16 %v2300, %v2284
  %v3517 = vpack.c.b16 %v2301, %v2285
  %v3518 = vpack.c.b16 %v2302, %v2286
  %v3519 = vpack.c.b16 %v2303, %v2287
  %v3520 = vpack.c.b16 %v2304, %v2288
  %v3521 = vpack.c.b16 %v2305, %v2289
  %v3522 = vpack.c.b16 %v2306, %v2290
  %v3523 = vpack.c.b16 %v2307, %v2291
  %v3524 = vpack.c.b16 %v2308, %v2292
  %v3525 = vpack.c.b16 %v2309, %v2293
  %v3526 = vpack.c.b16 %v2310, %v2294
  %v3527 = vpack.c.b16 %v2311, %v2295
  %v3528 = vpack.c.b16 %v2312, %v2296
  %v3529 = vpack.c.b16 %v2313, %v2297
  %v3530 = vpack.c.b16 %v2314, %v2298
  %v3531 = vpack.c.b16 %v2315, %v2299
  %v3532 = vpack.c.b16 %v2332, %v2316
  %v3533 = vpack.c.b16 %v2333, %v2317
  %v3534 = vpack.c.b16 %v2334, %v2318
  %v3535 = vpack.c.b16 %v2335, %v2319
  %v3536 = vpack.c.b16 %v2336, %v2320
  %v3537 = vpack.c.b16 %v2337, %v2321
  %v3538 = vpack.c.b16 %v2338, %v2322
  %v3539 = vpack.c.b16 %v2339, %v2323
  %v3540 = vpack.c.b16 %v2340, %v2324
  %v3541 = vpack.c.b16 %v2341, %v2325
  %v3542 = vpack.c.b16 %v2342, %v2326
  %v3543 = vpack.c.b16 %v2343, %v2327
  %v3544 = vpack.c.b16 %v2344, %v2328
  %v3545 = vpack.c.b16 %v2345, %v2329
  %v3546 = vpack.c.b16 %v2346, %v2330
  %v3547 = vpack.c.b16 %v2347, %v2331
  %v3548 = vpack.c.b16 %v2364, %v2348
  %v3549 = vpack.c.b16 %v2365, %v2349
  %v3550 = vpack.c.b16 %v2366, %v2350
  %v3551 = vpack.c.b16 %v2367, %v2351
  %v3552 = vpack.c.b16 %v2368, %v2352
  %v3553 = vpack.c.b16 %v2369, %v2353
  %v3554 = vpack.c.b16 %v2370, %v2354
  %v3555 = vpack.c.b16 %v2371, %v2355
  %v3556 = vpack.c.b16 %v2372, %v2356
  %v3557 = vpack.c.b16 %v2373, %v2357
  %v3558 = vpack.c.b16 %v2374, %v2358
  %v3559 = vpack.c.b16 %v2375, %v2359
  %v3560 = vpack.c.b16 %v2376, %v2360
  %v3561 = vpack.c.b16 %v2377, %v2361
  %v3562 = vpack.c.b16 %v2378, %v2362
  %v3563 = vpack.c.b16 %v2379, %v2363
  %v3564 = vpack.c.b16 %v2396, %v2380
  %v3565 = vpack.c.b16 %v2397, %v2381
  %v3566 = vpack.c.b16 %v2398, %v2382
  %v3567 = vpack.c.b16 %v2399, %v2383
  %v3568 = vpack.c.b16 %v2400, %v2384
  %v3569 = vpack.c.b16 %v2401, %v2385
  %v3570 = vpack.c.b16 %v2402, %v2386
  %v3571 = vpack.c.b16 %v2403, %v2387
  %v3572 = vpack.c.b16 %v2404, %v2388
  %v3573 = vpack.c.b16 %v2405, %v2389
  %v3574 = vpack.c.b16 %v2406, %v2390
  %v3575 = vpack.c.b16 %v2407, %v2391
  %v3576 = vpack.c.b16 %v2408, %v2392
  %v3577 = vpack.c.b16 %v2409, %v2393
  %v3578 = vpack.c.b16 %v2410, %v2394
  %v3579 = vpack.c.b16 %v2411, %v2395
  %v3580 = vpack.c.b16 %v2428, %v2412
  %v3581 = vpack.c.b16 %v2429, %v2413
  %v3582 = vpack.c.b16 %v2430, %v2414
  %v3583 = vpack.c.b16 %v2431, %v2415
  %v3584 = vpack.c.b16 %v2432, %v2416
  %v3585 = vpack.c.b16 %v2433, %v2417
  %v3586 = vpack.c.b16 %v2434, %v2418
  %v3587 = vpack.c.b16 %v2435, %v2419
  %v3588 = vpack.c.b16 %v2436, %v2420
  %v3589 = vpack.c.b16 %v2437, %v2421
  %v3590 = vpack.c.b16 %v2438, %v2422
  %v3591 = vpack.c.b16 %v2439, %v2423
  %v3592 = vpack.c.b16 %v2440, %v2424
  %v3593 = vpack.c.b16 %v2441, %v2425
  %v3594 = vpack.c.b16 %v2442, %v2426
  %v3595 = vpack.c.b16 %v2443, %v2427
  %v3596 = vpack.c.b16 %v2460, %v2444
  %v3597 = vpack.c.b16 %v2461, %v2445
  %v3598 = vpack.c.b16 %v2462, %v2446
  %v3599 = vpack.c.b16 %v2463, %v2447
  %v3600 = vpack.c.b16 %v2464, %v2448
  %v3601 = vpack.c.b16 %v2465, %v2449
  %v3602 = vpack.c.b16 %v2466, %v2450
  %v3603 = vpack.c.b16 %v2467, %v2451
  %v3604 = vpack.c.b16 %v2468, %v2452
  %v3605 = vpack.c.b16 %v2469, %v2453
  %v3606 = vpack.c.b16 %v2470, %v2454
  %v3607 = vpack.c.b16 %v2471, %v2455
  %v3608 = vpack.c.b16 %v2472, %v2456
  %v3609 = vpack.c.b16 %v2473, %v2457
  %v3610 = vpack.c.b16 %v2474, %v2458
  %v3611 = vpack.c.b16 %v2475, %v2459
  %v3612 = vpack.c.b16 %v2492, %v2476
  %v3613 = vpack.c.b16 %v2493, %v2477
  %v3614 = vpack.c.b16 %v2494, %v2478
  %v3615 = vpack.c.b16 %v2495, %v2479
  %v3616 = vpack.c.b16 %v2496, %v2480
  %v3617 = vpack.c.b16 %v2497, %v2481
  %v3618 = vpack.c.b16 %v2498, %v2482
  %v3619 = vpack.c.b16 %v2499, %v2483
  %v3620 = vpack.c.b16 %v2500, %v2484
  %v3621 = vpack.c.b16 %v2501, %v2485
  %v3622 = vpack.c.b16 %v2502, %v2486
  %v3623 = vpack.c.b16 %v2503, %v2487
  %v3624 = vpack.c.b16 %v2504, %v2488
  %v3625 = vpack.c.b16 %v2505, %v2489
  %v3626 = vpack.c.b16 %v2506, %v2490
  %v3627 = vpack.c.b16 %v2507, %v2491
  %v3628 = vpack.c.b16 %v2524, %v2508
  %v3629 = vpack.c.b16 %v2525, %v2509
  %v3630 = vpack.c.b16 %v2526, %v2510
  %v3631 = vpack.c.b16 %v2527, %v2511
  %v3632 = vpack.c.b16 %v2528, %v2512
  %v3633 = vpack.c.b16 %v2529, %v2513
  %v3634 = vpack.c.b16 %v2530, %v2514
  %v3635 = vpack.c.b16 %v2531, %v2515
  %v3636 = vpack.c.b16 %v2532, %v2516
  %v3637 = vpack.c.b16 %v2533, %v2517
  %v3638 = vpack.c.b16 %v2534, %v2518
  %v3639 = vpack.c.b16 %v2535, %v2519
  %v3640 = vpack.c.b16 %v2536, %v2520
  %v3641 = vpack.c.b16 %v2537, %v2521
  %v3642 = vpack.c.b16 %v2538, %v2522
  %v3643 = vpack.c.b16 %v2539, %v2523
  %v3644 = vpack.c.b16 %v2556, %v2540
  %v3645 = vpack.c.b16 %v2557, %v2541
  %v3646 = vpack.c.b16 %v2558, %v2542
  %v3647 = vpack.c.b16 %v2559, %v2543
  %v3648 = vpack.c.b16 %v2560, %v2544
  %v3649 = vpack.c.b16 %v2561, %v2545
  %v3650 = vpack.c.b16 %v2562, %v2546
  %v3651 = vpack.c.b16 %v2563, %v2547
  %v3652 = vpack.c.b16 %v2564, %v2548
  %v3653 = vpack.c.b16 %v2565, %v2549
  %v3654 = vpack.c.b16 %v2566, %v2550
  %v3655 = vpack.c.b16 %v2567, %v2551
  %v3656 = vpack.c.b16 %v2568, %v2552
  %v3657 = vpack.c.b16 %v2569, %v2553
  %v3658 = vpack.c.b16 %v2570, %v2554
  %v3659 = vpack.c.b16 %v2571, %v2555
  %v3660 = vpack.c.b16 %v2588, %v2572
  %v3661 = vpack.c.b16 %v2589, %v2573
  %v3662 = vpack.c.b16 %v2590, %v2574
  %v3663 = vpack.c.b16 %v2591, %v2575
  %v3664 = vpack.c.b16 %v2592, %v2576
  %v3665 = vpack.c.b16 %v2593, %v2577
  %v3666 = vpack.c.b16 %v2594, %v2578
  %v3667 = vpack.c.b16 %v2595, %v2579
  %v3668 = vpack.c.b16 %v2596, %v2580
  %v3669 = vpack.c.b16 %v2597, %v2581
  %v3670 = vpack.c.b16 %v2598, %v2582
  %v3671 = vpack.c.b16 %v2599, %v2583
  %v3672 = vpack.c.b16 %v2600, %v2584
  %v3673 = vpack.c.b16 %v2601, %v2585
  %v3674 = vpack.c.b16 %v2602, %v2586
  %v3675 = vpack.c.b16 %v2603, %v2587
  %v3676 = vpack.c.b16 %v2620, %v2604
  %v3677 = vpack.c.b16 %v2621, %v2605
  %v3678 = vpack.c.b16 %v2622, %v2606
  %v3679 = vpack.c.b16 %v2623, %v2607
  %v3680 = vpack.c.b16 %v2624, %v2608
  %v3681 = vpack.c.b16 %v2625, %v2609
  %v3682 = vpack.c.b16 %v2626, %v2610
  %v3683 = vpack.c.b16 %v2627, %v2611
  %v3684 = vpack.c.b16 %v2628, %v2612
  %v3685 = vpack.c.b16 %v2629, %v2613
  %v3686 = vpack.c.b16 %v2630, %v2614
  %v3687 = vpack.c.b16 %v2631, %v2615
  %v3688 = vpack.c.b16 %v2632, %v2616
  %v3689 = vpack.c.b16 %v2633, %v2617
  %v3690 = vpack.c.b16 %v2634, %v2618
  %v3691 = vpack.c.b16 %v2635, %v2619
  %v3692 = vpack.c.b16 %v2652, %v2636
  %v3693 = vpack.c.b16 %v2653, %v2637
  %v3694 = vpack.c.b16 %v2654, %v2638
  %v3695 = vpack.c.b16 %v2655, %v2639
  %v3696 = vpack.c.b16 %v2656, %v2640
  %v3697 = vpack.c.b16 %v2657, %v2641
  %v3698 = vpack.c.b16 %v2658, %v2642
  %v3699 = vpack.c.b16 %v2659, %v2643
  %v3700 = vpack.c.b16 %v2660, %v2644
  %v3701 = vpack.c.b16 %v2661, %v2645
  %v3702 = vpack.c.b16 %v2662, %v2646
  %v3703 = vpack.c.b16 %v2663, %v2647
  %v3704 = vpack.c.b16 %v2664, %v2648
  %v3705 = vpack.c.b16 %v2665, %v2649
  %v3706 = vpack.c.b16 %v2666, %v2650
  %v3707 = vpack.c.b16 %v2667, %v2651
  %v3708 = vpack.c.b16 %v2684, %v2668
  %v3709 = vpack.c.b16 %v2685, %v2669
  %v3710 = vpack.c.b16 %v2686, %v2670
  %v3711 = vpack.c.b16 %v2687, %v2671
  %v3712 = vpack.c.b16 %v2688, %v2672
  %v3713 = vpack.c.b16 %v2689, %v2673
  %v3714 = vpack.c.b16 %v2690, %v2674
  %v3715 = vpack.c.b16 %v2691, %v2675
  %v3716 = vpack.c.b16 %v2692, %v2676
  %v3717 = vpack.c.b16 %v2693, %v2677
  %v3718 = vpack.c.b16 %v2694, %v2678
  %v3719 = vpack.c.b16 %v2695, %v2679
  %v3720 = vpack.c.b16 %v2696, %v2680
  %v3721 = vpack.c.b16 %v2697, %v2681
  %v3722 = vpack.c.b16 %v2698, %v2682
  %v3723 = vpack.c.b16 %v2699, %v2683
  %v3724 = vpack.c.b16 %v2716, %v2700
  %v3725 = vpack.c.b16 %v2717, %v2701
  %v3726 = vpack.c.b16 %v2718, %v2702
  %v3727 = vpack.c.b16 %v2719, %v2703
  %v3728 = vpack.c.b16 %v2720, %v2704
  %v3729 = vpack.c.b16 %v2721, %v2705
  %v3730 = vpack.c.b16 %v2722, %v2706
  %v3731 = vpack.c.b16 %v2723, %v2707
  %v3732 = vpack.c.b16 %v2724, %v2708
  %v3733 = vpack.c.b16 %v2725, %v2709
  %v3734 = vpack.c.b16 %v2726, %v2710
  %v3735 = vpack.c.b16 %v2727, %v2711
  %v3736 = vpack.c.b16 %v2728, %v2712
  %v3737 = vpack.c.b16 %v2729, %v2713
  %v3738 = vpack.c.b16 %v2730, %v2714
  %v3739 = vpack.c.b16 %v2731, %v2715
  %v3740 = vpack.c.b16 %v2748, %v2732
  %v3741 = vpack.c.b16 %v2749, %v2733
  %v3742 = vpack.c.b16 %v2750, %v2734
  %v3743 = vpack.c.b16 %v2751, %v2735
  %v3744 = vpack.c.b16 %v2752, %v2736
  %v3745 = vpack.c.b16 %v2753, %v2737
  %v3746 = vpack.c.b16 %v2754, %v2738
  %v3747 = vpack.c.b16 %v2755, %v2739
  %v3748 = vpack.c.b16 %v2756, %v2740
  %v3749 = vpack.c.b16 %v2757, %v2741
  %v3750 = vpack.c.b16 %v2758, %v2742
  %v3751 = vpack.c.b16 %v2759, %v2743
  %v3752 = vpack.c.b16 %v2760, %v2744
  %v3753 = vpack.c.b16 %v2761, %v2745
  %v3754 = vpack.c.b16 %v2762, %v2746
  %v3755 = vpack.c.b16 %v2763, %v2747
  %v3756 = vpack.c.b16 %v2780, %v2764
  %v3757 = vpack.c.b16 %v2781, %v2765
  %v3758 = vpack.c.b16 %v2782, %v2766
  %v3759 = vpack.c.b16 %v2783, %v2767
  %v3760 = vpack.c.b16 %v2784, %v2768
  %v3761 = vpack.c.b16 %v2785, %v2769
  %v3762 = vpack.c.b16 %v2786, %v2770
  %v3763 = vpack.c.b16 %v2787, %v2771
  %v3764 = vpack.c.b16 %v2788, %v2772
  %v3765 = vpack.c.b16 %v2789, %v2773
  %v3766 = vpack.c.b16 %v2790, %v2774
  %v3767 = vpack.c.b16 %v2791, %v2775
  %v3768 = vpack.c.b16 %v2792, %v2776
  %v3769 = vpack.c.b16 %v2793, %v2777
  %v3770 = vpack.c.b16 %v2794, %v2778
  %v3771 = vpack.c.b16 %v2795, %v2779
  %v3772 = vpack.c.b16 %v2812, %v2796
  %v3773 = vpack.c.b16 %v2813, %v2797
  %v3774 = vpack.c.b16 %v2814, %v2798
  %v3775 = vpack.c.b16 %v2815, %v2799
  %v3776 = vpack.c.b16 %v2816, %v2800
  %v3777 = vpack.c.b16 %v2817, %v2801
  %v3778 = vpack.c.b16 %v2818, %v2802
  %v3779 = vpack.c.b16 %v2819, %v2803
  %v3780 = vpack.c.b16 %v2820, %v2804
  %v3781 = vpack.c.b16 %v2821, %v2805
  %v3782 = vpack.c.b16 %v2822, %v2806
  %v3783 = vpack.c.b16 %v2823, %v2807
  %v3784 = vpack.c.b16 %v2824, %v2808
  %v3785 = vpack.c.b16 %v2825, %v2809
  %v3786 = vpack.c.b16 %v2826, %v2810
  %v3787 = vpack.c.b16 %v2827, %v2811
  %v3788 = vpack.c.b16 %v2844, %v2828
  %v3789 = vpack.c.b16 %v2845, %v2829
  %v3790 = vpack.c.b16 %v2846, %v2830
  %v3791 = vpack.c.b16 %v2847, %v2831
  %v3792 = vpack.c.b16 %v2848, %v2832
  %v3793 = vpack.c.b16 %v2849, %v2833
  %v3794 = vpack.c.b16 %v2850, %v2834
  %v3795 = vpack.c.b16 %v2851, %v2835
  %v3796 = vpack.c.b16 %v2852, %v2836
  %v3797 = vpack.c.b16 %v2853, %v2837
  %v3798 = vpack.c.b16 %v2854, %v2838
  %v3799 = vpack.c.b16 %v2855, %v2839
  %v3800 = vpack.c.b16 %v2856, %v2840
  %v3801 = vpack.c.b16 %v2857, %v2841
  %v3802 = vpack.c.b16 %v2858, %v2842
  %v3803 = vpack.c.b16 %v2859, %v2843
  %v3804 = vpack.c.b16 %v2876, %v2860
  %v3805 = vpack.c.b16 %v2877, %v2861
  %v3806 = vpack.c.b16 %v2878, %v2862
  %v3807 = vpack.c.b16 %v2879, %v2863
  %v3808 = vpack.c.b16 %v2880, %v2864
  %v3809 = vpack.c.b16 %v2881, %v2865
  %v3810 = vpack.c.b16 %v2882, %v2866
  %v3811 = vpack.c.b16 %v2883, %v2867
  %v3812 = vpack.c.b16 %v2884, %v2868
  %v3813 = vpack.c.b16 %v2885, %v2869
  %v3814 = vpack.c.b16 %v2886, %v2870
  %v3815 = vpack.c.b16 %v2887, %v2871
  %v3816 = vpack.c.b16 %v2888, %v2872
  %v3817 = vpack.c.b16 %v2889, %v2873
  %v3818 = vpack.c.b16 %v2890, %v2874
  %v3819 = vpack.c.b16 %v2891, %v2875
  %v3820 = vpack.c.b16 %v2908, %v2892
  %v3821 = vpack.c.b16 %v2909, %v2893
  %v3822 = vpack.c.b16 %v2910, %v2894
  %v3823 = vpack.c.b16 %v2911, %v2895
  %v3824 = vpack.c.b16 %v2912, %v2896
  %v3825 = vpack.c.b16 %v2913, %v2897
  %v3826 = vpack.c.b16 %v2914, %v2898
  %v3827 = vpack.c.b16 %v2915, %v2899
  %v3828 = vpack.c.b16 %v2916, %v2900
  %v3829 = vpack.c.b16 %v2917, %v2901
  %v3830 = vpack.c.b16 %v2918, %v2902
  %v3831 = vpack.c.b16 %v2919, %v2903
  %v3832 = vpack.c.b16 %v2920, %v2904
  %v3833 = vpack.c.b16 %v2921, %v2905
  %v3834 = vpack.c.b16 %v2922, %v2906
  %v3835 = vpack.c.b16 %v2923, %v2907
  %v3836 = vpack.c.b16 %v2940, %v2924
  %v3837 = vpack.c.b16 %v2941, %v2925
  %v3838 = vpack.c.b16 %v2942, %v2926
  %v3839 = vpack.c.b16 %v2943, %v2927
  %v3840 = vpack.c.b16 %v2944, %v2928
  %v3841 = vpack.c.b16 %v2945, %v2929
  %v3842 = vpack.c.b16 %v2946, %v2930
  %v3843 = vpack.c.b16 %v2947, %v2931
  %v3844 = vpack.c.b16 %v2948, %v2932
  %v3845 = vpack.c.b16 %v2949, %v2933
  %v3846 = vpack.c.b16 %v2950, %v2934
  %v3847 = vpack.c.b16 %v2951, %v2935
  %v3848 = vpack.c.b16 %v2952, %v2936
  %v3849 = vpack.c.b16 %v2953, %v2937
  %v3850 = vpack.c.b16 %v2954, %v2938
  %v3851 = vpack.c.b16 %v2955, %v2939
  %v3852 = vpack.c.b16 %v2972, %v2956
  %v3853 = vpack.c.b16 %v2973, %v2957
  %v3854 = vpack.c.b16 %v2974, %v2958
  %v3855 = vpack.c.b16 %v2975, %v2959
  %v3856 = vpack.c.b16 %v2976, %v2960
  %v3857 = vpack.c.b16 %v2977, %v2961
  %v3858 = vpack.c.b16 %v2978, %v2962
  %v3859 = vpack.c.b16 %v2979, %v2963
  %v3860 = vpack.c.b16 %v2980, %v2964
  %v3861 = vpack.c.b16 %v2981, %v2965
  %v3862 = vpack.c.b16 %v2982, %v2966
  %v3863 = vpack.c.b16 %v2983, %v2967
  %v3864 = vpack.c.b16 %v2984, %v2968
  %v3865 = vpack.c.b16 %v2985, %v2969
  %v3866 = vpack.c.b16 %v2986, %v2970
  %v3867 = vpack.c.b16 %v2987, %v2971
  %v3868 = vpack.c.b16 %v3004, %v2988
  %v3869 = vpack.c.b16 %v3005, %v2989
  %v3870 = vpack.c.b16 %v3006, %v2990
  %v3871 = vpack.c.b16 %v3007, %v2991
  %v3872 = vpack.c.b16 %v3008, %v2992
  %v3873 = vpack.c.b16 %v3009, %v2993
  %v3874 = vpack.c.b16 %v3010, %v2994
  %v3875 = vpack.c.b16 %v3011, %v2995
  %v3876 = vpack.c.b16 %v3012, %v2996
  %v3877 = vpack.c.b16 %v3013, %v2997
  %v3878 = vpack.c.b16 %v3014, %v2998
  %v3879 = vpack.c.b16 %v3015, %v2999
  %v3880 = vpack.c.b16 %v3016, %v3000
  %v3881 = vpack.c.b16 %v3017, %v3001
  %v3882 = vpack.c.b16 %v3018, %v3002
  %v3883 = vpack.c.b16 %v3019, %v3003
  %v3884 = vpack.c.b16 %v3036, %v3020
  %v3885 = vpack.c.b16 %v3037, %v3021
  %v3886 = vpack.c.b16 %v3038, %v3022
  %v3887 = vpack.c.b16 %v3039, %v3023
  %v3888 = vpack.c.b16 %v3040, %v3024
  %v3889 = vpack.c.b16 %v3041, %v3025
  %v3890 = vpack.c.b16 %v3042, %v3026
  %v3891 = vpack.c.b16 %v3043, %v3027
  %v3892 = vpack.c.b16 %v3044, %v3028
  %v3893 = vpack.c.b16 %v3045, %v3029
  %v3894 = vpack.c.b16 %v3046, %v3030
  %v3895 = vpack.c.b16 %v3047, %v3031
  %v3896 = vpack.c.b16 %v3048, %v3032
  %v3897 = vpack.c.b16 %v3049, %v3033
  %v3898 = vpack.c.b16 %v3050, %v3034
  %v3899 = vpack.c.b16 %v3051, %v3035
  %v3900 = vpack.c.b16 %v3068, %v3052
  %v3901 = vpack.c.b16 %v3069, %v3053
  %v3902 = vpack.c.b16 %v3070, %v3054
  %v3903 = vpack.c.b16 %v3071, %v3055
  %v3904 = vpack.c.b16 %v3072, %v3056
  %v3905 = vpack.c.b16 %v3073, %v3057
  %v3906 = vpack.c.b16 %v3074, %v3058
  %v3907 = vpack.c.b16 %v3075, %v3059
  %v3908 = vpack.c.b16 %v3076, %v3060
  %v3909 = vpack.c.b16 %v3077, %v3061
  %v3910 = vpack.c.b16 %v3078, %v3062
  %v3911 = vpack.c.b16 %v3079, %v3063
  %v3912 = vpack.c.b16 %v3080, %v3064
  %v3913 = vpack.c.b16 %v3081, %v3065
  %v3914 = vpack.c.b16 %v3082, %v3066
  %v3915 = vpack.c.b16 %v3083, %v3067
  %v3916 = vpack.c.b16 %v3100, %v3084
  %v3917 = vpack.c.b16 %v3101, %v3085
  %v3918 = vpack.c.b16 %v3102, %v3086
  %v3919 = vpack.c.b16 %v3103, %v3087
  %v3920 = vpack.c.b16 %v3104, %v3088
  %v3921 = vpack.c.b16 %v3105, %v3089
  %v3922 = vpack.c.b16 %v3106, %v3090
  %v3923 = vpack.c.b16 %v3107, %v3091
  %v3924 = vpack.c.b16 %v3108, %v3092
  %v3925 = vpack.c.b16 %v3109, %v3093
  %v3926 = vpack.c.b16 %v3110, %v3094
  %v3927 = vpack.c.b16 %v3111, %v3095
  %v3928 = vpack.c.b16 %v3112, %v3096
  %v3929 = vpack.c.b16 %v3113, %v3097
  %v3930 = vpack.c.b16 %v3114, %v3098
  %v3931 = vpack.c.b16 %v3115, %v3099
  %v3932 = vpack.c.b16 %v3132, %v3116
  %v3933 = vpack.c.b16 %v3133, %v3117
  %v3934 = vpack.c.b16 %v3134, %v3118
  %v3935 = vpack.c.b16 %v3135, %v3119
  %v3936 = vpack.c.b16 %v3136, %v3120
  %v3937 = vpack.c.b16 %v3137, %v3121
  %v3938 = vpack.c.b16 %v3138, %v3122
  %v3939 = vpack.c.b16 %v3139, %v3123
  %v3940 = vpack.c.b16 %v3140, %v3124
  %v3941 = vpack.c.b16 %v3141, %v3125
  %v3942 = vpack.c.b16 %v3142, %v3126
  %v3943 = vpack.c.b16 %v3143, %v3127
  %v3944 = vpack.c.b16 %v3144, %v3128
  %v3945 = vpack.c.b16 %v3145, %v3129
  %v3946 = vpack.c.b16 %v3146, %v3130
  %v3947 = vpack.c.b16 %v3147, %v3131
  %v3948 = vpack.c.b16 %v3164, %v3148
  %v3949 = vpack.c.b16 %v3165, %v3149
  %v3950 = vpack.c.b16 %v3166, %v3150
  %v3951 = vpack.c.b16 %v3167, %v3151
  %v3952 = vpack.c.b16 %v3168, %v3152
  %v3953 = vpack.c.b16 %v3169, %v3153
  %v3954 = vpack.c.b16 %v3170, %v3154
  %v3955 = vpack.c.b16 %v3171, %v3155
  %v3956 = vpack.c.b16 %v3172, %v3156
  %v3957 = vpack.c.b16 %v3173, %v3157
  %v3958 = vpack.c.b16 %v3174, %v3158
  %v3959 = vpack.c.b16 %v3175, %v3159
  %v3960 = vpack.c.b16 %v3176, %v3160
  %v3961 = vpack.c.b16 %v3177, %v3161
  %v3962 = vpack.c.b16 %v3178, %v3162
  %v3963 = vpack.c.b16 %v3179, %v3163
  %v3964 = vpack.c.b16 %v3196, %v3180
  %v3965 = vpack.c.b16 %v3197, %v3181
  %v3966 = vpack.c.b16 %v3198, %v3182
  %v3967 = vpack.c.b16 %v3199, %v3183
  %v3968 = vpack.c.b16 %v3200, %v3184
  %v3969 = vpack.c.b16 %v3201, %v3185
  %v3970 = vpack.c.b16 %v3202, %v3186
  %v3971 = vpack.c.b16 %v3203, %v3187
  %v3972 = vpack.c.b16 %v3204, %v3188
  %v3973 = vpack.c.b16 %v3205, %v3189
  %v3974 = vpack.c.b16 %v3206, %v3190
  %v3975 = vpack.c.b16 %v3207, %v3191
  %v3976 = vpack.c.b16 %v3208, %v3192
  %v3977 = vpack.c.b16 %v3209, %v3193
  %v3978 = vpack.c.b16 %v3210, %v3194
  %v3979 = vpack.c.b16 %v3211, %v3195
  %4748 = vmatprep.subr.bf16.mxu0 %v3213
  %4749 = vmatpush1.bf16.msra.mxu0 %v3212
  %4750 = vmatprep.subr.bf16.mxu0 %v3229
  %4751 = vmatpush1.bf16.msra.mxu0 %v3228
  %4752 = vmatprep.subr.bf16.mxu0 %v3245
  %4753 = vmatpush1.bf16.msra.mxu0 %v3244
  %4754 = vmatprep.subr.bf16.mxu0 %v3261
  %4755 = vmatpush1.bf16.msra.mxu0 %v3260
  %4756 = vmatprep.subr.bf16.mxu0 %v3277
  %4757 = vmatpush1.bf16.msra.mxu0 %v3276
  %4758 = vmatprep.subr.bf16.mxu0 %v3293
  %4759 = vmatpush1.bf16.msra.mxu0 %v3292
  %4760 = vmatprep.subr.bf16.mxu0 %v3309
  %4761 = vmatpush1.bf16.msra.mxu0 %v3308
  %4762 = vmatprep.subr.bf16.mxu0 %v3325
  %4763 = vmatpush1.bf16.msra.mxu0 %v3324
  %4764 = vmatprep.subr.bf16.mxu0 %v3341
  %4765 = vmatpush1.bf16.msra.mxu0 %v3340
  %4766 = vmatprep.subr.bf16.mxu0 %v3357
  %4767 = vmatpush1.bf16.msra.mxu0 %v3356
  %4768 = vmatprep.subr.bf16.mxu0 %v3373
  %4769 = vmatpush1.bf16.msra.mxu0 %v3372
  %4770 = vmatprep.subr.bf16.mxu0 %v3389
  %4771 = vmatpush1.bf16.msra.mxu0 %v3388
  %4772 = vmatprep.subr.bf16.mxu0 %v3405
  %4773 = vmatpush1.bf16.msra.mxu0 %v3404
  %4774 = vmatprep.subr.bf16.mxu0 %v3421
  %4775 = vmatpush1.bf16.msra.mxu0 %v3420
  %4776 = vmatprep.subr.bf16.mxu0 %v3437
  %4777 = vmatpush1.bf16.msra.mxu0 %v3436
  %4778 = vmatprep.subr.bf16.mxu0 %v3453
  %4779 = vmatpush1.bf16.msra.mxu0 %v3452
  %4780 = vmatprep.mubr.bf16.mxu0 %v897
  %4781 = vmatmul.mubr.bf16.gmra.mrb[0].mxu0 %v896
  %v4782 = vpop.f32.mrb[0].mxu0
  %v4783 = vadd.f32 %v810, %v4782
  %v4784 = vpop.f32.mrb[0].mxu0
  %v4785 = vadd.f32 %v814, %v4784
  %v4786 = vpop.f32.mrb[0].mxu0
  %v4787 = vpop.f32.mrb[0].mxu0
  %4788 = vdwg.mxu0
  %4789 = vmatprep.subr.bf16.mxu0 %v3469
  %4790 = vmatpush1.bf16.msra.mxu0 %v3468
  %4791 = vmatprep.subr.bf16.mxu0 %v3485
  %4792 = vmatpush1.bf16.msra.mxu0 %v3484
  %4793 = vmatprep.subr.bf16.mxu0 %v3501
  %4794 = vmatpush1.bf16.msra.mxu0 %v3500
  %4795 = vmatprep.subr.bf16.mxu0 %v3517
  %4796 = vmatpush1.bf16.msra.mxu0 %v3516
  %4797 = vmatprep.subr.bf16.mxu0 %v3533
  %4798 = vmatpush1.bf16.msra.mxu0 %v3532
  %4799 = vmatprep.subr.bf16.mxu0 %v3549
  %4800 = vmatpush1.bf16.msra.mxu0 %v3548
  %4801 = vmatprep.subr.bf16.mxu0 %v3565
  %4802 = vmatpush1.bf16.msra.mxu0 %v3564
  %4803 = vmatprep.subr.bf16.mxu0 %v3581
  %4804 = vmatpush1.bf16.msra.mxu0 %v3580
  %4805 = vmatprep.subr.bf16.mxu0 %v3597
  %4806 = vmatpush1.bf16.msra.mxu0 %v3596
  %4807 = vmatprep.subr.bf16.mxu0 %v3613
  %4808 = vmatpush1.bf16.msra.mxu0 %v3612
  %4809 = vmatprep.subr.bf16.mxu0 %v3629
  %4810 = vmatpush1.bf16.msra.mxu0 %v3628
  %4811 = vmatprep.subr.bf16.mxu0 %v3645
  %4812 = vmatpush1.bf16.msra.mxu0 %v3644
  %4813 = vmatprep.subr.bf16.mxu0 %v3661
  %4814 = vmatpush1.bf16.msra.mxu0 %v3660
  %4815 = vmatprep.subr.bf16.mxu0 %v3677
  %4816 = vmatpush1.bf16.msra.mxu0 %v3676
  %4817 = vmatprep.subr.bf16.mxu0 %v3693
  %4818 = vmatpush1.bf16.msra.mxu0 %v3692
  %4819 = vmatprep.subr.bf16.mxu0 %v3709
  %4820 = vmatpush1.bf16.msra.mxu0 %v3708
  %4821 = vmatprep.mubr.bf16.mxu0 %v899
  %4822 = vmatmul.mubr.bf16.gmra.mrb[0].mxu0 %v898
  %v4823 = vpop.f32.mrb[0].mxu0
  %v4824 = vadd.f32 %v4783, %v4823
  %v4825 = vpop.f32.mrb[0].mxu0
  %v4826 = vadd.f32 %v4785, %v4825
  %v4827 = vpop.f32.mrb[0].mxu0
  %v4828 = vpop.f32.mrb[0].mxu0
  %4829 = vdwg.mxu0
  %4830 = vmatprep.subr.bf16.mxu0 %v3725
  %4831 = vmatpush1.bf16.msra.mxu0 %v3724
  %4832 = vmatprep.subr.bf16.mxu0 %v3741
  %4833 = vmatpush1.bf16.msra.mxu0 %v3740
  %4834 = vmatprep.subr.bf16.mxu0 %v3757
  %4835 = vmatpush1.bf16.msra.mxu0 %v3756
  %4836 = vmatprep.subr.bf16.mxu0 %v3773
  %4837 = vmatpush1.bf16.msra.mxu0 %v3772
  %4838 = vmatprep.subr.bf16.mxu0 %v3789
  %4839 = vmatpush1.bf16.msra.mxu0 %v3788
  %4840 = vmatprep.subr.bf16.mxu0 %v3805
  %4841 = vmatpush1.bf16.msra.mxu0 %v3804
  %4842 = vmatprep.subr.bf16.mxu0 %v3821
  %4843 = vmatpush1.bf16.msra.mxu0 %v3820
  %4844 = vmatprep.subr.bf16.mxu0 %v3837
  %4845 = vmatpush1.bf16.msra.mxu0 %v3836
  %4846 = vmatprep.subr.bf16.mxu0 %v3853
  %4847 = vmatpush1.bf16.msra.mxu0 %v3852
  %4848 = vmatprep.subr.bf16.mxu0 %v3869
  %4849 = vmatpush1.bf16.msra.mxu0 %v3868
  %4850 = vmatprep.subr.bf16.mxu0 %v3885
  %4851 = vmatpush1.bf16.msra.mxu0 %v3884
  %4852 = vmatprep.subr.bf16.mxu0 %v3901
  %4853 = vmatpush1.bf16.msra.mxu0 %v3900
  %4854 = vmatprep.subr.bf16.mxu0 %v3917
  %4855 = vmatpush1.bf16.msra.mxu0 %v3916
  %4856 = vmatprep.subr.bf16.mxu0 %v3933
  %4857 = vmatpush1.bf16.msra.mxu0 %v3932
  %4858 = vmatprep.subr.bf16.mxu0 %v3949
  %4859 = vmatpush1.bf16.msra.mxu0 %v3948
  %4860 = vmatprep.subr.bf16.mxu0 %v3965
  %4861 = vmatpush1.bf16.msra.mxu0 %v3964
  %4862 = vmatprep.mubr.bf16.mxu0 %v901
  %4863 = vmatmul.mubr.bf16.gmra.mrb[0].mxu0 %v900
  %v4864 = vpop.f32.mrb[0].mxu0
  %v4865 = vadd.f32 %v4824, %v4864
  %v4866 = vpop.f32.mrb[0].mxu0
  %v4867 = vadd.f32 %v4826, %v4866
  %v4868 = vpop.f32.mrb[0].mxu0
  %v4869 = vpop.f32.mrb[0].mxu0
  %4870 = vdwg.mxu0
  %4871 = vmatprep.subr.bf16.mxu0 %v3215
  %4872 = vmatpush1.bf16.msra.mxu0 %v3214
  %4873 = vmatprep.subr.bf16.mxu0 %v3231
  %4874 = vmatpush1.bf16.msra.mxu0 %v3230
  %4875 = vmatprep.subr.bf16.mxu0 %v3247
  %4876 = vmatpush1.bf16.msra.mxu0 %v3246
  %4877 = vmatprep.subr.bf16.mxu0 %v3263
  %4878 = vmatpush1.bf16.msra.mxu0 %v3262
  %4879 = vmatprep.subr.bf16.mxu0 %v3279
  %4880 = vmatpush1.bf16.msra.mxu0 %v3278
  %4881 = vmatprep.subr.bf16.mxu0 %v3295
  %4882 = vmatpush1.bf16.msra.mxu0 %v3294
  %4883 = vmatprep.subr.bf16.mxu0 %v3311
  %4884 = vmatpush1.bf16.msra.mxu0 %v3310
  %4885 = vmatprep.subr.bf16.mxu0 %v3327
  %4886 = vmatpush1.bf16.msra.mxu0 %v3326
  %4887 = vmatprep.subr.bf16.mxu0 %v3343
  %4888 = vmatpush1.bf16.msra.mxu0 %v3342
  %4889 = vmatprep.subr.bf16.mxu0 %v3359
  %4890 = vmatpush1.bf16.msra.mxu0 %v3358
  %4891 = vmatprep.subr.bf16.mxu0 %v3375
  %4892 = vmatpush1.bf16.msra.mxu0 %v3374
  %4893 = vmatprep.subr.bf16.mxu0 %v3391
  %4894 = vmatpush1.bf16.msra.mxu0 %v3390
  %4895 = vmatprep.subr.bf16.mxu0 %v3407
  %4896 = vmatpush1.bf16.msra.mxu0 %v3406
  %4897 = vmatprep.subr.bf16.mxu0 %v3423
  %4898 = vmatpush1.bf16.msra.mxu0 %v3422
  %4899 = vmatprep.subr.bf16.mxu0 %v3439
  %4900 = vmatpush1.bf16.msra.mxu0 %v3438
  %4901 = vmatprep.subr.bf16.mxu0 %v3455
  %4902 = vmatpush1.bf16.msra.mxu0 %v3454
  %4903 = vmatprep.mubr.bf16.mxu0 %v897
  %4904 = vmatmul.mubr.bf16.gmra.mrb[0].mxu0 %v896
  %v4905 = vpop.f32.mrb[0].mxu0
  %v4906 = vadd.f32 %v818, %v4905
  %v4907 = vpop.f32.mrb[0].mxu0
  %v4908 = vadd.f32 %v822, %v4907
  %v4909 = vpop.f32.mrb[0].mxu0
  %v4910 = vpop.f32.mrb[0].mxu0
  %4911 = vdwg.mxu0
  %4912 = vmatprep.subr.bf16.mxu0 %v3471
  %4913 = vmatpush1.bf16.msra.mxu0 %v3470
  %4914 = vmatprep.subr.bf16.mxu0 %v3487
  %4915 = vmatpush1.bf16.msra.mxu0 %v3486
  %4916 = vmatprep.subr.bf16.mxu0 %v3503
  %4917 = vmatpush1.bf16.msra.mxu0 %v3502
  %4918 = vmatprep.subr.bf16.mxu0 %v3519
  %4919 = vmatpush1.bf16.msra.mxu0 %v3518
  %4920 = vmatprep.subr.bf16.mxu0 %v3535
  %4921 = vmatpush1.bf16.msra.mxu0 %v3534
  %4922 = vmatprep.subr.bf16.mxu0 %v3551
  %4923 = vmatpush1.bf16.msra.mxu0 %v3550
  %4924 = vmatprep.subr.bf16.mxu0 %v3567
  %4925 = vmatpush1.bf16.msra.mxu0 %v3566
  %4926 = vmatprep.subr.bf16.mxu0 %v3583
  %4927 = vmatpush1.bf16.msra.mxu0 %v3582
  %4928 = vmatprep.subr.bf16.mxu0 %v3599
  %4929 = vmatpush1.bf16.msra.mxu0 %v3598
  %4930 = vmatprep.subr.bf16.mxu0 %v3615
  %4931 = vmatpush1.bf16.msra.mxu0 %v3614
  %4932 = vmatprep.subr.bf16.mxu0 %v3631
  %4933 = vmatpush1.bf16.msra.mxu0 %v3630
  %4934 = vmatprep.subr.bf16.mxu0 %v3647
  %4935 = vmatpush1.bf16.msra.mxu0 %v3646
  %4936 = vmatprep.subr.bf16.mxu0 %v3663
  %4937 = vmatpush1.bf16.msra.mxu0 %v3662
  %4938 = vmatprep.subr.bf16.mxu0 %v3679
  %4939 = vmatpush1.bf16.msra.mxu0 %v3678
  %4940 = vmatprep.subr.bf16.mxu0 %v3695
  %4941 = vmatpush1.bf16.msra.mxu0 %v3694
  %4942 = vmatprep.subr.bf16.mxu0 %v3711
  %4943 = vmatpush1.bf16.msra.mxu0 %v3710
  %4944 = vmatprep.mubr.bf16.mxu0 %v899
  %4945 = vmatmul.mubr.bf16.gmra.mrb[0].mxu0 %v898
  %v4946 = vpop.f32.mrb[0].mxu0
  %v4947 = vadd.f32 %v4906, %v4946
  %v4948 = vpop.f32.mrb[0].mxu0
  %v4949 = vadd.f32 %v4908, %v4948
  %v4950 = vpop.f32.mrb[0].mxu0
  %v4951 = vpop.f32.mrb[0].mxu0
  %4952 = vdwg.mxu0
  %4953 = vmatprep.subr.bf16.mxu0 %v3727
  %4954 = vmatpush1.bf16.msra.mxu0 %v3726
  %4955 = vmatprep.subr.bf16.mxu0 %v3743
  %4956 = vmatpush1.bf16.msra.mxu0 %v3742
  %4957 = vmatprep.subr.bf16.mxu0 %v3759
  %4958 = vmatpush1.bf16.msra.mxu0 %v3758
  %4959 = vmatprep.subr.bf16.mxu0 %v3775
  %4960 = vmatpush1.bf16.msra.mxu0 %v3774
  %4961 = vmatprep.subr.bf16.mxu0 %v3791
  %4962 = vmatpush1.bf16.msra.mxu0 %v3790
  %4963 = vmatprep.subr.bf16.mxu0 %v3807
  %4964 = vmatpush1.bf16.msra.mxu0 %v3806
  %4965 = vmatprep.subr.bf16.mxu0 %v3823
  %4966 = vmatpush1.bf16.msra.mxu0 %v3822
  %4967 = vmatprep.subr.bf16.mxu0 %v3839
  %4968 = vmatpush1.bf16.msra.mxu0 %v3838
  %4969 = vmatprep.subr.bf16.mxu0 %v3855
  %4970 = vmatpush1.bf16.msra.mxu0 %v3854
  %4971 = vmatprep.subr.bf16.mxu0 %v3871
  %4972 = vmatpush1.bf16.msra.mxu0 %v3870
  %4973 = vmatprep.subr.bf16.mxu0 %v3887
  %4974 = vmatpush1.bf16.msra.mxu0 %v3886
  %4975 = vmatprep.subr.bf16.mxu0 %v3903
  %4976 = vmatpush1.bf16.msra.mxu0 %v3902
  %4977 = vmatprep.subr.bf16.mxu0 %v3919
  %4978 = vmatpush1.bf16.msra.mxu0 %v3918
  %4979 = vmatprep.subr.bf16.mxu0 %v3935
  %4980 = vmatpush1.bf16.msra.mxu0 %v3934
  %4981 = vmatprep.subr.bf16.mxu0 %v3951
  %4982 = vmatpush1.bf16.msra.mxu0 %v3950
  %4983 = vmatprep.subr.bf16.mxu0 %v3967
  %4984 = vmatpush1.bf16.msra.mxu0 %v3966
  %4985 = vmatprep.mubr.bf16.mxu0 %v901
  %4986 = vmatmul.mubr.bf16.gmra.mrb[0].mxu0 %v900
  %v4987 = vpop.f32.mrb[0].mxu0
  %v4988 = vadd.f32 %v4947, %v4987
  %v4989 = vpop.f32.mrb[0].mxu0
  %v4990 = vadd.f32 %v4949, %v4989
  %v4991 = vpop.f32.mrb[0].mxu0
  %v4992 = vpop.f32.mrb[0].mxu0
  %4993 = vdwg.mxu0
  %4994 = vmatprep.subr.bf16.mxu0 %v3217
  %4995 = vmatpush1.bf16.msra.mxu0 %v3216
  %4996 = vmatprep.subr.bf16.mxu0 %v3233
  %4997 = vmatpush1.bf16.msra.mxu0 %v3232
  %4998 = vmatprep.subr.bf16.mxu0 %v3249
  %4999 = vmatpush1.bf16.msra.mxu0 %v3248
  %5000 = vmatprep.subr.bf16.mxu0 %v3265
  %5001 = vmatpush1.bf16.msra.mxu0 %v3264
  %5002 = vmatprep.subr.bf16.mxu0 %v3281
  %5003 = vmatpush1.bf16.msra.mxu0 %v3280
  %5004 = vmatprep.subr.bf16.mxu0 %v3297
  %5005 = vmatpush1.bf16.msra.mxu0 %v3296
  %5006 = vmatprep.subr.bf16.mxu0 %v3313
  %5007 = vmatpush1.bf16.msra.mxu0 %v3312
  %5008 = vmatprep.subr.bf16.mxu0 %v3329
  %5009 = vmatpush1.bf16.msra.mxu0 %v3328
  %5010 = vmatprep.subr.bf16.mxu0 %v3345
  %5011 = vmatpush1.bf16.msra.mxu0 %v3344
  %5012 = vmatprep.subr.bf16.mxu0 %v3361
  %5013 = vmatpush1.bf16.msra.mxu0 %v3360
  %5014 = vmatprep.subr.bf16.mxu0 %v3377
  %5015 = vmatpush1.bf16.msra.mxu0 %v3376
  %5016 = vmatprep.subr.bf16.mxu0 %v3393
  %5017 = vmatpush1.bf16.msra.mxu0 %v3392
  %5018 = vmatprep.subr.bf16.mxu0 %v3409
  %5019 = vmatpush1.bf16.msra.mxu0 %v3408
  %5020 = vmatprep.subr.bf16.mxu0 %v3425
  %5021 = vmatpush1.bf16.msra.mxu0 %v3424
  %5022 = vmatprep.subr.bf16.mxu0 %v3441
  %5023 = vmatpush1.bf16.msra.mxu0 %v3440
  %5024 = vmatprep.subr.bf16.mxu0 %v3457
  %5025 = vmatpush1.bf16.msra.mxu0 %v3456
  %5026 = vmatprep.mubr.bf16.mxu0 %v897
  %5027 = vmatmul.mubr.bf16.gmra.mrb[0].mxu0 %v896
  %v5028 = vpop.f32.mrb[0].mxu0
  %v5029 = vadd.f32 %v826, %v5028
  %v5030 = vpop.f32.mrb[0].mxu0
  %v5031 = vadd.f32 %v830, %v5030
  %v5032 = vpop.f32.mrb[0].mxu0
  %v5033 = vpop.f32.mrb[0].mxu0
  %5034 = vdwg.mxu0
  %5035 = vmatprep.subr.bf16.mxu0 %v3473
  %5036 = vmatpush1.bf16.msra.mxu0 %v3472
  %5037 = vmatprep.subr.bf16.mxu0 %v3489
  %5038 = vmatpush1.bf16.msra.mxu0 %v3488
  %5039 = vmatprep.subr.bf16.mxu0 %v3505
  %5040 = vmatpush1.bf16.msra.mxu0 %v3504
  %5041 = vmatprep.subr.bf16.mxu0 %v3521
  %5042 = vmatpush1.bf16.msra.mxu0 %v3520
  %5043 = vmatprep.subr.bf16.mxu0 %v3537
  %5044 = vmatpush1.bf16.msra.mxu0 %v3536
  %5045 = vmatprep.subr.bf16.mxu0 %v3553
  %5046 = vmatpush1.bf16.msra.mxu0 %v3552
  %5047 = vmatprep.subr.bf16.mxu0 %v3569
  %5048 = vmatpush1.bf16.msra.mxu0 %v3568
  %5049 = vmatprep.subr.bf16.mxu0 %v3585
  %5050 = vmatpush1.bf16.msra.mxu0 %v3584
  %5051 = vmatprep.subr.bf16.mxu0 %v3601
  %5052 = vmatpush1.bf16.msra.mxu0 %v3600
  %5053 = vmatprep.subr.bf16.mxu0 %v3617
  %5054 = vmatpush1.bf16.msra.mxu0 %v3616
  %5055 = vmatprep.subr.bf16.mxu0 %v3633
  %5056 = vmatpush1.bf16.msra.mxu0 %v3632
  %5057 = vmatprep.subr.bf16.mxu0 %v3649
  %5058 = vmatpush1.bf16.msra.mxu0 %v3648
  %5059 = vmatprep.subr.bf16.mxu0 %v3665
  %5060 = vmatpush1.bf16.msra.mxu0 %v3664
  %5061 = vmatprep.subr.bf16.mxu0 %v3681
  %5062 = vmatpush1.bf16.msra.mxu0 %v3680
  %5063 = vmatprep.subr.bf16.mxu0 %v3697
  %5064 = vmatpush1.bf16.msra.mxu0 %v3696
  %5065 = vmatprep.subr.bf16.mxu0 %v3713
  %5066 = vmatpush1.bf16.msra.mxu0 %v3712
  %5067 = vmatprep.mubr.bf16.mxu0 %v899
  %5068 = vmatmul.mubr.bf16.gmra.mrb[0].mxu0 %v898
  %v5069 = vpop.f32.mrb[0].mxu0
  %v5070 = vadd.f32 %v5029, %v5069
  %v5071 = vpop.f32.mrb[0].mxu0
  %v5072 = vadd.f32 %v5031, %v5071
  %v5073 = vpop.f32.mrb[0].mxu0
  %v5074 = vpop.f32.mrb[0].mxu0
  %5075 = vdwg.mxu0
  %5076 = vmatprep.subr.bf16.mxu0 %v3729
  %5077 = vmatpush1.bf16.msra.mxu0 %v3728
  %5078 = vmatprep.subr.bf16.mxu0 %v3745
  %5079 = vmatpush1.bf16.msra.mxu0 %v3744
  %5080 = vmatprep.subr.bf16.mxu0 %v3761
  %5081 = vmatpush1.bf16.msra.mxu0 %v3760
  %5082 = vmatprep.subr.bf16.mxu0 %v3777
  %5083 = vmatpush1.bf16.msra.mxu0 %v3776
  %5084 = vmatprep.subr.bf16.mxu0 %v3793
  %5085 = vmatpush1.bf16.msra.mxu0 %v3792
  %5086 = vmatprep.subr.bf16.mxu0 %v3809
  %5087 = vmatpush1.bf16.msra.mxu0 %v3808
  %5088 = vmatprep.subr.bf16.mxu0 %v3825
  %5089 = vmatpush1.bf16.msra.mxu0 %v3824
  %5090 = vmatprep.subr.bf16.mxu0 %v3841
  %5091 = vmatpush1.bf16.msra.mxu0 %v3840
  %5092 = vmatprep.subr.bf16.mxu0 %v3857
  %5093 = vmatpush1.bf16.msra.mxu0 %v3856
  %5094 = vmatprep.subr.bf16.mxu0 %v3873
  %5095 = vmatpush1.bf16.msra.mxu0 %v3872
  %5096 = vmatprep.subr.bf16.mxu0 %v3889
  %5097 = vmatpush1.bf16.msra.mxu0 %v3888
  %5098 = vmatprep.subr.bf16.mxu0 %v3905
  %5099 = vmatpush1.bf16.msra.mxu0 %v3904
  %5100 = vmatprep.subr.bf16.mxu0 %v3921
  %5101 = vmatpush1.bf16.msra.mxu0 %v3920
  %5102 = vmatprep.subr.bf16.mxu0 %v3937
  %5103 = vmatpush1.bf16.msra.mxu0 %v3936
  %5104 = vmatprep.subr.bf16.mxu0 %v3953
  %5105 = vmatpush1.bf16.msra.mxu0 %v3952
  %5106 = vmatprep.subr.bf16.mxu0 %v3969
  %5107 = vmatpush1.bf16.msra.mxu0 %v3968
  %5108 = vmatprep.mubr.bf16.mxu0 %v901
  %5109 = vmatmul.mubr.bf16.gmra.mrb[0].mxu0 %v900
  %v5110 = vpop.f32.mrb[0].mxu0
  %v5111 = vadd.f32 %v5070, %v5110
  %v5112 = vpop.f32.mrb[0].mxu0
  %v5113 = vadd.f32 %v5072, %v5112
  %v5114 = vpop.f32.mrb[0].mxu0
  %v5115 = vpop.f32.mrb[0].mxu0
  %5116 = vdwg.mxu0
  %5117 = vmatprep.subr.bf16.mxu0 %v3219
  %5118 = vmatpush1.bf16.msra.mxu0 %v3218
  %5119 = vmatprep.subr.bf16.mxu0 %v3235
  %5120 = vmatpush1.bf16.msra.mxu0 %v3234
  %5121 = vmatprep.subr.bf16.mxu0 %v3251
  %5122 = vmatpush1.bf16.msra.mxu0 %v3250
  %5123 = vmatprep.subr.bf16.mxu0 %v3267
  %5124 = vmatpush1.bf16.msra.mxu0 %v3266
  %5125 = vmatprep.subr.bf16.mxu0 %v3283
  %5126 = vmatpush1.bf16.msra.mxu0 %v3282
  %5127 = vmatprep.subr.bf16.mxu0 %v3299
  %5128 = vmatpush1.bf16.msra.mxu0 %v3298
  %5129 = vmatprep.subr.bf16.mxu0 %v3315
  %5130 = vmatpush1.bf16.msra.mxu0 %v3314
  %5131 = vmatprep.subr.bf16.mxu0 %v3331
  %5132 = vmatpush1.bf16.msra.mxu0 %v3330
  %5133 = vmatprep.subr.bf16.mxu0 %v3347
  %5134 = vmatpush1.bf16.msra.mxu0 %v3346
  %5135 = vmatprep.subr.bf16.mxu0 %v3363
  %5136 = vmatpush1.bf16.msra.mxu0 %v3362
  %5137 = vmatprep.subr.bf16.mxu0 %v3379
  %5138 = vmatpush1.bf16.msra.mxu0 %v3378
  %5139 = vmatprep.subr.bf16.mxu0 %v3395
  %5140 = vmatpush1.bf16.msra.mxu0 %v3394
  %5141 = vmatprep.subr.bf16.mxu0 %v3411
  %5142 = vmatpush1.bf16.msra.mxu0 %v3410
  %5143 = vmatprep.subr.bf16.mxu0 %v3427
  %5144 = vmatpush1.bf16.msra.mxu0 %v3426
  %5145 = vmatprep.subr.bf16.mxu0 %v3443
  %5146 = vmatpush1.bf16.msra.mxu0 %v3442
  %5147 = vmatprep.subr.bf16.mxu0 %v3459
  %5148 = vmatpush1.bf16.msra.mxu0 %v3458
  %5149 = vmatprep.mubr.bf16.mxu0 %v897
  %5150 = vmatmul.mubr.bf16.gmra.mrb[0].mxu0 %v896
  %v5151 = vpop.f32.mrb[0].mxu0
  %v5152 = vadd.f32 %v834, %v5151
  %v5153 = vpop.f32.mrb[0].mxu0
  %v5154 = vadd.f32 %v838, %v5153
  %v5155 = vpop.f32.mrb[0].mxu0
  %v5156 = vpop.f32.mrb[0].mxu0
  %5157 = vdwg.mxu0
  %5158 = vmatprep.subr.bf16.mxu0 %v3475
  %5159 = vmatpush1.bf16.msra.mxu0 %v3474
  %5160 = vmatprep.subr.bf16.mxu0 %v3491
  %5161 = vmatpush1.bf16.msra.mxu0 %v3490
  %5162 = vmatprep.subr.bf16.mxu0 %v3507
  %5163 = vmatpush1.bf16.msra.mxu0 %v3506
  %5164 = vmatprep.subr.bf16.mxu0 %v3523
  %5165 = vmatpush1.bf16.msra.mxu0 %v3522
  %5166 = vmatprep.subr.bf16.mxu0 %v3539
  %5167 = vmatpush1.bf16.msra.mxu0 %v3538
  %5168 = vmatprep.subr.bf16.mxu0 %v3555
  %5169 = vmatpush1.bf16.msra.mxu0 %v3554
  %5170 = vmatprep.subr.bf16.mxu0 %v3571
  %5171 = vmatpush1.bf16.msra.mxu0 %v3570
  %5172 = vmatprep.subr.bf16.mxu0 %v3587
  %5173 = vmatpush1.bf16.msra.mxu0 %v3586
  %5174 = vmatprep.subr.bf16.mxu0 %v3603
  %5175 = vmatpush1.bf16.msra.mxu0 %v3602
  %5176 = vmatprep.subr.bf16.mxu0 %v3619
  %5177 = vmatpush1.bf16.msra.mxu0 %v3618
  %5178 = vmatprep.subr.bf16.mxu0 %v3635
  %5179 = vmatpush1.bf16.msra.mxu0 %v3634
  %5180 = vmatprep.subr.bf16.mxu0 %v3651
  %5181 = vmatpush1.bf16.msra.mxu0 %v3650
  %5182 = vmatprep.subr.bf16.mxu0 %v3667
  %5183 = vmatpush1.bf16.msra.mxu0 %v3666
  %5184 = vmatprep.subr.bf16.mxu0 %v3683
  %5185 = vmatpush1.bf16.msra.mxu0 %v3682
  %5186 = vmatprep.subr.bf16.mxu0 %v3699
  %5187 = vmatpush1.bf16.msra.mxu0 %v3698
  %5188 = vmatprep.subr.bf16.mxu0 %v3715
  %5189 = vmatpush1.bf16.msra.mxu0 %v3714
  %5190 = vmatprep.mubr.bf16.mxu0 %v899
  %5191 = vmatmul.mubr.bf16.gmra.mrb[0].mxu0 %v898
  %v5192 = vpop.f32.mrb[0].mxu0
  %v5193 = vadd.f32 %v5152, %v5192
  %v5194 = vpop.f32.mrb[0].mxu0
  %v5195 = vadd.f32 %v5154, %v5194
  %v5196 = vpop.f32.mrb[0].mxu0
  %v5197 = vpop.f32.mrb[0].mxu0
  %5198 = vdwg.mxu0
  %5199 = vmatprep.subr.bf16.mxu0 %v3731
  %5200 = vmatpush1.bf16.msra.mxu0 %v3730
  %5201 = vmatprep.subr.bf16.mxu0 %v3747
  %5202 = vmatpush1.bf16.msra.mxu0 %v3746
  %5203 = vmatprep.subr.bf16.mxu0 %v3763
  %5204 = vmatpush1.bf16.msra.mxu0 %v3762
  %5205 = vmatprep.subr.bf16.mxu0 %v3779
  %5206 = vmatpush1.bf16.msra.mxu0 %v3778
  %5207 = vmatprep.subr.bf16.mxu0 %v3795
  %5208 = vmatpush1.bf16.msra.mxu0 %v3794
  %5209 = vmatprep.subr.bf16.mxu0 %v3811
  %5210 = vmatpush1.bf16.msra.mxu0 %v3810
  %5211 = vmatprep.subr.bf16.mxu0 %v3827
  %5212 = vmatpush1.bf16.msra.mxu0 %v3826
  %5213 = vmatprep.subr.bf16.mxu0 %v3843
  %5214 = vmatpush1.bf16.msra.mxu0 %v3842
  %5215 = vmatprep.subr.bf16.mxu0 %v3859
  %5216 = vmatpush1.bf16.msra.mxu0 %v3858
  %5217 = vmatprep.subr.bf16.mxu0 %v3875
  %5218 = vmatpush1.bf16.msra.mxu0 %v3874
  %5219 = vmatprep.subr.bf16.mxu0 %v3891
  %5220 = vmatpush1.bf16.msra.mxu0 %v3890
  %5221 = vmatprep.subr.bf16.mxu0 %v3907
  %5222 = vmatpush1.bf16.msra.mxu0 %v3906
  %5223 = vmatprep.subr.bf16.mxu0 %v3923
  %5224 = vmatpush1.bf16.msra.mxu0 %v3922
  %5225 = vmatprep.subr.bf16.mxu0 %v3939
  %5226 = vmatpush1.bf16.msra.mxu0 %v3938
  %5227 = vmatprep.subr.bf16.mxu0 %v3955
  %5228 = vmatpush1.bf16.msra.mxu0 %v3954
  %5229 = vmatprep.subr.bf16.mxu0 %v3971
  %5230 = vmatpush1.bf16.msra.mxu0 %v3970
  %5231 = vmatprep.mubr.bf16.mxu0 %v901
  %5232 = vmatmul.mubr.bf16.gmra.mrb[0].mxu0 %v900
  %v5233 = vpop.f32.mrb[0].mxu0
  %v5234 = vadd.f32 %v5193, %v5233
  %v5235 = vpop.f32.mrb[0].mxu0
  %v5236 = vadd.f32 %v5195, %v5235
  %v5237 = vpop.f32.mrb[0].mxu0
  %v5238 = vpop.f32.mrb[0].mxu0
  %5239 = vdwg.mxu0
  %5240 = vmatprep.subr.bf16.mxu0 %v3221
  %5241 = vmatpush1.bf16.msra.mxu0 %v3220
  %5242 = vmatprep.subr.bf16.mxu0 %v3237
  %5243 = vmatpush1.bf16.msra.mxu0 %v3236
  %5244 = vmatprep.subr.bf16.mxu0 %v3253
  %5245 = vmatpush1.bf16.msra.mxu0 %v3252
  %5246 = vmatprep.subr.bf16.mxu0 %v3269
  %5247 = vmatpush1.bf16.msra.mxu0 %v3268
  %5248 = vmatprep.subr.bf16.mxu0 %v3285
  %5249 = vmatpush1.bf16.msra.mxu0 %v3284
  %5250 = vmatprep.subr.bf16.mxu0 %v3301
  %5251 = vmatpush1.bf16.msra.mxu0 %v3300
  %5252 = vmatprep.subr.bf16.mxu0 %v3317
  %5253 = vmatpush1.bf16.msra.mxu0 %v3316
  %5254 = vmatprep.subr.bf16.mxu0 %v3333
  %5255 = vmatpush1.bf16.msra.mxu0 %v3332
  %5256 = vmatprep.subr.bf16.mxu0 %v3349
  %5257 = vmatpush1.bf16.msra.mxu0 %v3348
  %5258 = vmatprep.subr.bf16.mxu0 %v3365
  %5259 = vmatpush1.bf16.msra.mxu0 %v3364
  %5260 = vmatprep.subr.bf16.mxu0 %v3381
  %5261 = vmatpush1.bf16.msra.mxu0 %v3380
  %5262 = vmatprep.subr.bf16.mxu0 %v3397
  %5263 = vmatpush1.bf16.msra.mxu0 %v3396
  %5264 = vmatprep.subr.bf16.mxu0 %v3413
  %5265 = vmatpush1.bf16.msra.mxu0 %v3412
  %5266 = vmatprep.subr.bf16.mxu0 %v3429
  %5267 = vmatpush1.bf16.msra.mxu0 %v3428
  %5268 = vmatprep.subr.bf16.mxu0 %v3445
  %5269 = vmatpush1.bf16.msra.mxu0 %v3444
  %5270 = vmatprep.subr.bf16.mxu0 %v3461
  %5271 = vmatpush1.bf16.msra.mxu0 %v3460
  %5272 = vmatprep.mubr.bf16.mxu0 %v897
  %5273 = vmatmul.mubr.bf16.gmra.mrb[0].mxu0 %v896
  %v5274 = vpop.f32.mrb[0].mxu0
  %v5275 = vadd.f32 %v842, %v5274
  %v5276 = vpop.f32.mrb[0].mxu0
  %v5277 = vadd.f32 %v846, %v5276
  %v5278 = vpop.f32.mrb[0].mxu0
  %v5279 = vpop.f32.mrb[0].mxu0
  %5280 = vdwg.mxu0
  %5281 = vmatprep.subr.bf16.mxu0 %v3477
  %5282 = vmatpush1.bf16.msra.mxu0 %v3476
  %5283 = vmatprep.subr.bf16.mxu0 %v3493
  %5284 = vmatpush1.bf16.msra.mxu0 %v3492
  %5285 = vmatprep.subr.bf16.mxu0 %v3509
  %5286 = vmatpush1.bf16.msra.mxu0 %v3508
  %5287 = vmatprep.subr.bf16.mxu0 %v3525
  %5288 = vmatpush1.bf16.msra.mxu0 %v3524
  %5289 = vmatprep.subr.bf16.mxu0 %v3541
  %5290 = vmatpush1.bf16.msra.mxu0 %v3540
  %5291 = vmatprep.subr.bf16.mxu0 %v3557
  %5292 = vmatpush1.bf16.msra.mxu0 %v3556
  %5293 = vmatprep.subr.bf16.mxu0 %v3573
  %5294 = vmatpush1.bf16.msra.mxu0 %v3572
  %5295 = vmatprep.subr.bf16.mxu0 %v3589
  %5296 = vmatpush1.bf16.msra.mxu0 %v3588
  %5297 = vmatprep.subr.bf16.mxu0 %v3605
  %5298 = vmatpush1.bf16.msra.mxu0 %v3604
  %5299 = vmatprep.subr.bf16.mxu0 %v3621
  %5300 = vmatpush1.bf16.msra.mxu0 %v3620
  %5301 = vmatprep.subr.bf16.mxu0 %v3637
  %5302 = vmatpush1.bf16.msra.mxu0 %v3636
  %5303 = vmatprep.subr.bf16.mxu0 %v3653
  %5304 = vmatpush1.bf16.msra.mxu0 %v3652
  %5305 = vmatprep.subr.bf16.mxu0 %v3669
  %5306 = vmatpush1.bf16.msra.mxu0 %v3668
  %5307 = vmatprep.subr.bf16.mxu0 %v3685
  %5308 = vmatpush1.bf16.msra.mxu0 %v3684
  %5309 = vmatprep.subr.bf16.mxu0 %v3701
  %5310 = vmatpush1.bf16.msra.mxu0 %v3700
  %5311 = vmatprep.subr.bf16.mxu0 %v3717
  %5312 = vmatpush1.bf16.msra.mxu0 %v3716
  %5313 = vmatprep.mubr.bf16.mxu0 %v899
  %5314 = vmatmul.mubr.bf16.gmra.mrb[0].mxu0 %v898
  %v5315 = vpop.f32.mrb[0].mxu0
  %v5316 = vadd.f32 %v5275, %v5315
  %v5317 = vpop.f32.mrb[0].mxu0
  %v5318 = vadd.f32 %v5277, %v5317
  %v5319 = vpop.f32.mrb[0].mxu0
  %v5320 = vpop.f32.mrb[0].mxu0
  %5321 = vdwg.mxu0
  %5322 = vmatprep.subr.bf16.mxu0 %v3733
  %5323 = vmatpush1.bf16.msra.mxu0 %v3732
  %5324 = vmatprep.subr.bf16.mxu0 %v3749
  %5325 = vmatpush1.bf16.msra.mxu0 %v3748
  %5326 = vmatprep.subr.bf16.mxu0 %v3765
  %5327 = vmatpush1.bf16.msra.mxu0 %v3764
  %5328 = vmatprep.subr.bf16.mxu0 %v3781
  %5329 = vmatpush1.bf16.msra.mxu0 %v3780
  %5330 = vmatprep.subr.bf16.mxu0 %v3797
  %5331 = vmatpush1.bf16.msra.mxu0 %v3796
  %5332 = vmatprep.subr.bf16.mxu0 %v3813
  %5333 = vmatpush1.bf16.msra.mxu0 %v3812
  %5334 = vmatprep.subr.bf16.mxu0 %v3829
  %5335 = vmatpush1.bf16.msra.mxu0 %v3828
  %5336 = vmatprep.subr.bf16.mxu0 %v3845
  %5337 = vmatpush1.bf16.msra.mxu0 %v3844
  %5338 = vmatprep.subr.bf16.mxu0 %v3861
  %5339 = vmatpush1.bf16.msra.mxu0 %v3860
  %5340 = vmatprep.subr.bf16.mxu0 %v3877
  %5341 = vmatpush1.bf16.msra.mxu0 %v3876
  %5342 = vmatprep.subr.bf16.mxu0 %v3893
  %5343 = vmatpush1.bf16.msra.mxu0 %v3892
  %5344 = vmatprep.subr.bf16.mxu0 %v3909
  %5345 = vmatpush1.bf16.msra.mxu0 %v3908
  %5346 = vmatprep.subr.bf16.mxu0 %v3925
  %5347 = vmatpush1.bf16.msra.mxu0 %v3924
  %5348 = vmatprep.subr.bf16.mxu0 %v3941
  %5349 = vmatpush1.bf16.msra.mxu0 %v3940
  %5350 = vmatprep.subr.bf16.mxu0 %v3957
  %5351 = vmatpush1.bf16.msra.mxu0 %v3956
  %5352 = vmatprep.subr.bf16.mxu0 %v3973
  %5353 = vmatpush1.bf16.msra.mxu0 %v3972
  %5354 = vmatprep.mubr.bf16.mxu0 %v901
  %5355 = vmatmul.mubr.bf16.gmra.mrb[0].mxu0 %v900
  %v5356 = vpop.f32.mrb[0].mxu0
  %v5357 = vadd.f32 %v5316, %v5356
  %v5358 = vpop.f32.mrb[0].mxu0
  %v5359 = vadd.f32 %v5318, %v5358
  %v5360 = vpop.f32.mrb[0].mxu0
  %v5361 = vpop.f32.mrb[0].mxu0
  %5362 = vdwg.mxu0
  %5363 = vmatprep.subr.bf16.mxu0 %v3223
  %5364 = vmatpush1.bf16.msra.mxu0 %v3222
  %5365 = vmatprep.subr.bf16.mxu0 %v3239
  %5366 = vmatpush1.bf16.msra.mxu0 %v3238
  %5367 = vmatprep.subr.bf16.mxu0 %v3255
  %5368 = vmatpush1.bf16.msra.mxu0 %v3254
  %5369 = vmatprep.subr.bf16.mxu0 %v3271
  %5370 = vmatpush1.bf16.msra.mxu0 %v3270
  %5371 = vmatprep.subr.bf16.mxu0 %v3287
  %5372 = vmatpush1.bf16.msra.mxu0 %v3286
  %5373 = vmatprep.subr.bf16.mxu0 %v3303
  %5374 = vmatpush1.bf16.msra.mxu0 %v3302
  %5375 = vmatprep.subr.bf16.mxu0 %v3319
  %5376 = vmatpush1.bf16.msra.mxu0 %v3318
  %5377 = vmatprep.subr.bf16.mxu0 %v3335
  %5378 = vmatpush1.bf16.msra.mxu0 %v3334
  %5379 = vmatprep.subr.bf16.mxu0 %v3351
  %5380 = vmatpush1.bf16.msra.mxu0 %v3350
  %5381 = vmatprep.subr.bf16.mxu0 %v3367
  %5382 = vmatpush1.bf16.msra.mxu0 %v3366
  %5383 = vmatprep.subr.bf16.mxu0 %v3383
  %5384 = vmatpush1.bf16.msra.mxu0 %v3382
  %5385 = vmatprep.subr.bf16.mxu0 %v3399
  %5386 = vmatpush1.bf16.msra.mxu0 %v3398
  %5387 = vmatprep.subr.bf16.mxu0 %v3415
  %5388 = vmatpush1.bf16.msra.mxu0 %v3414
  %5389 = vmatprep.subr.bf16.mxu0 %v3431
  %5390 = vmatpush1.bf16.msra.mxu0 %v3430
  %5391 = vmatprep.subr.bf16.mxu0 %v3447
  %5392 = vmatpush1.bf16.msra.mxu0 %v3446
  %5393 = vmatprep.subr.bf16.mxu0 %v3463
  %5394 = vmatpush1.bf16.msra.mxu0 %v3462
  %5395 = vmatprep.mubr.bf16.mxu0 %v897
  %5396 = vmatmul.mubr.bf16.gmra.mrb[0].mxu0 %v896
  %v5397 = vpop.f32.mrb[0].mxu0
  %v5398 = vadd.f32 %v850, %v5397
  %v5399 = vpop.f32.mrb[0].mxu0
  %v5400 = vadd.f32 %v854, %v5399
  %v5401 = vpop.f32.mrb[0].mxu0
  %v5402 = vpop.f32.mrb[0].mxu0
  %5403 = vdwg.mxu0
  %5404 = vmatprep.subr.bf16.mxu0 %v3479
  %5405 = vmatpush1.bf16.msra.mxu0 %v3478
  %5406 = vmatprep.subr.bf16.mxu0 %v3495
  %5407 = vmatpush1.bf16.msra.mxu0 %v3494
  %5408 = vmatprep.subr.bf16.mxu0 %v3511
  %5409 = vmatpush1.bf16.msra.mxu0 %v3510
  %5410 = vmatprep.subr.bf16.mxu0 %v3527
  %5411 = vmatpush1.bf16.msra.mxu0 %v3526
  %5412 = vmatprep.subr.bf16.mxu0 %v3543
  %5413 = vmatpush1.bf16.msra.mxu0 %v3542
  %5414 = vmatprep.subr.bf16.mxu0 %v3559
  %5415 = vmatpush1.bf16.msra.mxu0 %v3558
  %5416 = vmatprep.subr.bf16.mxu0 %v3575
  %5417 = vmatpush1.bf16.msra.mxu0 %v3574
  %5418 = vmatprep.subr.bf16.mxu0 %v3591
  %5419 = vmatpush1.bf16.msra.mxu0 %v3590
  %5420 = vmatprep.subr.bf16.mxu0 %v3607
  %5421 = vmatpush1.bf16.msra.mxu0 %v3606
  %5422 = vmatprep.subr.bf16.mxu0 %v3623
  %5423 = vmatpush1.bf16.msra.mxu0 %v3622
  %5424 = vmatprep.subr.bf16.mxu0 %v3639
  %5425 = vmatpush1.bf16.msra.mxu0 %v3638
  %5426 = vmatprep.subr.bf16.mxu0 %v3655
  %5427 = vmatpush1.bf16.msra.mxu0 %v3654
  %5428 = vmatprep.subr.bf16.mxu0 %v3671
  %5429 = vmatpush1.bf16.msra.mxu0 %v3670
  %5430 = vmatprep.subr.bf16.mxu0 %v3687
  %5431 = vmatpush1.bf16.msra.mxu0 %v3686
  %5432 = vmatprep.subr.bf16.mxu0 %v3703
  %5433 = vmatpush1.bf16.msra.mxu0 %v3702
  %5434 = vmatprep.subr.bf16.mxu0 %v3719
  %5435 = vmatpush1.bf16.msra.mxu0 %v3718
  %5436 = vmatprep.mubr.bf16.mxu0 %v899
  %5437 = vmatmul.mubr.bf16.gmra.mrb[0].mxu0 %v898
  %v5438 = vpop.f32.mrb[0].mxu0
  %v5439 = vadd.f32 %v5398, %v5438
  %v5440 = vpop.f32.mrb[0].mxu0
  %v5441 = vadd.f32 %v5400, %v5440
  %v5442 = vpop.f32.mrb[0].mxu0
  %v5443 = vpop.f32.mrb[0].mxu0
  %5444 = vdwg.mxu0
  %5445 = vmatprep.subr.bf16.mxu0 %v3735
  %5446 = vmatpush1.bf16.msra.mxu0 %v3734
  %5447 = vmatprep.subr.bf16.mxu0 %v3751
  %5448 = vmatpush1.bf16.msra.mxu0 %v3750
  %5449 = vmatprep.subr.bf16.mxu0 %v3767
  %5450 = vmatpush1.bf16.msra.mxu0 %v3766
  %5451 = vmatprep.subr.bf16.mxu0 %v3783
  %5452 = vmatpush1.bf16.msra.mxu0 %v3782
  %5453 = vmatprep.subr.bf16.mxu0 %v3799
  %5454 = vmatpush1.bf16.msra.mxu0 %v3798
  %5455 = vmatprep.subr.bf16.mxu0 %v3815
  %5456 = vmatpush1.bf16.msra.mxu0 %v3814
  %5457 = vmatprep.subr.bf16.mxu0 %v3831
  %5458 = vmatpush1.bf16.msra.mxu0 %v3830
  %5459 = vmatprep.subr.bf16.mxu0 %v3847
  %5460 = vmatpush1.bf16.msra.mxu0 %v3846
  %5461 = vmatprep.subr.bf16.mxu0 %v3863
  %5462 = vmatpush1.bf16.msra.mxu0 %v3862
  %5463 = vmatprep.subr.bf16.mxu0 %v3879
  %5464 = vmatpush1.bf16.msra.mxu0 %v3878
  %5465 = vmatprep.subr.bf16.mxu0 %v3895
  %5466 = vmatpush1.bf16.msra.mxu0 %v3894
  %5467 = vmatprep.subr.bf16.mxu0 %v3911
  %5468 = vmatpush1.bf16.msra.mxu0 %v3910
  %5469 = vmatprep.subr.bf16.mxu0 %v3927
  %5470 = vmatpush1.bf16.msra.mxu0 %v3926
  %5471 = vmatprep.subr.bf16.mxu0 %v3943
  %5472 = vmatpush1.bf16.msra.mxu0 %v3942
  %5473 = vmatprep.subr.bf16.mxu0 %v3959
  %5474 = vmatpush1.bf16.msra.mxu0 %v3958
  %5475 = vmatprep.subr.bf16.mxu0 %v3975
  %5476 = vmatpush1.bf16.msra.mxu0 %v3974
  %5477 = vmatprep.mubr.bf16.mxu0 %v901
  %5478 = vmatmul.mubr.bf16.gmra.mrb[0].mxu0 %v900
  %v5479 = vpop.f32.mrb[0].mxu0
  %v5480 = vadd.f32 %v5439, %v5479
  %v5481 = vpop.f32.mrb[0].mxu0
  %v5482 = vadd.f32 %v5441, %v5481
  %v5483 = vpop.f32.mrb[0].mxu0
  %v5484 = vpop.f32.mrb[0].mxu0
  %5485 = vdwg.mxu0
  %5486 = vmatprep.subr.bf16.mxu0 %v3225
  %5487 = vmatpush1.bf16.msra.mxu0 %v3224
  %5488 = vmatprep.subr.bf16.mxu0 %v3241
  %5489 = vmatpush1.bf16.msra.mxu0 %v3240
  %5490 = vmatprep.subr.bf16.mxu0 %v3257
  %5491 = vmatpush1.bf16.msra.mxu0 %v3256
  %5492 = vmatprep.subr.bf16.mxu0 %v3273
  %5493 = vmatpush1.bf16.msra.mxu0 %v3272
  %5494 = vmatprep.subr.bf16.mxu0 %v3289
  %5495 = vmatpush1.bf16.msra.mxu0 %v3288
  %5496 = vmatprep.subr.bf16.mxu0 %v3305
  %5497 = vmatpush1.bf16.msra.mxu0 %v3304
  %5498 = vmatprep.subr.bf16.mxu0 %v3321
  %5499 = vmatpush1.bf16.msra.mxu0 %v3320
  %5500 = vmatprep.subr.bf16.mxu0 %v3337
  %5501 = vmatpush1.bf16.msra.mxu0 %v3336
  %5502 = vmatprep.subr.bf16.mxu0 %v3353
  %5503 = vmatpush1.bf16.msra.mxu0 %v3352
  %5504 = vmatprep.subr.bf16.mxu0 %v3369
  %5505 = vmatpush1.bf16.msra.mxu0 %v3368
  %5506 = vmatprep.subr.bf16.mxu0 %v3385
  %5507 = vmatpush1.bf16.msra.mxu0 %v3384
  %5508 = vmatprep.subr.bf16.mxu0 %v3401
  %5509 = vmatpush1.bf16.msra.mxu0 %v3400
  %5510 = vmatprep.subr.bf16.mxu0 %v3417
  %5511 = vmatpush1.bf16.msra.mxu0 %v3416
  %5512 = vmatprep.subr.bf16.mxu0 %v3433
  %5513 = vmatpush1.bf16.msra.mxu0 %v3432
  %5514 = vmatprep.subr.bf16.mxu0 %v3449
  %5515 = vmatpush1.bf16.msra.mxu0 %v3448
  %5516 = vmatprep.subr.bf16.mxu0 %v3465
  %5517 = vmatpush1.bf16.msra.mxu0 %v3464
  %5518 = vmatprep.mubr.bf16.mxu0 %v897
  %5519 = vmatmul.mubr.bf16.gmra.mrb[0].mxu0 %v896
  %v5520 = vpop.f32.mrb[0].mxu0
  %v5521 = vadd.f32 %v858, %v5520
  %v5522 = vpop.f32.mrb[0].mxu0
  %v5523 = vadd.f32 %v862, %v5522
  %v5524 = vpop.f32.mrb[0].mxu0
  %v5525 = vpop.f32.mrb[0].mxu0
  %5526 = vdwg.mxu0
  %5527 = vmatprep.subr.bf16.mxu0 %v3481
  %5528 = vmatpush1.bf16.msra.mxu0 %v3480
  %5529 = vmatprep.subr.bf16.mxu0 %v3497
  %5530 = vmatpush1.bf16.msra.mxu0 %v3496
  %5531 = vmatprep.subr.bf16.mxu0 %v3513
  %5532 = vmatpush1.bf16.msra.mxu0 %v3512
  %5533 = vmatprep.subr.bf16.mxu0 %v3529
  %5534 = vmatpush1.bf16.msra.mxu0 %v3528
  %5535 = vmatprep.subr.bf16.mxu0 %v3545
  %5536 = vmatpush1.bf16.msra.mxu0 %v3544
  %5537 = vmatprep.subr.bf16.mxu0 %v3561
  %5538 = vmatpush1.bf16.msra.mxu0 %v3560
  %5539 = vmatprep.subr.bf16.mxu0 %v3577
  %5540 = vmatpush1.bf16.msra.mxu0 %v3576
  %5541 = vmatprep.subr.bf16.mxu0 %v3593
  %5542 = vmatpush1.bf16.msra.mxu0 %v3592
  %5543 = vmatprep.subr.bf16.mxu0 %v3609
  %5544 = vmatpush1.bf16.msra.mxu0 %v3608
  %5545 = vmatprep.subr.bf16.mxu0 %v3625
  %5546 = vmatpush1.bf16.msra.mxu0 %v3624
  %5547 = vmatprep.subr.bf16.mxu0 %v3641
  %5548 = vmatpush1.bf16.msra.mxu0 %v3640
  %5549 = vmatprep.subr.bf16.mxu0 %v3657
  %5550 = vmatpush1.bf16.msra.mxu0 %v3656
  %5551 = vmatprep.subr.bf16.mxu0 %v3673
  %5552 = vmatpush1.bf16.msra.mxu0 %v3672
  %5553 = vmatprep.subr.bf16.mxu0 %v3689
  %5554 = vmatpush1.bf16.msra.mxu0 %v3688
  %5555 = vmatprep.subr.bf16.mxu0 %v3705
  %5556 = vmatpush1.bf16.msra.mxu0 %v3704
  %5557 = vmatprep.subr.bf16.mxu0 %v3721
  %5558 = vmatpush1.bf16.msra.mxu0 %v3720
  %5559 = vmatprep.mubr.bf16.mxu0 %v899
  %5560 = vmatmul.mubr.bf16.gmra.mrb[0].mxu0 %v898
  %v5561 = vpop.f32.mrb[0].mxu0
  %v5562 = vadd.f32 %v5521, %v5561
  %v5563 = vpop.f32.mrb[0].mxu0
  %v5564 = vadd.f32 %v5523, %v5563
  %v5565 = vpop.f32.mrb[0].mxu0
  %v5566 = vpop.f32.mrb[0].mxu0
  %5567 = vdwg.mxu0
  %5568 = vmatprep.subr.bf16.mxu0 %v3737
  %5569 = vmatpush1.bf16.msra.mxu0 %v3736
  %5570 = vmatprep.subr.bf16.mxu0 %v3753
  %5571 = vmatpush1.bf16.msra.mxu0 %v3752
  %5572 = vmatprep.subr.bf16.mxu0 %v3769
  %5573 = vmatpush1.bf16.msra.mxu0 %v3768
  %5574 = vmatprep.subr.bf16.mxu0 %v3785
  %5575 = vmatpush1.bf16.msra.mxu0 %v3784
  %5576 = vmatprep.subr.bf16.mxu0 %v3801
  %5577 = vmatpush1.bf16.msra.mxu0 %v3800
  %5578 = vmatprep.subr.bf16.mxu0 %v3817
  %5579 = vmatpush1.bf16.msra.mxu0 %v3816
  %5580 = vmatprep.subr.bf16.mxu0 %v3833
  %5581 = vmatpush1.bf16.msra.mxu0 %v3832
  %5582 = vmatprep.subr.bf16.mxu0 %v3849
  %5583 = vmatpush1.bf16.msra.mxu0 %v3848
  %5584 = vmatprep.subr.bf16.mxu0 %v3865
  %5585 = vmatpush1.bf16.msra.mxu0 %v3864
  %5586 = vmatprep.subr.bf16.mxu0 %v3881
  %5587 = vmatpush1.bf16.msra.mxu0 %v3880
  %5588 = vmatprep.subr.bf16.mxu0 %v3897
  %5589 = vmatpush1.bf16.msra.mxu0 %v3896
  %5590 = vmatprep.subr.bf16.mxu0 %v3913
  %5591 = vmatpush1.bf16.msra.mxu0 %v3912
  %5592 = vmatprep.subr.bf16.mxu0 %v3929
  %5593 = vmatpush1.bf16.msra.mxu0 %v3928
  %5594 = vmatprep.subr.bf16.mxu0 %v3945
  %5595 = vmatpush1.bf16.msra.mxu0 %v3944
  %5596 = vmatprep.subr.bf16.mxu0 %v3961
  %5597 = vmatpush1.bf16.msra.mxu0 %v3960
  %5598 = vmatprep.subr.bf16.mxu0 %v3977
  %5599 = vmatpush1.bf16.msra.mxu0 %v3976
  %5600 = vmatprep.mubr.bf16.mxu0 %v901
  %5601 = vmatmul.mubr.bf16.gmra.mrb[0].mxu0 %v900
  %v5602 = vpop.f32.mrb[0].mxu0
  %v5603 = vadd.f32 %v5562, %v5602
  %v5604 = vpop.f32.mrb[0].mxu0
  %v5605 = vadd.f32 %v5564, %v5604
  %v5606 = vpop.f32.mrb[0].mxu0
  %v5607 = vpop.f32.mrb[0].mxu0
  %5608 = vdwg.mxu0
  %5609 = vmatprep.subr.bf16.mxu0 %v3227
  %5610 = vmatpush1.bf16.msra.mxu0 %v3226
  %5611 = vmatprep.subr.bf16.mxu0 %v3243
  %5612 = vmatpush1.bf16.msra.mxu0 %v3242
  %5613 = vmatprep.subr.bf16.mxu0 %v3259
  %5614 = vmatpush1.bf16.msra.mxu0 %v3258
  %5615 = vmatprep.subr.bf16.mxu0 %v3275
  %5616 = vmatpush1.bf16.msra.mxu0 %v3274
  %5617 = vmatprep.subr.bf16.mxu0 %v3291
  %5618 = vmatpush1.bf16.msra.mxu0 %v3290
  %5619 = vmatprep.subr.bf16.mxu0 %v3307
  %5620 = vmatpush1.bf16.msra.mxu0 %v3306
  %5621 = vmatprep.subr.bf16.mxu0 %v3323
  %5622 = vmatpush1.bf16.msra.mxu0 %v3322
  %5623 = vmatprep.subr.bf16.mxu0 %v3339
  %5624 = vmatpush1.bf16.msra.mxu0 %v3338
  %5625 = vmatprep.subr.bf16.mxu0 %v3355
  %5626 = vmatpush1.bf16.msra.mxu0 %v3354
  %5627 = vmatprep.subr.bf16.mxu0 %v3371
  %5628 = vmatpush1.bf16.msra.mxu0 %v3370
  %5629 = vmatprep.subr.bf16.mxu0 %v3387
  %5630 = vmatpush1.bf16.msra.mxu0 %v3386
  %5631 = vmatprep.subr.bf16.mxu0 %v3403
  %5632 = vmatpush1.bf16.msra.mxu0 %v3402
  %5633 = vmatprep.subr.bf16.mxu0 %v3419
  %5634 = vmatpush1.bf16.msra.mxu0 %v3418
  %5635 = vmatprep.subr.bf16.mxu0 %v3435
  %5636 = vmatpush1.bf16.msra.mxu0 %v3434
  %5637 = vmatprep.subr.bf16.mxu0 %v3451
  %5638 = vmatpush1.bf16.msra.mxu0 %v3450
  %5639 = vmatprep.subr.bf16.mxu0 %v3467
  %5640 = vmatpush1.bf16.msra.mxu0 %v3466
  %5641 = vmatprep.mubr.bf16.mxu0 %v897
  %5642 = vmatmul.mubr.bf16.gmra.mrb[0].mxu0 %v896
  %v5643 = vpop.f32.mrb[0].mxu0
  %v5644 = vadd.f32 %v866, %v5643
  %v5645 = vpop.f32.mrb[0].mxu0
  %v5646 = vadd.f32 %v870, %v5645
  %v5647 = vpop.f32.mrb[0].mxu0
  %v5648 = vpop.f32.mrb[0].mxu0
  %5649 = vdwg.mxu0
  %5650 = vmatprep.subr.bf16.mxu0 %v3483
  %5651 = vmatpush1.bf16.msra.mxu0 %v3482
  %5652 = vmatprep.subr.bf16.mxu0 %v3499
  %5653 = vmatpush1.bf16.msra.mxu0 %v3498
  %5654 = vmatprep.subr.bf16.mxu0 %v3515
  %5655 = vmatpush1.bf16.msra.mxu0 %v3514
  %5656 = vmatprep.subr.bf16.mxu0 %v3531
  %5657 = vmatpush1.bf16.msra.mxu0 %v3530
  %5658 = vmatprep.subr.bf16.mxu0 %v3547
  %5659 = vmatpush1.bf16.msra.mxu0 %v3546
  %5660 = vmatprep.subr.bf16.mxu0 %v3563
  %5661 = vmatpush1.bf16.msra.mxu0 %v3562
  %5662 = vmatprep.subr.bf16.mxu0 %v3579
  %5663 = vmatpush1.bf16.msra.mxu0 %v3578
  %5664 = vmatprep.subr.bf16.mxu0 %v3595
  %5665 = vmatpush1.bf16.msra.mxu0 %v3594
  %5666 = vmatprep.subr.bf16.mxu0 %v3611
  %5667 = vmatpush1.bf16.msra.mxu0 %v3610
  %5668 = vmatprep.subr.bf16.mxu0 %v3627
  %5669 = vmatpush1.bf16.msra.mxu0 %v3626
  %5670 = vmatprep.subr.bf16.mxu0 %v3643
  %5671 = vmatpush1.bf16.msra.mxu0 %v3642
  %5672 = vmatprep.subr.bf16.mxu0 %v3659
  %5673 = vmatpush1.bf16.msra.mxu0 %v3658
  %5674 = vmatprep.subr.bf16.mxu0 %v3675
  %5675 = vmatpush1.bf16.msra.mxu0 %v3674
  %5676 = vmatprep.subr.bf16.mxu0 %v3691
  %5677 = vmatpush1.bf16.msra.mxu0 %v3690
  %5678 = vmatprep.subr.bf16.mxu0 %v3707
  %5679 = vmatpush1.bf16.msra.mxu0 %v3706
  %5680 = vmatprep.subr.bf16.mxu0 %v3723
  %5681 = vmatpush1.bf16.msra.mxu0 %v3722
  %5682 = vmatprep.mubr.bf16.mxu0 %v899
  %5683 = vmatmul.mubr.bf16.gmra.mrb[0].mxu0 %v898
  %v5684 = vpop.f32.mrb[0].mxu0
  %v5685 = vadd.f32 %v5644, %v5684
  %v5686 = vpop.f32.mrb[0].mxu0
  %v5687 = vadd.f32 %v5646, %v5686
  %v5688 = vpop.f32.mrb[0].mxu0
  %v5689 = vpop.f32.mrb[0].mxu0
  %5690 = vdwg.mxu0
  %5691 = vmatprep.subr.bf16.mxu0 %v3739
  %5692 = vmatpush1.bf16.msra.mxu0 %v3738
  %5693 = vmatprep.subr.bf16.mxu0 %v3755
  %5694 = vmatpush1.bf16.msra.mxu0 %v3754
  %5695 = vmatprep.subr.bf16.mxu0 %v3771
  %5696 = vmatpush1.bf16.msra.mxu0 %v3770
  %5697 = vmatprep.subr.bf16.mxu0 %v3787
  %5698 = vmatpush1.bf16.msra.mxu0 %v3786
  %5699 = vmatprep.subr.bf16.mxu0 %v3803
  %5700 = vmatpush1.bf16.msra.mxu0 %v3802
  %5701 = vmatprep.subr.bf16.mxu0 %v3819
  %5702 = vmatpush1.bf16.msra.mxu0 %v3818
  %5703 = vmatprep.subr.bf16.mxu0 %v3835
  %5704 = vmatpush1.bf16.msra.mxu0 %v3834
  %5705 = vmatprep.subr.bf16.mxu0 %v3851
  %5706 = vmatpush1.bf16.msra.mxu0 %v3850
  %5707 = vmatprep.subr.bf16.mxu0 %v3867
  %5708 = vmatpush1.bf16.msra.mxu0 %v3866
  %5709 = vmatprep.subr.bf16.mxu0 %v3883
  %5710 = vmatpush1.bf16.msra.mxu0 %v3882
  %5711 = vmatprep.subr.bf16.mxu0 %v3899
  %5712 = vmatpush1.bf16.msra.mxu0 %v3898
  %5713 = vmatprep.subr.bf16.mxu0 %v3915
  %5714 = vmatpush1.bf16.msra.mxu0 %v3914
  %5715 = vmatprep.subr.bf16.mxu0 %v3931
  %5716 = vmatpush1.bf16.msra.mxu0 %v3930
  %5717 = vmatprep.subr.bf16.mxu0 %v3947
  %5718 = vmatpush1.bf16.msra.mxu0 %v3946
  %5719 = vmatprep.subr.bf16.mxu0 %v3963
  %5720 = vmatpush1.bf16.msra.mxu0 %v3962
  %5721 = vmatprep.subr.bf16.mxu0 %v3979
  %5722 = vmatpush1.bf16.msra.mxu0 %v3978
  %5723 = vmatprep.mubr.bf16.mxu0 %v901
  %5724 = vmatmul.mubr.bf16.gmra.mrb[0].mxu0 %v900
  %v5725 = vpop.f32.mrb[0].mxu0
  %v5726 = vadd.f32 %v5685, %v5725
  %v5727 = vpop.f32.mrb[0].mxu0
  %v5728 = vadd.f32 %v5687, %v5727
  %v5729 = vpop.f32.mrb[0].mxu0
  %v5730 = vpop.f32.mrb[0].mxu0
  %5731 = vdwg.mxu0
  %v5732 = vmax.f32 %v4865, 0.0
  %v5733 = vmax.f32 %v4867, 0.0
  %v5734 = vmax.f32 %v4988, 0.0
  %v5735 = vmax.f32 %v4990, 0.0
  %v5736 = vmax.f32 %v5111, 0.0
  %v5737 = vmax.f32 %v5113, 0.0
  %v5738 = vmax.f32 %v5234, 0.0
  %v5739 = vmax.f32 %v5236, 0.0
  %v5740 = vmax.f32 %v5357, 0.0
  %v5741 = vmax.f32 %v5359, 0.0
  %v5742 = vmax.f32 %v5480, 0.0
  %v5743 = vmax.f32 %v5482, 0.0
  %v5744 = vmax.f32 %v5603, 0.0
  %v5745 = vmax.f32 %v5605, 0.0
  %v5746 = vmax.f32 %v5726, 0.0
  %v5747 = vmax.f32 %v5728, 0.0
  %v5748 = vpack.c.bf16 %v5732, %v5732
  %v5749 = vpack.c.bf16 %v5733, %v5733
  %v5750 = vpack.c.bf16 %v5734, %v5734
  %v5751 = vpack.c.bf16 %v5735, %v5735
  %v5752 = vpack.c.bf16 %v5736, %v5736
  %v5753 = vpack.c.bf16 %v5737, %v5737
  %v5754 = vpack.c.bf16 %v5738, %v5738
  %v5755 = vpack.c.bf16 %v5739, %v5739
  %v5756 = vpack.c.bf16 %v5740, %v5740
  %v5757 = vpack.c.bf16 %v5741, %v5741
  %v5758 = vpack.c.bf16 %v5742, %v5742
  %v5759 = vpack.c.bf16 %v5743, %v5743
  %v5760 = vpack.c.bf16 %v5744, %v5744
  %v5761 = vpack.c.bf16 %v5745, %v5745
  %v5762 = vpack.c.bf16 %v5746, %v5746
  %v5763 = vpack.c.bf16 %v5747, %v5747
  %v5764 = vld [vmem:[%s3] sm:$0xff]
  %v5765 = vld [vmem:[%s3 + $0x8] sm:$0xff]
  %v5766 = vld [vmem:[%s3 + $0x10] sm:$0xff]
  %v5767 = vld [vmem:[%s3 + $0x18] sm:$0xff]
  %v5768 = vld [vmem:[%s3 + $0x20] sm:$0xff]
  %v5769 = vld [vmem:[%s3 + $0x28] sm:$0xff]
  %v5770 = vld [vmem:[%s3 + $0x30] sm:$0xff]
  %v5771 = vld [vmem:[%s3 + $0x38] sm:$0xff]
  %v5772 = vld [vmem:[%s3 + $0x40] sm:$0xff]
  %v5773 = vld [vmem:[%s3 + $0x48] sm:$0xff]
  %v5774 = vld [vmem:[%s3 + $0x50] sm:$0xff]
  %v5775 = vld [vmem:[%s3 + $0x58] sm:$0xff]
  %v5776 = vld [vmem:[%s3 + $0x60] sm:$0xff]
  %v5777 = vld [vmem:[%s3 + $0x68] sm:$0xff]
  %v5778 = vld [vmem:[%s3 + $0x70] sm:$0xff]
  %v5779 = vld [vmem:[%s3 + $0x78] sm:$0xff]
  %v5780 = vld [vmem:[%s3 + $0x80] sm:$0xff]
  %v5781 = vld [vmem:[%s3 + $0x88] sm:$0xff]
  %v5782 = vld [vmem:[%s3 + $0x90] sm:$0xff]
  %v5783 = vld [vmem:[%s3 + $0x98] sm:$0xff]
  %v5784 = vld [vmem:[%s3 + $0xa0] sm:$0xff]
  %v5785 = vld [vmem:[%s3 + $0xa8] sm:$0xff]
  %v5786 = vld [vmem:[%s3 + $0xb0] sm:$0xff]
  %v5787 = vld [vmem:[%s3 + $0xb8] sm:$0xff]
  %v5788 = vld [vmem:[%s3 + $0xc0] sm:$0xff]
  %v5789 = vld [vmem:[%s3 + $0xc8] sm:$0xff]
  %v5790 = vld [vmem:[%s3 + $0xd0] sm:$0xff]
  %v5791 = vld [vmem:[%s3 + $0xd8] sm:$0xff]
  %v5792 = vld [vmem:[%s3 + $0xe0] sm:$0xff]
  %v5793 = vld [vmem:[%s3 + $0xe8] sm:$0xff]
  %v5794 = vld [vmem:[%s3 + $0xf0] sm:$0xff]
  %v5795 = vld [vmem:[%s3 + $0xf8] sm:$0xff]
  %v5796 = vld [vmem:[%s3 + $0x100] sm:$0xff]
  %v5797 = vld [vmem:[%s3 + $0x108] sm:$0xff]
  %v5798 = vld [vmem:[%s3 + $0x110] sm:$0xff]
  %v5799 = vld [vmem:[%s3 + $0x118] sm:$0xff]
  %v5800 = vld [vmem:[%s3 + $0x120] sm:$0xff]
  %v5801 = vld [vmem:[%s3 + $0x128] sm:$0xff]
  %v5802 = vld [vmem:[%s3 + $0x130] sm:$0xff]
  %v5803 = vld [vmem:[%s3 + $0x138] sm:$0xff]
  %v5804 = vld [vmem:[%s3 + $0x140] sm:$0xff]
  %v5805 = vld [vmem:[%s3 + $0x148] sm:$0xff]
  %v5806 = vld [vmem:[%s3 + $0x150] sm:$0xff]
  %v5807 = vld [vmem:[%s3 + $0x158] sm:$0xff]
  %v5808 = vld [vmem:[%s3 + $0x160] sm:$0xff]
  %v5809 = vld [vmem:[%s3 + $0x168] sm:$0xff]
  %v5810 = vld [vmem:[%s3 + $0x170] sm:$0xff]
  %v5811 = vld [vmem:[%s3 + $0x178] sm:$0xff]
  %v5812 = vld [vmem:[%s3 + $0x180] sm:$0xff]
  %v5813 = vld [vmem:[%s3 + $0x188] sm:$0xff]
  %v5814 = vld [vmem:[%s3 + $0x190] sm:$0xff]
  %v5815 = vld [vmem:[%s3 + $0x198] sm:$0xff]
  %v5816 = vld [vmem:[%s3 + $0x1a0] sm:$0xff]
  %v5817 = vld [vmem:[%s3 + $0x1a8] sm:$0xff]
  %v5818 = vld [vmem:[%s3 + $0x1b0] sm:$0xff]
  %v5819 = vld [vmem:[%s3 + $0x1b8] sm:$0xff]
  %v5820 = vld [vmem:[%s3 + $0x1c0] sm:$0xff]
  %v5821 = vld [vmem:[%s3 + $0x1c8] sm:$0xff]
  %v5822 = vld [vmem:[%s3 + $0x1d0] sm:$0xff]
  %v5823 = vld [vmem:[%s3 + $0x1d8] sm:$0xff]
  %v5824 = vld [vmem:[%s3 + $0x1e0] sm:$0xff]
  %v5825 = vld [vmem:[%s3 + $0x1e8] sm:$0xff]
  %v5826 = vld [vmem:[%s3 + $0x1f0] sm:$0xff]
  %v5827 = vld [vmem:[%s3 + $0x1f8] sm:$0xff]
  %v5828 = vld [vmem:[%s3 + $0x200] sm:$0xff]
  %v5829 = vld [vmem:[%s3 + $0x208] sm:$0xff]
  %v5830 = vld [vmem:[%s3 + $0x210] sm:$0xff]
  %v5831 = vld [vmem:[%s3 + $0x218] sm:$0xff]
  %v5832 = vld [vmem:[%s3 + $0x220] sm:$0xff]
  %v5833 = vld [vmem:[%s3 + $0x228] sm:$0xff]
  %v5834 = vld [vmem:[%s3 + $0x230] sm:$0xff]
  %v5835 = vld [vmem:[%s3 + $0x238] sm:$0xff]
  %v5836 = vld [vmem:[%s3 + $0x240] sm:$0xff]
  %v5837 = vld [vmem:[%s3 + $0x248] sm:$0xff]
  %v5838 = vld [vmem:[%s3 + $0x250] sm:$0xff]
  %v5839 = vld [vmem:[%s3 + $0x258] sm:$0xff]
  %v5840 = vld [vmem:[%s3 + $0x260] sm:$0xff]
  %v5841 = vld [vmem:[%s3 + $0x268] sm:$0xff]
  %v5842 = vld [vmem:[%s3 + $0x270] sm:$0xff]
  %v5843 = vld [vmem:[%s3 + $0x278] sm:$0xff]
  %v5844 = vld [vmem:[%s3 + $0x280] sm:$0xff]
  %v5845 = vld [vmem:[%s3 + $0x288] sm:$0xff]
  %v5846 = vld [vmem:[%s3 + $0x290] sm:$0xff]
  %v5847 = vld [vmem:[%s3 + $0x298] sm:$0xff]
  %v5848 = vld [vmem:[%s3 + $0x2a0] sm:$0xff]
  %v5849 = vld [vmem:[%s3 + $0x2a8] sm:$0xff]
  %v5850 = vld [vmem:[%s3 + $0x2b0] sm:$0xff]
  %v5851 = vld [vmem:[%s3 + $0x2b8] sm:$0xff]
  %v5852 = vld [vmem:[%s3 + $0x2c0] sm:$0xff]
  %v5853 = vld [vmem:[%s3 + $0x2c8] sm:$0xff]
  %v5854 = vld [vmem:[%s3 + $0x2d0] sm:$0xff]
  %v5855 = vld [vmem:[%s3 + $0x2d8] sm:$0xff]
  %v5856 = vld [vmem:[%s3 + $0x2e0] sm:$0xff]
  %v5857 = vld [vmem:[%s3 + $0x2e8] sm:$0xff]
  %v5858 = vld [vmem:[%s3 + $0x2f0] sm:$0xff]
  %v5859 = vld [vmem:[%s3 + $0x2f8] sm:$0xff]
  %v5860 = vld [vmem:[%s3 + $0x300] sm:$0xff]
  %v5861 = vld [vmem:[%s3 + $0x308] sm:$0xff]
  %v5862 = vld [vmem:[%s3 + $0x310] sm:$0xff]
  %v5863 = vld [vmem:[%s3 + $0x318] sm:$0xff]
  %v5864 = vld [vmem:[%s3 + $0x320] sm:$0xff]
  %v5865 = vld [vmem:[%s3 + $0x328] sm:$0xff]
  %v5866 = vld [vmem:[%s3 + $0x330] sm:$0xff]
  %v5867 = vld [vmem:[%s3 + $0x338] sm:$0xff]
  %v5868 = vld [vmem:[%s3 + $0x340] sm:$0xff]
  %v5869 = vld [vmem:[%s3 + $0x348] sm:$0xff]
  %v5870 = vld [vmem:[%s3 + $0x350] sm:$0xff]
  %v5871 = vld [vmem:[%s3 + $0x358] sm:$0xff]
  %v5872 = vld [vmem:[%s3 + $0x360] sm:$0xff]
  %v5873 = vld [vmem:[%s3 + $0x368] sm:$0xff]
  %v5874 = vld [vmem:[%s3 + $0x370] sm:$0xff]
  %v5875 = vld [vmem:[%s3 + $0x378] sm:$0xff]
  %v5876 = vld [vmem:[%s3 + $0x380] sm:$0xff]
  %v5877 = vld [vmem:[%s3 + $0x388] sm:$0xff]
  %v5878 = vld [vmem:[%s3 + $0x390] sm:$0xff]
  %v5879 = vld [vmem:[%s3 + $0x398] sm:$0xff]
  %v5880 = vld [vmem:[%s3 + $0x3a0] sm:$0xff]
  %v5881 = vld [vmem:[%s3 + $0x3a8] sm:$0xff]
  %v5882 = vld [vmem:[%s3 + $0x3b0] sm:$0xff]
  %v5883 = vld [vmem:[%s3 + $0x3b8] sm:$0xff]
  %v5884 = vld [vmem:[%s3 + $0x3c0] sm:$0xff]
  %v5885 = vld [vmem:[%s3 + $0x3c8] sm:$0xff]
  %v5886 = vld [vmem:[%s3 + $0x3d0] sm:$0xff]
  %v5887 = vld [vmem:[%s3 + $0x3d8] sm:$0xff]
  %v5888 = vld [vmem:[%s3 + $0x3e0] sm:$0xff]
  %v5889 = vld [vmem:[%s3 + $0x3e8] sm:$0xff]
  %v5890 = vld [vmem:[%s3 + $0x3f0] sm:$0xff]
  %v5891 = vld [vmem:[%s3 + $0x3f8] sm:$0xff]
  %v5892 = vld [vmem:[%s3 + $0x400] sm:$0xff]
  %v5893 = vld [vmem:[%s3 + $0x408] sm:$0xff]
  %v5894 = vld [vmem:[%s3 + $0x410] sm:$0xff]
  %v5895 = vld [vmem:[%s3 + $0x418] sm:$0xff]
  %v5896 = vld [vmem:[%s3 + $0x420] sm:$0xff]
  %v5897 = vld [vmem:[%s3 + $0x428] sm:$0xff]
  %v5898 = vld [vmem:[%s3 + $0x430] sm:$0xff]
  %v5899 = vld [vmem:[%s3 + $0x438] sm:$0xff]
  %v5900 = vld [vmem:[%s3 + $0x440] sm:$0xff]
  %v5901 = vld [vmem:[%s3 + $0x448] sm:$0xff]
  %v5902 = vld [vmem:[%s3 + $0x450] sm:$0xff]
  %v5903 = vld [vmem:[%s3 + $0x458] sm:$0xff]
  %v5904 = vld [vmem:[%s3 + $0x460] sm:$0xff]
  %v5905 = vld [vmem:[%s3 + $0x468] sm:$0xff]
  %v5906 = vld [vmem:[%s3 + $0x470] sm:$0xff]
  %v5907 = vld [vmem:[%s3 + $0x478] sm:$0xff]
  %v5908 = vld [vmem:[%s3 + $0x480] sm:$0xff]
  %v5909 = vld [vmem:[%s3 + $0x488] sm:$0xff]
  %v5910 = vld [vmem:[%s3 + $0x490] sm:$0xff]
  %v5911 = vld [vmem:[%s3 + $0x498] sm:$0xff]
  %v5912 = vld [vmem:[%s3 + $0x4a0] sm:$0xff]
  %v5913 = vld [vmem:[%s3 + $0x4a8] sm:$0xff]
  %v5914 = vld [vmem:[%s3 + $0x4b0] sm:$0xff]
  %v5915 = vld [vmem:[%s3 + $0x4b8] sm:$0xff]
  %v5916 = vld [vmem:[%s3 + $0x4c0] sm:$0xff]
  %v5917 = vld [vmem:[%s3 + $0x4c8] sm:$0xff]
  %v5918 = vld [vmem:[%s3 + $0x4d0] sm:$0xff]
  %v5919 = vld [vmem:[%s3 + $0x4d8] sm:$0xff]
  %v5920 = vld [vmem:[%s3 + $0x4e0] sm:$0xff]
  %v5921 = vld [vmem:[%s3 + $0x4e8] sm:$0xff]
  %v5922 = vld [vmem:[%s3 + $0x4f0] sm:$0xff]
  %v5923 = vld [vmem:[%s3 + $0x4f8] sm:$0xff]
  %v5924 = vld [vmem:[%s3 + $0x500] sm:$0xff]
  %v5925 = vld [vmem:[%s3 + $0x508] sm:$0xff]
  %v5926 = vld [vmem:[%s3 + $0x510] sm:$0xff]
  %v5927 = vld [vmem:[%s3 + $0x518] sm:$0xff]
  %v5928 = vld [vmem:[%s3 + $0x520] sm:$0xff]
  %v5929 = vld [vmem:[%s3 + $0x528] sm:$0xff]
  %v5930 = vld [vmem:[%s3 + $0x530] sm:$0xff]
  %v5931 = vld [vmem:[%s3 + $0x538] sm:$0xff]
  %v5932 = vld [vmem:[%s3 + $0x540] sm:$0xff]
  %v5933 = vld [vmem:[%s3 + $0x548] sm:$0xff]
  %v5934 = vld [vmem:[%s3 + $0x550] sm:$0xff]
  %v5935 = vld [vmem:[%s3 + $0x558] sm:$0xff]
  %v5936 = vld [vmem:[%s3 + $0x560] sm:$0xff]
  %v5937 = vld [vmem:[%s3 + $0x568] sm:$0xff]
  %v5938 = vld [vmem:[%s3 + $0x570] sm:$0xff]
  %v5939 = vld [vmem:[%s3 + $0x578] sm:$0xff]
  %v5940 = vld [vmem:[%s3 + $0x580] sm:$0xff]
  %v5941 = vld [vmem:[%s3 + $0x588] sm:$0xff]
  %v5942 = vld [vmem:[%s3 + $0x590] sm:$0xff]
  %v5943 = vld [vmem:[%s3 + $0x598] sm:$0xff]
  %v5944 = vld [vmem:[%s3 + $0x5a0] sm:$0xff]
  %v5945 = vld [vmem:[%s3 + $0x5a8] sm:$0xff]
  %v5946 = vld [vmem:[%s3 + $0x5b0] sm:$0xff]
  %v5947 = vld [vmem:[%s3 + $0x5b8] sm:$0xff]
  %v5948 = vld [vmem:[%s3 + $0x5c0] sm:$0xff]
  %v5949 = vld [vmem:[%s3 + $0x5c8] sm:$0xff]
  %v5950 = vld [vmem:[%s3 + $0x5d0] sm:$0xff]
  %v5951 = vld [vmem:[%s3 + $0x5d8] sm:$0xff]
  %v5952 = vld [vmem:[%s3 + $0x5e0] sm:$0xff]
  %v5953 = vld [vmem:[%s3 + $0x5e8] sm:$0xff]
  %v5954 = vld [vmem:[%s3 + $0x5f0] sm:$0xff]
  %v5955 = vld [vmem:[%s3 + $0x5f8] sm:$0xff]
  %v5956 = vld [vmem:[%s3 + $0x600] sm:$0xff]
  %v5957 = vld [vmem:[%s3 + $0x608] sm:$0xff]
  %v5958 = vld [vmem:[%s3 + $0x610] sm:$0xff]
  %v5959 = vld [vmem:[%s3 + $0x618] sm:$0xff]
  %v5960 = vld [vmem:[%s3 + $0x620] sm:$0xff]
  %v5961 = vld [vmem:[%s3 + $0x628] sm:$0xff]
  %v5962 = vld [vmem:[%s3 + $0x630] sm:$0xff]
  %v5963 = vld [vmem:[%s3 + $0x638] sm:$0xff]
  %v5964 = vld [vmem:[%s3 + $0x640] sm:$0xff]
  %v5965 = vld [vmem:[%s3 + $0x648] sm:$0xff]
  %v5966 = vld [vmem:[%s3 + $0x650] sm:$0xff]
  %v5967 = vld [vmem:[%s3 + $0x658] sm:$0xff]
  %v5968 = vld [vmem:[%s3 + $0x660] sm:$0xff]
  %v5969 = vld [vmem:[%s3 + $0x668] sm:$0xff]
  %v5970 = vld [vmem:[%s3 + $0x670] sm:$0xff]
  %v5971 = vld [vmem:[%s3 + $0x678] sm:$0xff]
  %v5972 = vld [vmem:[%s3 + $0x680] sm:$0xff]
  %v5973 = vld [vmem:[%s3 + $0x688] sm:$0xff]
  %v5974 = vld [vmem:[%s3 + $0x690] sm:$0xff]
  %v5975 = vld [vmem:[%s3 + $0x698] sm:$0xff]
  %v5976 = vld [vmem:[%s3 + $0x6a0] sm:$0xff]
  %v5977 = vld [vmem:[%s3 + $0x6a8] sm:$0xff]
  %v5978 = vld [vmem:[%s3 + $0x6b0] sm:$0xff]
  %v5979 = vld [vmem:[%s3 + $0x6b8] sm:$0xff]
  %v5980 = vld [vmem:[%s3 + $0x6c0] sm:$0xff]
  %v5981 = vld [vmem:[%s3 + $0x6c8] sm:$0xff]
  %v5982 = vld [vmem:[%s3 + $0x6d0] sm:$0xff]
  %v5983 = vld [vmem:[%s3 + $0x6d8] sm:$0xff]
  %v5984 = vld [vmem:[%s3 + $0x6e0] sm:$0xff]
  %v5985 = vld [vmem:[%s3 + $0x6e8] sm:$0xff]
  %v5986 = vld [vmem:[%s3 + $0x6f0] sm:$0xff]
  %v5987 = vld [vmem:[%s3 + $0x6f8] sm:$0xff]
  %v5988 = vld [vmem:[%s3 + $0x700] sm:$0xff]
  %v5989 = vld [vmem:[%s3 + $0x708] sm:$0xff]
  %v5990 = vld [vmem:[%s3 + $0x710] sm:$0xff]
  %v5991 = vld [vmem:[%s3 + $0x718] sm:$0xff]
  %v5992 = vld [vmem:[%s3 + $0x720] sm:$0xff]
  %v5993 = vld [vmem:[%s3 + $0x728] sm:$0xff]
  %v5994 = vld [vmem:[%s3 + $0x730] sm:$0xff]
  %v5995 = vld [vmem:[%s3 + $0x738] sm:$0xff]
  %v5996 = vld [vmem:[%s3 + $0x740] sm:$0xff]
  %v5997 = vld [vmem:[%s3 + $0x748] sm:$0xff]
  %v5998 = vld [vmem:[%s3 + $0x750] sm:$0xff]
  %v5999 = vld [vmem:[%s3 + $0x758] sm:$0xff]
  %v6000 = vld [vmem:[%s3 + $0x760] sm:$0xff]
  %v6001 = vld [vmem:[%s3 + $0x768] sm:$0xff]
  %v6002 = vld [vmem:[%s3 + $0x770] sm:$0xff]
  %v6003 = vld [vmem:[%s3 + $0x778] sm:$0xff]
  %v6004 = vld [vmem:[%s3 + $0x780] sm:$0xff]
  %v6005 = vld [vmem:[%s3 + $0x788] sm:$0xff]
  %v6006 = vld [vmem:[%s3 + $0x790] sm:$0xff]
  %v6007 = vld [vmem:[%s3 + $0x798] sm:$0xff]
  %v6008 = vld [vmem:[%s3 + $0x7a0] sm:$0xff]
  %v6009 = vld [vmem:[%s3 + $0x7a8] sm:$0xff]
  %v6010 = vld [vmem:[%s3 + $0x7b0] sm:$0xff]
  %v6011 = vld [vmem:[%s3 + $0x7b8] sm:$0xff]
  %v6012 = vld [vmem:[%s3 + $0x7c0] sm:$0xff]
  %v6013 = vld [vmem:[%s3 + $0x7c8] sm:$0xff]
  %v6014 = vld [vmem:[%s3 + $0x7d0] sm:$0xff]
  %v6015 = vld [vmem:[%s3 + $0x7d8] sm:$0xff]
  %v6016 = vld [vmem:[%s3 + $0x7e0] sm:$0xff]
  %v6017 = vld [vmem:[%s3 + $0x7e8] sm:$0xff]
  %v6018 = vld [vmem:[%s3 + $0x7f0] sm:$0xff]
  %v6019 = vld [vmem:[%s3 + $0x7f8] sm:$0xff]
  %v6020 = vld [vmem:[%s3 + $0x800] sm:$0xff]
  %v6021 = vld [vmem:[%s3 + $0x808] sm:$0xff]
  %v6022 = vld [vmem:[%s3 + $0x810] sm:$0xff]
  %v6023 = vld [vmem:[%s3 + $0x818] sm:$0xff]
  %v6024 = vld [vmem:[%s3 + $0x820] sm:$0xff]
  %v6025 = vld [vmem:[%s3 + $0x828] sm:$0xff]
  %v6026 = vld [vmem:[%s3 + $0x830] sm:$0xff]
  %v6027 = vld [vmem:[%s3 + $0x838] sm:$0xff]
  %v6028 = vld [vmem:[%s3 + $0x840] sm:$0xff]
  %v6029 = vld [vmem:[%s3 + $0x848] sm:$0xff]
  %v6030 = vld [vmem:[%s3 + $0x850] sm:$0xff]
  %v6031 = vld [vmem:[%s3 + $0x858] sm:$0xff]
  %v6032 = vld [vmem:[%s3 + $0x860] sm:$0xff]
  %v6033 = vld [vmem:[%s3 + $0x868] sm:$0xff]
  %v6034 = vld [vmem:[%s3 + $0x870] sm:$0xff]
  %v6035 = vld [vmem:[%s3 + $0x878] sm:$0xff]
  %v6036 = vld [vmem:[%s3 + $0x880] sm:$0xff]
  %v6037 = vld [vmem:[%s3 + $0x888] sm:$0xff]
  %v6038 = vld [vmem:[%s3 + $0x890] sm:$0xff]
  %v6039 = vld [vmem:[%s3 + $0x898] sm:$0xff]
  %v6040 = vld [vmem:[%s3 + $0x8a0] sm:$0xff]
  %v6041 = vld [vmem:[%s3 + $0x8a8] sm:$0xff]
  %v6042 = vld [vmem:[%s3 + $0x8b0] sm:$0xff]
  %v6043 = vld [vmem:[%s3 + $0x8b8] sm:$0xff]
  %v6044 = vld [vmem:[%s3 + $0x8c0] sm:$0xff]
  %v6045 = vld [vmem:[%s3 + $0x8c8] sm:$0xff]
  %v6046 = vld [vmem:[%s3 + $0x8d0] sm:$0xff]
  %v6047 = vld [vmem:[%s3 + $0x8d8] sm:$0xff]
  %v6048 = vld [vmem:[%s3 + $0x8e0] sm:$0xff]
  %v6049 = vld [vmem:[%s3 + $0x8e8] sm:$0xff]
  %v6050 = vld [vmem:[%s3 + $0x8f0] sm:$0xff]
  %v6051 = vld [vmem:[%s3 + $0x8f8] sm:$0xff]
  %v6052 = vld [vmem:[%s3 + $0x900] sm:$0xff]
  %v6053 = vld [vmem:[%s3 + $0x908] sm:$0xff]
  %v6054 = vld [vmem:[%s3 + $0x910] sm:$0xff]
  %v6055 = vld [vmem:[%s3 + $0x918] sm:$0xff]
  %v6056 = vld [vmem:[%s3 + $0x920] sm:$0xff]
  %v6057 = vld [vmem:[%s3 + $0x928] sm:$0xff]
  %v6058 = vld [vmem:[%s3 + $0x930] sm:$0xff]
  %v6059 = vld [vmem:[%s3 + $0x938] sm:$0xff]
  %v6060 = vld [vmem:[%s3 + $0x940] sm:$0xff]
  %v6061 = vld [vmem:[%s3 + $0x948] sm:$0xff]
  %v6062 = vld [vmem:[%s3 + $0x950] sm:$0xff]
  %v6063 = vld [vmem:[%s3 + $0x958] sm:$0xff]
  %v6064 = vld [vmem:[%s3 + $0x960] sm:$0xff]
  %v6065 = vld [vmem:[%s3 + $0x968] sm:$0xff]
  %v6066 = vld [vmem:[%s3 + $0x970] sm:$0xff]
  %v6067 = vld [vmem:[%s3 + $0x978] sm:$0xff]
  %v6068 = vld [vmem:[%s3 + $0x980] sm:$0xff]
  %v6069 = vld [vmem:[%s3 + $0x988] sm:$0xff]
  %v6070 = vld [vmem:[%s3 + $0x990] sm:$0xff]
  %v6071 = vld [vmem:[%s3 + $0x998] sm:$0xff]
  %v6072 = vld [vmem:[%s3 + $0x9a0] sm:$0xff]
  %v6073 = vld [vmem:[%s3 + $0x9a8] sm:$0xff]
  %v6074 = vld [vmem:[%s3 + $0x9b0] sm:$0xff]
  %v6075 = vld [vmem:[%s3 + $0x9b8] sm:$0xff]
  %v6076 = vld [vmem:[%s3 + $0x9c0] sm:$0xff]
  %v6077 = vld [vmem:[%s3 + $0x9c8] sm:$0xff]
  %v6078 = vld [vmem:[%s3 + $0x9d0] sm:$0xff]
  %v6079 = vld [vmem:[%s3 + $0x9d8] sm:$0xff]
  %v6080 = vld [vmem:[%s3 + $0x9e0] sm:$0xff]
  %v6081 = vld [vmem:[%s3 + $0x9e8] sm:$0xff]
  %v6082 = vld [vmem:[%s3 + $0x9f0] sm:$0xff]
  %v6083 = vld [vmem:[%s3 + $0x9f8] sm:$0xff]
  %v6084 = vld [vmem:[%s3 + $0xa00] sm:$0xff]
  %v6085 = vld [vmem:[%s3 + $0xa08] sm:$0xff]
  %v6086 = vld [vmem:[%s3 + $0xa10] sm:$0xff]
  %v6087 = vld [vmem:[%s3 + $0xa18] sm:$0xff]
  %v6088 = vld [vmem:[%s3 + $0xa20] sm:$0xff]
  %v6089 = vld [vmem:[%s3 + $0xa28] sm:$0xff]
  %v6090 = vld [vmem:[%s3 + $0xa30] sm:$0xff]
  %v6091 = vld [vmem:[%s3 + $0xa38] sm:$0xff]
  %v6092 = vld [vmem:[%s3 + $0xa40] sm:$0xff]
  %v6093 = vld [vmem:[%s3 + $0xa48] sm:$0xff]
  %v6094 = vld [vmem:[%s3 + $0xa50] sm:$0xff]
  %v6095 = vld [vmem:[%s3 + $0xa58] sm:$0xff]
  %v6096 = vld [vmem:[%s3 + $0xa60] sm:$0xff]
  %v6097 = vld [vmem:[%s3 + $0xa68] sm:$0xff]
  %v6098 = vld [vmem:[%s3 + $0xa70] sm:$0xff]
  %v6099 = vld [vmem:[%s3 + $0xa78] sm:$0xff]
  %v6100 = vld [vmem:[%s3 + $0xa80] sm:$0xff]
  %v6101 = vld [vmem:[%s3 + $0xa88] sm:$0xff]
  %v6102 = vld [vmem:[%s3 + $0xa90] sm:$0xff]
  %v6103 = vld [vmem:[%s3 + $0xa98] sm:$0xff]
  %v6104 = vld [vmem:[%s3 + $0xaa0] sm:$0xff]
  %v6105 = vld [vmem:[%s3 + $0xaa8] sm:$0xff]
  %v6106 = vld [vmem:[%s3 + $0xab0] sm:$0xff]
  %v6107 = vld [vmem:[%s3 + $0xab8] sm:$0xff]
  %v6108 = vld [vmem:[%s3 + $0xac0] sm:$0xff]
  %v6109 = vld [vmem:[%s3 + $0xac8] sm:$0xff]
  %v6110 = vld [vmem:[%s3 + $0xad0] sm:$0xff]
  %v6111 = vld [vmem:[%s3 + $0xad8] sm:$0xff]
  %v6112 = vld [vmem:[%s3 + $0xae0] sm:$0xff]
  %v6113 = vld [vmem:[%s3 + $0xae8] sm:$0xff]
  %v6114 = vld [vmem:[%s3 + $0xaf0] sm:$0xff]
  %v6115 = vld [vmem:[%s3 + $0xaf8] sm:$0xff]
  %v6116 = vld [vmem:[%s3 + $0xb00] sm:$0xff]
  %v6117 = vld [vmem:[%s3 + $0xb08] sm:$0xff]
  %v6118 = vld [vmem:[%s3 + $0xb10] sm:$0xff]
  %v6119 = vld [vmem:[%s3 + $0xb18] sm:$0xff]
  %v6120 = vld [vmem:[%s3 + $0xb20] sm:$0xff]
  %v6121 = vld [vmem:[%s3 + $0xb28] sm:$0xff]
  %v6122 = vld [vmem:[%s3 + $0xb30] sm:$0xff]
  %v6123 = vld [vmem:[%s3 + $0xb38] sm:$0xff]
  %v6124 = vld [vmem:[%s3 + $0xb40] sm:$0xff]
  %v6125 = vld [vmem:[%s3 + $0xb48] sm:$0xff]
  %v6126 = vld [vmem:[%s3 + $0xb50] sm:$0xff]
  %v6127 = vld [vmem:[%s3 + $0xb58] sm:$0xff]
  %v6128 = vld [vmem:[%s3 + $0xb60] sm:$0xff]
  %v6129 = vld [vmem:[%s3 + $0xb68] sm:$0xff]
  %v6130 = vld [vmem:[%s3 + $0xb70] sm:$0xff]
  %v6131 = vld [vmem:[%s3 + $0xb78] sm:$0xff]
  %v6132 = vld [vmem:[%s3 + $0xb80] sm:$0xff]
  %v6133 = vld [vmem:[%s3 + $0xb88] sm:$0xff]
  %v6134 = vld [vmem:[%s3 + $0xb90] sm:$0xff]
  %v6135 = vld [vmem:[%s3 + $0xb98] sm:$0xff]
  %v6136 = vld [vmem:[%s3 + $0xba0] sm:$0xff]
  %v6137 = vld [vmem:[%s3 + $0xba8] sm:$0xff]
  %v6138 = vld [vmem:[%s3 + $0xbb0] sm:$0xff]
  %v6139 = vld [vmem:[%s3 + $0xbb8] sm:$0xff]
  %v6140 = vld [vmem:[%s3 + $0xbc0] sm:$0xff]
  %v6141 = vld [vmem:[%s3 + $0xbc8] sm:$0xff]
  %v6142 = vld [vmem:[%s3 + $0xbd0] sm:$0xff]
  %v6143 = vld [vmem:[%s3 + $0xbd8] sm:$0xff]
  %v6144 = vld [vmem:[%s3 + $0xbe0] sm:$0xff]
  %v6145 = vld [vmem:[%s3 + $0xbe8] sm:$0xff]
  %v6146 = vld [vmem:[%s3 + $0xbf0] sm:$0xff]
  %v6147 = vld [vmem:[%s3 + $0xbf8] sm:$0xff]
  %v6148 = vld [vmem:[%s3 + $0xc00] sm:$0xff]
  %v6149 = vld [vmem:[%s3 + $0xc08] sm:$0xff]
  %v6150 = vld [vmem:[%s3 + $0xc10] sm:$0xff]
  %v6151 = vld [vmem:[%s3 + $0xc18] sm:$0xff]
  %v6152 = vld [vmem:[%s3 + $0xc20] sm:$0xff]
  %v6153 = vld [vmem:[%s3 + $0xc28] sm:$0xff]
  %v6154 = vld [vmem:[%s3 + $0xc30] sm:$0xff]
  %v6155 = vld [vmem:[%s3 + $0xc38] sm:$0xff]
  %v6156 = vld [vmem:[%s3 + $0xc40] sm:$0xff]
  %v6157 = vld [vmem:[%s3 + $0xc48] sm:$0xff]
  %v6158 = vld [vmem:[%s3 + $0xc50] sm:$0xff]
  %v6159 = vld [vmem:[%s3 + $0xc58] sm:$0xff]
  %v6160 = vld [vmem:[%s3 + $0xc60] sm:$0xff]
  %v6161 = vld [vmem:[%s3 + $0xc68] sm:$0xff]
  %v6162 = vld [vmem:[%s3 + $0xc70] sm:$0xff]
  %v6163 = vld [vmem:[%s3 + $0xc78] sm:$0xff]
  %v6164 = vld [vmem:[%s3 + $0xc80] sm:$0xff]
  %v6165 = vld [vmem:[%s3 + $0xc88] sm:$0xff]
  %v6166 = vld [vmem:[%s3 + $0xc90] sm:$0xff]
  %v6167 = vld [vmem:[%s3 + $0xc98] sm:$0xff]
  %v6168 = vld [vmem:[%s3 + $0xca0] sm:$0xff]
  %v6169 = vld [vmem:[%s3 + $0xca8] sm:$0xff]
  %v6170 = vld [vmem:[%s3 + $0xcb0] sm:$0xff]
  %v6171 = vld [vmem:[%s3 + $0xcb8] sm:$0xff]
  %v6172 = vld [vmem:[%s3 + $0xcc0] sm:$0xff]
  %v6173 = vld [vmem:[%s3 + $0xcc8] sm:$0xff]
  %v6174 = vld [vmem:[%s3 + $0xcd0] sm:$0xff]
  %v6175 = vld [vmem:[%s3 + $0xcd8] sm:$0xff]
  %v6176 = vld [vmem:[%s3 + $0xce0] sm:$0xff]
  %v6177 = vld [vmem:[%s3 + $0xce8] sm:$0xff]
  %v6178 = vld [vmem:[%s3 + $0xcf0] sm:$0xff]
  %v6179 = vld [vmem:[%s3 + $0xcf8] sm:$0xff]
  %v6180 = vld [vmem:[%s3 + $0xd00] sm:$0xff]
  %v6181 = vld [vmem:[%s3 + $0xd08] sm:$0xff]
  %v6182 = vld [vmem:[%s3 + $0xd10] sm:$0xff]
  %v6183 = vld [vmem:[%s3 + $0xd18] sm:$0xff]
  %v6184 = vld [vmem:[%s3 + $0xd20] sm:$0xff]
  %v6185 = vld [vmem:[%s3 + $0xd28] sm:$0xff]
  %v6186 = vld [vmem:[%s3 + $0xd30] sm:$0xff]
  %v6187 = vld [vmem:[%s3 + $0xd38] sm:$0xff]
  %v6188 = vld [vmem:[%s3 + $0xd40] sm:$0xff]
  %v6189 = vld [vmem:[%s3 + $0xd48] sm:$0xff]
  %v6190 = vld [vmem:[%s3 + $0xd50] sm:$0xff]
  %v6191 = vld [vmem:[%s3 + $0xd58] sm:$0xff]
  %v6192 = vld [vmem:[%s3 + $0xd60] sm:$0xff]
  %v6193 = vld [vmem:[%s3 + $0xd68] sm:$0xff]
  %v6194 = vld [vmem:[%s3 + $0xd70] sm:$0xff]
  %v6195 = vld [vmem:[%s3 + $0xd78] sm:$0xff]
  %v6196 = vld [vmem:[%s3 + $0xd80] sm:$0xff]
  %v6197 = vld [vmem:[%s3 + $0xd88] sm:$0xff]
  %v6198 = vld [vmem:[%s3 + $0xd90] sm:$0xff]
  %v6199 = vld [vmem:[%s3 + $0xd98] sm:$0xff]
  %v6200 = vld [vmem:[%s3 + $0xda0] sm:$0xff]
  %v6201 = vld [vmem:[%s3 + $0xda8] sm:$0xff]
  %v6202 = vld [vmem:[%s3 + $0xdb0] sm:$0xff]
  %v6203 = vld [vmem:[%s3 + $0xdb8] sm:$0xff]
  %v6204 = vld [vmem:[%s3 + $0xdc0] sm:$0xff]
  %v6205 = vld [vmem:[%s3 + $0xdc8] sm:$0xff]
  %v6206 = vld [vmem:[%s3 + $0xdd0] sm:$0xff]
  %v6207 = vld [vmem:[%s3 + $0xdd8] sm:$0xff]
  %v6208 = vld [vmem:[%s3 + $0xde0] sm:$0xff]
  %v6209 = vld [vmem:[%s3 + $0xde8] sm:$0xff]
  %v6210 = vld [vmem:[%s3 + $0xdf0] sm:$0xff]
  %v6211 = vld [vmem:[%s3 + $0xdf8] sm:$0xff]
  %v6212 = vld [vmem:[%s3 + $0xe00] sm:$0xff]
  %v6213 = vld [vmem:[%s3 + $0xe08] sm:$0xff]
  %v6214 = vld [vmem:[%s3 + $0xe10] sm:$0xff]
  %v6215 = vld [vmem:[%s3 + $0xe18] sm:$0xff]
  %v6216 = vld [vmem:[%s3 + $0xe20] sm:$0xff]
  %v6217 = vld [vmem:[%s3 + $0xe28] sm:$0xff]
  %v6218 = vld [vmem:[%s3 + $0xe30] sm:$0xff]
  %v6219 = vld [vmem:[%s3 + $0xe38] sm:$0xff]
  %v6220 = vld [vmem:[%s3 + $0xe40] sm:$0xff]
  %v6221 = vld [vmem:[%s3 + $0xe48] sm:$0xff]
  %v6222 = vld [vmem:[%s3 + $0xe50] sm:$0xff]
  %v6223 = vld [vmem:[%s3 + $0xe58] sm:$0xff]
  %v6224 = vld [vmem:[%s3 + $0xe60] sm:$0xff]
  %v6225 = vld [vmem:[%s3 + $0xe68] sm:$0xff]
  %v6226 = vld [vmem:[%s3 + $0xe70] sm:$0xff]
  %v6227 = vld [vmem:[%s3 + $0xe78] sm:$0xff]
  %v6228 = vld [vmem:[%s3 + $0xe80] sm:$0xff]
  %v6229 = vld [vmem:[%s3 + $0xe88] sm:$0xff]
  %v6230 = vld [vmem:[%s3 + $0xe90] sm:$0xff]
  %v6231 = vld [vmem:[%s3 + $0xe98] sm:$0xff]
  %v6232 = vld [vmem:[%s3 + $0xea0] sm:$0xff]
  %v6233 = vld [vmem:[%s3 + $0xea8] sm:$0xff]
  %v6234 = vld [vmem:[%s3 + $0xeb0] sm:$0xff]
  %v6235 = vld [vmem:[%s3 + $0xeb8] sm:$0xff]
  %v6236 = vld [vmem:[%s3 + $0xec0] sm:$0xff]
  %v6237 = vld [vmem:[%s3 + $0xec8] sm:$0xff]
  %v6238 = vld [vmem:[%s3 + $0xed0] sm:$0xff]
  %v6239 = vld [vmem:[%s3 + $0xed8] sm:$0xff]
  %v6240 = vld [vmem:[%s3 + $0xee0] sm:$0xff]
  %v6241 = vld [vmem:[%s3 + $0xee8] sm:$0xff]
  %v6242 = vld [vmem:[%s3 + $0xef0] sm:$0xff]
  %v6243 = vld [vmem:[%s3 + $0xef8] sm:$0xff]
  %v6244 = vld [vmem:[%s3 + $0xf00] sm:$0xff]
  %v6245 = vld [vmem:[%s3 + $0xf08] sm:$0xff]
  %v6246 = vld [vmem:[%s3 + $0xf10] sm:$0xff]
  %v6247 = vld [vmem:[%s3 + $0xf18] sm:$0xff]
  %v6248 = vld [vmem:[%s3 + $0xf20] sm:$0xff]
  %v6249 = vld [vmem:[%s3 + $0xf28] sm:$0xff]
  %v6250 = vld [vmem:[%s3 + $0xf30] sm:$0xff]
  %v6251 = vld [vmem:[%s3 + $0xf38] sm:$0xff]
  %v6252 = vld [vmem:[%s3 + $0xf40] sm:$0xff]
  %v6253 = vld [vmem:[%s3 + $0xf48] sm:$0xff]
  %v6254 = vld [vmem:[%s3 + $0xf50] sm:$0xff]
  %v6255 = vld [vmem:[%s3 + $0xf58] sm:$0xff]
  %v6256 = vld [vmem:[%s3 + $0xf60] sm:$0xff]
  %v6257 = vld [vmem:[%s3 + $0xf68] sm:$0xff]
  %v6258 = vld [vmem:[%s3 + $0xf70] sm:$0xff]
  %v6259 = vld [vmem:[%s3 + $0xf78] sm:$0xff]
  %v6260 = vld [vmem:[%s3 + $0xf80] sm:$0xff]
  %v6261 = vld [vmem:[%s3 + $0xf88] sm:$0xff]
  %v6262 = vld [vmem:[%s3 + $0xf90] sm:$0xff]
  %v6263 = vld [vmem:[%s3 + $0xf98] sm:$0xff]
  %v6264 = vld [vmem:[%s3 + $0xfa0] sm:$0xff]
  %v6265 = vld [vmem:[%s3 + $0xfa8] sm:$0xff]
  %v6266 = vld [vmem:[%s3 + $0xfb0] sm:$0xff]
  %v6267 = vld [vmem:[%s3 + $0xfb8] sm:$0xff]
  %v6268 = vld [vmem:[%s3 + $0xfc0] sm:$0xff]
  %v6269 = vld [vmem:[%s3 + $0xfc8] sm:$0xff]
  %v6270 = vld [vmem:[%s3 + $0xfd0] sm:$0xff]
  %v6271 = vld [vmem:[%s3 + $0xfd8] sm:$0xff]
  %v6272 = vld [vmem:[%s3 + $0xfe0] sm:$0xff]
  %v6273 = vld [vmem:[%s3 + $0xfe8] sm:$0xff]
  %v6274 = vld [vmem:[%s3 + $0xff0] sm:$0xff]
  %v6275 = vld [vmem:[%s3 + $0xff8] sm:$0xff]
  %v6276 = vld [vmem:[%s4] sm:$0xf]
  %v6278 = vlaneseq
  %v6279 = vshrl.u32 %v6278, 7
  %v6280 = vsub.s32 0, %v6279
  %v6281 = vrot.slane %v6276, %v6280
  %v6282 = vlaneseq
  %v6283 = vshrl.u32 %v6282, 7
  %v6284 = vsub.s32 1, %v6283
  %v6285 = vrot.slane %v6276, %v6284
  %v6286 = vlaneseq
  %v6287 = vshrl.u32 %v6286, 7
  %v6288 = vsub.s32 2, %v6287
  %v6289 = vrot.slane %v6276, %v6288
  %v6290 = vlaneseq
  %v6291 = vshrl.u32 %v6290, 7
  %v6292 = vsub.s32 3, %v6291
  %v6293 = vrot.slane %v6276, %v6292
  %v6810 = vunpack.c.l.b16 %v5764
  %v6811 = vunpack.c.h.b16 %v5764
  %v6812 = vunpack.c.l.b16 %v5765
  %v6813 = vunpack.c.h.b16 %v5765
  %v6814 = vunpack.c.l.b16 %v5766
  %v6815 = vunpack.c.h.b16 %v5766
  %v6816 = vunpack.c.l.b16 %v5767
  %v6817 = vunpack.c.h.b16 %v5767
  %v6818 = vunpack.c.l.b16 %v5768
  %v6819 = vunpack.c.h.b16 %v5768
  %v6820 = vunpack.c.l.b16 %v5769
  %v6821 = vunpack.c.h.b16 %v5769
  %v6822 = vunpack.c.l.b16 %v5770
  %v6823 = vunpack.c.h.b16 %v5770
  %v6824 = vunpack.c.l.b16 %v5771
  %v6825 = vunpack.c.h.b16 %v5771
  %v6826 = vunpack.c.l.b16 %v5772
  %v6827 = vunpack.c.h.b16 %v5772
  %v6828 = vunpack.c.l.b16 %v5773
  %v6829 = vunpack.c.h.b16 %v5773
  %v6830 = vunpack.c.l.b16 %v5774
  %v6831 = vunpack.c.h.b16 %v5774
  %v6832 = vunpack.c.l.b16 %v5775
  %v6833 = vunpack.c.h.b16 %v5775
  %v6834 = vunpack.c.l.b16 %v5776
  %v6835 = vunpack.c.h.b16 %v5776
  %v6836 = vunpack.c.l.b16 %v5777
  %v6837 = vunpack.c.h.b16 %v5777
  %v6838 = vunpack.c.l.b16 %v5778
  %v6839 = vunpack.c.h.b16 %v5778
  %v6840 = vunpack.c.l.b16 %v5779
  %v6841 = vunpack.c.h.b16 %v5779
  %v6842 = vunpack.c.l.b16 %v5780
  %v6843 = vunpack.c.h.b16 %v5780
  %v6844 = vunpack.c.l.b16 %v5781
  %v6845 = vunpack.c.h.b16 %v5781
  %v6846 = vunpack.c.l.b16 %v5782
  %v6847 = vunpack.c.h.b16 %v5782
  %v6848 = vunpack.c.l.b16 %v5783
  %v6849 = vunpack.c.h.b16 %v5783
  %v6850 = vunpack.c.l.b16 %v5784
  %v6851 = vunpack.c.h.b16 %v5784
  %v6852 = vunpack.c.l.b16 %v5785
  %v6853 = vunpack.c.h.b16 %v5785
  %v6854 = vunpack.c.l.b16 %v5786
  %v6855 = vunpack.c.h.b16 %v5786
  %v6856 = vunpack.c.l.b16 %v5787
  %v6857 = vunpack.c.h.b16 %v5787
  %v6858 = vunpack.c.l.b16 %v5788
  %v6859 = vunpack.c.h.b16 %v5788
  %v6860 = vunpack.c.l.b16 %v5789
  %v6861 = vunpack.c.h.b16 %v5789
  %v6862 = vunpack.c.l.b16 %v5790
  %v6863 = vunpack.c.h.b16 %v5790
  %v6864 = vunpack.c.l.b16 %v5791
  %v6865 = vunpack.c.h.b16 %v5791
  %v6866 = vunpack.c.l.b16 %v5792
  %v6867 = vunpack.c.h.b16 %v5792
  %v6868 = vunpack.c.l.b16 %v5793
  %v6869 = vunpack.c.h.b16 %v5793
  %v6870 = vunpack.c.l.b16 %v5794
  %v6871 = vunpack.c.h.b16 %v5794
  %v6872 = vunpack.c.l.b16 %v5795
  %v6873 = vunpack.c.h.b16 %v5795
  %v6874 = vunpack.c.l.b16 %v5796
  %v6875 = vunpack.c.h.b16 %v5796
  %v6876 = vunpack.c.l.b16 %v5797
  %v6877 = vunpack.c.h.b16 %v5797
  %v6878 = vunpack.c.l.b16 %v5798
  %v6879 = vunpack.c.h.b16 %v5798
  %v6880 = vunpack.c.l.b16 %v5799
  %v6881 = vunpack.c.h.b16 %v5799
  %v6882 = vunpack.c.l.b16 %v5800
  %v6883 = vunpack.c.h.b16 %v5800
  %v6884 = vunpack.c.l.b16 %v5801
  %v6885 = vunpack.c.h.b16 %v5801
  %v6886 = vunpack.c.l.b16 %v5802
  %v6887 = vunpack.c.h.b16 %v5802
  %v6888 = vunpack.c.l.b16 %v5803
  %v6889 = vunpack.c.h.b16 %v5803
  %v6890 = vunpack.c.l.b16 %v5804
  %v6891 = vunpack.c.h.b16 %v5804
  %v6892 = vunpack.c.l.b16 %v5805
  %v6893 = vunpack.c.h.b16 %v5805
  %v6894 = vunpack.c.l.b16 %v5806
  %v6895 = vunpack.c.h.b16 %v5806
  %v6896 = vunpack.c.l.b16 %v5807
  %v6897 = vunpack.c.h.b16 %v5807
  %v6898 = vunpack.c.l.b16 %v5808
  %v6899 = vunpack.c.h.b16 %v5808
  %v6900 = vunpack.c.l.b16 %v5809
  %v6901 = vunpack.c.h.b16 %v5809
  %v6902 = vunpack.c.l.b16 %v5810
  %v6903 = vunpack.c.h.b16 %v5810
  %v6904 = vunpack.c.l.b16 %v5811
  %v6905 = vunpack.c.h.b16 %v5811
  %v6906 = vunpack.c.l.b16 %v5812
  %v6907 = vunpack.c.h.b16 %v5812
  %v6908 = vunpack.c.l.b16 %v5813
  %v6909 = vunpack.c.h.b16 %v5813
  %v6910 = vunpack.c.l.b16 %v5814
  %v6911 = vunpack.c.h.b16 %v5814
  %v6912 = vunpack.c.l.b16 %v5815
  %v6913 = vunpack.c.h.b16 %v5815
  %v6914 = vunpack.c.l.b16 %v5816
  %v6915 = vunpack.c.h.b16 %v5816
  %v6916 = vunpack.c.l.b16 %v5817
  %v6917 = vunpack.c.h.b16 %v5817
  %v6918 = vunpack.c.l.b16 %v5818
  %v6919 = vunpack.c.h.b16 %v5818
  %v6920 = vunpack.c.l.b16 %v5819
  %v6921 = vunpack.c.h.b16 %v5819
  %v6922 = vunpack.c.l.b16 %v5820
  %v6923 = vunpack.c.h.b16 %v5820
  %v6924 = vunpack.c.l.b16 %v5821
  %v6925 = vunpack.c.h.b16 %v5821
  %v6926 = vunpack.c.l.b16 %v5822
  %v6927 = vunpack.c.h.b16 %v5822
  %v6928 = vunpack.c.l.b16 %v5823
  %v6929 = vunpack.c.h.b16 %v5823
  %v6930 = vunpack.c.l.b16 %v5824
  %v6931 = vunpack.c.h.b16 %v5824
  %v6932 = vunpack.c.l.b16 %v5825
  %v6933 = vunpack.c.h.b16 %v5825
  %v6934 = vunpack.c.l.b16 %v5826
  %v6935 = vunpack.c.h.b16 %v5826
  %v6936 = vunpack.c.l.b16 %v5827
  %v6937 = vunpack.c.h.b16 %v5827
  %v6938 = vunpack.c.l.b16 %v5828
  %v6939 = vunpack.c.h.b16 %v5828
  %v6940 = vunpack.c.l.b16 %v5829
  %v6941 = vunpack.c.h.b16 %v5829
  %v6942 = vunpack.c.l.b16 %v5830
  %v6943 = vunpack.c.h.b16 %v5830
  %v6944 = vunpack.c.l.b16 %v5831
  %v6945 = vunpack.c.h.b16 %v5831
  %v6946 = vunpack.c.l.b16 %v5832
  %v6947 = vunpack.c.h.b16 %v5832
  %v6948 = vunpack.c.l.b16 %v5833
  %v6949 = vunpack.c.h.b16 %v5833
  %v6950 = vunpack.c.l.b16 %v5834
  %v6951 = vunpack.c.h.b16 %v5834
  %v6952 = vunpack.c.l.b16 %v5835
  %v6953 = vunpack.c.h.b16 %v5835
  %v6954 = vunpack.c.l.b16 %v5836
  %v6955 = vunpack.c.h.b16 %v5836
  %v6956 = vunpack.c.l.b16 %v5837
  %v6957 = vunpack.c.h.b16 %v5837
  %v6958 = vunpack.c.l.b16 %v5838
  %v6959 = vunpack.c.h.b16 %v5838
  %v6960 = vunpack.c.l.b16 %v5839
  %v6961 = vunpack.c.h.b16 %v5839
  %v6962 = vunpack.c.l.b16 %v5840
  %v6963 = vunpack.c.h.b16 %v5840
  %v6964 = vunpack.c.l.b16 %v5841
  %v6965 = vunpack.c.h.b16 %v5841
  %v6966 = vunpack.c.l.b16 %v5842
  %v6967 = vunpack.c.h.b16 %v5842
  %v6968 = vunpack.c.l.b16 %v5843
  %v6969 = vunpack.c.h.b16 %v5843
  %v6970 = vunpack.c.l.b16 %v5844
  %v6971 = vunpack.c.h.b16 %v5844
  %v6972 = vunpack.c.l.b16 %v5845
  %v6973 = vunpack.c.h.b16 %v5845
  %v6974 = vunpack.c.l.b16 %v5846
  %v6975 = vunpack.c.h.b16 %v5846
  %v6976 = vunpack.c.l.b16 %v5847
  %v6977 = vunpack.c.h.b16 %v5847
  %v6978 = vunpack.c.l.b16 %v5848
  %v6979 = vunpack.c.h.b16 %v5848
  %v6980 = vunpack.c.l.b16 %v5849
  %v6981 = vunpack.c.h.b16 %v5849
  %v6982 = vunpack.c.l.b16 %v5850
  %v6983 = vunpack.c.h.b16 %v5850
  %v6984 = vunpack.c.l.b16 %v5851
  %v6985 = vunpack.c.h.b16 %v5851
  %v6986 = vunpack.c.l.b16 %v5852
  %v6987 = vunpack.c.h.b16 %v5852
  %v6988 = vunpack.c.l.b16 %v5853
  %v6989 = vunpack.c.h.b16 %v5853
  %v6990 = vunpack.c.l.b16 %v5854
  %v6991 = vunpack.c.h.b16 %v5854
  %v6992 = vunpack.c.l.b16 %v5855
  %v6993 = vunpack.c.h.b16 %v5855
  %v6994 = vunpack.c.l.b16 %v5856
  %v6995 = vunpack.c.h.b16 %v5856
  %v6996 = vunpack.c.l.b16 %v5857
  %v6997 = vunpack.c.h.b16 %v5857
  %v6998 = vunpack.c.l.b16 %v5858
  %v6999 = vunpack.c.h.b16 %v5858
  %v7000 = vunpack.c.l.b16 %v5859
  %v7001 = vunpack.c.h.b16 %v5859
  %v7002 = vunpack.c.l.b16 %v5860
  %v7003 = vunpack.c.h.b16 %v5860
  %v7004 = vunpack.c.l.b16 %v5861
  %v7005 = vunpack.c.h.b16 %v5861
  %v7006 = vunpack.c.l.b16 %v5862
  %v7007 = vunpack.c.h.b16 %v5862
  %v7008 = vunpack.c.l.b16 %v5863
  %v7009 = vunpack.c.h.b16 %v5863
  %v7010 = vunpack.c.l.b16 %v5864
  %v7011 = vunpack.c.h.b16 %v5864
  %v7012 = vunpack.c.l.b16 %v5865
  %v7013 = vunpack.c.h.b16 %v5865
  %v7014 = vunpack.c.l.b16 %v5866
  %v7015 = vunpack.c.h.b16 %v5866
  %v7016 = vunpack.c.l.b16 %v5867
  %v7017 = vunpack.c.h.b16 %v5867
  %v7018 = vunpack.c.l.b16 %v5868
  %v7019 = vunpack.c.h.b16 %v5868
  %v7020 = vunpack.c.l.b16 %v5869
  %v7021 = vunpack.c.h.b16 %v5869
  %v7022 = vunpack.c.l.b16 %v5870
  %v7023 = vunpack.c.h.b16 %v5870
  %v7024 = vunpack.c.l.b16 %v5871
  %v7025 = vunpack.c.h.b16 %v5871
  %v7026 = vunpack.c.l.b16 %v5872
  %v7027 = vunpack.c.h.b16 %v5872
  %v7028 = vunpack.c.l.b16 %v5873
  %v7029 = vunpack.c.h.b16 %v5873
  %v7030 = vunpack.c.l.b16 %v5874
  %v7031 = vunpack.c.h.b16 %v5874
  %v7032 = vunpack.c.l.b16 %v5875
  %v7033 = vunpack.c.h.b16 %v5875
  %v7034 = vunpack.c.l.b16 %v5876
  %v7035 = vunpack.c.h.b16 %v5876
  %v7036 = vunpack.c.l.b16 %v5877
  %v7037 = vunpack.c.h.b16 %v5877
  %v7038 = vunpack.c.l.b16 %v5878
  %v7039 = vunpack.c.h.b16 %v5878
  %v7040 = vunpack.c.l.b16 %v5879
  %v7041 = vunpack.c.h.b16 %v5879
  %v7042 = vunpack.c.l.b16 %v5880
  %v7043 = vunpack.c.h.b16 %v5880
  %v7044 = vunpack.c.l.b16 %v5881
  %v7045 = vunpack.c.h.b16 %v5881
  %v7046 = vunpack.c.l.b16 %v5882
  %v7047 = vunpack.c.h.b16 %v5882
  %v7048 = vunpack.c.l.b16 %v5883
  %v7049 = vunpack.c.h.b16 %v5883
  %v7050 = vunpack.c.l.b16 %v5884
  %v7051 = vunpack.c.h.b16 %v5884
  %v7052 = vunpack.c.l.b16 %v5885
  %v7053 = vunpack.c.h.b16 %v5885
  %v7054 = vunpack.c.l.b16 %v5886
  %v7055 = vunpack.c.h.b16 %v5886
  %v7056 = vunpack.c.l.b16 %v5887
  %v7057 = vunpack.c.h.b16 %v5887
  %v7058 = vunpack.c.l.b16 %v5888
  %v7059 = vunpack.c.h.b16 %v5888
  %v7060 = vunpack.c.l.b16 %v5889
  %v7061 = vunpack.c.h.b16 %v5889
  %v7062 = vunpack.c.l.b16 %v5890
  %v7063 = vunpack.c.h.b16 %v5890
  %v7064 = vunpack.c.l.b16 %v5891
  %v7065 = vunpack.c.h.b16 %v5891
  %v7066 = vunpack.c.l.b16 %v5892
  %v7067 = vunpack.c.h.b16 %v5892
  %v7068 = vunpack.c.l.b16 %v5893
  %v7069 = vunpack.c.h.b16 %v5893
  %v7070 = vunpack.c.l.b16 %v5894
  %v7071 = vunpack.c.h.b16 %v5894
  %v7072 = vunpack.c.l.b16 %v5895
  %v7073 = vunpack.c.h.b16 %v5895
  %v7074 = vunpack.c.l.b16 %v5896
  %v7075 = vunpack.c.h.b16 %v5896
  %v7076 = vunpack.c.l.b16 %v5897
  %v7077 = vunpack.c.h.b16 %v5897
  %v7078 = vunpack.c.l.b16 %v5898
  %v7079 = vunpack.c.h.b16 %v5898
  %v7080 = vunpack.c.l.b16 %v5899
  %v7081 = vunpack.c.h.b16 %v5899
  %v7082 = vunpack.c.l.b16 %v5900
  %v7083 = vunpack.c.h.b16 %v5900
  %v7084 = vunpack.c.l.b16 %v5901
  %v7085 = vunpack.c.h.b16 %v5901
  %v7086 = vunpack.c.l.b16 %v5902
  %v7087 = vunpack.c.h.b16 %v5902
  %v7088 = vunpack.c.l.b16 %v5903
  %v7089 = vunpack.c.h.b16 %v5903
  %v7090 = vunpack.c.l.b16 %v5904
  %v7091 = vunpack.c.h.b16 %v5904
  %v7092 = vunpack.c.l.b16 %v5905
  %v7093 = vunpack.c.h.b16 %v5905
  %v7094 = vunpack.c.l.b16 %v5906
  %v7095 = vunpack.c.h.b16 %v5906
  %v7096 = vunpack.c.l.b16 %v5907
  %v7097 = vunpack.c.h.b16 %v5907
  %v7098 = vunpack.c.l.b16 %v5908
  %v7099 = vunpack.c.h.b16 %v5908
  %v7100 = vunpack.c.l.b16 %v5909
  %v7101 = vunpack.c.h.b16 %v5909
  %v7102 = vunpack.c.l.b16 %v5910
  %v7103 = vunpack.c.h.b16 %v5910
  %v7104 = vunpack.c.l.b16 %v5911
  %v7105 = vunpack.c.h.b16 %v5911
  %v7106 = vunpack.c.l.b16 %v5912
  %v7107 = vunpack.c.h.b16 %v5912
  %v7108 = vunpack.c.l.b16 %v5913
  %v7109 = vunpack.c.h.b16 %v5913
  %v7110 = vunpack.c.l.b16 %v5914
  %v7111 = vunpack.c.h.b16 %v5914
  %v7112 = vunpack.c.l.b16 %v5915
  %v7113 = vunpack.c.h.b16 %v5915
  %v7114 = vunpack.c.l.b16 %v5916
  %v7115 = vunpack.c.h.b16 %v5916
  %v7116 = vunpack.c.l.b16 %v5917
  %v7117 = vunpack.c.h.b16 %v5917
  %v7118 = vunpack.c.l.b16 %v5918
  %v7119 = vunpack.c.h.b16 %v5918
  %v7120 = vunpack.c.l.b16 %v5919
  %v7121 = vunpack.c.h.b16 %v5919
  %v7122 = vunpack.c.l.b16 %v5920
  %v7123 = vunpack.c.h.b16 %v5920
  %v7124 = vunpack.c.l.b16 %v5921
  %v7125 = vunpack.c.h.b16 %v5921
  %v7126 = vunpack.c.l.b16 %v5922
  %v7127 = vunpack.c.h.b16 %v5922
  %v7128 = vunpack.c.l.b16 %v5923
  %v7129 = vunpack.c.h.b16 %v5923
  %v7130 = vunpack.c.l.b16 %v5924
  %v7131 = vunpack.c.h.b16 %v5924
  %v7132 = vunpack.c.l.b16 %v5925
  %v7133 = vunpack.c.h.b16 %v5925
  %v7134 = vunpack.c.l.b16 %v5926
  %v7135 = vunpack.c.h.b16 %v5926
  %v7136 = vunpack.c.l.b16 %v5927
  %v7137 = vunpack.c.h.b16 %v5927
  %v7138 = vunpack.c.l.b16 %v5928
  %v7139 = vunpack.c.h.b16 %v5928
  %v7140 = vunpack.c.l.b16 %v5929
  %v7141 = vunpack.c.h.b16 %v5929
  %v7142 = vunpack.c.l.b16 %v5930
  %v7143 = vunpack.c.h.b16 %v5930
  %v7144 = vunpack.c.l.b16 %v5931
  %v7145 = vunpack.c.h.b16 %v5931
  %v7146 = vunpack.c.l.b16 %v5932
  %v7147 = vunpack.c.h.b16 %v5932
  %v7148 = vunpack.c.l.b16 %v5933
  %v7149 = vunpack.c.h.b16 %v5933
  %v7150 = vunpack.c.l.b16 %v5934
  %v7151 = vunpack.c.h.b16 %v5934
  %v7152 = vunpack.c.l.b16 %v5935
  %v7153 = vunpack.c.h.b16 %v5935
  %v7154 = vunpack.c.l.b16 %v5936
  %v7155 = vunpack.c.h.b16 %v5936
  %v7156 = vunpack.c.l.b16 %v5937
  %v7157 = vunpack.c.h.b16 %v5937
  %v7158 = vunpack.c.l.b16 %v5938
  %v7159 = vunpack.c.h.b16 %v5938
  %v7160 = vunpack.c.l.b16 %v5939
  %v7161 = vunpack.c.h.b16 %v5939
  %v7162 = vunpack.c.l.b16 %v5940
  %v7163 = vunpack.c.h.b16 %v5940
  %v7164 = vunpack.c.l.b16 %v5941
  %v7165 = vunpack.c.h.b16 %v5941
  %v7166 = vunpack.c.l.b16 %v5942
  %v7167 = vunpack.c.h.b16 %v5942
  %v7168 = vunpack.c.l.b16 %v5943
  %v7169 = vunpack.c.h.b16 %v5943
  %v7170 = vunpack.c.l.b16 %v5944
  %v7171 = vunpack.c.h.b16 %v5944
  %v7172 = vunpack.c.l.b16 %v5945
  %v7173 = vunpack.c.h.b16 %v5945
  %v7174 = vunpack.c.l.b16 %v5946
  %v7175 = vunpack.c.h.b16 %v5946
  %v7176 = vunpack.c.l.b16 %v5947
  %v7177 = vunpack.c.h.b16 %v5947
  %v7178 = vunpack.c.l.b16 %v5948
  %v7179 = vunpack.c.h.b16 %v5948
  %v7180 = vunpack.c.l.b16 %v5949
  %v7181 = vunpack.c.h.b16 %v5949
  %v7182 = vunpack.c.l.b16 %v5950
  %v7183 = vunpack.c.h.b16 %v5950
  %v7184 = vunpack.c.l.b16 %v5951
  %v7185 = vunpack.c.h.b16 %v5951
  %v7186 = vunpack.c.l.b16 %v5952
  %v7187 = vunpack.c.h.b16 %v5952
  %v7188 = vunpack.c.l.b16 %v5953
  %v7189 = vunpack.c.h.b16 %v5953
  %v7190 = vunpack.c.l.b16 %v5954
  %v7191 = vunpack.c.h.b16 %v5954
  %v7192 = vunpack.c.l.b16 %v5955
  %v7193 = vunpack.c.h.b16 %v5955
  %v7194 = vunpack.c.l.b16 %v5956
  %v7195 = vunpack.c.h.b16 %v5956
  %v7196 = vunpack.c.l.b16 %v5957
  %v7197 = vunpack.c.h.b16 %v5957
  %v7198 = vunpack.c.l.b16 %v5958
  %v7199 = vunpack.c.h.b16 %v5958
  %v7200 = vunpack.c.l.b16 %v5959
  %v7201 = vunpack.c.h.b16 %v5959
  %v7202 = vunpack.c.l.b16 %v5960
  %v7203 = vunpack.c.h.b16 %v5960
  %v7204 = vunpack.c.l.b16 %v5961
  %v7205 = vunpack.c.h.b16 %v5961
  %v7206 = vunpack.c.l.b16 %v5962
  %v7207 = vunpack.c.h.b16 %v5962
  %v7208 = vunpack.c.l.b16 %v5963
  %v7209 = vunpack.c.h.b16 %v5963
  %v7210 = vunpack.c.l.b16 %v5964
  %v7211 = vunpack.c.h.b16 %v5964
  %v7212 = vunpack.c.l.b16 %v5965
  %v7213 = vunpack.c.h.b16 %v5965
  %v7214 = vunpack.c.l.b16 %v5966
  %v7215 = vunpack.c.h.b16 %v5966
  %v7216 = vunpack.c.l.b16 %v5967
  %v7217 = vunpack.c.h.b16 %v5967
  %v7218 = vunpack.c.l.b16 %v5968
  %v7219 = vunpack.c.h.b16 %v5968
  %v7220 = vunpack.c.l.b16 %v5969
  %v7221 = vunpack.c.h.b16 %v5969
  %v7222 = vunpack.c.l.b16 %v5970
  %v7223 = vunpack.c.h.b16 %v5970
  %v7224 = vunpack.c.l.b16 %v5971
  %v7225 = vunpack.c.h.b16 %v5971
  %v7226 = vunpack.c.l.b16 %v5972
  %v7227 = vunpack.c.h.b16 %v5972
  %v7228 = vunpack.c.l.b16 %v5973
  %v7229 = vunpack.c.h.b16 %v5973
  %v7230 = vunpack.c.l.b16 %v5974
  %v7231 = vunpack.c.h.b16 %v5974
  %v7232 = vunpack.c.l.b16 %v5975
  %v7233 = vunpack.c.h.b16 %v5975
  %v7234 = vunpack.c.l.b16 %v5976
  %v7235 = vunpack.c.h.b16 %v5976
  %v7236 = vunpack.c.l.b16 %v5977
  %v7237 = vunpack.c.h.b16 %v5977
  %v7238 = vunpack.c.l.b16 %v5978
  %v7239 = vunpack.c.h.b16 %v5978
  %v7240 = vunpack.c.l.b16 %v5979
  %v7241 = vunpack.c.h.b16 %v5979
  %v7242 = vunpack.c.l.b16 %v5980
  %v7243 = vunpack.c.h.b16 %v5980
  %v7244 = vunpack.c.l.b16 %v5981
  %v7245 = vunpack.c.h.b16 %v5981
  %v7246 = vunpack.c.l.b16 %v5982
  %v7247 = vunpack.c.h.b16 %v5982
  %v7248 = vunpack.c.l.b16 %v5983
  %v7249 = vunpack.c.h.b16 %v5983
  %v7250 = vunpack.c.l.b16 %v5984
  %v7251 = vunpack.c.h.b16 %v5984
  %v7252 = vunpack.c.l.b16 %v5985
  %v7253 = vunpack.c.h.b16 %v5985
  %v7254 = vunpack.c.l.b16 %v5986
  %v7255 = vunpack.c.h.b16 %v5986
  %v7256 = vunpack.c.l.b16 %v5987
  %v7257 = vunpack.c.h.b16 %v5987
  %v7258 = vunpack.c.l.b16 %v5988
  %v7259 = vunpack.c.h.b16 %v5988
  %v7260 = vunpack.c.l.b16 %v5989
  %v7261 = vunpack.c.h.b16 %v5989
  %v7262 = vunpack.c.l.b16 %v5990
  %v7263 = vunpack.c.h.b16 %v5990
  %v7264 = vunpack.c.l.b16 %v5991
  %v7265 = vunpack.c.h.b16 %v5991
  %v7266 = vunpack.c.l.b16 %v5992
  %v7267 = vunpack.c.h.b16 %v5992
  %v7268 = vunpack.c.l.b16 %v5993
  %v7269 = vunpack.c.h.b16 %v5993
  %v7270 = vunpack.c.l.b16 %v5994
  %v7271 = vunpack.c.h.b16 %v5994
  %v7272 = vunpack.c.l.b16 %v5995
  %v7273 = vunpack.c.h.b16 %v5995
  %v7274 = vunpack.c.l.b16 %v5996
  %v7275 = vunpack.c.h.b16 %v5996
  %v7276 = vunpack.c.l.b16 %v5997
  %v7277 = vunpack.c.h.b16 %v5997
  %v7278 = vunpack.c.l.b16 %v5998
  %v7279 = vunpack.c.h.b16 %v5998
  %v7280 = vunpack.c.l.b16 %v5999
  %v7281 = vunpack.c.h.b16 %v5999
  %v7282 = vunpack.c.l.b16 %v6000
  %v7283 = vunpack.c.h.b16 %v6000
  %v7284 = vunpack.c.l.b16 %v6001
  %v7285 = vunpack.c.h.b16 %v6001
  %v7286 = vunpack.c.l.b16 %v6002
  %v7287 = vunpack.c.h.b16 %v6002
  %v7288 = vunpack.c.l.b16 %v6003
  %v7289 = vunpack.c.h.b16 %v6003
  %v7290 = vunpack.c.l.b16 %v6004
  %v7291 = vunpack.c.h.b16 %v6004
  %v7292 = vunpack.c.l.b16 %v6005
  %v7293 = vunpack.c.h.b16 %v6005
  %v7294 = vunpack.c.l.b16 %v6006
  %v7295 = vunpack.c.h.b16 %v6006
  %v7296 = vunpack.c.l.b16 %v6007
  %v7297 = vunpack.c.h.b16 %v6007
  %v7298 = vunpack.c.l.b16 %v6008
  %v7299 = vunpack.c.h.b16 %v6008
  %v7300 = vunpack.c.l.b16 %v6009
  %v7301 = vunpack.c.h.b16 %v6009
  %v7302 = vunpack.c.l.b16 %v6010
  %v7303 = vunpack.c.h.b16 %v6010
  %v7304 = vunpack.c.l.b16 %v6011
  %v7305 = vunpack.c.h.b16 %v6011
  %v7306 = vunpack.c.l.b16 %v6012
  %v7307 = vunpack.c.h.b16 %v6012
  %v7308 = vunpack.c.l.b16 %v6013
  %v7309 = vunpack.c.h.b16 %v6013
  %v7310 = vunpack.c.l.b16 %v6014
  %v7311 = vunpack.c.h.b16 %v6014
  %v7312 = vunpack.c.l.b16 %v6015
  %v7313 = vunpack.c.h.b16 %v6015
  %v7314 = vunpack.c.l.b16 %v6016
  %v7315 = vunpack.c.h.b16 %v6016
  %v7316 = vunpack.c.l.b16 %v6017
  %v7317 = vunpack.c.h.b16 %v6017
  %v7318 = vunpack.c.l.b16 %v6018
  %v7319 = vunpack.c.h.b16 %v6018
  %v7320 = vunpack.c.l.b16 %v6019
  %v7321 = vunpack.c.h.b16 %v6019
  %v7322 = vunpack.c.l.b16 %v6020
  %v7323 = vunpack.c.h.b16 %v6020
  %v7324 = vunpack.c.l.b16 %v6021
  %v7325 = vunpack.c.h.b16 %v6021
  %v7326 = vunpack.c.l.b16 %v6022
  %v7327 = vunpack.c.h.b16 %v6022
  %v7328 = vunpack.c.l.b16 %v6023
  %v7329 = vunpack.c.h.b16 %v6023
  %v7330 = vunpack.c.l.b16 %v6024
  %v7331 = vunpack.c.h.b16 %v6024
  %v7332 = vunpack.c.l.b16 %v6025
  %v7333 = vunpack.c.h.b16 %v6025
  %v7334 = vunpack.c.l.b16 %v6026
  %v7335 = vunpack.c.h.b16 %v6026
  %v7336 = vunpack.c.l.b16 %v6027
  %v7337 = vunpack.c.h.b16 %v6027
  %v7338 = vunpack.c.l.b16 %v6028
  %v7339 = vunpack.c.h.b16 %v6028
  %v7340 = vunpack.c.l.b16 %v6029
  %v7341 = vunpack.c.h.b16 %v6029
  %v7342 = vunpack.c.l.b16 %v6030
  %v7343 = vunpack.c.h.b16 %v6030
  %v7344 = vunpack.c.l.b16 %v6031
  %v7345 = vunpack.c.h.b16 %v6031
  %v7346 = vunpack.c.l.b16 %v6032
  %v7347 = vunpack.c.h.b16 %v6032
  %v7348 = vunpack.c.l.b16 %v6033
  %v7349 = vunpack.c.h.b16 %v6033
  %v7350 = vunpack.c.l.b16 %v6034
  %v7351 = vunpack.c.h.b16 %v6034
  %v7352 = vunpack.c.l.b16 %v6035
  %v7353 = vunpack.c.h.b16 %v6035
  %v7354 = vunpack.c.l.b16 %v6036
  %v7355 = vunpack.c.h.b16 %v6036
  %v7356 = vunpack.c.l.b16 %v6037
  %v7357 = vunpack.c.h.b16 %v6037
  %v7358 = vunpack.c.l.b16 %v6038
  %v7359 = vunpack.c.h.b16 %v6038
  %v7360 = vunpack.c.l.b16 %v6039
  %v7361 = vunpack.c.h.b16 %v6039
  %v7362 = vunpack.c.l.b16 %v6040
  %v7363 = vunpack.c.h.b16 %v6040
  %v7364 = vunpack.c.l.b16 %v6041
  %v7365 = vunpack.c.h.b16 %v6041
  %v7366 = vunpack.c.l.b16 %v6042
  %v7367 = vunpack.c.h.b16 %v6042
  %v7368 = vunpack.c.l.b16 %v6043
  %v7369 = vunpack.c.h.b16 %v6043
  %v7370 = vunpack.c.l.b16 %v6044
  %v7371 = vunpack.c.h.b16 %v6044
  %v7372 = vunpack.c.l.b16 %v6045
  %v7373 = vunpack.c.h.b16 %v6045
  %v7374 = vunpack.c.l.b16 %v6046
  %v7375 = vunpack.c.h.b16 %v6046
  %v7376 = vunpack.c.l.b16 %v6047
  %v7377 = vunpack.c.h.b16 %v6047
  %v7378 = vunpack.c.l.b16 %v6048
  %v7379 = vunpack.c.h.b16 %v6048
  %v7380 = vunpack.c.l.b16 %v6049
  %v7381 = vunpack.c.h.b16 %v6049
  %v7382 = vunpack.c.l.b16 %v6050
  %v7383 = vunpack.c.h.b16 %v6050
  %v7384 = vunpack.c.l.b16 %v6051
  %v7385 = vunpack.c.h.b16 %v6051
  %v7386 = vunpack.c.l.b16 %v6052
  %v7387 = vunpack.c.h.b16 %v6052
  %v7388 = vunpack.c.l.b16 %v6053
  %v7389 = vunpack.c.h.b16 %v6053
  %v7390 = vunpack.c.l.b16 %v6054
  %v7391 = vunpack.c.h.b16 %v6054
  %v7392 = vunpack.c.l.b16 %v6055
  %v7393 = vunpack.c.h.b16 %v6055
  %v7394 = vunpack.c.l.b16 %v6056
  %v7395 = vunpack.c.h.b16 %v6056
  %v7396 = vunpack.c.l.b16 %v6057
  %v7397 = vunpack.c.h.b16 %v6057
  %v7398 = vunpack.c.l.b16 %v6058
  %v7399 = vunpack.c.h.b16 %v6058
  %v7400 = vunpack.c.l.b16 %v6059
  %v7401 = vunpack.c.h.b16 %v6059
  %v7402 = vunpack.c.l.b16 %v6060
  %v7403 = vunpack.c.h.b16 %v6060
  %v7404 = vunpack.c.l.b16 %v6061
  %v7405 = vunpack.c.h.b16 %v6061
  %v7406 = vunpack.c.l.b16 %v6062
  %v7407 = vunpack.c.h.b16 %v6062
  %v7408 = vunpack.c.l.b16 %v6063
  %v7409 = vunpack.c.h.b16 %v6063
  %v7410 = vunpack.c.l.b16 %v6064
  %v7411 = vunpack.c.h.b16 %v6064
  %v7412 = vunpack.c.l.b16 %v6065
  %v7413 = vunpack.c.h.b16 %v6065
  %v7414 = vunpack.c.l.b16 %v6066
  %v7415 = vunpack.c.h.b16 %v6066
  %v7416 = vunpack.c.l.b16 %v6067
  %v7417 = vunpack.c.h.b16 %v6067
  %v7418 = vunpack.c.l.b16 %v6068
  %v7419 = vunpack.c.h.b16 %v6068
  %v7420 = vunpack.c.l.b16 %v6069
  %v7421 = vunpack.c.h.b16 %v6069
  %v7422 = vunpack.c.l.b16 %v6070
  %v7423 = vunpack.c.h.b16 %v6070
  %v7424 = vunpack.c.l.b16 %v6071
  %v7425 = vunpack.c.h.b16 %v6071
  %v7426 = vunpack.c.l.b16 %v6072
  %v7427 = vunpack.c.h.b16 %v6072
  %v7428 = vunpack.c.l.b16 %v6073
  %v7429 = vunpack.c.h.b16 %v6073
  %v7430 = vunpack.c.l.b16 %v6074
  %v7431 = vunpack.c.h.b16 %v6074
  %v7432 = vunpack.c.l.b16 %v6075
  %v7433 = vunpack.c.h.b16 %v6075
  %v7434 = vunpack.c.l.b16 %v6076
  %v7435 = vunpack.c.h.b16 %v6076
  %v7436 = vunpack.c.l.b16 %v6077
  %v7437 = vunpack.c.h.b16 %v6077
  %v7438 = vunpack.c.l.b16 %v6078
  %v7439 = vunpack.c.h.b16 %v6078
  %v7440 = vunpack.c.l.b16 %v6079
  %v7441 = vunpack.c.h.b16 %v6079
  %v7442 = vunpack.c.l.b16 %v6080
  %v7443 = vunpack.c.h.b16 %v6080
  %v7444 = vunpack.c.l.b16 %v6081
  %v7445 = vunpack.c.h.b16 %v6081
  %v7446 = vunpack.c.l.b16 %v6082
  %v7447 = vunpack.c.h.b16 %v6082
  %v7448 = vunpack.c.l.b16 %v6083
  %v7449 = vunpack.c.h.b16 %v6083
  %v7450 = vunpack.c.l.b16 %v6084
  %v7451 = vunpack.c.h.b16 %v6084
  %v7452 = vunpack.c.l.b16 %v6085
  %v7453 = vunpack.c.h.b16 %v6085
  %v7454 = vunpack.c.l.b16 %v6086
  %v7455 = vunpack.c.h.b16 %v6086
  %v7456 = vunpack.c.l.b16 %v6087
  %v7457 = vunpack.c.h.b16 %v6087
  %v7458 = vunpack.c.l.b16 %v6088
  %v7459 = vunpack.c.h.b16 %v6088
  %v7460 = vunpack.c.l.b16 %v6089
  %v7461 = vunpack.c.h.b16 %v6089
  %v7462 = vunpack.c.l.b16 %v6090
  %v7463 = vunpack.c.h.b16 %v6090
  %v7464 = vunpack.c.l.b16 %v6091
  %v7465 = vunpack.c.h.b16 %v6091
  %v7466 = vunpack.c.l.b16 %v6092
  %v7467 = vunpack.c.h.b16 %v6092
  %v7468 = vunpack.c.l.b16 %v6093
  %v7469 = vunpack.c.h.b16 %v6093
  %v7470 = vunpack.c.l.b16 %v6094
  %v7471 = vunpack.c.h.b16 %v6094
  %v7472 = vunpack.c.l.b16 %v6095
  %v7473 = vunpack.c.h.b16 %v6095
  %v7474 = vunpack.c.l.b16 %v6096
  %v7475 = vunpack.c.h.b16 %v6096
  %v7476 = vunpack.c.l.b16 %v6097
  %v7477 = vunpack.c.h.b16 %v6097
  %v7478 = vunpack.c.l.b16 %v6098
  %v7479 = vunpack.c.h.b16 %v6098
  %v7480 = vunpack.c.l.b16 %v6099
  %v7481 = vunpack.c.h.b16 %v6099
  %v7482 = vunpack.c.l.b16 %v6100
  %v7483 = vunpack.c.h.b16 %v6100
  %v7484 = vunpack.c.l.b16 %v6101
  %v7485 = vunpack.c.h.b16 %v6101
  %v7486 = vunpack.c.l.b16 %v6102
  %v7487 = vunpack.c.h.b16 %v6102
  %v7488 = vunpack.c.l.b16 %v6103
  %v7489 = vunpack.c.h.b16 %v6103
  %v7490 = vunpack.c.l.b16 %v6104
  %v7491 = vunpack.c.h.b16 %v6104
  %v7492 = vunpack.c.l.b16 %v6105
  %v7493 = vunpack.c.h.b16 %v6105
  %v7494 = vunpack.c.l.b16 %v6106
  %v7495 = vunpack.c.h.b16 %v6106
  %v7496 = vunpack.c.l.b16 %v6107
  %v7497 = vunpack.c.h.b16 %v6107
  %v7498 = vunpack.c.l.b16 %v6108
  %v7499 = vunpack.c.h.b16 %v6108
  %v7500 = vunpack.c.l.b16 %v6109
  %v7501 = vunpack.c.h.b16 %v6109
  %v7502 = vunpack.c.l.b16 %v6110
  %v7503 = vunpack.c.h.b16 %v6110
  %v7504 = vunpack.c.l.b16 %v6111
  %v7505 = vunpack.c.h.b16 %v6111
  %v7506 = vunpack.c.l.b16 %v6112
  %v7507 = vunpack.c.h.b16 %v6112
  %v7508 = vunpack.c.l.b16 %v6113
  %v7509 = vunpack.c.h.b16 %v6113
  %v7510 = vunpack.c.l.b16 %v6114
  %v7511 = vunpack.c.h.b16 %v6114
  %v7512 = vunpack.c.l.b16 %v6115
  %v7513 = vunpack.c.h.b16 %v6115
  %v7514 = vunpack.c.l.b16 %v6116
  %v7515 = vunpack.c.h.b16 %v6116
  %v7516 = vunpack.c.l.b16 %v6117
  %v7517 = vunpack.c.h.b16 %v6117
  %v7518 = vunpack.c.l.b16 %v6118
  %v7519 = vunpack.c.h.b16 %v6118
  %v7520 = vunpack.c.l.b16 %v6119
  %v7521 = vunpack.c.h.b16 %v6119
  %v7522 = vunpack.c.l.b16 %v6120
  %v7523 = vunpack.c.h.b16 %v6120
  %v7524 = vunpack.c.l.b16 %v6121
  %v7525 = vunpack.c.h.b16 %v6121
  %v7526 = vunpack.c.l.b16 %v6122
  %v7527 = vunpack.c.h.b16 %v6122
  %v7528 = vunpack.c.l.b16 %v6123
  %v7529 = vunpack.c.h.b16 %v6123
  %v7530 = vunpack.c.l.b16 %v6124
  %v7531 = vunpack.c.h.b16 %v6124
  %v7532 = vunpack.c.l.b16 %v6125
  %v7533 = vunpack.c.h.b16 %v6125
  %v7534 = vunpack.c.l.b16 %v6126
  %v7535 = vunpack.c.h.b16 %v6126
  %v7536 = vunpack.c.l.b16 %v6127
  %v7537 = vunpack.c.h.b16 %v6127
  %v7538 = vunpack.c.l.b16 %v6128
  %v7539 = vunpack.c.h.b16 %v6128
  %v7540 = vunpack.c.l.b16 %v6129
  %v7541 = vunpack.c.h.b16 %v6129
  %v7542 = vunpack.c.l.b16 %v6130
  %v7543 = vunpack.c.h.b16 %v6130
  %v7544 = vunpack.c.l.b16 %v6131
  %v7545 = vunpack.c.h.b16 %v6131
  %v7546 = vunpack.c.l.b16 %v6132
  %v7547 = vunpack.c.h.b16 %v6132
  %v7548 = vunpack.c.l.b16 %v6133
  %v7549 = vunpack.c.h.b16 %v6133
  %v7550 = vunpack.c.l.b16 %v6134
  %v7551 = vunpack.c.h.b16 %v6134
  %v7552 = vunpack.c.l.b16 %v6135
  %v7553 = vunpack.c.h.b16 %v6135
  %v7554 = vunpack.c.l.b16 %v6136
  %v7555 = vunpack.c.h.b16 %v6136
  %v7556 = vunpack.c.l.b16 %v6137
  %v7557 = vunpack.c.h.b16 %v6137
  %v7558 = vunpack.c.l.b16 %v6138
  %v7559 = vunpack.c.h.b16 %v6138
  %v7560 = vunpack.c.l.b16 %v6139
  %v7561 = vunpack.c.h.b16 %v6139
  %v7562 = vunpack.c.l.b16 %v6140
  %v7563 = vunpack.c.h.b16 %v6140
  %v7564 = vunpack.c.l.b16 %v6141
  %v7565 = vunpack.c.h.b16 %v6141
  %v7566 = vunpack.c.l.b16 %v6142
  %v7567 = vunpack.c.h.b16 %v6142
  %v7568 = vunpack.c.l.b16 %v6143
  %v7569 = vunpack.c.h.b16 %v6143
  %v7570 = vunpack.c.l.b16 %v6144
  %v7571 = vunpack.c.h.b16 %v6144
  %v7572 = vunpack.c.l.b16 %v6145
  %v7573 = vunpack.c.h.b16 %v6145
  %v7574 = vunpack.c.l.b16 %v6146
  %v7575 = vunpack.c.h.b16 %v6146
  %v7576 = vunpack.c.l.b16 %v6147
  %v7577 = vunpack.c.h.b16 %v6147
  %v7578 = vunpack.c.l.b16 %v6148
  %v7579 = vunpack.c.h.b16 %v6148
  %v7580 = vunpack.c.l.b16 %v6149
  %v7581 = vunpack.c.h.b16 %v6149
  %v7582 = vunpack.c.l.b16 %v6150
  %v7583 = vunpack.c.h.b16 %v6150
  %v7584 = vunpack.c.l.b16 %v6151
  %v7585 = vunpack.c.h.b16 %v6151
  %v7586 = vunpack.c.l.b16 %v6152
  %v7587 = vunpack.c.h.b16 %v6152
  %v7588 = vunpack.c.l.b16 %v6153
  %v7589 = vunpack.c.h.b16 %v6153
  %v7590 = vunpack.c.l.b16 %v6154
  %v7591 = vunpack.c.h.b16 %v6154
  %v7592 = vunpack.c.l.b16 %v6155
  %v7593 = vunpack.c.h.b16 %v6155
  %v7594 = vunpack.c.l.b16 %v6156
  %v7595 = vunpack.c.h.b16 %v6156
  %v7596 = vunpack.c.l.b16 %v6157
  %v7597 = vunpack.c.h.b16 %v6157
  %v7598 = vunpack.c.l.b16 %v6158
  %v7599 = vunpack.c.h.b16 %v6158
  %v7600 = vunpack.c.l.b16 %v6159
  %v7601 = vunpack.c.h.b16 %v6159
  %v7602 = vunpack.c.l.b16 %v6160
  %v7603 = vunpack.c.h.b16 %v6160
  %v7604 = vunpack.c.l.b16 %v6161
  %v7605 = vunpack.c.h.b16 %v6161
  %v7606 = vunpack.c.l.b16 %v6162
  %v7607 = vunpack.c.h.b16 %v6162
  %v7608 = vunpack.c.l.b16 %v6163
  %v7609 = vunpack.c.h.b16 %v6163
  %v7610 = vunpack.c.l.b16 %v6164
  %v7611 = vunpack.c.h.b16 %v6164
  %v7612 = vunpack.c.l.b16 %v6165
  %v7613 = vunpack.c.h.b16 %v6165
  %v7614 = vunpack.c.l.b16 %v6166
  %v7615 = vunpack.c.h.b16 %v6166
  %v7616 = vunpack.c.l.b16 %v6167
  %v7617 = vunpack.c.h.b16 %v6167
  %v7618 = vunpack.c.l.b16 %v6168
  %v7619 = vunpack.c.h.b16 %v6168
  %v7620 = vunpack.c.l.b16 %v6169
  %v7621 = vunpack.c.h.b16 %v6169
  %v7622 = vunpack.c.l.b16 %v6170
  %v7623 = vunpack.c.h.b16 %v6170
  %v7624 = vunpack.c.l.b16 %v6171
  %v7625 = vunpack.c.h.b16 %v6171
  %v7626 = vunpack.c.l.b16 %v6172
  %v7627 = vunpack.c.h.b16 %v6172
  %v7628 = vunpack.c.l.b16 %v6173
  %v7629 = vunpack.c.h.b16 %v6173
  %v7630 = vunpack.c.l.b16 %v6174
  %v7631 = vunpack.c.h.b16 %v6174
  %v7632 = vunpack.c.l.b16 %v6175
  %v7633 = vunpack.c.h.b16 %v6175
  %v7634 = vunpack.c.l.b16 %v6176
  %v7635 = vunpack.c.h.b16 %v6176
  %v7636 = vunpack.c.l.b16 %v6177
  %v7637 = vunpack.c.h.b16 %v6177
  %v7638 = vunpack.c.l.b16 %v6178
  %v7639 = vunpack.c.h.b16 %v6178
  %v7640 = vunpack.c.l.b16 %v6179
  %v7641 = vunpack.c.h.b16 %v6179
  %v7642 = vunpack.c.l.b16 %v6180
  %v7643 = vunpack.c.h.b16 %v6180
  %v7644 = vunpack.c.l.b16 %v6181
  %v7645 = vunpack.c.h.b16 %v6181
  %v7646 = vunpack.c.l.b16 %v6182
  %v7647 = vunpack.c.h.b16 %v6182
  %v7648 = vunpack.c.l.b16 %v6183
  %v7649 = vunpack.c.h.b16 %v6183
  %v7650 = vunpack.c.l.b16 %v6184
  %v7651 = vunpack.c.h.b16 %v6184
  %v7652 = vunpack.c.l.b16 %v6185
  %v7653 = vunpack.c.h.b16 %v6185
  %v7654 = vunpack.c.l.b16 %v6186
  %v7655 = vunpack.c.h.b16 %v6186
  %v7656 = vunpack.c.l.b16 %v6187
  %v7657 = vunpack.c.h.b16 %v6187
  %v7658 = vunpack.c.l.b16 %v6188
  %v7659 = vunpack.c.h.b16 %v6188
  %v7660 = vunpack.c.l.b16 %v6189
  %v7661 = vunpack.c.h.b16 %v6189
  %v7662 = vunpack.c.l.b16 %v6190
  %v7663 = vunpack.c.h.b16 %v6190
  %v7664 = vunpack.c.l.b16 %v6191
  %v7665 = vunpack.c.h.b16 %v6191
  %v7666 = vunpack.c.l.b16 %v6192
  %v7667 = vunpack.c.h.b16 %v6192
  %v7668 = vunpack.c.l.b16 %v6193
  %v7669 = vunpack.c.h.b16 %v6193
  %v7670 = vunpack.c.l.b16 %v6194
  %v7671 = vunpack.c.h.b16 %v6194
  %v7672 = vunpack.c.l.b16 %v6195
  %v7673 = vunpack.c.h.b16 %v6195
  %v7674 = vunpack.c.l.b16 %v6196
  %v7675 = vunpack.c.h.b16 %v6196
  %v7676 = vunpack.c.l.b16 %v6197
  %v7677 = vunpack.c.h.b16 %v6197
  %v7678 = vunpack.c.l.b16 %v6198
  %v7679 = vunpack.c.h.b16 %v6198
  %v7680 = vunpack.c.l.b16 %v6199
  %v7681 = vunpack.c.h.b16 %v6199
  %v7682 = vunpack.c.l.b16 %v6200
  %v7683 = vunpack.c.h.b16 %v6200
  %v7684 = vunpack.c.l.b16 %v6201
  %v7685 = vunpack.c.h.b16 %v6201
  %v7686 = vunpack.c.l.b16 %v6202
  %v7687 = vunpack.c.h.b16 %v6202
  %v7688 = vunpack.c.l.b16 %v6203
  %v7689 = vunpack.c.h.b16 %v6203
  %v7690 = vunpack.c.l.b16 %v6204
  %v7691 = vunpack.c.h.b16 %v6204
  %v7692 = vunpack.c.l.b16 %v6205
  %v7693 = vunpack.c.h.b16 %v6205
  %v7694 = vunpack.c.l.b16 %v6206
  %v7695 = vunpack.c.h.b16 %v6206
  %v7696 = vunpack.c.l.b16 %v6207
  %v7697 = vunpack.c.h.b16 %v6207
  %v7698 = vunpack.c.l.b16 %v6208
  %v7699 = vunpack.c.h.b16 %v6208
  %v7700 = vunpack.c.l.b16 %v6209
  %v7701 = vunpack.c.h.b16 %v6209
  %v7702 = vunpack.c.l.b16 %v6210
  %v7703 = vunpack.c.h.b16 %v6210
  %v7704 = vunpack.c.l.b16 %v6211
  %v7705 = vunpack.c.h.b16 %v6211
  %v7706 = vunpack.c.l.b16 %v6212
  %v7707 = vunpack.c.h.b16 %v6212
  %v7708 = vunpack.c.l.b16 %v6213
  %v7709 = vunpack.c.h.b16 %v6213
  %v7710 = vunpack.c.l.b16 %v6214
  %v7711 = vunpack.c.h.b16 %v6214
  %v7712 = vunpack.c.l.b16 %v6215
  %v7713 = vunpack.c.h.b16 %v6215
  %v7714 = vunpack.c.l.b16 %v6216
  %v7715 = vunpack.c.h.b16 %v6216
  %v7716 = vunpack.c.l.b16 %v6217
  %v7717 = vunpack.c.h.b16 %v6217
  %v7718 = vunpack.c.l.b16 %v6218
  %v7719 = vunpack.c.h.b16 %v6218
  %v7720 = vunpack.c.l.b16 %v6219
  %v7721 = vunpack.c.h.b16 %v6219
  %v7722 = vunpack.c.l.b16 %v6220
  %v7723 = vunpack.c.h.b16 %v6220
  %v7724 = vunpack.c.l.b16 %v6221
  %v7725 = vunpack.c.h.b16 %v6221
  %v7726 = vunpack.c.l.b16 %v6222
  %v7727 = vunpack.c.h.b16 %v6222
  %v7728 = vunpack.c.l.b16 %v6223
  %v7729 = vunpack.c.h.b16 %v6223
  %v7730 = vunpack.c.l.b16 %v6224
  %v7731 = vunpack.c.h.b16 %v6224
  %v7732 = vunpack.c.l.b16 %v6225
  %v7733 = vunpack.c.h.b16 %v6225
  %v7734 = vunpack.c.l.b16 %v6226
  %v7735 = vunpack.c.h.b16 %v6226
  %v7736 = vunpack.c.l.b16 %v6227
  %v7737 = vunpack.c.h.b16 %v6227
  %v7738 = vunpack.c.l.b16 %v6228
  %v7739 = vunpack.c.h.b16 %v6228
  %v7740 = vunpack.c.l.b16 %v6229
  %v7741 = vunpack.c.h.b16 %v6229
  %v7742 = vunpack.c.l.b16 %v6230
  %v7743 = vunpack.c.h.b16 %v6230
  %v7744 = vunpack.c.l.b16 %v6231
  %v7745 = vunpack.c.h.b16 %v6231
  %v7746 = vunpack.c.l.b16 %v6232
  %v7747 = vunpack.c.h.b16 %v6232
  %v7748 = vunpack.c.l.b16 %v6233
  %v7749 = vunpack.c.h.b16 %v6233
  %v7750 = vunpack.c.l.b16 %v6234
  %v7751 = vunpack.c.h.b16 %v6234
  %v7752 = vunpack.c.l.b16 %v6235
  %v7753 = vunpack.c.h.b16 %v6235
  %v7754 = vunpack.c.l.b16 %v6236
  %v7755 = vunpack.c.h.b16 %v6236
  %v7756 = vunpack.c.l.b16 %v6237
  %v7757 = vunpack.c.h.b16 %v6237
  %v7758 = vunpack.c.l.b16 %v6238
  %v7759 = vunpack.c.h.b16 %v6238
  %v7760 = vunpack.c.l.b16 %v6239
  %v7761 = vunpack.c.h.b16 %v6239
  %v7762 = vunpack.c.l.b16 %v6240
  %v7763 = vunpack.c.h.b16 %v6240
  %v7764 = vunpack.c.l.b16 %v6241
  %v7765 = vunpack.c.h.b16 %v6241
  %v7766 = vunpack.c.l.b16 %v6242
  %v7767 = vunpack.c.h.b16 %v6242
  %v7768 = vunpack.c.l.b16 %v6243
  %v7769 = vunpack.c.h.b16 %v6243
  %v7770 = vunpack.c.l.b16 %v6244
  %v7771 = vunpack.c.h.b16 %v6244
  %v7772 = vunpack.c.l.b16 %v6245
  %v7773 = vunpack.c.h.b16 %v6245
  %v7774 = vunpack.c.l.b16 %v6246
  %v7775 = vunpack.c.h.b16 %v6246
  %v7776 = vunpack.c.l.b16 %v6247
  %v7777 = vunpack.c.h.b16 %v6247
  %v7778 = vunpack.c.l.b16 %v6248
  %v7779 = vunpack.c.h.b16 %v6248
  %v7780 = vunpack.c.l.b16 %v6249
  %v7781 = vunpack.c.h.b16 %v6249
  %v7782 = vunpack.c.l.b16 %v6250
  %v7783 = vunpack.c.h.b16 %v6250
  %v7784 = vunpack.c.l.b16 %v6251
  %v7785 = vunpack.c.h.b16 %v6251
  %v7786 = vunpack.c.l.b16 %v6252
  %v7787 = vunpack.c.h.b16 %v6252
  %v7788 = vunpack.c.l.b16 %v6253
  %v7789 = vunpack.c.h.b16 %v6253
  %v7790 = vunpack.c.l.b16 %v6254
  %v7791 = vunpack.c.h.b16 %v6254
  %v7792 = vunpack.c.l.b16 %v6255
  %v7793 = vunpack.c.h.b16 %v6255
  %v7794 = vunpack.c.l.b16 %v6256
  %v7795 = vunpack.c.h.b16 %v6256
  %v7796 = vunpack.c.l.b16 %v6257
  %v7797 = vunpack.c.h.b16 %v6257
  %v7798 = vunpack.c.l.b16 %v6258
  %v7799 = vunpack.c.h.b16 %v6258
  %v7800 = vunpack.c.l.b16 %v6259
  %v7801 = vunpack.c.h.b16 %v6259
  %v7802 = vunpack.c.l.b16 %v6260
  %v7803 = vunpack.c.h.b16 %v6260
  %v7804 = vunpack.c.l.b16 %v6261
  %v7805 = vunpack.c.h.b16 %v6261
  %v7806 = vunpack.c.l.b16 %v6262
  %v7807 = vunpack.c.h.b16 %v6262
  %v7808 = vunpack.c.l.b16 %v6263
  %v7809 = vunpack.c.h.b16 %v6263
  %v7810 = vunpack.c.l.b16 %v6264
  %v7811 = vunpack.c.h.b16 %v6264
  %v7812 = vunpack.c.l.b16 %v6265
  %v7813 = vunpack.c.h.b16 %v6265
  %v7814 = vunpack.c.l.b16 %v6266
  %v7815 = vunpack.c.h.b16 %v6266
  %v7816 = vunpack.c.l.b16 %v6267
  %v7817 = vunpack.c.h.b16 %v6267
  %v7818 = vunpack.c.l.b16 %v6268
  %v7819 = vunpack.c.h.b16 %v6268
  %v7820 = vunpack.c.l.b16 %v6269
  %v7821 = vunpack.c.h.b16 %v6269
  %v7822 = vunpack.c.l.b16 %v6270
  %v7823 = vunpack.c.h.b16 %v6270
  %v7824 = vunpack.c.l.b16 %v6271
  %v7825 = vunpack.c.h.b16 %v6271
  %v7826 = vunpack.c.l.b16 %v6272
  %v7827 = vunpack.c.h.b16 %v6272
  %v7828 = vunpack.c.l.b16 %v6273
  %v7829 = vunpack.c.h.b16 %v6273
  %v7830 = vunpack.c.l.b16 %v6274
  %v7831 = vunpack.c.h.b16 %v6274
  %v7832 = vunpack.c.l.b16 %v6275
  %v7833 = vunpack.c.h.b16 %v6275
  %v7834 = vpack.c.b16 %v6814, %v6810
  %v7835 = vpack.c.b16 %v6815, %v6811
  %v7836 = vpack.c.b16 %v6816, %v6812
  %v7837 = vpack.c.b16 %v6817, %v6813
  %v7838 = vpack.c.b16 %v6822, %v6818
  %v7839 = vpack.c.b16 %v6823, %v6819
  %v7840 = vpack.c.b16 %v6824, %v6820
  %v7841 = vpack.c.b16 %v6825, %v6821
  %v7842 = vpack.c.b16 %v6830, %v6826
  %v7843 = vpack.c.b16 %v6831, %v6827
  %v7844 = vpack.c.b16 %v6832, %v6828
  %v7845 = vpack.c.b16 %v6833, %v6829
  %v7846 = vpack.c.b16 %v6838, %v6834
  %v7847 = vpack.c.b16 %v6839, %v6835
  %v7848 = vpack.c.b16 %v6840, %v6836
  %v7849 = vpack.c.b16 %v6841, %v6837
  %v7850 = vpack.c.b16 %v6846, %v6842
  %v7851 = vpack.c.b16 %v6847, %v6843
  %v7852 = vpack.c.b16 %v6848, %v6844
  %v7853 = vpack.c.b16 %v6849, %v6845
  %v7854 = vpack.c.b16 %v6854, %v6850
  %v7855 = vpack.c.b16 %v6855, %v6851
  %v7856 = vpack.c.b16 %v6856, %v6852
  %v7857 = vpack.c.b16 %v6857, %v6853
  %v7858 = vpack.c.b16 %v6862, %v6858
  %v7859 = vpack.c.b16 %v6863, %v6859
  %v7860 = vpack.c.b16 %v6864, %v6860
  %v7861 = vpack.c.b16 %v6865, %v6861
  %v7862 = vpack.c.b16 %v6870, %v6866
  %v7863 = vpack.c.b16 %v6871, %v6867
  %v7864 = vpack.c.b16 %v6872, %v6868
  %v7865 = vpack.c.b16 %v6873, %v6869
  %v7866 = vpack.c.b16 %v6878, %v6874
  %v7867 = vpack.c.b16 %v6879, %v6875
  %v7868 = vpack.c.b16 %v6880, %v6876
  %v7869 = vpack.c.b16 %v6881, %v6877
  %v7870 = vpack.c.b16 %v6886, %v6882
  %v7871 = vpack.c.b16 %v6887, %v6883
  %v7872 = vpack.c.b16 %v6888, %v6884
  %v7873 = vpack.c.b16 %v6889, %v6885
  %v7874 = vpack.c.b16 %v6894, %v6890
  %v7875 = vpack.c.b16 %v6895, %v6891
  %v7876 = vpack.c.b16 %v6896, %v6892
  %v7877 = vpack.c.b16 %v6897, %v6893
  %v7878 = vpack.c.b16 %v6902, %v6898
  %v7879 = vpack.c.b16 %v6903, %v6899
  %v7880 = vpack.c.b16 %v6904, %v6900
  %v7881 = vpack.c.b16 %v6905, %v6901
  %v7882 = vpack.c.b16 %v6910, %v6906
  %v7883 = vpack.c.b16 %v6911, %v6907
  %v7884 = vpack.c.b16 %v6912, %v6908
  %v7885 = vpack.c.b16 %v6913, %v6909
  %v7886 = vpack.c.b16 %v6918, %v6914
  %v7887 = vpack.c.b16 %v6919, %v6915
  %v7888 = vpack.c.b16 %v6920, %v6916
  %v7889 = vpack.c.b16 %v6921, %v6917
  %v7890 = vpack.c.b16 %v6926, %v6922
  %v7891 = vpack.c.b16 %v6927, %v6923
  %v7892 = vpack.c.b16 %v6928, %v6924
  %v7893 = vpack.c.b16 %v6929, %v6925
  %v7894 = vpack.c.b16 %v6934, %v6930
  %v7895 = vpack.c.b16 %v6935, %v6931
  %v7896 = vpack.c.b16 %v6936, %v6932
  %v7897 = vpack.c.b16 %v6937, %v6933
  %v7898 = vpack.c.b16 %v6942, %v6938
  %v7899 = vpack.c.b16 %v6943, %v6939
  %v7900 = vpack.c.b16 %v6944, %v6940
  %v7901 = vpack.c.b16 %v6945, %v6941
  %v7902 = vpack.c.b16 %v6950, %v6946
  %v7903 = vpack.c.b16 %v6951, %v6947
  %v7904 = vpack.c.b16 %v6952, %v6948
  %v7905 = vpack.c.b16 %v6953, %v6949
  %v7906 = vpack.c.b16 %v6958, %v6954
  %v7907 = vpack.c.b16 %v6959, %v6955
  %v7908 = vpack.c.b16 %v6960, %v6956
  %v7909 = vpack.c.b16 %v6961, %v6957
  %v7910 = vpack.c.b16 %v6966, %v6962
  %v7911 = vpack.c.b16 %v6967, %v6963
  %v7912 = vpack.c.b16 %v6968, %v6964
  %v7913 = vpack.c.b16 %v6969, %v6965
  %v7914 = vpack.c.b16 %v6974, %v6970
  %v7915 = vpack.c.b16 %v6975, %v6971
  %v7916 = vpack.c.b16 %v6976, %v6972
  %v7917 = vpack.c.b16 %v6977, %v6973
  %v7918 = vpack.c.b16 %v6982, %v6978
  %v7919 = vpack.c.b16 %v6983, %v6979
  %v7920 = vpack.c.b16 %v6984, %v6980
  %v7921 = vpack.c.b16 %v6985, %v6981
  %v7922 = vpack.c.b16 %v6990, %v6986
  %v7923 = vpack.c.b16 %v6991, %v6987
  %v7924 = vpack.c.b16 %v6992, %v6988
  %v7925 = vpack.c.b16 %v6993, %v6989
  %v7926 = vpack.c.b16 %v6998, %v6994
  %v7927 = vpack.c.b16 %v6999, %v6995
  %v7928 = vpack.c.b16 %v7000, %v6996
  %v7929 = vpack.c.b16 %v7001, %v6997
  %v7930 = vpack.c.b16 %v7006, %v7002
  %v7931 = vpack.c.b16 %v7007, %v7003
  %v7932 = vpack.c.b16 %v7008, %v7004
  %v7933 = vpack.c.b16 %v7009, %v7005
  %v7934 = vpack.c.b16 %v7014, %v7010
  %v7935 = vpack.c.b16 %v7015, %v7011
  %v7936 = vpack.c.b16 %v7016, %v7012
  %v7937 = vpack.c.b16 %v7017, %v7013
  %v7938 = vpack.c.b16 %v7022, %v7018
  %v7939 = vpack.c.b16 %v7023, %v7019
  %v7940 = vpack.c.b16 %v7024, %v7020
  %v7941 = vpack.c.b16 %v7025, %v7021
  %v7942 = vpack.c.b16 %v7030, %v7026
  %v7943 = vpack.c.b16 %v7031, %v7027
  %v7944 = vpack.c.b16 %v7032, %v7028
  %v7945 = vpack.c.b16 %v7033, %v7029
  %v7946 = vpack.c.b16 %v7038, %v7034
  %v7947 = vpack.c.b16 %v7039, %v7035
  %v7948 = vpack.c.b16 %v7040, %v7036
  %v7949 = vpack.c.b16 %v7041, %v7037
  %v7950 = vpack.c.b16 %v7046, %v7042
  %v7951 = vpack.c.b16 %v7047, %v7043
  %v7952 = vpack.c.b16 %v7048, %v7044
  %v7953 = vpack.c.b16 %v7049, %v7045
  %v7954 = vpack.c.b16 %v7054, %v7050
  %v7955 = vpack.c.b16 %v7055, %v7051
  %v7956 = vpack.c.b16 %v7056, %v7052
  %v7957 = vpack.c.b16 %v7057, %v7053
  %v7958 = vpack.c.b16 %v7062, %v7058
  %v7959 = vpack.c.b16 %v7063, %v7059
  %v7960 = vpack.c.b16 %v7064, %v7060
  %v7961 = vpack.c.b16 %v7065, %v7061
  %v7962 = vpack.c.b16 %v7070, %v7066
  %v7963 = vpack.c.b16 %v7071, %v7067
  %v7964 = vpack.c.b16 %v7072, %v7068
  %v7965 = vpack.c.b16 %v7073, %v7069
  %v7966 = vpack.c.b16 %v7078, %v7074
  %v7967 = vpack.c.b16 %v7079, %v7075
  %v7968 = vpack.c.b16 %v7080, %v7076
  %v7969 = vpack.c.b16 %v7081, %v7077
  %v7970 = vpack.c.b16 %v7086, %v7082
  %v7971 = vpack.c.b16 %v7087, %v7083
  %v7972 = vpack.c.b16 %v7088, %v7084
  %v7973 = vpack.c.b16 %v7089, %v7085
  %v7974 = vpack.c.b16 %v7094, %v7090
  %v7975 = vpack.c.b16 %v7095, %v7091
  %v7976 = vpack.c.b16 %v7096, %v7092
  %v7977 = vpack.c.b16 %v7097, %v7093
  %v7978 = vpack.c.b16 %v7102, %v7098
  %v7979 = vpack.c.b16 %v7103, %v7099
  %v7980 = vpack.c.b16 %v7104, %v7100
  %v7981 = vpack.c.b16 %v7105, %v7101
  %v7982 = vpack.c.b16 %v7110, %v7106
  %v7983 = vpack.c.b16 %v7111, %v7107
  %v7984 = vpack.c.b16 %v7112, %v7108
  %v7985 = vpack.c.b16 %v7113, %v7109
  %v7986 = vpack.c.b16 %v7118, %v7114
  %v7987 = vpack.c.b16 %v7119, %v7115
  %v7988 = vpack.c.b16 %v7120, %v7116
  %v7989 = vpack.c.b16 %v7121, %v7117
  %v7990 = vpack.c.b16 %v7126, %v7122
  %v7991 = vpack.c.b16 %v7127, %v7123
  %v7992 = vpack.c.b16 %v7128, %v7124
  %v7993 = vpack.c.b16 %v7129, %v7125
  %v7994 = vpack.c.b16 %v7134, %v7130
  %v7995 = vpack.c.b16 %v7135, %v7131
  %v7996 = vpack.c.b16 %v7136, %v7132
  %v7997 = vpack.c.b16 %v7137, %v7133
  %v7998 = vpack.c.b16 %v7142, %v7138
  %v7999 = vpack.c.b16 %v7143, %v7139
  %v8000 = vpack.c.b16 %v7144, %v7140
  %v8001 = vpack.c.b16 %v7145, %v7141
  %v8002 = vpack.c.b16 %v7150, %v7146
  %v8003 = vpack.c.b16 %v7151, %v7147
  %v8004 = vpack.c.b16 %v7152, %v7148
  %v8005 = vpack.c.b16 %v7153, %v7149
  %v8006 = vpack.c.b16 %v7158, %v7154
  %v8007 = vpack.c.b16 %v7159, %v7155
  %v8008 = vpack.c.b16 %v7160, %v7156
  %v8009 = vpack.c.b16 %v7161, %v7157
  %v8010 = vpack.c.b16 %v7166, %v7162
  %v8011 = vpack.c.b16 %v7167, %v7163
  %v8012 = vpack.c.b16 %v7168, %v7164
  %v8013 = vpack.c.b16 %v7169, %v7165
  %v8014 = vpack.c.b16 %v7174, %v7170
  %v8015 = vpack.c.b16 %v7175, %v7171
  %v8016 = vpack.c.b16 %v7176, %v7172
  %v8017 = vpack.c.b16 %v7177, %v7173
  %v8018 = vpack.c.b16 %v7182, %v7178
  %v8019 = vpack.c.b16 %v7183, %v7179
  %v8020 = vpack.c.b16 %v7184, %v7180
  %v8021 = vpack.c.b16 %v7185, %v7181
  %v8022 = vpack.c.b16 %v7190, %v7186
  %v8023 = vpack.c.b16 %v7191, %v7187
  %v8024 = vpack.c.b16 %v7192, %v7188
  %v8025 = vpack.c.b16 %v7193, %v7189
  %v8026 = vpack.c.b16 %v7198, %v7194
  %v8027 = vpack.c.b16 %v7199, %v7195
  %v8028 = vpack.c.b16 %v7200, %v7196
  %v8029 = vpack.c.b16 %v7201, %v7197
  %v8030 = vpack.c.b16 %v7206, %v7202
  %v8031 = vpack.c.b16 %v7207, %v7203
  %v8032 = vpack.c.b16 %v7208, %v7204
  %v8033 = vpack.c.b16 %v7209, %v7205
  %v8034 = vpack.c.b16 %v7214, %v7210
  %v8035 = vpack.c.b16 %v7215, %v7211
  %v8036 = vpack.c.b16 %v7216, %v7212
  %v8037 = vpack.c.b16 %v7217, %v7213
  %v8038 = vpack.c.b16 %v7222, %v7218
  %v8039 = vpack.c.b16 %v7223, %v7219
  %v8040 = vpack.c.b16 %v7224, %v7220
  %v8041 = vpack.c.b16 %v7225, %v7221
  %v8042 = vpack.c.b16 %v7230, %v7226
  %v8043 = vpack.c.b16 %v7231, %v7227
  %v8044 = vpack.c.b16 %v7232, %v7228
  %v8045 = vpack.c.b16 %v7233, %v7229
  %v8046 = vpack.c.b16 %v7238, %v7234
  %v8047 = vpack.c.b16 %v7239, %v7235
  %v8048 = vpack.c.b16 %v7240, %v7236
  %v8049 = vpack.c.b16 %v7241, %v7237
  %v8050 = vpack.c.b16 %v7246, %v7242
  %v8051 = vpack.c.b16 %v7247, %v7243
  %v8052 = vpack.c.b16 %v7248, %v7244
  %v8053 = vpack.c.b16 %v7249, %v7245
  %v8054 = vpack.c.b16 %v7254, %v7250
  %v8055 = vpack.c.b16 %v7255, %v7251
  %v8056 = vpack.c.b16 %v7256, %v7252
  %v8057 = vpack.c.b16 %v7257, %v7253
  %v8058 = vpack.c.b16 %v7262, %v7258
  %v8059 = vpack.c.b16 %v7263, %v7259
  %v8060 = vpack.c.b16 %v7264, %v7260
  %v8061 = vpack.c.b16 %v7265, %v7261
  %v8062 = vpack.c.b16 %v7270, %v7266
  %v8063 = vpack.c.b16 %v7271, %v7267
  %v8064 = vpack.c.b16 %v7272, %v7268
  %v8065 = vpack.c.b16 %v7273, %v7269
  %v8066 = vpack.c.b16 %v7278, %v7274
  %v8067 = vpack.c.b16 %v7279, %v7275
  %v8068 = vpack.c.b16 %v7280, %v7276
  %v8069 = vpack.c.b16 %v7281, %v7277
  %v8070 = vpack.c.b16 %v7286, %v7282
  %v8071 = vpack.c.b16 %v7287, %v7283
  %v8072 = vpack.c.b16 %v7288, %v7284
  %v8073 = vpack.c.b16 %v7289, %v7285
  %v8074 = vpack.c.b16 %v7294, %v7290
  %v8075 = vpack.c.b16 %v7295, %v7291
  %v8076 = vpack.c.b16 %v7296, %v7292
  %v8077 = vpack.c.b16 %v7297, %v7293
  %v8078 = vpack.c.b16 %v7302, %v7298
  %v8079 = vpack.c.b16 %v7303, %v7299
  %v8080 = vpack.c.b16 %v7304, %v7300
  %v8081 = vpack.c.b16 %v7305, %v7301
  %v8082 = vpack.c.b16 %v7310, %v7306
  %v8083 = vpack.c.b16 %v7311, %v7307
  %v8084 = vpack.c.b16 %v7312, %v7308
  %v8085 = vpack.c.b16 %v7313, %v7309
  %v8086 = vpack.c.b16 %v7318, %v7314
  %v8087 = vpack.c.b16 %v7319, %v7315
  %v8088 = vpack.c.b16 %v7320, %v7316
  %v8089 = vpack.c.b16 %v7321, %v7317
  %v8090 = vpack.c.b16 %v7326, %v7322
  %v8091 = vpack.c.b16 %v7327, %v7323
  %v8092 = vpack.c.b16 %v7328, %v7324
  %v8093 = vpack.c.b16 %v7329, %v7325
  %v8094 = vpack.c.b16 %v7334, %v7330
  %v8095 = vpack.c.b16 %v7335, %v7331
  %v8096 = vpack.c.b16 %v7336, %v7332
  %v8097 = vpack.c.b16 %v7337, %v7333
  %v8098 = vpack.c.b16 %v7342, %v7338
  %v8099 = vpack.c.b16 %v7343, %v7339
  %v8100 = vpack.c.b16 %v7344, %v7340
  %v8101 = vpack.c.b16 %v7345, %v7341
  %v8102 = vpack.c.b16 %v7350, %v7346
  %v8103 = vpack.c.b16 %v7351, %v7347
  %v8104 = vpack.c.b16 %v7352, %v7348
  %v8105 = vpack.c.b16 %v7353, %v7349
  %v8106 = vpack.c.b16 %v7358, %v7354
  %v8107 = vpack.c.b16 %v7359, %v7355
  %v8108 = vpack.c.b16 %v7360, %v7356
  %v8109 = vpack.c.b16 %v7361, %v7357
  %v8110 = vpack.c.b16 %v7366, %v7362
  %v8111 = vpack.c.b16 %v7367, %v7363
  %v8112 = vpack.c.b16 %v7368, %v7364
  %v8113 = vpack.c.b16 %v7369, %v7365
  %v8114 = vpack.c.b16 %v7374, %v7370
  %v8115 = vpack.c.b16 %v7375, %v7371
  %v8116 = vpack.c.b16 %v7376, %v7372
  %v8117 = vpack.c.b16 %v7377, %v7373
  %v8118 = vpack.c.b16 %v7382, %v7378
  %v8119 = vpack.c.b16 %v7383, %v7379
  %v8120 = vpack.c.b16 %v7384, %v7380
  %v8121 = vpack.c.b16 %v7385, %v7381
  %v8122 = vpack.c.b16 %v7390, %v7386
  %v8123 = vpack.c.b16 %v7391, %v7387
  %v8124 = vpack.c.b16 %v7392, %v7388
  %v8125 = vpack.c.b16 %v7393, %v7389
  %v8126 = vpack.c.b16 %v7398, %v7394
  %v8127 = vpack.c.b16 %v7399, %v7395
  %v8128 = vpack.c.b16 %v7400, %v7396
  %v8129 = vpack.c.b16 %v7401, %v7397
  %v8130 = vpack.c.b16 %v7406, %v7402
  %v8131 = vpack.c.b16 %v7407, %v7403
  %v8132 = vpack.c.b16 %v7408, %v7404
  %v8133 = vpack.c.b16 %v7409, %v7405
  %v8134 = vpack.c.b16 %v7414, %v7410
  %v8135 = vpack.c.b16 %v7415, %v7411
  %v8136 = vpack.c.b16 %v7416, %v7412
  %v8137 = vpack.c.b16 %v7417, %v7413
  %v8138 = vpack.c.b16 %v7422, %v7418
  %v8139 = vpack.c.b16 %v7423, %v7419
  %v8140 = vpack.c.b16 %v7424, %v7420
  %v8141 = vpack.c.b16 %v7425, %v7421
  %v8142 = vpack.c.b16 %v7430, %v7426
  %v8143 = vpack.c.b16 %v7431, %v7427
  %v8144 = vpack.c.b16 %v7432, %v7428
  %v8145 = vpack.c.b16 %v7433, %v7429
  %v8146 = vpack.c.b16 %v7438, %v7434
  %v8147 = vpack.c.b16 %v7439, %v7435
  %v8148 = vpack.c.b16 %v7440, %v7436
  %v8149 = vpack.c.b16 %v7441, %v7437
  %v8150 = vpack.c.b16 %v7446, %v7442
  %v8151 = vpack.c.b16 %v7447, %v7443
  %v8152 = vpack.c.b16 %v7448, %v7444
  %v8153 = vpack.c.b16 %v7449, %v7445
  %v8154 = vpack.c.b16 %v7454, %v7450
  %v8155 = vpack.c.b16 %v7455, %v7451
  %v8156 = vpack.c.b16 %v7456, %v7452
  %v8157 = vpack.c.b16 %v7457, %v7453
  %v8158 = vpack.c.b16 %v7462, %v7458
  %v8159 = vpack.c.b16 %v7463, %v7459
  %v8160 = vpack.c.b16 %v7464, %v7460
  %v8161 = vpack.c.b16 %v7465, %v7461
  %v8162 = vpack.c.b16 %v7470, %v7466
  %v8163 = vpack.c.b16 %v7471, %v7467
  %v8164 = vpack.c.b16 %v7472, %v7468
  %v8165 = vpack.c.b16 %v7473, %v7469
  %v8166 = vpack.c.b16 %v7478, %v7474
  %v8167 = vpack.c.b16 %v7479, %v7475
  %v8168 = vpack.c.b16 %v7480, %v7476
  %v8169 = vpack.c.b16 %v7481, %v7477
  %v8170 = vpack.c.b16 %v7486, %v7482
  %v8171 = vpack.c.b16 %v7487, %v7483
  %v8172 = vpack.c.b16 %v7488, %v7484
  %v8173 = vpack.c.b16 %v7489, %v7485
  %v8174 = vpack.c.b16 %v7494, %v7490
  %v8175 = vpack.c.b16 %v7495, %v7491
  %v8176 = vpack.c.b16 %v7496, %v7492
  %v8177 = vpack.c.b16 %v7497, %v7493
  %v8178 = vpack.c.b16 %v7502, %v7498
  %v8179 = vpack.c.b16 %v7503, %v7499
  %v8180 = vpack.c.b16 %v7504, %v7500
  %v8181 = vpack.c.b16 %v7505, %v7501
  %v8182 = vpack.c.b16 %v7510, %v7506
  %v8183 = vpack.c.b16 %v7511, %v7507
  %v8184 = vpack.c.b16 %v7512, %v7508
  %v8185 = vpack.c.b16 %v7513, %v7509
  %v8186 = vpack.c.b16 %v7518, %v7514
  %v8187 = vpack.c.b16 %v7519, %v7515
  %v8188 = vpack.c.b16 %v7520, %v7516
  %v8189 = vpack.c.b16 %v7521, %v7517
  %v8190 = vpack.c.b16 %v7526, %v7522
  %v8191 = vpack.c.b16 %v7527, %v7523
  %v8192 = vpack.c.b16 %v7528, %v7524
  %v8193 = vpack.c.b16 %v7529, %v7525
  %v8194 = vpack.c.b16 %v7534, %v7530
  %v8195 = vpack.c.b16 %v7535, %v7531
  %v8196 = vpack.c.b16 %v7536, %v7532
  %v8197 = vpack.c.b16 %v7537, %v7533
  %v8198 = vpack.c.b16 %v7542, %v7538
  %v8199 = vpack.c.b16 %v7543, %v7539
  %v8200 = vpack.c.b16 %v7544, %v7540
  %v8201 = vpack.c.b16 %v7545, %v7541
  %v8202 = vpack.c.b16 %v7550, %v7546
  %v8203 = vpack.c.b16 %v7551, %v7547
  %v8204 = vpack.c.b16 %v7552, %v7548
  %v8205 = vpack.c.b16 %v7553, %v7549
  %v8206 = vpack.c.b16 %v7558, %v7554
  %v8207 = vpack.c.b16 %v7559, %v7555
  %v8208 = vpack.c.b16 %v7560, %v7556
  %v8209 = vpack.c.b16 %v7561, %v7557
  %v8210 = vpack.c.b16 %v7566, %v7562
  %v8211 = vpack.c.b16 %v7567, %v7563
  %v8212 = vpack.c.b16 %v7568, %v7564
  %v8213 = vpack.c.b16 %v7569, %v7565
  %v8214 = vpack.c.b16 %v7574, %v7570
  %v8215 = vpack.c.b16 %v7575, %v7571
  %v8216 = vpack.c.b16 %v7576, %v7572
  %v8217 = vpack.c.b16 %v7577, %v7573
  %v8218 = vpack.c.b16 %v7582, %v7578
  %v8219 = vpack.c.b16 %v7583, %v7579
  %v8220 = vpack.c.b16 %v7584, %v7580
  %v8221 = vpack.c.b16 %v7585, %v7581
  %v8222 = vpack.c.b16 %v7590, %v7586
  %v8223 = vpack.c.b16 %v7591, %v7587
  %v8224 = vpack.c.b16 %v7592, %v7588
  %v8225 = vpack.c.b16 %v7593, %v7589
  %v8226 = vpack.c.b16 %v7598, %v7594
  %v8227 = vpack.c.b16 %v7599, %v7595
  %v8228 = vpack.c.b16 %v7600, %v7596
  %v8229 = vpack.c.b16 %v7601, %v7597
  %v8230 = vpack.c.b16 %v7606, %v7602
  %v8231 = vpack.c.b16 %v7607, %v7603
  %v8232 = vpack.c.b16 %v7608, %v7604
  %v8233 = vpack.c.b16 %v7609, %v7605
  %v8234 = vpack.c.b16 %v7614, %v7610
  %v8235 = vpack.c.b16 %v7615, %v7611
  %v8236 = vpack.c.b16 %v7616, %v7612
  %v8237 = vpack.c.b16 %v7617, %v7613
  %v8238 = vpack.c.b16 %v7622, %v7618
  %v8239 = vpack.c.b16 %v7623, %v7619
  %v8240 = vpack.c.b16 %v7624, %v7620
  %v8241 = vpack.c.b16 %v7625, %v7621
  %v8242 = vpack.c.b16 %v7630, %v7626
  %v8243 = vpack.c.b16 %v7631, %v7627
  %v8244 = vpack.c.b16 %v7632, %v7628
  %v8245 = vpack.c.b16 %v7633, %v7629
  %v8246 = vpack.c.b16 %v7638, %v7634
  %v8247 = vpack.c.b16 %v7639, %v7635
  %v8248 = vpack.c.b16 %v7640, %v7636
  %v8249 = vpack.c.b16 %v7641, %v7637
  %v8250 = vpack.c.b16 %v7646, %v7642
  %v8251 = vpack.c.b16 %v7647, %v7643
  %v8252 = vpack.c.b16 %v7648, %v7644
  %v8253 = vpack.c.b16 %v7649, %v7645
  %v8254 = vpack.c.b16 %v7654, %v7650
  %v8255 = vpack.c.b16 %v7655, %v7651
  %v8256 = vpack.c.b16 %v7656, %v7652
  %v8257 = vpack.c.b16 %v7657, %v7653
  %v8258 = vpack.c.b16 %v7662, %v7658
  %v8259 = vpack.c.b16 %v7663, %v7659
  %v8260 = vpack.c.b16 %v7664, %v7660
  %v8261 = vpack.c.b16 %v7665, %v7661
  %v8262 = vpack.c.b16 %v7670, %v7666
  %v8263 = vpack.c.b16 %v7671, %v7667
  %v8264 = vpack.c.b16 %v7672, %v7668
  %v8265 = vpack.c.b16 %v7673, %v7669
  %v8266 = vpack.c.b16 %v7678, %v7674
  %v8267 = vpack.c.b16 %v7679, %v7675
  %v8268 = vpack.c.b16 %v7680, %v7676
  %v8269 = vpack.c.b16 %v7681, %v7677
  %v8270 = vpack.c.b16 %v7686, %v7682
  %v8271 = vpack.c.b16 %v7687, %v7683
  %v8272 = vpack.c.b16 %v7688, %v7684
  %v8273 = vpack.c.b16 %v7689, %v7685
  %v8274 = vpack.c.b16 %v7694, %v7690
  %v8275 = vpack.c.b16 %v7695, %v7691
  %v8276 = vpack.c.b16 %v7696, %v7692
  %v8277 = vpack.c.b16 %v7697, %v7693
  %v8278 = vpack.c.b16 %v7702, %v7698
  %v8279 = vpack.c.b16 %v7703, %v7699
  %v8280 = vpack.c.b16 %v7704, %v7700
  %v8281 = vpack.c.b16 %v7705, %v7701
  %v8282 = vpack.c.b16 %v7710, %v7706
  %v8283 = vpack.c.b16 %v7711, %v7707
  %v8284 = vpack.c.b16 %v7712, %v7708
  %v8285 = vpack.c.b16 %v7713, %v7709
  %v8286 = vpack.c.b16 %v7718, %v7714
  %v8287 = vpack.c.b16 %v7719, %v7715
  %v8288 = vpack.c.b16 %v7720, %v7716
  %v8289 = vpack.c.b16 %v7721, %v7717
  %v8290 = vpack.c.b16 %v7726, %v7722
  %v8291 = vpack.c.b16 %v7727, %v7723
  %v8292 = vpack.c.b16 %v7728, %v7724
  %v8293 = vpack.c.b16 %v7729, %v7725
  %v8294 = vpack.c.b16 %v7734, %v7730
  %v8295 = vpack.c.b16 %v7735, %v7731
  %v8296 = vpack.c.b16 %v7736, %v7732
  %v8297 = vpack.c.b16 %v7737, %v7733
  %v8298 = vpack.c.b16 %v7742, %v7738
  %v8299 = vpack.c.b16 %v7743, %v7739
  %v8300 = vpack.c.b16 %v7744, %v7740
  %v8301 = vpack.c.b16 %v7745, %v7741
  %v8302 = vpack.c.b16 %v7750, %v7746
  %v8303 = vpack.c.b16 %v7751, %v7747
  %v8304 = vpack.c.b16 %v7752, %v7748
  %v8305 = vpack.c.b16 %v7753, %v7749
  %v8306 = vpack.c.b16 %v7758, %v7754
  %v8307 = vpack.c.b16 %v7759, %v7755
  %v8308 = vpack.c.b16 %v7760, %v7756
  %v8309 = vpack.c.b16 %v7761, %v7757
  %v8310 = vpack.c.b16 %v7766, %v7762
  %v8311 = vpack.c.b16 %v7767, %v7763
  %v8312 = vpack.c.b16 %v7768, %v7764
  %v8313 = vpack.c.b16 %v7769, %v7765
  %v8314 = vpack.c.b16 %v7774, %v7770
  %v8315 = vpack.c.b16 %v7775, %v7771
  %v8316 = vpack.c.b16 %v7776, %v7772
  %v8317 = vpack.c.b16 %v7777, %v7773
  %v8318 = vpack.c.b16 %v7782, %v7778
  %v8319 = vpack.c.b16 %v7783, %v7779
  %v8320 = vpack.c.b16 %v7784, %v7780
  %v8321 = vpack.c.b16 %v7785, %v7781
  %v8322 = vpack.c.b16 %v7790, %v7786
  %v8323 = vpack.c.b16 %v7791, %v7787
  %v8324 = vpack.c.b16 %v7792, %v7788
  %v8325 = vpack.c.b16 %v7793, %v7789
  %v8326 = vpack.c.b16 %v7798, %v7794
  %v8327 = vpack.c.b16 %v7799, %v7795
  %v8328 = vpack.c.b16 %v7800, %v7796
  %v8329 = vpack.c.b16 %v7801, %v7797
  %v8330 = vpack.c.b16 %v7806, %v7802
  %v8331 = vpack.c.b16 %v7807, %v7803
  %v8332 = vpack.c.b16 %v7808, %v7804
  %v8333 = vpack.c.b16 %v7809, %v7805
  %v8334 = vpack.c.b16 %v7814, %v7810
  %v8335 = vpack.c.b16 %v7815, %v7811
  %v8336 = vpack.c.b16 %v7816, %v7812
  %v8337 = vpack.c.b16 %v7817, %v7813
  %v8338 = vpack.c.b16 %v7822, %v7818
  %v8339 = vpack.c.b16 %v7823, %v7819
  %v8340 = vpack.c.b16 %v7824, %v7820
  %v8341 = vpack.c.b16 %v7825, %v7821
  %v8342 = vpack.c.b16 %v7830, %v7826
  %v8343 = vpack.c.b16 %v7831, %v7827
  %v8344 = vpack.c.b16 %v7832, %v7828
  %v8345 = vpack.c.b16 %v7833, %v7829
  %8858 = vmatprep.subr.bf16.mxu0 %v7835
  %8859 = vmatpush1.bf16.msra.mxu0 %v7834
  %8860 = vmatprep.subr.bf16.mxu0 %v7839
  %8861 = vmatpush1.bf16.msra.mxu0 %v7838
  %8862 = vmatprep.subr.bf16.mxu0 %v7843
  %8863 = vmatpush1.bf16.msra.mxu0 %v7842
  %8864 = vmatprep.subr.bf16.mxu0 %v7847
  %8865 = vmatpush1.bf16.msra.mxu0 %v7846
  %8866 = vmatprep.subr.bf16.mxu0 %v7851
  %8867 = vmatpush1.bf16.msra.mxu0 %v7850
  %8868 = vmatprep.subr.bf16.mxu0 %v7855
  %8869 = vmatpush1.bf16.msra.mxu0 %v7854
  %8870 = vmatprep.subr.bf16.mxu0 %v7859
  %8871 = vmatpush1.bf16.msra.mxu0 %v7858
  %8872 = vmatprep.subr.bf16.mxu0 %v7863
  %8873 = vmatpush1.bf16.msra.mxu0 %v7862
  %8874 = vmatprep.subr.bf16.mxu0 %v7867
  %8875 = vmatpush1.bf16.msra.mxu0 %v7866
  %8876 = vmatprep.subr.bf16.mxu0 %v7871
  %8877 = vmatpush1.bf16.msra.mxu0 %v7870
  %8878 = vmatprep.subr.bf16.mxu0 %v7875
  %8879 = vmatpush1.bf16.msra.mxu0 %v7874
  %8880 = vmatprep.subr.bf16.mxu0 %v7879
  %8881 = vmatpush1.bf16.msra.mxu0 %v7878
  %8882 = vmatprep.subr.bf16.mxu0 %v7883
  %8883 = vmatpush1.bf16.msra.mxu0 %v7882
  %8884 = vmatprep.subr.bf16.mxu0 %v7887
  %8885 = vmatpush1.bf16.msra.mxu0 %v7886
  %8886 = vmatprep.subr.bf16.mxu0 %v7891
  %8887 = vmatpush1.bf16.msra.mxu0 %v7890
  %8888 = vmatprep.subr.bf16.mxu0 %v7895
  %8889 = vmatpush1.bf16.msra.mxu0 %v7894
  %8890 = vmatprep.mubr.bf16.mxu0 %v5749
  %8891 = vmatmul.mubr.bf16.gmra.mrb[0].mxu0 %v5748
  %v8892 = vpop.f32.mrb[0].mxu0
  %v8893 = vadd.f32 %v6281, %v8892
  %v8894 = vpop.f32.mrb[0].mxu0
  %v8895 = vadd.f32 %v6285, %v8894
  %v8896 = vpop.f32.mrb[0].mxu0
  %v8897 = vpop.f32.mrb[0].mxu0
  %8898 = vdwg.mxu0
  %8899 = vmatprep.subr.bf16.mxu0 %v7899
  %8900 = vmatpush1.bf16.msra.mxu0 %v7898
  %8901 = vmatprep.subr.bf16.mxu0 %v7903
  %8902 = vmatpush1.bf16.msra.mxu0 %v7902
  %8903 = vmatprep.subr.bf16.mxu0 %v7907
  %8904 = vmatpush1.bf16.msra.mxu0 %v7906
  %8905 = vmatprep.subr.bf16.mxu0 %v7911
  %8906 = vmatpush1.bf16.msra.mxu0 %v7910
  %8907 = vmatprep.subr.bf16.mxu0 %v7915
  %8908 = vmatpush1.bf16.msra.mxu0 %v7914
  %8909 = vmatprep.subr.bf16.mxu0 %v7919
  %8910 = vmatpush1.bf16.msra.mxu0 %v7918
  %8911 = vmatprep.subr.bf16.mxu0 %v7923
  %8912 = vmatpush1.bf16.msra.mxu0 %v7922
  %8913 = vmatprep.subr.bf16.mxu0 %v7927
  %8914 = vmatpush1.bf16.msra.mxu0 %v7926
  %8915 = vmatprep.subr.bf16.mxu0 %v7931
  %8916 = vmatpush1.bf16.msra.mxu0 %v7930
  %8917 = vmatprep.subr.bf16.mxu0 %v7935
  %8918 = vmatpush1.bf16.msra.mxu0 %v7934
  %8919 = vmatprep.subr.bf16.mxu0 %v7939
  %8920 = vmatpush1.bf16.msra.mxu0 %v7938
  %8921 = vmatprep.subr.bf16.mxu0 %v7943
  %8922 = vmatpush1.bf16.msra.mxu0 %v7942
  %8923 = vmatprep.subr.bf16.mxu0 %v7947
  %8924 = vmatpush1.bf16.msra.mxu0 %v7946
  %8925 = vmatprep.subr.bf16.mxu0 %v7951
  %8926 = vmatpush1.bf16.msra.mxu0 %v7950
  %8927 = vmatprep.subr.bf16.mxu0 %v7955
  %8928 = vmatpush1.bf16.msra.mxu0 %v7954
  %8929 = vmatprep.subr.bf16.mxu0 %v7959
  %8930 = vmatpush1.bf16.msra.mxu0 %v7958
  %8931 = vmatprep.mubr.bf16.mxu0 %v5751
  %8932 = vmatmul.mubr.bf16.gmra.mrb[0].mxu0 %v5750
  %v8933 = vpop.f32.mrb[0].mxu0
  %v8934 = vadd.f32 %v8893, %v8933
  %v8935 = vpop.f32.mrb[0].mxu0
  %v8936 = vadd.f32 %v8895, %v8935
  %v8937 = vpop.f32.mrb[0].mxu0
  %v8938 = vpop.f32.mrb[0].mxu0
  %8939 = vdwg.mxu0
  %8940 = vmatprep.subr.bf16.mxu0 %v7963
  %8941 = vmatpush1.bf16.msra.mxu0 %v7962
  %8942 = vmatprep.subr.bf16.mxu0 %v7967
  %8943 = vmatpush1.bf16.msra.mxu0 %v7966
  %8944 = vmatprep.subr.bf16.mxu0 %v7971
  %8945 = vmatpush1.bf16.msra.mxu0 %v7970
  %8946 = vmatprep.subr.bf16.mxu0 %v7975
  %8947 = vmatpush1.bf16.msra.mxu0 %v7974
  %8948 = vmatprep.subr.bf16.mxu0 %v7979
  %8949 = vmatpush1.bf16.msra.mxu0 %v7978
  %8950 = vmatprep.subr.bf16.mxu0 %v7983
  %8951 = vmatpush1.bf16.msra.mxu0 %v7982
  %8952 = vmatprep.subr.bf16.mxu0 %v7987
  %8953 = vmatpush1.bf16.msra.mxu0 %v7986
  %8954 = vmatprep.subr.bf16.mxu0 %v7991
  %8955 = vmatpush1.bf16.msra.mxu0 %v7990
  %8956 = vmatprep.subr.bf16.mxu0 %v7995
  %8957 = vmatpush1.bf16.msra.mxu0 %v7994
  %8958 = vmatprep.subr.bf16.mxu0 %v7999
  %8959 = vmatpush1.bf16.msra.mxu0 %v7998
  %8960 = vmatprep.subr.bf16.mxu0 %v8003
  %8961 = vmatpush1.bf16.msra.mxu0 %v8002
  %8962 = vmatprep.subr.bf16.mxu0 %v8007
  %8963 = vmatpush1.bf16.msra.mxu0 %v8006
  %8964 = vmatprep.subr.bf16.mxu0 %v8011
  %8965 = vmatpush1.bf16.msra.mxu0 %v8010
  %8966 = vmatprep.subr.bf16.mxu0 %v8015
  %8967 = vmatpush1.bf16.msra.mxu0 %v8014
  %8968 = vmatprep.subr.bf16.mxu0 %v8019
  %8969 = vmatpush1.bf16.msra.mxu0 %v8018
  %8970 = vmatprep.subr.bf16.mxu0 %v8023
  %8971 = vmatpush1.bf16.msra.mxu0 %v8022
  %8972 = vmatprep.mubr.bf16.mxu0 %v5753
  %8973 = vmatmul.mubr.bf16.gmra.mrb[0].mxu0 %v5752
  %v8974 = vpop.f32.mrb[0].mxu0
  %v8975 = vadd.f32 %v8934, %v8974
  %v8976 = vpop.f32.mrb[0].mxu0
  %v8977 = vadd.f32 %v8936, %v8976
  %v8978 = vpop.f32.mrb[0].mxu0
  %v8979 = vpop.f32.mrb[0].mxu0
  %8980 = vdwg.mxu0
  %8981 = vmatprep.subr.bf16.mxu0 %v8027
  %8982 = vmatpush1.bf16.msra.mxu0 %v8026
  %8983 = vmatprep.subr.bf16.mxu0 %v8031
  %8984 = vmatpush1.bf16.msra.mxu0 %v8030
  %8985 = vmatprep.subr.bf16.mxu0 %v8035
  %8986 = vmatpush1.bf16.msra.mxu0 %v8034
  %8987 = vmatprep.subr.bf16.mxu0 %v8039
  %8988 = vmatpush1.bf16.msra.mxu0 %v8038
  %8989 = vmatprep.subr.bf16.mxu0 %v8043
  %8990 = vmatpush1.bf16.msra.mxu0 %v8042
  %8991 = vmatprep.subr.bf16.mxu0 %v8047
  %8992 = vmatpush1.bf16.msra.mxu0 %v8046
  %8993 = vmatprep.subr.bf16.mxu0 %v8051
  %8994 = vmatpush1.bf16.msra.mxu0 %v8050
  %8995 = vmatprep.subr.bf16.mxu0 %v8055
  %8996 = vmatpush1.bf16.msra.mxu0 %v8054
  %8997 = vmatprep.subr.bf16.mxu0 %v8059
  %8998 = vmatpush1.bf16.msra.mxu0 %v8058
  %8999 = vmatprep.subr.bf16.mxu0 %v8063
  %9000 = vmatpush1.bf16.msra.mxu0 %v8062
  %9001 = vmatprep.subr.bf16.mxu0 %v8067
  %9002 = vmatpush1.bf16.msra.mxu0 %v8066
  %9003 = vmatprep.subr.bf16.mxu0 %v8071
  %9004 = vmatpush1.bf16.msra.mxu0 %v8070
  %9005 = vmatprep.subr.bf16.mxu0 %v8075
  %9006 = vmatpush1.bf16.msra.mxu0 %v8074
  %9007 = vmatprep.subr.bf16.mxu0 %v8079
  %9008 = vmatpush1.bf16.msra.mxu0 %v8078
  %9009 = vmatprep.subr.bf16.mxu0 %v8083
  %9010 = vmatpush1.bf16.msra.mxu0 %v8082
  %9011 = vmatprep.subr.bf16.mxu0 %v8087
  %9012 = vmatpush1.bf16.msra.mxu0 %v8086
  %9013 = vmatprep.mubr.bf16.mxu0 %v5755
  %9014 = vmatmul.mubr.bf16.gmra.mrb[0].mxu0 %v5754
  %v9015 = vpop.f32.mrb[0].mxu0
  %v9016 = vadd.f32 %v8975, %v9015
  %v9017 = vpop.f32.mrb[0].mxu0
  %v9018 = vadd.f32 %v8977, %v9017
  %v9019 = vpop.f32.mrb[0].mxu0
  %v9020 = vpop.f32.mrb[0].mxu0
  %9021 = vdwg.mxu0
  %9022 = vmatprep.subr.bf16.mxu0 %v8091
  %9023 = vmatpush1.bf16.msra.mxu0 %v8090
  %9024 = vmatprep.subr.bf16.mxu0 %v8095
  %9025 = vmatpush1.bf16.msra.mxu0 %v8094
  %9026 = vmatprep.subr.bf16.mxu0 %v8099
  %9027 = vmatpush1.bf16.msra.mxu0 %v8098
  %9028 = vmatprep.subr.bf16.mxu0 %v8103
  %9029 = vmatpush1.bf16.msra.mxu0 %v8102
  %9030 = vmatprep.subr.bf16.mxu0 %v8107
  %9031 = vmatpush1.bf16.msra.mxu0 %v8106
  %9032 = vmatprep.subr.bf16.mxu0 %v8111
  %9033 = vmatpush1.bf16.msra.mxu0 %v8110
  %9034 = vmatprep.subr.bf16.mxu0 %v8115
  %9035 = vmatpush1.bf16.msra.mxu0 %v8114
  %9036 = vmatprep.subr.bf16.mxu0 %v8119
  %9037 = vmatpush1.bf16.msra.mxu0 %v8118
  %9038 = vmatprep.subr.bf16.mxu0 %v8123
  %9039 = vmatpush1.bf16.msra.mxu0 %v8122
  %9040 = vmatprep.subr.bf16.mxu0 %v8127
  %9041 = vmatpush1.bf16.msra.mxu0 %v8126
  %9042 = vmatprep.subr.bf16.mxu0 %v8131
  %9043 = vmatpush1.bf16.msra.mxu0 %v8130
  %9044 = vmatprep.subr.bf16.mxu0 %v8135
  %9045 = vmatpush1.bf16.msra.mxu0 %v8134
  %9046 = vmatprep.subr.bf16.mxu0 %v8139
  %9047 = vmatpush1.bf16.msra.mxu0 %v8138
  %9048 = vmatprep.subr.bf16.mxu0 %v8143
  %9049 = vmatpush1.bf16.msra.mxu0 %v8142
  %9050 = vmatprep.subr.bf16.mxu0 %v8147
  %9051 = vmatpush1.bf16.msra.mxu0 %v8146
  %9052 = vmatprep.subr.bf16.mxu0 %v8151
  %9053 = vmatpush1.bf16.msra.mxu0 %v8150
  %9054 = vmatprep.mubr.bf16.mxu0 %v5757
  %9055 = vmatmul.mubr.bf16.gmra.mrb[0].mxu0 %v5756
  %v9056 = vpop.f32.mrb[0].mxu0
  %v9057 = vadd.f32 %v9016, %v9056
  %v9058 = vpop.f32.mrb[0].mxu0
  %v9059 = vadd.f32 %v9018, %v9058
  %v9060 = vpop.f32.mrb[0].mxu0
  %v9061 = vpop.f32.mrb[0].mxu0
  %9062 = vdwg.mxu0
  %9063 = vmatprep.subr.bf16.mxu0 %v8155
  %9064 = vmatpush1.bf16.msra.mxu0 %v8154
  %9065 = vmatprep.subr.bf16.mxu0 %v8159
  %9066 = vmatpush1.bf16.msra.mxu0 %v8158
  %9067 = vmatprep.subr.bf16.mxu0 %v8163
  %9068 = vmatpush1.bf16.msra.mxu0 %v8162
  %9069 = vmatprep.subr.bf16.mxu0 %v8167
  %9070 = vmatpush1.bf16.msra.mxu0 %v8166
  %9071 = vmatprep.subr.bf16.mxu0 %v8171
  %9072 = vmatpush1.bf16.msra.mxu0 %v8170
  %9073 = vmatprep.subr.bf16.mxu0 %v8175
  %9074 = vmatpush1.bf16.msra.mxu0 %v8174
  %9075 = vmatprep.subr.bf16.mxu0 %v8179
  %9076 = vmatpush1.bf16.msra.mxu0 %v8178
  %9077 = vmatprep.subr.bf16.mxu0 %v8183
  %9078 = vmatpush1.bf16.msra.mxu0 %v8182
  %9079 = vmatprep.subr.bf16.mxu0 %v8187
  %9080 = vmatpush1.bf16.msra.mxu0 %v8186
  %9081 = vmatprep.subr.bf16.mxu0 %v8191
  %9082 = vmatpush1.bf16.msra.mxu0 %v8190
  %9083 = vmatprep.subr.bf16.mxu0 %v8195
  %9084 = vmatpush1.bf16.msra.mxu0 %v8194
  %9085 = vmatprep.subr.bf16.mxu0 %v8199
  %9086 = vmatpush1.bf16.msra.mxu0 %v8198
  %9087 = vmatprep.subr.bf16.mxu0 %v8203
  %9088 = vmatpush1.bf16.msra.mxu0 %v8202
  %9089 = vmatprep.subr.bf16.mxu0 %v8207
  %9090 = vmatpush1.bf16.msra.mxu0 %v8206
  %9091 = vmatprep.subr.bf16.mxu0 %v8211
  %9092 = vmatpush1.bf16.msra.mxu0 %v8210
  %9093 = vmatprep.subr.bf16.mxu0 %v8215
  %9094 = vmatpush1.bf16.msra.mxu0 %v8214
  %9095 = vmatprep.mubr.bf16.mxu0 %v5759
  %9096 = vmatmul.mubr.bf16.gmra.mrb[0].mxu0 %v5758
  %v9097 = vpop.f32.mrb[0].mxu0
  %v9098 = vadd.f32 %v9057, %v9097
  %v9099 = vpop.f32.mrb[0].mxu0
  %v9100 = vadd.f32 %v9059, %v9099
  %v9101 = vpop.f32.mrb[0].mxu0
  %v9102 = vpop.f32.mrb[0].mxu0
  %9103 = vdwg.mxu0
  %9104 = vmatprep.subr.bf16.mxu0 %v8219
  %9105 = vmatpush1.bf16.msra.mxu0 %v8218
  %9106 = vmatprep.subr.bf16.mxu0 %v8223
  %9107 = vmatpush1.bf16.msra.mxu0 %v8222
  %9108 = vmatprep.subr.bf16.mxu0 %v8227
  %9109 = vmatpush1.bf16.msra.mxu0 %v8226
  %9110 = vmatprep.subr.bf16.mxu0 %v8231
  %9111 = vmatpush1.bf16.msra.mxu0 %v8230
  %9112 = vmatprep.subr.bf16.mxu0 %v8235
  %9113 = vmatpush1.bf16.msra.mxu0 %v8234
  %9114 = vmatprep.subr.bf16.mxu0 %v8239
  %9115 = vmatpush1.bf16.msra.mxu0 %v8238
  %9116 = vmatprep.subr.bf16.mxu0 %v8243
  %9117 = vmatpush1.bf16.msra.mxu0 %v8242
  %9118 = vmatprep.subr.bf16.mxu0 %v8247
  %9119 = vmatpush1.bf16.msra.mxu0 %v8246
  %9120 = vmatprep.subr.bf16.mxu0 %v8251
  %9121 = vmatpush1.bf16.msra.mxu0 %v8250
  %9122 = vmatprep.subr.bf16.mxu0 %v8255
  %9123 = vmatpush1.bf16.msra.mxu0 %v8254
  %9124 = vmatprep.subr.bf16.mxu0 %v8259
  %9125 = vmatpush1.bf16.msra.mxu0 %v8258
  %9126 = vmatprep.subr.bf16.mxu0 %v8263
  %9127 = vmatpush1.bf16.msra.mxu0 %v8262
  %9128 = vmatprep.subr.bf16.mxu0 %v8267
  %9129 = vmatpush1.bf16.msra.mxu0 %v8266
  %9130 = vmatprep.subr.bf16.mxu0 %v8271
  %9131 = vmatpush1.bf16.msra.mxu0 %v8270
  %9132 = vmatprep.subr.bf16.mxu0 %v8275
  %9133 = vmatpush1.bf16.msra.mxu0 %v8274
  %9134 = vmatprep.subr.bf16.mxu0 %v8279
  %9135 = vmatpush1.bf16.msra.mxu0 %v8278
  %9136 = vmatprep.mubr.bf16.mxu0 %v5761
  %9137 = vmatmul.mubr.bf16.gmra.mrb[0].mxu0 %v5760
  %v9138 = vpop.f32.mrb[0].mxu0
  %v9139 = vadd.f32 %v9098, %v9138
  %v9140 = vpop.f32.mrb[0].mxu0
  %v9141 = vadd.f32 %v9100, %v9140
  %v9142 = vpop.f32.mrb[0].mxu0
  %v9143 = vpop.f32.mrb[0].mxu0
  %9144 = vdwg.mxu0
  %9145 = vmatprep.subr.bf16.mxu0 %v8283
  %9146 = vmatpush1.bf16.msra.mxu0 %v8282
  %9147 = vmatprep.subr.bf16.mxu0 %v8287
  %9148 = vmatpush1.bf16.msra.mxu0 %v8286
  %9149 = vmatprep.subr.bf16.mxu0 %v8291
  %9150 = vmatpush1.bf16.msra.mxu0 %v8290
  %9151 = vmatprep.subr.bf16.mxu0 %v8295
  %9152 = vmatpush1.bf16.msra.mxu0 %v8294
  %9153 = vmatprep.subr.bf16.mxu0 %v8299
  %9154 = vmatpush1.bf16.msra.mxu0 %v8298
  %9155 = vmatprep.subr.bf16.mxu0 %v8303
  %9156 = vmatpush1.bf16.msra.mxu0 %v8302
  %9157 = vmatprep.subr.bf16.mxu0 %v8307
  %9158 = vmatpush1.bf16.msra.mxu0 %v8306
  %9159 = vmatprep.subr.bf16.mxu0 %v8311
  %9160 = vmatpush1.bf16.msra.mxu0 %v8310
  %9161 = vmatprep.subr.bf16.mxu0 %v8315
  %9162 = vmatpush1.bf16.msra.mxu0 %v8314
  %9163 = vmatprep.subr.bf16.mxu0 %v8319
  %9164 = vmatpush1.bf16.msra.mxu0 %v8318
  %9165 = vmatprep.subr.bf16.mxu0 %v8323
  %9166 = vmatpush1.bf16.msra.mxu0 %v8322
  %9167 = vmatprep.subr.bf16.mxu0 %v8327
  %9168 = vmatpush1.bf16.msra.mxu0 %v8326
  %9169 = vmatprep.subr.bf16.mxu0 %v8331
  %9170 = vmatpush1.bf16.msra.mxu0 %v8330
  %9171 = vmatprep.subr.bf16.mxu0 %v8335
  %9172 = vmatpush1.bf16.msra.mxu0 %v8334
  %9173 = vmatprep.subr.bf16.mxu0 %v8339
  %9174 = vmatpush1.bf16.msra.mxu0 %v8338
  %9175 = vmatprep.subr.bf16.mxu0 %v8343
  %9176 = vmatpush1.bf16.msra.mxu0 %v8342
  %9177 = vmatprep.mubr.bf16.mxu0 %v5763
  %9178 = vmatmul.mubr.bf16.gmra.mrb[0].mxu0 %v5762
  %v9179 = vpop.f32.mrb[0].mxu0
  %v9180 = vadd.f32 %v9139, %v9179
  %v9181 = vpop.f32.mrb[0].mxu0
  %v9182 = vadd.f32 %v9141, %v9181
  %v9183 = vpop.f32.mrb[0].mxu0
  %v9184 = vpop.f32.mrb[0].mxu0
  %9185 = vdwg.mxu0
  %9186 = vmatprep.subr.bf16.mxu0 %v7837
  %9187 = vmatpush1.bf16.msra.mxu0 %v7836
  %9188 = vmatprep.subr.bf16.mxu0 %v7841
  %9189 = vmatpush1.bf16.msra.mxu0 %v7840
  %9190 = vmatprep.subr.bf16.mxu0 %v7845
  %9191 = vmatpush1.bf16.msra.mxu0 %v7844
  %9192 = vmatprep.subr.bf16.mxu0 %v7849
  %9193 = vmatpush1.bf16.msra.mxu0 %v7848
  %9194 = vmatprep.subr.bf16.mxu0 %v7853
  %9195 = vmatpush1.bf16.msra.mxu0 %v7852
  %9196 = vmatprep.subr.bf16.mxu0 %v7857
  %9197 = vmatpush1.bf16.msra.mxu0 %v7856
  %9198 = vmatprep.subr.bf16.mxu0 %v7861
  %9199 = vmatpush1.bf16.msra.mxu0 %v7860
  %9200 = vmatprep.subr.bf16.mxu0 %v7865
  %9201 = vmatpush1.bf16.msra.mxu0 %v7864
  %9202 = vmatprep.subr.bf16.mxu0 %v7869
  %9203 = vmatpush1.bf16.msra.mxu0 %v7868
  %9204 = vmatprep.subr.bf16.mxu0 %v7873
  %9205 = vmatpush1.bf16.msra.mxu0 %v7872
  %9206 = vmatprep.subr.bf16.mxu0 %v7877
  %9207 = vmatpush1.bf16.msra.mxu0 %v7876
  %9208 = vmatprep.subr.bf16.mxu0 %v7881
  %9209 = vmatpush1.bf16.msra.mxu0 %v7880
  %9210 = vmatprep.subr.bf16.mxu0 %v7885
  %9211 = vmatpush1.bf16.msra.mxu0 %v7884
  %9212 = vmatprep.subr.bf16.mxu0 %v7889
  %9213 = vmatpush1.bf16.msra.mxu0 %v7888
  %9214 = vmatprep.subr.bf16.mxu0 %v7893
  %9215 = vmatpush1.bf16.msra.mxu0 %v7892
  %9216 = vmatprep.subr.bf16.mxu0 %v7897
  %9217 = vmatpush1.bf16.msra.mxu0 %v7896
  %9218 = vmatprep.mubr.bf16.mxu0 %v5749
  %9219 = vmatmul.mubr.bf16.gmra.mrb[0].mxu0 %v5748
  %v9220 = vpop.f32.mrb[0].mxu0
  %v9221 = vadd.f32 %v6289, %v9220
  %v9222 = vpop.f32.mrb[0].mxu0
  %v9223 = vadd.f32 %v6293, %v9222
  %v9224 = vpop.f32.mrb[0].mxu0
  %v9225 = vpop.f32.mrb[0].mxu0
  %9226 = vdwg.mxu0
  %9227 = vmatprep.subr.bf16.mxu0 %v7901
  %9228 = vmatpush1.bf16.msra.mxu0 %v7900
  %9229 = vmatprep.subr.bf16.mxu0 %v7905
  %9230 = vmatpush1.bf16.msra.mxu0 %v7904
  %9231 = vmatprep.subr.bf16.mxu0 %v7909
  %9232 = vmatpush1.bf16.msra.mxu0 %v7908
  %9233 = vmatprep.subr.bf16.mxu0 %v7913
  %9234 = vmatpush1.bf16.msra.mxu0 %v7912
  %9235 = vmatprep.subr.bf16.mxu0 %v7917
  %9236 = vmatpush1.bf16.msra.mxu0 %v7916
  %9237 = vmatprep.subr.bf16.mxu0 %v7921
  %9238 = vmatpush1.bf16.msra.mxu0 %v7920
  %9239 = vmatprep.subr.bf16.mxu0 %v7925
  %9240 = vmatpush1.bf16.msra.mxu0 %v7924
  %9241 = vmatprep.subr.bf16.mxu0 %v7929
  %9242 = vmatpush1.bf16.msra.mxu0 %v7928
  %9243 = vmatprep.subr.bf16.mxu0 %v7933
  %9244 = vmatpush1.bf16.msra.mxu0 %v7932
  %9245 = vmatprep.subr.bf16.mxu0 %v7937
  %9246 = vmatpush1.bf16.msra.mxu0 %v7936
  %9247 = vmatprep.subr.bf16.mxu0 %v7941
  %9248 = vmatpush1.bf16.msra.mxu0 %v7940
  %9249 = vmatprep.subr.bf16.mxu0 %v7945
  %9250 = vmatpush1.bf16.msra.mxu0 %v7944
  %9251 = vmatprep.subr.bf16.mxu0 %v7949
  %9252 = vmatpush1.bf16.msra.mxu0 %v7948
  %9253 = vmatprep.subr.bf16.mxu0 %v7953
  %9254 = vmatpush1.bf16.msra.mxu0 %v7952
  %9255 = vmatprep.subr.bf16.mxu0 %v7957
  %9256 = vmatpush1.bf16.msra.mxu0 %v7956
  %9257 = vmatprep.subr.bf16.mxu0 %v7961
  %9258 = vmatpush1.bf16.msra.mxu0 %v7960
  %9259 = vmatprep.mubr.bf16.mxu0 %v5751
  %9260 = vmatmul.mubr.bf16.gmra.mrb[0].mxu0 %v5750
  %v9261 = vpop.f32.mrb[0].mxu0
  %v9262 = vadd.f32 %v9221, %v9261
  %v9263 = vpop.f32.mrb[0].mxu0
  %v9264 = vadd.f32 %v9223, %v9263
  %v9265 = vpop.f32.mrb[0].mxu0
  %v9266 = vpop.f32.mrb[0].mxu0
  %9267 = vdwg.mxu0
  %9268 = vmatprep.subr.bf16.mxu0 %v7965
  %9269 = vmatpush1.bf16.msra.mxu0 %v7964
  %9270 = vmatprep.subr.bf16.mxu0 %v7969
  %9271 = vmatpush1.bf16.msra.mxu0 %v7968
  %9272 = vmatprep.subr.bf16.mxu0 %v7973
  %9273 = vmatpush1.bf16.msra.mxu0 %v7972
  %9274 = vmatprep.subr.bf16.mxu0 %v7977
  %9275 = vmatpush1.bf16.msra.mxu0 %v7976
  %9276 = vmatprep.subr.bf16.mxu0 %v7981
  %9277 = vmatpush1.bf16.msra.mxu0 %v7980
  %9278 = vmatprep.subr.bf16.mxu0 %v7985
  %9279 = vmatpush1.bf16.msra.mxu0 %v7984
  %9280 = vmatprep.subr.bf16.mxu0 %v7989
  %9281 = vmatpush1.bf16.msra.mxu0 %v7988
  %9282 = vmatprep.subr.bf16.mxu0 %v7993
  %9283 = vmatpush1.bf16.msra.mxu0 %v7992
  %9284 = vmatprep.subr.bf16.mxu0 %v7997
  %9285 = vmatpush1.bf16.msra.mxu0 %v7996
  %9286 = vmatprep.subr.bf16.mxu0 %v8001
  %9287 = vmatpush1.bf16.msra.mxu0 %v8000
  %9288 = vmatprep.subr.bf16.mxu0 %v8005
  %9289 = vmatpush1.bf16.msra.mxu0 %v8004
  %9290 = vmatprep.subr.bf16.mxu0 %v8009
  %9291 = vmatpush1.bf16.msra.mxu0 %v8008
  %9292 = vmatprep.subr.bf16.mxu0 %v8013
  %9293 = vmatpush1.bf16.msra.mxu0 %v8012
  %9294 = vmatprep.subr.bf16.mxu0 %v8017
  %9295 = vmatpush1.bf16.msra.mxu0 %v8016
  %9296 = vmatprep.subr.bf16.mxu0 %v8021
  %9297 = vmatpush1.bf16.msra.mxu0 %v8020
  %9298 = vmatprep.subr.bf16.mxu0 %v8025
  %9299 = vmatpush1.bf16.msra.mxu0 %v8024
  %9300 = vmatprep.mubr.bf16.mxu0 %v5753
  %9301 = vmatmul.mubr.bf16.gmra.mrb[0].mxu0 %v5752
  %v9302 = vpop.f32.mrb[0].mxu0
  %v9303 = vadd.f32 %v9262, %v9302
  %v9304 = vpop.f32.mrb[0].mxu0
  %v9305 = vadd.f32 %v9264, %v9304
  %v9306 = vpop.f32.mrb[0].mxu0
  %v9307 = vpop.f32.mrb[0].mxu0
  %9308 = vdwg.mxu0
  %9309 = vmatprep.subr.bf16.mxu0 %v8029
  %9310 = vmatpush1.bf16.msra.mxu0 %v8028
  %9311 = vmatprep.subr.bf16.mxu0 %v8033
  %9312 = vmatpush1.bf16.msra.mxu0 %v8032
  %9313 = vmatprep.subr.bf16.mxu0 %v8037
  %9314 = vmatpush1.bf16.msra.mxu0 %v8036
  %9315 = vmatprep.subr.bf16.mxu0 %v8041
  %9316 = vmatpush1.bf16.msra.mxu0 %v8040
  %9317 = vmatprep.subr.bf16.mxu0 %v8045
  %9318 = vmatpush1.bf16.msra.mxu0 %v8044
  %9319 = vmatprep.subr.bf16.mxu0 %v8049
  %9320 = vmatpush1.bf16.msra.mxu0 %v8048
  %9321 = vmatprep.subr.bf16.mxu0 %v8053
  %9322 = vmatpush1.bf16.msra.mxu0 %v8052
  %9323 = vmatprep.subr.bf16.mxu0 %v8057
  %9324 = vmatpush1.bf16.msra.mxu0 %v8056
  %9325 = vmatprep.subr.bf16.mxu0 %v8061
  %9326 = vmatpush1.bf16.msra.mxu0 %v8060
  %9327 = vmatprep.subr.bf16.mxu0 %v8065
  %9328 = vmatpush1.bf16.msra.mxu0 %v8064
  %9329 = vmatprep.subr.bf16.mxu0 %v8069
  %9330 = vmatpush1.bf16.msra.mxu0 %v8068
  %9331 = vmatprep.subr.bf16.mxu0 %v8073
  %9332 = vmatpush1.bf16.msra.mxu0 %v8072
  %9333 = vmatprep.subr.bf16.mxu0 %v8077
  %9334 = vmatpush1.bf16.msra.mxu0 %v8076
  %9335 = vmatprep.subr.bf16.mxu0 %v8081
  %9336 = vmatpush1.bf16.msra.mxu0 %v8080
  %9337 = vmatprep.subr.bf16.mxu0 %v8085
  %9338 = vmatpush1.bf16.msra.mxu0 %v8084
  %9339 = vmatprep.subr.bf16.mxu0 %v8089
  %9340 = vmatpush1.bf16.msra.mxu0 %v8088
  %9341 = vmatprep.mubr.bf16.mxu0 %v5755
  %9342 = vmatmul.mubr.bf16.gmra.mrb[0].mxu0 %v5754
  %v9343 = vpop.f32.mrb[0].mxu0
  %v9344 = vadd.f32 %v9303, %v9343
  %v9345 = vpop.f32.mrb[0].mxu0
  %v9346 = vadd.f32 %v9305, %v9345
  %v9347 = vpop.f32.mrb[0].mxu0
  %v9348 = vpop.f32.mrb[0].mxu0
  %9349 = vdwg.mxu0
  %9350 = vmatprep.subr.bf16.mxu0 %v8093
  %9351 = vmatpush1.bf16.msra.mxu0 %v8092
  %9352 = vmatprep.subr.bf16.mxu0 %v8097
  %9353 = vmatpush1.bf16.msra.mxu0 %v8096
  %9354 = vmatprep.subr.bf16.mxu0 %v8101
  %9355 = vmatpush1.bf16.msra.mxu0 %v8100
  %9356 = vmatprep.subr.bf16.mxu0 %v8105
  %9357 = vmatpush1.bf16.msra.mxu0 %v8104
  %9358 = vmatprep.subr.bf16.mxu0 %v8109
  %9359 = vmatpush1.bf16.msra.mxu0 %v8108
  %9360 = vmatprep.subr.bf16.mxu0 %v8113
  %9361 = vmatpush1.bf16.msra.mxu0 %v8112
  %9362 = vmatprep.subr.bf16.mxu0 %v8117
  %9363 = vmatpush1.bf16.msra.mxu0 %v8116
  %9364 = vmatprep.subr.bf16.mxu0 %v8121
  %9365 = vmatpush1.bf16.msra.mxu0 %v8120
  %9366 = vmatprep.subr.bf16.mxu0 %v8125
  %9367 = vmatpush1.bf16.msra.mxu0 %v8124
  %9368 = vmatprep.subr.bf16.mxu0 %v8129
  %9369 = vmatpush1.bf16.msra.mxu0 %v8128
  %9370 = vmatprep.subr.bf16.mxu0 %v8133
  %9371 = vmatpush1.bf16.msra.mxu0 %v8132
  %9372 = vmatprep.subr.bf16.mxu0 %v8137
  %9373 = vmatpush1.bf16.msra.mxu0 %v8136
  %9374 = vmatprep.subr.bf16.mxu0 %v8141
  %9375 = vmatpush1.bf16.msra.mxu0 %v8140
  %9376 = vmatprep.subr.bf16.mxu0 %v8145
  %9377 = vmatpush1.bf16.msra.mxu0 %v8144
  %9378 = vmatprep.subr.bf16.mxu0 %v8149
  %9379 = vmatpush1.bf16.msra.mxu0 %v8148
  %9380 = vmatprep.subr.bf16.mxu0 %v8153
  %9381 = vmatpush1.bf16.msra.mxu0 %v8152
  %9382 = vmatprep.mubr.bf16.mxu0 %v5757
  %9383 = vmatmul.mubr.bf16.gmra.mrb[0].mxu0 %v5756
  %v9384 = vpop.f32.mrb[0].mxu0
  %v9385 = vadd.f32 %v9344, %v9384
  %v9386 = vpop.f32.mrb[0].mxu0
  %v9387 = vadd.f32 %v9346, %v9386
  %v9388 = vpop.f32.mrb[0].mxu0
  %v9389 = vpop.f32.mrb[0].mxu0
  %9390 = vdwg.mxu0
  %9391 = vmatprep.subr.bf16.mxu0 %v8157
  %9392 = vmatpush1.bf16.msra.mxu0 %v8156
  %9393 = vmatprep.subr.bf16.mxu0 %v8161
  %9394 = vmatpush1.bf16.msra.mxu0 %v8160
  %9395 = vmatprep.subr.bf16.mxu0 %v8165
  %9396 = vmatpush1.bf16.msra.mxu0 %v8164
  %9397 = vmatprep.subr.bf16.mxu0 %v8169
  %9398 = vmatpush1.bf16.msra.mxu0 %v8168
  %9399 = vmatprep.subr.bf16.mxu0 %v8173
  %9400 = vmatpush1.bf16.msra.mxu0 %v8172
  %9401 = vmatprep.subr.bf16.mxu0 %v8177
  %9402 = vmatpush1.bf16.msra.mxu0 %v8176
  %9403 = vmatprep.subr.bf16.mxu0 %v8181
  %9404 = vmatpush1.bf16.msra.mxu0 %v8180
  %9405 = vmatprep.subr.bf16.mxu0 %v8185
  %9406 = vmatpush1.bf16.msra.mxu0 %v8184
  %9407 = vmatprep.subr.bf16.mxu0 %v8189
  %9408 = vmatpush1.bf16.msra.mxu0 %v8188
  %9409 = vmatprep.subr.bf16.mxu0 %v8193
  %9410 = vmatpush1.bf16.msra.mxu0 %v8192
  %9411 = vmatprep.subr.bf16.mxu0 %v8197
  %9412 = vmatpush1.bf16.msra.mxu0 %v8196
  %9413 = vmatprep.subr.bf16.mxu0 %v8201
  %9414 = vmatpush1.bf16.msra.mxu0 %v8200
  %9415 = vmatprep.subr.bf16.mxu0 %v8205
  %9416 = vmatpush1.bf16.msra.mxu0 %v8204
  %9417 = vmatprep.subr.bf16.mxu0 %v8209
  %9418 = vmatpush1.bf16.msra.mxu0 %v8208
  %9419 = vmatprep.subr.bf16.mxu0 %v8213
  %9420 = vmatpush1.bf16.msra.mxu0 %v8212
  %9421 = vmatprep.subr.bf16.mxu0 %v8217
  %9422 = vmatpush1.bf16.msra.mxu0 %v8216
  %9423 = vmatprep.mubr.bf16.mxu0 %v5759
  %9424 = vmatmul.mubr.bf16.gmra.mrb[0].mxu0 %v5758
  %v9425 = vpop.f32.mrb[0].mxu0
  %v9426 = vadd.f32 %v9385, %v9425
  %v9427 = vpop.f32.mrb[0].mxu0
  %v9428 = vadd.f32 %v9387, %v9427
  %v9429 = vpop.f32.mrb[0].mxu0
  %v9430 = vpop.f32.mrb[0].mxu0
  %9431 = vdwg.mxu0
  %9432 = vmatprep.subr.bf16.mxu0 %v8221
  %9433 = vmatpush1.bf16.msra.mxu0 %v8220
  %9434 = vmatprep.subr.bf16.mxu0 %v8225
  %9435 = vmatpush1.bf16.msra.mxu0 %v8224
  %9436 = vmatprep.subr.bf16.mxu0 %v8229
  %9437 = vmatpush1.bf16.msra.mxu0 %v8228
  %9438 = vmatprep.subr.bf16.mxu0 %v8233
  %9439 = vmatpush1.bf16.msra.mxu0 %v8232
  %9440 = vmatprep.subr.bf16.mxu0 %v8237
  %9441 = vmatpush1.bf16.msra.mxu0 %v8236
  %9442 = vmatprep.subr.bf16.mxu0 %v8241
  %9443 = vmatpush1.bf16.msra.mxu0 %v8240
  %9444 = vmatprep.subr.bf16.mxu0 %v8245
  %9445 = vmatpush1.bf16.msra.mxu0 %v8244
  %9446 = vmatprep.subr.bf16.mxu0 %v8249
  %9447 = vmatpush1.bf16.msra.mxu0 %v8248
  %9448 = vmatprep.subr.bf16.mxu0 %v8253
  %9449 = vmatpush1.bf16.msra.mxu0 %v8252
  %9450 = vmatprep.subr.bf16.mxu0 %v8257
  %9451 = vmatpush1.bf16.msra.mxu0 %v8256
  %9452 = vmatprep.subr.bf16.mxu0 %v8261
  %9453 = vmatpush1.bf16.msra.mxu0 %v8260
  %9454 = vmatprep.subr.bf16.mxu0 %v8265
  %9455 = vmatpush1.bf16.msra.mxu0 %v8264
  %9456 = vmatprep.subr.bf16.mxu0 %v8269
  %9457 = vmatpush1.bf16.msra.mxu0 %v8268
  %9458 = vmatprep.subr.bf16.mxu0 %v8273
  %9459 = vmatpush1.bf16.msra.mxu0 %v8272
  %9460 = vmatprep.subr.bf16.mxu0 %v8277
  %9461 = vmatpush1.bf16.msra.mxu0 %v8276
  %9462 = vmatprep.subr.bf16.mxu0 %v8281
  %9463 = vmatpush1.bf16.msra.mxu0 %v8280
  %9464 = vmatprep.mubr.bf16.mxu0 %v5761
  %9465 = vmatmul.mubr.bf16.gmra.mrb[0].mxu0 %v5760
  %v9466 = vpop.f32.mrb[0].mxu0
  %v9467 = vadd.f32 %v9426, %v9466
  %v9468 = vpop.f32.mrb[0].mxu0
  %v9469 = vadd.f32 %v9428, %v9468
  %v9470 = vpop.f32.mrb[0].mxu0
  %v9471 = vpop.f32.mrb[0].mxu0
  %9472 = vdwg.mxu0
  %9473 = vmatprep.subr.bf16.mxu0 %v8285
  %9474 = vmatpush1.bf16.msra.mxu0 %v8284
  %9475 = vmatprep.subr.bf16.mxu0 %v8289
  %9476 = vmatpush1.bf16.msra.mxu0 %v8288
  %9477 = vmatprep.subr.bf16.mxu0 %v8293
  %9478 = vmatpush1.bf16.msra.mxu0 %v8292
  %9479 = vmatprep.subr.bf16.mxu0 %v8297
  %9480 = vmatpush1.bf16.msra.mxu0 %v8296
  %9481 = vmatprep.subr.bf16.mxu0 %v8301
  %9482 = vmatpush1.bf16.msra.mxu0 %v8300
  %9483 = vmatprep.subr.bf16.mxu0 %v8305
  %9484 = vmatpush1.bf16.msra.mxu0 %v8304
  %9485 = vmatprep.subr.bf16.mxu0 %v8309
  %9486 = vmatpush1.bf16.msra.mxu0 %v8308
  %9487 = vmatprep.subr.bf16.mxu0 %v8313
  %9488 = vmatpush1.bf16.msra.mxu0 %v8312
  %9489 = vmatprep.subr.bf16.mxu0 %v8317
  %9490 = vmatpush1.bf16.msra.mxu0 %v8316
  %9491 = vmatprep.subr.bf16.mxu0 %v8321
  %9492 = vmatpush1.bf16.msra.mxu0 %v8320
  %9493 = vmatprep.subr.bf16.mxu0 %v8325
  %9494 = vmatpush1.bf16.msra.mxu0 %v8324
  %9495 = vmatprep.subr.bf16.mxu0 %v8329
  %9496 = vmatpush1.bf16.msra.mxu0 %v8328
  %9497 = vmatprep.subr.bf16.mxu0 %v8333
  %9498 = vmatpush1.bf16.msra.mxu0 %v8332
  %9499 = vmatprep.subr.bf16.mxu0 %v8337
  %9500 = vmatpush1.bf16.msra.mxu0 %v8336
  %9501 = vmatprep.subr.bf16.mxu0 %v8341
  %9502 = vmatpush1.bf16.msra.mxu0 %v8340
  %9503 = vmatprep.subr.bf16.mxu0 %v8345
  %9504 = vmatpush1.bf16.msra.mxu0 %v8344
  %9505 = vmatprep.mubr.bf16.mxu0 %v5763
  %9506 = vmatmul.mubr.bf16.gmra.mrb[0].mxu0 %v5762
  %v9507 = vpop.f32.mrb[0].mxu0
  %v9508 = vadd.f32 %v9467, %v9507
  %v9509 = vpop.f32.mrb[0].mxu0
  %v9510 = vadd.f32 %v9469, %v9509
  %v9511 = vpop.f32.mrb[0].mxu0
  %v9512 = vpop.f32.mrb[0].mxu0
  %9513 = vdwg.mxu0
  %v9514 = vmax.f32 %v9180, 0.0
  %v9515 = vmax.f32 %v9182, 0.0
  %v9516 = vmax.f32 %v9508, 0.0
  %v9517 = vmax.f32 %v9510, 0.0
  %v9518 = vpack.c.bf16 %v9514, %v9514
  %v9519 = vpack.c.bf16 %v9515, %v9515
  %v9520 = vpack.c.bf16 %v9516, %v9516
  %v9521 = vpack.c.bf16 %v9517, %v9517
  %v9522 = vld [vmem:[%s5] sm:$0xff]
  %v9523 = vld [vmem:[%s5 + $0x8] sm:$0xff]
  %v9524 = vld [vmem:[%s5 + $0x10] sm:$0xff]
  %v9525 = vld [vmem:[%s5 + $0x18] sm:$0xff]
  %v9526 = vld [vmem:[%s5 + $0x20] sm:$0xff]
  %v9527 = vld [vmem:[%s5 + $0x28] sm:$0xff]
  %v9528 = vld [vmem:[%s5 + $0x30] sm:$0xff]
  %v9529 = vld [vmem:[%s5 + $0x38] sm:$0xff]
  %v9530 = vld [vmem:[%s5 + $0x40] sm:$0xff]
  %v9531 = vld [vmem:[%s5 + $0x48] sm:$0xff]
  %v9532 = vld [vmem:[%s5 + $0x50] sm:$0xff]
  %v9533 = vld [vmem:[%s5 + $0x58] sm:$0xff]
  %v9534 = vld [vmem:[%s5 + $0x60] sm:$0xff]
  %v9535 = vld [vmem:[%s5 + $0x68] sm:$0xff]
  %v9536 = vld [vmem:[%s5 + $0x70] sm:$0xff]
  %v9537 = vld [vmem:[%s5 + $0x78] sm:$0xff]
  %v9538 = vld [vmem:[%s5 + $0x80] sm:$0xff]
  %v9539 = vld [vmem:[%s5 + $0x88] sm:$0xff]
  %v9540 = vld [vmem:[%s5 + $0x90] sm:$0xff]
  %v9541 = vld [vmem:[%s5 + $0x98] sm:$0xff]
  %v9542 = vld [vmem:[%s5 + $0xa0] sm:$0xff]
  %v9543 = vld [vmem:[%s5 + $0xa8] sm:$0xff]
  %v9544 = vld [vmem:[%s5 + $0xb0] sm:$0xff]
  %v9545 = vld [vmem:[%s5 + $0xb8] sm:$0xff]
  %v9546 = vld [vmem:[%s5 + $0xc0] sm:$0xff]
  %v9547 = vld [vmem:[%s5 + $0xc8] sm:$0xff]
  %v9548 = vld [vmem:[%s5 + $0xd0] sm:$0xff]
  %v9549 = vld [vmem:[%s5 + $0xd8] sm:$0xff]
  %v9550 = vld [vmem:[%s5 + $0xe0] sm:$0xff]
  %v9551 = vld [vmem:[%s5 + $0xe8] sm:$0xff]
  %v9552 = vld [vmem:[%s5 + $0xf0] sm:$0xff]
  %v9553 = vld [vmem:[%s5 + $0xf8] sm:$0xff]
  %v9554 = vld [vmem:[%s5 + $0x100] sm:$0xff]
  %v9555 = vld [vmem:[%s5 + $0x108] sm:$0xff]
  %v9556 = vld [vmem:[%s5 + $0x110] sm:$0xff]
  %v9557 = vld [vmem:[%s5 + $0x118] sm:$0xff]
  %v9558 = vld [vmem:[%s5 + $0x120] sm:$0xff]
  %v9559 = vld [vmem:[%s5 + $0x128] sm:$0xff]
  %v9560 = vld [vmem:[%s5 + $0x130] sm:$0xff]
  %v9561 = vld [vmem:[%s5 + $0x138] sm:$0xff]
  %v9562 = vld [vmem:[%s5 + $0x140] sm:$0xff]
  %v9563 = vld [vmem:[%s5 + $0x148] sm:$0xff]
  %v9564 = vld [vmem:[%s5 + $0x150] sm:$0xff]
  %v9565 = vld [vmem:[%s5 + $0x158] sm:$0xff]
  %v9566 = vld [vmem:[%s5 + $0x160] sm:$0xff]
  %v9567 = vld [vmem:[%s5 + $0x168] sm:$0xff]
  %v9568 = vld [vmem:[%s5 + $0x170] sm:$0xff]
  %v9569 = vld [vmem:[%s5 + $0x178] sm:$0xff]
  %v9570 = vld [vmem:[%s5 + $0x180] sm:$0xff]
  %v9571 = vld [vmem:[%s5 + $0x188] sm:$0xff]
  %v9572 = vld [vmem:[%s5 + $0x190] sm:$0xff]
  %v9573 = vld [vmem:[%s5 + $0x198] sm:$0xff]
  %v9574 = vld [vmem:[%s5 + $0x1a0] sm:$0xff]
  %v9575 = vld [vmem:[%s5 + $0x1a8] sm:$0xff]
  %v9576 = vld [vmem:[%s5 + $0x1b0] sm:$0xff]
  %v9577 = vld [vmem:[%s5 + $0x1b8] sm:$0xff]
  %v9578 = vld [vmem:[%s5 + $0x1c0] sm:$0xff]
  %v9579 = vld [vmem:[%s5 + $0x1c8] sm:$0xff]
  %v9580 = vld [vmem:[%s5 + $0x1d0] sm:$0xff]
  %v9581 = vld [vmem:[%s5 + $0x1d8] sm:$0xff]
  %v9582 = vld [vmem:[%s5 + $0x1e0] sm:$0xff]
  %v9583 = vld [vmem:[%s5 + $0x1e8] sm:$0xff]
  %v9584 = vld [vmem:[%s5 + $0x1f0] sm:$0xff]
  %v9585 = vld [vmem:[%s5 + $0x1f8] sm:$0xff]
  %v9586 = vld [vmem:[%s5 + $0x200] sm:$0xff]
  %v9587 = vld [vmem:[%s5 + $0x208] sm:$0xff]
  %v9588 = vld [vmem:[%s5 + $0x210] sm:$0xff]
  %v9589 = vld [vmem:[%s5 + $0x218] sm:$0xff]
  %v9590 = vld [vmem:[%s5 + $0x220] sm:$0xff]
  %v9591 = vld [vmem:[%s5 + $0x228] sm:$0xff]
  %v9592 = vld [vmem:[%s5 + $0x230] sm:$0xff]
  %v9593 = vld [vmem:[%s5 + $0x238] sm:$0xff]
  %v9594 = vld [vmem:[%s5 + $0x240] sm:$0xff]
  %v9595 = vld [vmem:[%s5 + $0x248] sm:$0xff]
  %v9596 = vld [vmem:[%s5 + $0x250] sm:$0xff]
  %v9597 = vld [vmem:[%s5 + $0x258] sm:$0xff]
  %v9598 = vld [vmem:[%s5 + $0x260] sm:$0xff]
  %v9599 = vld [vmem:[%s5 + $0x268] sm:$0xff]
  %v9600 = vld [vmem:[%s5 + $0x270] sm:$0xff]
  %v9601 = vld [vmem:[%s5 + $0x278] sm:$0xff]
  %v9602 = vld [vmem:[%s5 + $0x280] sm:$0xff]
  %v9603 = vld [vmem:[%s5 + $0x288] sm:$0xff]
  %v9604 = vld [vmem:[%s5 + $0x290] sm:$0xff]
  %v9605 = vld [vmem:[%s5 + $0x298] sm:$0xff]
  %v9606 = vld [vmem:[%s5 + $0x2a0] sm:$0xff]
  %v9607 = vld [vmem:[%s5 + $0x2a8] sm:$0xff]
  %v9608 = vld [vmem:[%s5 + $0x2b0] sm:$0xff]
  %v9609 = vld [vmem:[%s5 + $0x2b8] sm:$0xff]
  %v9610 = vld [vmem:[%s5 + $0x2c0] sm:$0xff]
  %v9611 = vld [vmem:[%s5 + $0x2c8] sm:$0xff]
  %v9612 = vld [vmem:[%s5 + $0x2d0] sm:$0xff]
  %v9613 = vld [vmem:[%s5 + $0x2d8] sm:$0xff]
  %v9614 = vld [vmem:[%s5 + $0x2e0] sm:$0xff]
  %v9615 = vld [vmem:[%s5 + $0x2e8] sm:$0xff]
  %v9616 = vld [vmem:[%s5 + $0x2f0] sm:$0xff]
  %v9617 = vld [vmem:[%s5 + $0x2f8] sm:$0xff]
  %v9618 = vld [vmem:[%s5 + $0x300] sm:$0xff]
  %v9619 = vld [vmem:[%s5 + $0x308] sm:$0xff]
  %v9620 = vld [vmem:[%s5 + $0x310] sm:$0xff]
  %v9621 = vld [vmem:[%s5 + $0x318] sm:$0xff]
  %v9622 = vld [vmem:[%s5 + $0x320] sm:$0xff]
  %v9623 = vld [vmem:[%s5 + $0x328] sm:$0xff]
  %v9624 = vld [vmem:[%s5 + $0x330] sm:$0xff]
  %v9625 = vld [vmem:[%s5 + $0x338] sm:$0xff]
  %v9626 = vld [vmem:[%s5 + $0x340] sm:$0xff]
  %v9627 = vld [vmem:[%s5 + $0x348] sm:$0xff]
  %v9628 = vld [vmem:[%s5 + $0x350] sm:$0xff]
  %v9629 = vld [vmem:[%s5 + $0x358] sm:$0xff]
  %v9630 = vld [vmem:[%s5 + $0x360] sm:$0xff]
  %v9631 = vld [vmem:[%s5 + $0x368] sm:$0xff]
  %v9632 = vld [vmem:[%s5 + $0x370] sm:$0xff]
  %v9633 = vld [vmem:[%s5 + $0x378] sm:$0xff]
  %v9634 = vld [vmem:[%s5 + $0x380] sm:$0xff]
  %v9635 = vld [vmem:[%s5 + $0x388] sm:$0xff]
  %v9636 = vld [vmem:[%s5 + $0x390] sm:$0xff]
  %v9637 = vld [vmem:[%s5 + $0x398] sm:$0xff]
  %v9638 = vld [vmem:[%s5 + $0x3a0] sm:$0xff]
  %v9639 = vld [vmem:[%s5 + $0x3a8] sm:$0xff]
  %v9640 = vld [vmem:[%s5 + $0x3b0] sm:$0xff]
  %v9641 = vld [vmem:[%s5 + $0x3b8] sm:$0xff]
  %v9642 = vld [vmem:[%s5 + $0x3c0] sm:$0xff]
  %v9643 = vld [vmem:[%s5 + $0x3c8] sm:$0xff]
  %v9644 = vld [vmem:[%s5 + $0x3d0] sm:$0xff]
  %v9645 = vld [vmem:[%s5 + $0x3d8] sm:$0xff]
  %v9646 = vld [vmem:[%s5 + $0x3e0] sm:$0xff]
  %v9647 = vld [vmem:[%s5 + $0x3e8] sm:$0xff]
  %v9648 = vld [vmem:[%s5 + $0x3f0] sm:$0xff]
  %v9649 = vld [vmem:[%s5 + $0x3f8] sm:$0xff]
  %v9650 = vld [vmem:[%s6] sm:$0xf]
  %v9652 = vlaneseq
  %v9653 = vshrl.u32 %v9652, 7
  %v9654 = vsub.s32 0, %v9653
  %v9655 = vrot.slane %v9650, %v9654
  %v9656 = vlaneseq
  %v9657 = vshrl.u32 %v9656, 7
  %v9658 = vsub.s32 1, %v9657
  %v9659 = vrot.slane %v9650, %v9658
  %v9660 = vlaneseq
  %v9661 = vshrl.u32 %v9660, 7
  %v9662 = vsub.s32 2, %v9661
  %v9663 = vrot.slane %v9650, %v9662
  %v9664 = vlaneseq
  %v9665 = vshrl.u32 %v9664, 7
  %v9666 = vsub.s32 3, %v9665
  %v9667 = vrot.slane %v9650, %v9666
  %v9800 = vunpack.c.l.b16 %v9522
  %v9801 = vunpack.c.h.b16 %v9522
  %v9802 = vunpack.c.l.b16 %v9523
  %v9803 = vunpack.c.h.b16 %v9523
  %v9804 = vunpack.c.l.b16 %v9524
  %v9805 = vunpack.c.h.b16 %v9524
  %v9806 = vunpack.c.l.b16 %v9525
  %v9807 = vunpack.c.h.b16 %v9525
  %v9808 = vunpack.c.l.b16 %v9526
  %v9809 = vunpack.c.h.b16 %v9526
  %v9810 = vunpack.c.l.b16 %v9527
  %v9811 = vunpack.c.h.b16 %v9527
  %v9812 = vunpack.c.l.b16 %v9528
  %v9813 = vunpack.c.h.b16 %v9528
  %v9814 = vunpack.c.l.b16 %v9529
  %v9815 = vunpack.c.h.b16 %v9529
  %v9816 = vunpack.c.l.b16 %v9530
  %v9817 = vunpack.c.h.b16 %v9530
  %v9818 = vunpack.c.l.b16 %v9531
  %v9819 = vunpack.c.h.b16 %v9531
  %v9820 = vunpack.c.l.b16 %v9532
  %v9821 = vunpack.c.h.b16 %v9532
  %v9822 = vunpack.c.l.b16 %v9533
  %v9823 = vunpack.c.h.b16 %v9533
  %v9824 = vunpack.c.l.b16 %v9534
  %v9825 = vunpack.c.h.b16 %v9534
  %v9826 = vunpack.c.l.b16 %v9535
  %v9827 = vunpack.c.h.b16 %v9535
  %v9828 = vunpack.c.l.b16 %v9536
  %v9829 = vunpack.c.h.b16 %v9536
  %v9830 = vunpack.c.l.b16 %v9537
  %v9831 = vunpack.c.h.b16 %v9537
  %v9832 = vunpack.c.l.b16 %v9538
  %v9833 = vunpack.c.h.b16 %v9538
  %v9834 = vunpack.c.l.b16 %v9539
  %v9835 = vunpack.c.h.b16 %v9539
  %v9836 = vunpack.c.l.b16 %v9540
  %v9837 = vunpack.c.h.b16 %v9540
  %v9838 = vunpack.c.l.b16 %v9541
  %v9839 = vunpack.c.h.b16 %v9541
  %v9840 = vunpack.c.l.b16 %v9542
  %v9841 = vunpack.c.h.b16 %v9542
  %v9842 = vunpack.c.l.b16 %v9543
  %v9843 = vunpack.c.h.b16 %v9543
  %v9844 = vunpack.c.l.b16 %v9544
  %v9845 = vunpack.c.h.b16 %v9544
  %v9846 = vunpack.c.l.b16 %v9545
  %v9847 = vunpack.c.h.b16 %v9545
  %v9848 = vunpack.c.l.b16 %v9546
  %v9849 = vunpack.c.h.b16 %v9546
  %v9850 = vunpack.c.l.b16 %v9547
  %v9851 = vunpack.c.h.b16 %v9547
  %v9852 = vunpack.c.l.b16 %v9548
  %v9853 = vunpack.c.h.b16 %v9548
  %v9854 = vunpack.c.l.b16 %v9549
  %v9855 = vunpack.c.h.b16 %v9549
  %v9856 = vunpack.c.l.b16 %v9550
  %v9857 = vunpack.c.h.b16 %v9550
  %v9858 = vunpack.c.l.b16 %v9551
  %v9859 = vunpack.c.h.b16 %v9551
  %v9860 = vunpack.c.l.b16 %v9552
  %v9861 = vunpack.c.h.b16 %v9552
  %v9862 = vunpack.c.l.b16 %v9553
  %v9863 = vunpack.c.h.b16 %v9553
  %v9864 = vunpack.c.l.b16 %v9554
  %v9865 = vunpack.c.h.b16 %v9554
  %v9866 = vunpack.c.l.b16 %v9555
  %v9867 = vunpack.c.h.b16 %v9555
  %v9868 = vunpack.c.l.b16 %v9556
  %v9869 = vunpack.c.h.b16 %v9556
  %v9870 = vunpack.c.l.b16 %v9557
  %v9871 = vunpack.c.h.b16 %v9557
  %v9872 = vunpack.c.l.b16 %v9558
  %v9873 = vunpack.c.h.b16 %v9558
  %v9874 = vunpack.c.l.b16 %v9559
  %v9875 = vunpack.c.h.b16 %v9559
  %v9876 = vunpack.c.l.b16 %v9560
  %v9877 = vunpack.c.h.b16 %v9560
  %v9878 = vunpack.c.l.b16 %v9561
  %v9879 = vunpack.c.h.b16 %v9561
  %v9880 = vunpack.c.l.b16 %v9562
  %v9881 = vunpack.c.h.b16 %v9562
  %v9882 = vunpack.c.l.b16 %v9563
  %v9883 = vunpack.c.h.b16 %v9563
  %v9884 = vunpack.c.l.b16 %v9564
  %v9885 = vunpack.c.h.b16 %v9564
  %v9886 = vunpack.c.l.b16 %v9565
  %v9887 = vunpack.c.h.b16 %v9565
  %v9888 = vunpack.c.l.b16 %v9566
  %v9889 = vunpack.c.h.b16 %v9566
  %v9890 = vunpack.c.l.b16 %v9567
  %v9891 = vunpack.c.h.b16 %v9567
  %v9892 = vunpack.c.l.b16 %v9568
  %v9893 = vunpack.c.h.b16 %v9568
  %v9894 = vunpack.c.l.b16 %v9569
  %v9895 = vunpack.c.h.b16 %v9569
  %v9896 = vunpack.c.l.b16 %v9570
  %v9897 = vunpack.c.h.b16 %v9570
  %v9898 = vunpack.c.l.b16 %v9571
  %v9899 = vunpack.c.h.b16 %v9571
  %v9900 = vunpack.c.l.b16 %v9572
  %v9901 = vunpack.c.h.b16 %v9572
  %v9902 = vunpack.c.l.b16 %v9573
  %v9903 = vunpack.c.h.b16 %v9573
  %v9904 = vunpack.c.l.b16 %v9574
  %v9905 = vunpack.c.h.b16 %v9574
  %v9906 = vunpack.c.l.b16 %v9575
  %v9907 = vunpack.c.h.b16 %v9575
  %v9908 = vunpack.c.l.b16 %v9576
  %v9909 = vunpack.c.h.b16 %v9576
  %v9910 = vunpack.c.l.b16 %v9577
  %v9911 = vunpack.c.h.b16 %v9577
  %v9912 = vunpack.c.l.b16 %v9578
  %v9913 = vunpack.c.h.b16 %v9578
  %v9914 = vunpack.c.l.b16 %v9579
  %v9915 = vunpack.c.h.b16 %v9579
  %v9916 = vunpack.c.l.b16 %v9580
  %v9917 = vunpack.c.h.b16 %v9580
  %v9918 = vunpack.c.l.b16 %v9581
  %v9919 = vunpack.c.h.b16 %v9581
  %v9920 = vunpack.c.l.b16 %v9582
  %v9921 = vunpack.c.h.b16 %v9582
  %v9922 = vunpack.c.l.b16 %v9583
  %v9923 = vunpack.c.h.b16 %v9583
  %v9924 = vunpack.c.l.b16 %v9584
  %v9925 = vunpack.c.h.b16 %v9584
  %v9926 = vunpack.c.l.b16 %v9585
  %v9927 = vunpack.c.h.b16 %v9585
  %v9928 = vunpack.c.l.b16 %v9586
  %v9929 = vunpack.c.h.b16 %v9586
  %v9930 = vunpack.c.l.b16 %v9587
  %v9931 = vunpack.c.h.b16 %v9587
  %v9932 = vunpack.c.l.b16 %v9588
  %v9933 = vunpack.c.h.b16 %v9588
  %v9934 = vunpack.c.l.b16 %v9589
  %v9935 = vunpack.c.h.b16 %v9589
  %v9936 = vunpack.c.l.b16 %v9590
  %v9937 = vunpack.c.h.b16 %v9590
  %v9938 = vunpack.c.l.b16 %v9591
  %v9939 = vunpack.c.h.b16 %v9591
  %v9940 = vunpack.c.l.b16 %v9592
  %v9941 = vunpack.c.h.b16 %v9592
  %v9942 = vunpack.c.l.b16 %v9593
  %v9943 = vunpack.c.h.b16 %v9593
  %v9944 = vunpack.c.l.b16 %v9594
  %v9945 = vunpack.c.h.b16 %v9594
  %v9946 = vunpack.c.l.b16 %v9595
  %v9947 = vunpack.c.h.b16 %v9595
  %v9948 = vunpack.c.l.b16 %v9596
  %v9949 = vunpack.c.h.b16 %v9596
  %v9950 = vunpack.c.l.b16 %v9597
  %v9951 = vunpack.c.h.b16 %v9597
  %v9952 = vunpack.c.l.b16 %v9598
  %v9953 = vunpack.c.h.b16 %v9598
  %v9954 = vunpack.c.l.b16 %v9599
  %v9955 = vunpack.c.h.b16 %v9599
  %v9956 = vunpack.c.l.b16 %v9600
  %v9957 = vunpack.c.h.b16 %v9600
  %v9958 = vunpack.c.l.b16 %v9601
  %v9959 = vunpack.c.h.b16 %v9601
  %v9960 = vunpack.c.l.b16 %v9602
  %v9961 = vunpack.c.h.b16 %v9602
  %v9962 = vunpack.c.l.b16 %v9603
  %v9963 = vunpack.c.h.b16 %v9603
  %v9964 = vunpack.c.l.b16 %v9604
  %v9965 = vunpack.c.h.b16 %v9604
  %v9966 = vunpack.c.l.b16 %v9605
  %v9967 = vunpack.c.h.b16 %v9605
  %v9968 = vunpack.c.l.b16 %v9606
  %v9969 = vunpack.c.h.b16 %v9606
  %v9970 = vunpack.c.l.b16 %v9607
  %v9971 = vunpack.c.h.b16 %v9607
  %v9972 = vunpack.c.l.b16 %v9608
  %v9973 = vunpack.c.h.b16 %v9608
  %v9974 = vunpack.c.l.b16 %v9609
  %v9975 = vunpack.c.h.b16 %v9609
  %v9976 = vunpack.c.l.b16 %v9610
  %v9977 = vunpack.c.h.b16 %v9610
  %v9978 = vunpack.c.l.b16 %v9611
  %v9979 = vunpack.c.h.b16 %v9611
  %v9980 = vunpack.c.l.b16 %v9612
  %v9981 = vunpack.c.h.b16 %v9612
  %v9982 = vunpack.c.l.b16 %v9613
  %v9983 = vunpack.c.h.b16 %v9613
  %v9984 = vunpack.c.l.b16 %v9614
  %v9985 = vunpack.c.h.b16 %v9614
  %v9986 = vunpack.c.l.b16 %v9615
  %v9987 = vunpack.c.h.b16 %v9615
  %v9988 = vunpack.c.l.b16 %v9616
  %v9989 = vunpack.c.h.b16 %v9616
  %v9990 = vunpack.c.l.b16 %v9617
  %v9991 = vunpack.c.h.b16 %v9617
  %v9992 = vunpack.c.l.b16 %v9618
  %v9993 = vunpack.c.h.b16 %v9618
  %v9994 = vunpack.c.l.b16 %v9619
  %v9995 = vunpack.c.h.b16 %v9619
  %v9996 = vunpack.c.l.b16 %v9620
  %v9997 = vunpack.c.h.b16 %v9620
  %v9998 = vunpack.c.l.b16 %v9621
  %v9999 = vunpack.c.h.b16 %v9621
  %v10000 = vunpack.c.l.b16 %v9622
  %v10001 = vunpack.c.h.b16 %v9622
  %v10002 = vunpack.c.l.b16 %v9623
  %v10003 = vunpack.c.h.b16 %v9623
  %v10004 = vunpack.c.l.b16 %v9624
  %v10005 = vunpack.c.h.b16 %v9624
  %v10006 = vunpack.c.l.b16 %v9625
  %v10007 = vunpack.c.h.b16 %v9625
  %v10008 = vunpack.c.l.b16 %v9626
  %v10009 = vunpack.c.h.b16 %v9626
  %v10010 = vunpack.c.l.b16 %v9627
  %v10011 = vunpack.c.h.b16 %v9627
  %v10012 = vunpack.c.l.b16 %v9628
  %v10013 = vunpack.c.h.b16 %v9628
  %v10014 = vunpack.c.l.b16 %v9629
  %v10015 = vunpack.c.h.b16 %v9629
  %v10016 = vunpack.c.l.b16 %v9630
  %v10017 = vunpack.c.h.b16 %v9630
  %v10018 = vunpack.c.l.b16 %v9631
  %v10019 = vunpack.c.h.b16 %v9631
  %v10020 = vunpack.c.l.b16 %v9632
  %v10021 = vunpack.c.h.b16 %v9632
  %v10022 = vunpack.c.l.b16 %v9633
  %v10023 = vunpack.c.h.b16 %v9633
  %v10024 = vunpack.c.l.b16 %v9634
  %v10025 = vunpack.c.h.b16 %v9634
  %v10026 = vunpack.c.l.b16 %v9635
  %v10027 = vunpack.c.h.b16 %v9635
  %v10028 = vunpack.c.l.b16 %v9636
  %v10029 = vunpack.c.h.b16 %v9636
  %v10030 = vunpack.c.l.b16 %v9637
  %v10031 = vunpack.c.h.b16 %v9637
  %v10032 = vunpack.c.l.b16 %v9638
  %v10033 = vunpack.c.h.b16 %v9638
  %v10034 = vunpack.c.l.b16 %v9639
  %v10035 = vunpack.c.h.b16 %v9639
  %v10036 = vunpack.c.l.b16 %v9640
  %v10037 = vunpack.c.h.b16 %v9640
  %v10038 = vunpack.c.l.b16 %v9641
  %v10039 = vunpack.c.h.b16 %v9641
  %v10040 = vunpack.c.l.b16 %v9642
  %v10041 = vunpack.c.h.b16 %v9642
  %v10042 = vunpack.c.l.b16 %v9643
  %v10043 = vunpack.c.h.b16 %v9643
  %v10044 = vunpack.c.l.b16 %v9644
  %v10045 = vunpack.c.h.b16 %v9644
  %v10046 = vunpack.c.l.b16 %v9645
  %v10047 = vunpack.c.h.b16 %v9645
  %v10048 = vunpack.c.l.b16 %v9646
  %v10049 = vunpack.c.h.b16 %v9646
  %v10050 = vunpack.c.l.b16 %v9647
  %v10051 = vunpack.c.h.b16 %v9647
  %v10052 = vunpack.c.l.b16 %v9648
  %v10053 = vunpack.c.h.b16 %v9648
  %v10054 = vunpack.c.l.b16 %v9649
  %v10055 = vunpack.c.h.b16 %v9649
  %v10056 = vpack.c.b16 %v9804, %v9800
  %v10057 = vpack.c.b16 %v9805, %v9801
  %v10058 = vpack.c.b16 %v9806, %v9802
  %v10059 = vpack.c.b16 %v9807, %v9803
  %v10060 = vpack.c.b16 %v9812, %v9808
  %v10061 = vpack.c.b16 %v9813, %v9809
  %v10062 = vpack.c.b16 %v9814, %v9810
  %v10063 = vpack.c.b16 %v9815, %v9811
  %v10064 = vpack.c.b16 %v9820, %v9816
  %v10065 = vpack.c.b16 %v9821, %v9817
  %v10066 = vpack.c.b16 %v9822, %v9818
  %v10067 = vpack.c.b16 %v9823, %v9819
  %v10068 = vpack.c.b16 %v9828, %v9824
  %v10069 = vpack.c.b16 %v9829, %v9825
  %v10070 = vpack.c.b16 %v9830, %v9826
  %v10071 = vpack.c.b16 %v9831, %v9827
  %v10072 = vpack.c.b16 %v9836, %v9832
  %v10073 = vpack.c.b16 %v9837, %v9833
  %v10074 = vpack.c.b16 %v9838, %v9834
  %v10075 = vpack.c.b16 %v9839, %v9835
  %v10076 = vpack.c.b16 %v9844, %v9840
  %v10077 = vpack.c.b16 %v9845, %v9841
  %v10078 = vpack.c.b16 %v9846, %v9842
  %v10079 = vpack.c.b16 %v9847, %v9843
  %v10080 = vpack.c.b16 %v9852, %v9848
  %v10081 = vpack.c.b16 %v9853, %v9849
  %v10082 = vpack.c.b16 %v9854, %v9850
  %v10083 = vpack.c.b16 %v9855, %v9851
  %v10084 = vpack.c.b16 %v9860, %v9856
  %v10085 = vpack.c.b16 %v9861, %v9857
  %v10086 = vpack.c.b16 %v9862, %v9858
  %v10087 = vpack.c.b16 %v9863, %v9859
  %v10088 = vpack.c.b16 %v9868, %v9864
  %v10089 = vpack.c.b16 %v9869, %v9865
  %v10090 = vpack.c.b16 %v9870, %v9866
  %v10091 = vpack.c.b16 %v9871, %v9867
  %v10092 = vpack.c.b16 %v9876, %v9872
  %v10093 = vpack.c.b16 %v9877, %v9873
  %v10094 = vpack.c.b16 %v9878, %v9874
  %v10095 = vpack.c.b16 %v9879, %v9875
  %v10096 = vpack.c.b16 %v9884, %v9880
  %v10097 = vpack.c.b16 %v9885, %v9881
  %v10098 = vpack.c.b16 %v9886, %v9882
  %v10099 = vpack.c.b16 %v9887, %v9883
  %v10100 = vpack.c.b16 %v9892, %v9888
  %v10101 = vpack.c.b16 %v9893, %v9889
  %v10102 = vpack.c.b16 %v9894, %v9890
  %v10103 = vpack.c.b16 %v9895, %v9891
  %v10104 = vpack.c.b16 %v9900, %v9896
  %v10105 = vpack.c.b16 %v9901, %v9897
  %v10106 = vpack.c.b16 %v9902, %v9898
  %v10107 = vpack.c.b16 %v9903, %v9899
  %v10108 = vpack.c.b16 %v9908, %v9904
  %v10109 = vpack.c.b16 %v9909, %v9905
  %v10110 = vpack.c.b16 %v9910, %v9906
  %v10111 = vpack.c.b16 %v9911, %v9907
  %v10112 = vpack.c.b16 %v9916, %v9912
  %v10113 = vpack.c.b16 %v9917, %v9913
  %v10114 = vpack.c.b16 %v9918, %v9914
  %v10115 = vpack.c.b16 %v9919, %v9915
  %v10116 = vpack.c.b16 %v9924, %v9920
  %v10117 = vpack.c.b16 %v9925, %v9921
  %v10118 = vpack.c.b16 %v9926, %v9922
  %v10119 = vpack.c.b16 %v9927, %v9923
  %v10120 = vpack.c.b16 %v9932, %v9928
  %v10121 = vpack.c.b16 %v9933, %v9929
  %v10122 = vpack.c.b16 %v9934, %v9930
  %v10123 = vpack.c.b16 %v9935, %v9931
  %v10124 = vpack.c.b16 %v9940, %v9936
  %v10125 = vpack.c.b16 %v9941, %v9937
  %v10126 = vpack.c.b16 %v9942, %v9938
  %v10127 = vpack.c.b16 %v9943, %v9939
  %v10128 = vpack.c.b16 %v9948, %v9944
  %v10129 = vpack.c.b16 %v9949, %v9945
  %v10130 = vpack.c.b16 %v9950, %v9946
  %v10131 = vpack.c.b16 %v9951, %v9947
  %v10132 = vpack.c.b16 %v9956, %v9952
  %v10133 = vpack.c.b16 %v9957, %v9953
  %v10134 = vpack.c.b16 %v9958, %v9954
  %v10135 = vpack.c.b16 %v9959, %v9955
  %v10136 = vpack.c.b16 %v9964, %v9960
  %v10137 = vpack.c.b16 %v9965, %v9961
  %v10138 = vpack.c.b16 %v9966, %v9962
  %v10139 = vpack.c.b16 %v9967, %v9963
  %v10140 = vpack.c.b16 %v9972, %v9968
  %v10141 = vpack.c.b16 %v9973, %v9969
  %v10142 = vpack.c.b16 %v9974, %v9970
  %v10143 = vpack.c.b16 %v9975, %v9971
  %v10144 = vpack.c.b16 %v9980, %v9976
  %v10145 = vpack.c.b16 %v9981, %v9977
  %v10146 = vpack.c.b16 %v9982, %v9978
  %v10147 = vpack.c.b16 %v9983, %v9979
  %v10148 = vpack.c.b16 %v9988, %v9984
  %v10149 = vpack.c.b16 %v9989, %v9985
  %v10150 = vpack.c.b16 %v9990, %v9986
  %v10151 = vpack.c.b16 %v9991, %v9987
  %v10152 = vpack.c.b16 %v9996, %v9992
  %v10153 = vpack.c.b16 %v9997, %v9993
  %v10154 = vpack.c.b16 %v9998, %v9994
  %v10155 = vpack.c.b16 %v9999, %v9995
  %v10156 = vpack.c.b16 %v10004, %v10000
  %v10157 = vpack.c.b16 %v10005, %v10001
  %v10158 = vpack.c.b16 %v10006, %v10002
  %v10159 = vpack.c.b16 %v10007, %v10003
  %v10160 = vpack.c.b16 %v10012, %v10008
  %v10161 = vpack.c.b16 %v10013, %v10009
  %v10162 = vpack.c.b16 %v10014, %v10010
  %v10163 = vpack.c.b16 %v10015, %v10011
  %v10164 = vpack.c.b16 %v10020, %v10016
  %v10165 = vpack.c.b16 %v10021, %v10017
  %v10166 = vpack.c.b16 %v10022, %v10018
  %v10167 = vpack.c.b16 %v10023, %v10019
  %v10168 = vpack.c.b16 %v10028, %v10024
  %v10169 = vpack.c.b16 %v10029, %v10025
  %v10170 = vpack.c.b16 %v10030, %v10026
  %v10171 = vpack.c.b16 %v10031, %v10027
  %v10172 = vpack.c.b16 %v10036, %v10032
  %v10173 = vpack.c.b16 %v10037, %v10033
  %v10174 = vpack.c.b16 %v10038, %v10034
  %v10175 = vpack.c.b16 %v10039, %v10035
  %v10176 = vpack.c.b16 %v10044, %v10040
  %v10177 = vpack.c.b16 %v10045, %v10041
  %v10178 = vpack.c.b16 %v10046, %v10042
  %v10179 = vpack.c.b16 %v10047, %v10043
  %v10180 = vpack.c.b16 %v10052, %v10048
  %v10181 = vpack.c.b16 %v10053, %v10049
  %v10182 = vpack.c.b16 %v10054, %v10050
  %v10183 = vpack.c.b16 %v10055, %v10051
  %10312 = vmatprep.subr.bf16.mxu0 %v10057
  %10313 = vmatpush1.bf16.msra.mxu0 %v10056
  %10314 = vmatprep.subr.bf16.mxu0 %v10061
  %10315 = vmatpush1.bf16.msra.mxu0 %v10060
  %10316 = vmatprep.subr.bf16.mxu0 %v10065
  %10317 = vmatpush1.bf16.msra.mxu0 %v10064
  %10318 = vmatprep.subr.bf16.mxu0 %v10069
  %10319 = vmatpush1.bf16.msra.mxu0 %v10068
  %10320 = vmatprep.subr.bf16.mxu0 %v10073
  %10321 = vmatpush1.bf16.msra.mxu0 %v10072
  %10322 = vmatprep.subr.bf16.mxu0 %v10077
  %10323 = vmatpush1.bf16.msra.mxu0 %v10076
  %10324 = vmatprep.subr.bf16.mxu0 %v10081
  %10325 = vmatpush1.bf16.msra.mxu0 %v10080
  %10326 = vmatprep.subr.bf16.mxu0 %v10085
  %10327 = vmatpush1.bf16.msra.mxu0 %v10084
  %10328 = vmatprep.subr.bf16.mxu0 %v10089
  %10329 = vmatpush1.bf16.msra.mxu0 %v10088
  %10330 = vmatprep.subr.bf16.mxu0 %v10093
  %10331 = vmatpush1.bf16.msra.mxu0 %v10092
  %10332 = vmatprep.subr.bf16.mxu0 %v10097
  %10333 = vmatpush1.bf16.msra.mxu0 %v10096
  %10334 = vmatprep.subr.bf16.mxu0 %v10101
  %10335 = vmatpush1.bf16.msra.mxu0 %v10100
  %10336 = vmatprep.subr.bf16.mxu0 %v10105
  %10337 = vmatpush1.bf16.msra.mxu0 %v10104
  %10338 = vmatprep.subr.bf16.mxu0 %v10109
  %10339 = vmatpush1.bf16.msra.mxu0 %v10108
  %10340 = vmatprep.subr.bf16.mxu0 %v10113
  %10341 = vmatpush1.bf16.msra.mxu0 %v10112
  %10342 = vmatprep.subr.bf16.mxu0 %v10117
  %10343 = vmatpush1.bf16.msra.mxu0 %v10116
  %10344 = vmatprep.mubr.bf16.mxu0 %v9519
  %10345 = vmatmul.mubr.bf16.gmra.mrb[0].mxu0 %v9518
  %v10346 = vpop.f32.mrb[0].mxu0
  %v10347 = vadd.f32 %v9655, %v10346
  %v10348 = vpop.f32.mrb[0].mxu0
  %v10349 = vadd.f32 %v9659, %v10348
  %v10350 = vpop.f32.mrb[0].mxu0
  %v10351 = vpop.f32.mrb[0].mxu0
  %10352 = vdwg.mxu0
  %10353 = vmatprep.subr.bf16.mxu0 %v10121
  %10354 = vmatpush1.bf16.msra.mxu0 %v10120
  %10355 = vmatprep.subr.bf16.mxu0 %v10125
  %10356 = vmatpush1.bf16.msra.mxu0 %v10124
  %10357 = vmatprep.subr.bf16.mxu0 %v10129
  %10358 = vmatpush1.bf16.msra.mxu0 %v10128
  %10359 = vmatprep.subr.bf16.mxu0 %v10133
  %10360 = vmatpush1.bf16.msra.mxu0 %v10132
  %10361 = vmatprep.subr.bf16.mxu0 %v10137
  %10362 = vmatpush1.bf16.msra.mxu0 %v10136
  %10363 = vmatprep.subr.bf16.mxu0 %v10141
  %10364 = vmatpush1.bf16.msra.mxu0 %v10140
  %10365 = vmatprep.subr.bf16.mxu0 %v10145
  %10366 = vmatpush1.bf16.msra.mxu0 %v10144
  %10367 = vmatprep.subr.bf16.mxu0 %v10149
  %10368 = vmatpush1.bf16.msra.mxu0 %v10148
  %10369 = vmatprep.subr.bf16.mxu0 %v10153
  %10370 = vmatpush1.bf16.msra.mxu0 %v10152
  %10371 = vmatprep.subr.bf16.mxu0 %v10157
  %10372 = vmatpush1.bf16.msra.mxu0 %v10156
  %10373 = vmatprep.subr.bf16.mxu0 %v10161
  %10374 = vmatpush1.bf16.msra.mxu0 %v10160
  %10375 = vmatprep.subr.bf16.mxu0 %v10165
  %10376 = vmatpush1.bf16.msra.mxu0 %v10164
  %10377 = vmatprep.subr.bf16.mxu0 %v10169
  %10378 = vmatpush1.bf16.msra.mxu0 %v10168
  %10379 = vmatprep.subr.bf16.mxu0 %v10173
  %10380 = vmatpush1.bf16.msra.mxu0 %v10172
  %10381 = vmatprep.subr.bf16.mxu0 %v10177
  %10382 = vmatpush1.bf16.msra.mxu0 %v10176
  %10383 = vmatprep.subr.bf16.mxu0 %v10181
  %10384 = vmatpush1.bf16.msra.mxu0 %v10180
  %10385 = vmatprep.mubr.bf16.mxu0 %v9521
  %10386 = vmatmul.mubr.bf16.gmra.mrb[0].mxu0 %v9520
  %v10387 = vpop.f32.mrb[0].mxu0
  %v10388 = vadd.f32 %v10347, %v10387
  %v10389 = vpop.f32.mrb[0].mxu0
  %v10390 = vadd.f32 %v10349, %v10389
  %v10391 = vpop.f32.mrb[0].mxu0
  %v10392 = vpop.f32.mrb[0].mxu0
  %10393 = vdwg.mxu0
  %10394 = vmatprep.subr.bf16.mxu0 %v10059
  %10395 = vmatpush1.bf16.msra.mxu0 %v10058
  %10396 = vmatprep.subr.bf16.mxu0 %v10063
  %10397 = vmatpush1.bf16.msra.mxu0 %v10062
  %10398 = vmatprep.subr.bf16.mxu0 %v10067
  %10399 = vmatpush1.bf16.msra.mxu0 %v10066
  %10400 = vmatprep.subr.bf16.mxu0 %v10071
  %10401 = vmatpush1.bf16.msra.mxu0 %v10070
  %10402 = vmatprep.subr.bf16.mxu0 %v10075
  %10403 = vmatpush1.bf16.msra.mxu0 %v10074
  %10404 = vmatprep.subr.bf16.mxu0 %v10079
  %10405 = vmatpush1.bf16.msra.mxu0 %v10078
  %10406 = vmatprep.subr.bf16.mxu0 %v10083
  %10407 = vmatpush1.bf16.msra.mxu0 %v10082
  %10408 = vmatprep.subr.bf16.mxu0 %v10087
  %10409 = vmatpush1.bf16.msra.mxu0 %v10086
  %10410 = vmatprep.subr.bf16.mxu0 %v10091
  %10411 = vmatpush1.bf16.msra.mxu0 %v10090
  %10412 = vmatprep.subr.bf16.mxu0 %v10095
  %10413 = vmatpush1.bf16.msra.mxu0 %v10094
  %10414 = vmatprep.subr.bf16.mxu0 %v10099
  %10415 = vmatpush1.bf16.msra.mxu0 %v10098
  %10416 = vmatprep.subr.bf16.mxu0 %v10103
  %10417 = vmatpush1.bf16.msra.mxu0 %v10102
  %10418 = vmatprep.subr.bf16.mxu0 %v10107
  %10419 = vmatpush1.bf16.msra.mxu0 %v10106
  %10420 = vmatprep.subr.bf16.mxu0 %v10111
  %10421 = vmatpush1.bf16.msra.mxu0 %v10110
  %10422 = vmatprep.subr.bf16.mxu0 %v10115
  %10423 = vmatpush1.bf16.msra.mxu0 %v10114
  %10424 = vmatprep.subr.bf16.mxu0 %v10119
  %10425 = vmatpush1.bf16.msra.mxu0 %v10118
  %10426 = vmatprep.mubr.bf16.mxu0 %v9519
  %10427 = vmatmul.mubr.bf16.gmra.mrb[0].mxu0 %v9518
  %v10428 = vpop.f32.mrb[0].mxu0
  %v10429 = vadd.f32 %v9663, %v10428
  %v10430 = vpop.f32.mrb[0].mxu0
  %v10431 = vadd.f32 %v9667, %v10430
  %v10432 = vpop.f32.mrb[0].mxu0
  %v10433 = vpop.f32.mrb[0].mxu0
  %10434 = vdwg.mxu0
  %10435 = vmatprep.subr.bf16.mxu0 %v10123
  %10436 = vmatpush1.bf16.msra.mxu0 %v10122
  %10437 = vmatprep.subr.bf16.mxu0 %v10127
  %10438 = vmatpush1.bf16.msra.mxu0 %v10126
  %10439 = vmatprep.subr.bf16.mxu0 %v10131
  %10440 = vmatpush1.bf16.msra.mxu0 %v10130
  %10441 = vmatprep.subr.bf16.mxu0 %v10135
  %10442 = vmatpush1.bf16.msra.mxu0 %v10134
  %10443 = vmatprep.subr.bf16.mxu0 %v10139
  %10444 = vmatpush1.bf16.msra.mxu0 %v10138
  %10445 = vmatprep.subr.bf16.mxu0 %v10143
  %10446 = vmatpush1.bf16.msra.mxu0 %v10142
  %10447 = vmatprep.subr.bf16.mxu0 %v10147
  %10448 = vmatpush1.bf16.msra.mxu0 %v10146
  %10449 = vmatprep.subr.bf16.mxu0 %v10151
  %10450 = vmatpush1.bf16.msra.mxu0 %v10150
  %10451 = vmatprep.subr.bf16.mxu0 %v10155
  %10452 = vmatpush1.bf16.msra.mxu0 %v10154
  %10453 = vmatprep.subr.bf16.mxu0 %v10159
  %10454 = vmatpush1.bf16.msra.mxu0 %v10158
  %10455 = vmatprep.subr.bf16.mxu0 %v10163
  %10456 = vmatpush1.bf16.msra.mxu0 %v10162
  %10457 = vmatprep.subr.bf16.mxu0 %v10167
  %10458 = vmatpush1.bf16.msra.mxu0 %v10166
  %10459 = vmatprep.subr.bf16.mxu0 %v10171
  %10460 = vmatpush1.bf16.msra.mxu0 %v10170
  %10461 = vmatprep.subr.bf16.mxu0 %v10175
  %10462 = vmatpush1.bf16.msra.mxu0 %v10174
  %10463 = vmatprep.subr.bf16.mxu0 %v10179
  %10464 = vmatpush1.bf16.msra.mxu0 %v10178
  %10465 = vmatprep.subr.bf16.mxu0 %v10183
  %10466 = vmatpush1.bf16.msra.mxu0 %v10182
  %10467 = vmatprep.mubr.bf16.mxu0 %v9521
  %10468 = vmatmul.mubr.bf16.gmra.mrb[0].mxu0 %v9520
  %v10469 = vpop.f32.mrb[0].mxu0
  %v10470 = vadd.f32 %v10429, %v10469
  %v10471 = vpop.f32.mrb[0].mxu0
  %v10472 = vadd.f32 %v10431, %v10471
  %v10473 = vpop.f32.mrb[0].mxu0
  %v10474 = vpop.f32.mrb[0].mxu0
  %10475 = vdwg.mxu0
  %v10476 = vmax.f32 %v10388, 0.0
  %v10477 = vmax.f32 %v10390, 0.0
  %v10478 = vmax.f32 %v10470, 0.0
  %v10479 = vmax.f32 %v10472, 0.0
  %v10480 = vpack.c.bf16 %v10476, %v10476
  %v10481 = vpack.c.bf16 %v10477, %v10477
  %v10482 = vpack.c.bf16 %v10478, %v10478
  %v10483 = vpack.c.bf16 %v10479, %v10479
  %v10484 = vld [vmem:[%s7] sm:$0xff]
  %v10485 = vld [vmem:[%s7 + $0x8] sm:$0xff]
  %v10486 = vld [vmem:[%s7 + $0x10] sm:$0xff]
  %v10487 = vld [vmem:[%s7 + $0x18] sm:$0xff]
  %v10488 = vld [vmem:[%s7 + $0x20] sm:$0xff]
  %v10489 = vld [vmem:[%s7 + $0x28] sm:$0xff]
  %v10490 = vld [vmem:[%s7 + $0x30] sm:$0xff]
  %v10491 = vld [vmem:[%s7 + $0x38] sm:$0xff]
  %v10492 = vld [vmem:[%s7 + $0x40] sm:$0xff]
  %v10493 = vld [vmem:[%s7 + $0x48] sm:$0xff]
  %v10494 = vld [vmem:[%s7 + $0x50] sm:$0xff]
  %v10495 = vld [vmem:[%s7 + $0x58] sm:$0xff]
  %v10496 = vld [vmem:[%s7 + $0x60] sm:$0xff]
  %v10497 = vld [vmem:[%s7 + $0x68] sm:$0xff]
  %v10498 = vld [vmem:[%s7 + $0x70] sm:$0xff]
  %v10499 = vld [vmem:[%s7 + $0x78] sm:$0xff]
  %v10500 = vld [vmem:[%s7 + $0x80] sm:$0xff]
  %v10501 = vld [vmem:[%s7 + $0x88] sm:$0xff]
  %v10502 = vld [vmem:[%s7 + $0x90] sm:$0xff]
  %v10503 = vld [vmem:[%s7 + $0x98] sm:$0xff]
  %v10504 = vld [vmem:[%s7 + $0xa0] sm:$0xff]
  %v10505 = vld [vmem:[%s7 + $0xa8] sm:$0xff]
  %v10506 = vld [vmem:[%s7 + $0xb0] sm:$0xff]
  %v10507 = vld [vmem:[%s7 + $0xb8] sm:$0xff]
  %v10508 = vld [vmem:[%s7 + $0xc0] sm:$0xff]
  %v10509 = vld [vmem:[%s7 + $0xc8] sm:$0xff]
  %v10510 = vld [vmem:[%s7 + $0xd0] sm:$0xff]
  %v10511 = vld [vmem:[%s7 + $0xd8] sm:$0xff]
  %v10512 = vld [vmem:[%s7 + $0xe0] sm:$0xff]
  %v10513 = vld [vmem:[%s7 + $0xe8] sm:$0xff]
  %v10514 = vld [vmem:[%s7 + $0xf0] sm:$0xff]
  %v10515 = vld [vmem:[%s7 + $0xf8] sm:$0xff]
  %v10516 = vld [vmem:[%s7 + $0x100] sm:$0xff]
  %v10517 = vld [vmem:[%s7 + $0x108] sm:$0xff]
  %v10518 = vld [vmem:[%s7 + $0x110] sm:$0xff]
  %v10519 = vld [vmem:[%s7 + $0x118] sm:$0xff]
  %v10520 = vld [vmem:[%s7 + $0x120] sm:$0xff]
  %v10521 = vld [vmem:[%s7 + $0x128] sm:$0xff]
  %v10522 = vld [vmem:[%s7 + $0x130] sm:$0xff]
  %v10523 = vld [vmem:[%s7 + $0x138] sm:$0xff]
  %v10524 = vld [vmem:[%s7 + $0x140] sm:$0xff]
  %v10525 = vld [vmem:[%s7 + $0x148] sm:$0xff]
  %v10526 = vld [vmem:[%s7 + $0x150] sm:$0xff]
  %v10527 = vld [vmem:[%s7 + $0x158] sm:$0xff]
  %v10528 = vld [vmem:[%s7 + $0x160] sm:$0xff]
  %v10529 = vld [vmem:[%s7 + $0x168] sm:$0xff]
  %v10530 = vld [vmem:[%s7 + $0x170] sm:$0xff]
  %v10531 = vld [vmem:[%s7 + $0x178] sm:$0xff]
  %v10532 = vld [vmem:[%s7 + $0x180] sm:$0xff]
  %v10533 = vld [vmem:[%s7 + $0x188] sm:$0xff]
  %v10534 = vld [vmem:[%s7 + $0x190] sm:$0xff]
  %v10535 = vld [vmem:[%s7 + $0x198] sm:$0xff]
  %v10536 = vld [vmem:[%s7 + $0x1a0] sm:$0xff]
  %v10537 = vld [vmem:[%s7 + $0x1a8] sm:$0xff]
  %v10538 = vld [vmem:[%s7 + $0x1b0] sm:$0xff]
  %v10539 = vld [vmem:[%s7 + $0x1b8] sm:$0xff]
  %v10540 = vld [vmem:[%s7 + $0x1c0] sm:$0xff]
  %v10541 = vld [vmem:[%s7 + $0x1c8] sm:$0xff]
  %v10542 = vld [vmem:[%s7 + $0x1d0] sm:$0xff]
  %v10543 = vld [vmem:[%s7 + $0x1d8] sm:$0xff]
  %v10544 = vld [vmem:[%s7 + $0x1e0] sm:$0xff]
  %v10545 = vld [vmem:[%s7 + $0x1e8] sm:$0xff]
  %v10546 = vld [vmem:[%s7 + $0x1f0] sm:$0xff]
  %v10547 = vld [vmem:[%s7 + $0x1f8] sm:$0xff]
  %v10548 = vld [vmem:[%s7 + $0x200] sm:$0xff]
  %v10549 = vld [vmem:[%s7 + $0x208] sm:$0xff]
  %v10550 = vld [vmem:[%s7 + $0x210] sm:$0xff]
  %v10551 = vld [vmem:[%s7 + $0x218] sm:$0xff]
  %v10552 = vld [vmem:[%s7 + $0x220] sm:$0xff]
  %v10553 = vld [vmem:[%s7 + $0x228] sm:$0xff]
  %v10554 = vld [vmem:[%s7 + $0x230] sm:$0xff]
  %v10555 = vld [vmem:[%s7 + $0x238] sm:$0xff]
  %v10556 = vld [vmem:[%s7 + $0x240] sm:$0xff]
  %v10557 = vld [vmem:[%s7 + $0x248] sm:$0xff]
  %v10558 = vld [vmem:[%s7 + $0x250] sm:$0xff]
  %v10559 = vld [vmem:[%s7 + $0x258] sm:$0xff]
  %v10560 = vld [vmem:[%s7 + $0x260] sm:$0xff]
  %v10561 = vld [vmem:[%s7 + $0x268] sm:$0xff]
  %v10562 = vld [vmem:[%s7 + $0x270] sm:$0xff]
  %v10563 = vld [vmem:[%s7 + $0x278] sm:$0xff]
  %v10564 = vld [vmem:[%s7 + $0x280] sm:$0xff]
  %v10565 = vld [vmem:[%s7 + $0x288] sm:$0xff]
  %v10566 = vld [vmem:[%s7 + $0x290] sm:$0xff]
  %v10567 = vld [vmem:[%s7 + $0x298] sm:$0xff]
  %v10568 = vld [vmem:[%s7 + $0x2a0] sm:$0xff]
  %v10569 = vld [vmem:[%s7 + $0x2a8] sm:$0xff]
  %v10570 = vld [vmem:[%s7 + $0x2b0] sm:$0xff]
  %v10571 = vld [vmem:[%s7 + $0x2b8] sm:$0xff]
  %v10572 = vld [vmem:[%s7 + $0x2c0] sm:$0xff]
  %v10573 = vld [vmem:[%s7 + $0x2c8] sm:$0xff]
  %v10574 = vld [vmem:[%s7 + $0x2d0] sm:$0xff]
  %v10575 = vld [vmem:[%s7 + $0x2d8] sm:$0xff]
  %v10576 = vld [vmem:[%s7 + $0x2e0] sm:$0xff]
  %v10577 = vld [vmem:[%s7 + $0x2e8] sm:$0xff]
  %v10578 = vld [vmem:[%s7 + $0x2f0] sm:$0xff]
  %v10579 = vld [vmem:[%s7 + $0x2f8] sm:$0xff]
  %v10580 = vld [vmem:[%s7 + $0x300] sm:$0xff]
  %v10581 = vld [vmem:[%s7 + $0x308] sm:$0xff]
  %v10582 = vld [vmem:[%s7 + $0x310] sm:$0xff]
  %v10583 = vld [vmem:[%s7 + $0x318] sm:$0xff]
  %v10584 = vld [vmem:[%s7 + $0x320] sm:$0xff]
  %v10585 = vld [vmem:[%s7 + $0x328] sm:$0xff]
  %v10586 = vld [vmem:[%s7 + $0x330] sm:$0xff]
  %v10587 = vld [vmem:[%s7 + $0x338] sm:$0xff]
  %v10588 = vld [vmem:[%s7 + $0x340] sm:$0xff]
  %v10589 = vld [vmem:[%s7 + $0x348] sm:$0xff]
  %v10590 = vld [vmem:[%s7 + $0x350] sm:$0xff]
  %v10591 = vld [vmem:[%s7 + $0x358] sm:$0xff]
  %v10592 = vld [vmem:[%s7 + $0x360] sm:$0xff]
  %v10593 = vld [vmem:[%s7 + $0x368] sm:$0xff]
  %v10594 = vld [vmem:[%s7 + $0x370] sm:$0xff]
  %v10595 = vld [vmem:[%s7 + $0x378] sm:$0xff]
  %v10596 = vld [vmem:[%s7 + $0x380] sm:$0xff]
  %v10597 = vld [vmem:[%s7 + $0x388] sm:$0xff]
  %v10598 = vld [vmem:[%s7 + $0x390] sm:$0xff]
  %v10599 = vld [vmem:[%s7 + $0x398] sm:$0xff]
  %v10600 = vld [vmem:[%s7 + $0x3a0] sm:$0xff]
  %v10601 = vld [vmem:[%s7 + $0x3a8] sm:$0xff]
  %v10602 = vld [vmem:[%s7 + $0x3b0] sm:$0xff]
  %v10603 = vld [vmem:[%s7 + $0x3b8] sm:$0xff]
  %v10604 = vld [vmem:[%s7 + $0x3c0] sm:$0xff]
  %v10605 = vld [vmem:[%s7 + $0x3c8] sm:$0xff]
  %v10606 = vld [vmem:[%s7 + $0x3d0] sm:$0xff]
  %v10607 = vld [vmem:[%s7 + $0x3d8] sm:$0xff]
  %v10608 = vld [vmem:[%s7 + $0x3e0] sm:$0xff]
  %v10609 = vld [vmem:[%s7 + $0x3e8] sm:$0xff]
  %v10610 = vld [vmem:[%s7 + $0x3f0] sm:$0xff]
  %v10611 = vld [vmem:[%s7 + $0x3f8] sm:$0xff]
  %v10612 = vld [vmem:[%s8] sm:$0xf]
  %v10614 = vlaneseq
  %v10615 = vshrl.u32 %v10614, 7
  %v10616 = vsub.s32 0, %v10615
  %v10617 = vrot.slane %v10612, %v10616
  %v10618 = vlaneseq
  %v10619 = vshrl.u32 %v10618, 7
  %v10620 = vsub.s32 1, %v10619
  %v10621 = vrot.slane %v10612, %v10620
  %v10622 = vlaneseq
  %v10623 = vshrl.u32 %v10622, 7
  %v10624 = vsub.s32 2, %v10623
  %v10625 = vrot.slane %v10612, %v10624
  %v10626 = vlaneseq
  %v10627 = vshrl.u32 %v10626, 7
  %v10628 = vsub.s32 3, %v10627
  %v10629 = vrot.slane %v10612, %v10628
  %v10762 = vunpack.c.l.b16 %v10484
  %v10763 = vunpack.c.h.b16 %v10484
  %v10764 = vunpack.c.l.b16 %v10485
  %v10765 = vunpack.c.h.b16 %v10485
  %v10766 = vunpack.c.l.b16 %v10486
  %v10767 = vunpack.c.h.b16 %v10486
  %v10768 = vunpack.c.l.b16 %v10487
  %v10769 = vunpack.c.h.b16 %v10487
  %v10770 = vunpack.c.l.b16 %v10488
  %v10771 = vunpack.c.h.b16 %v10488
  %v10772 = vunpack.c.l.b16 %v10489
  %v10773 = vunpack.c.h.b16 %v10489
  %v10774 = vunpack.c.l.b16 %v10490
  %v10775 = vunpack.c.h.b16 %v10490
  %v10776 = vunpack.c.l.b16 %v10491
  %v10777 = vunpack.c.h.b16 %v10491
  %v10778 = vunpack.c.l.b16 %v10492
  %v10779 = vunpack.c.h.b16 %v10492
  %v10780 = vunpack.c.l.b16 %v10493
  %v10781 = vunpack.c.h.b16 %v10493
  %v10782 = vunpack.c.l.b16 %v10494
  %v10783 = vunpack.c.h.b16 %v10494
  %v10784 = vunpack.c.l.b16 %v10495
  %v10785 = vunpack.c.h.b16 %v10495
  %v10786 = vunpack.c.l.b16 %v10496
  %v10787 = vunpack.c.h.b16 %v10496
  %v10788 = vunpack.c.l.b16 %v10497
  %v10789 = vunpack.c.h.b16 %v10497
  %v10790 = vunpack.c.l.b16 %v10498
  %v10791 = vunpack.c.h.b16 %v10498
  %v10792 = vunpack.c.l.b16 %v10499
  %v10793 = vunpack.c.h.b16 %v10499
  %v10794 = vunpack.c.l.b16 %v10500
  %v10795 = vunpack.c.h.b16 %v10500
  %v10796 = vunpack.c.l.b16 %v10501
  %v10797 = vunpack.c.h.b16 %v10501
  %v10798 = vunpack.c.l.b16 %v10502
  %v10799 = vunpack.c.h.b16 %v10502
  %v10800 = vunpack.c.l.b16 %v10503
  %v10801 = vunpack.c.h.b16 %v10503
  %v10802 = vunpack.c.l.b16 %v10504
  %v10803 = vunpack.c.h.b16 %v10504
  %v10804 = vunpack.c.l.b16 %v10505
  %v10805 = vunpack.c.h.b16 %v10505
  %v10806 = vunpack.c.l.b16 %v10506
  %v10807 = vunpack.c.h.b16 %v10506
  %v10808 = vunpack.c.l.b16 %v10507
  %v10809 = vunpack.c.h.b16 %v10507
  %v10810 = vunpack.c.l.b16 %v10508
  %v10811 = vunpack.c.h.b16 %v10508
  %v10812 = vunpack.c.l.b16 %v10509
  %v10813 = vunpack.c.h.b16 %v10509
  %v10814 = vunpack.c.l.b16 %v10510
  %v10815 = vunpack.c.h.b16 %v10510
  %v10816 = vunpack.c.l.b16 %v10511
  %v10817 = vunpack.c.h.b16 %v10511
  %v10818 = vunpack.c.l.b16 %v10512
  %v10819 = vunpack.c.h.b16 %v10512
  %v10820 = vunpack.c.l.b16 %v10513
  %v10821 = vunpack.c.h.b16 %v10513
  %v10822 = vunpack.c.l.b16 %v10514
  %v10823 = vunpack.c.h.b16 %v10514
  %v10824 = vunpack.c.l.b16 %v10515
  %v10825 = vunpack.c.h.b16 %v10515
  %v10826 = vunpack.c.l.b16 %v10516
  %v10827 = vunpack.c.h.b16 %v10516
  %v10828 = vunpack.c.l.b16 %v10517
  %v10829 = vunpack.c.h.b16 %v10517
  %v10830 = vunpack.c.l.b16 %v10518
  %v10831 = vunpack.c.h.b16 %v10518
  %v10832 = vunpack.c.l.b16 %v10519
  %v10833 = vunpack.c.h.b16 %v10519
  %v10834 = vunpack.c.l.b16 %v10520
  %v10835 = vunpack.c.h.b16 %v10520
  %v10836 = vunpack.c.l.b16 %v10521
  %v10837 = vunpack.c.h.b16 %v10521
  %v10838 = vunpack.c.l.b16 %v10522
  %v10839 = vunpack.c.h.b16 %v10522
  %v10840 = vunpack.c.l.b16 %v10523
  %v10841 = vunpack.c.h.b16 %v10523
  %v10842 = vunpack.c.l.b16 %v10524
  %v10843 = vunpack.c.h.b16 %v10524
  %v10844 = vunpack.c.l.b16 %v10525
  %v10845 = vunpack.c.h.b16 %v10525
  %v10846 = vunpack.c.l.b16 %v10526
  %v10847 = vunpack.c.h.b16 %v10526
  %v10848 = vunpack.c.l.b16 %v10527
  %v10849 = vunpack.c.h.b16 %v10527
  %v10850 = vunpack.c.l.b16 %v10528
  %v10851 = vunpack.c.h.b16 %v10528
  %v10852 = vunpack.c.l.b16 %v10529
  %v10853 = vunpack.c.h.b16 %v10529
  %v10854 = vunpack.c.l.b16 %v10530
  %v10855 = vunpack.c.h.b16 %v10530
  %v10856 = vunpack.c.l.b16 %v10531
  %v10857 = vunpack.c.h.b16 %v10531
  %v10858 = vunpack.c.l.b16 %v10532
  %v10859 = vunpack.c.h.b16 %v10532
  %v10860 = vunpack.c.l.b16 %v10533
  %v10861 = vunpack.c.h.b16 %v10533
  %v10862 = vunpack.c.l.b16 %v10534
  %v10863 = vunpack.c.h.b16 %v10534
  %v10864 = vunpack.c.l.b16 %v10535
  %v10865 = vunpack.c.h.b16 %v10535
  %v10866 = vunpack.c.l.b16 %v10536
  %v10867 = vunpack.c.h.b16 %v10536
  %v10868 = vunpack.c.l.b16 %v10537
  %v10869 = vunpack.c.h.b16 %v10537
  %v10870 = vunpack.c.l.b16 %v10538
  %v10871 = vunpack.c.h.b16 %v10538
  %v10872 = vunpack.c.l.b16 %v10539
  %v10873 = vunpack.c.h.b16 %v10539
  %v10874 = vunpack.c.l.b16 %v10540
  %v10875 = vunpack.c.h.b16 %v10540
  %v10876 = vunpack.c.l.b16 %v10541
  %v10877 = vunpack.c.h.b16 %v10541
  %v10878 = vunpack.c.l.b16 %v10542
  %v10879 = vunpack.c.h.b16 %v10542
  %v10880 = vunpack.c.l.b16 %v10543
  %v10881 = vunpack.c.h.b16 %v10543
  %v10882 = vunpack.c.l.b16 %v10544
  %v10883 = vunpack.c.h.b16 %v10544
  %v10884 = vunpack.c.l.b16 %v10545
  %v10885 = vunpack.c.h.b16 %v10545
  %v10886 = vunpack.c.l.b16 %v10546
  %v10887 = vunpack.c.h.b16 %v10546
  %v10888 = vunpack.c.l.b16 %v10547
  %v10889 = vunpack.c.h.b16 %v10547
  %v10890 = vunpack.c.l.b16 %v10548
  %v10891 = vunpack.c.h.b16 %v10548
  %v10892 = vunpack.c.l.b16 %v10549
  %v10893 = vunpack.c.h.b16 %v10549
  %v10894 = vunpack.c.l.b16 %v10550
  %v10895 = vunpack.c.h.b16 %v10550
  %v10896 = vunpack.c.l.b16 %v10551
  %v10897 = vunpack.c.h.b16 %v10551
  %v10898 = vunpack.c.l.b16 %v10552
  %v10899 = vunpack.c.h.b16 %v10552
  %v10900 = vunpack.c.l.b16 %v10553
  %v10901 = vunpack.c.h.b16 %v10553
  %v10902 = vunpack.c.l.b16 %v10554
  %v10903 = vunpack.c.h.b16 %v10554
  %v10904 = vunpack.c.l.b16 %v10555
  %v10905 = vunpack.c.h.b16 %v10555
  %v10906 = vunpack.c.l.b16 %v10556
  %v10907 = vunpack.c.h.b16 %v10556
  %v10908 = vunpack.c.l.b16 %v10557
  %v10909 = vunpack.c.h.b16 %v10557
  %v10910 = vunpack.c.l.b16 %v10558
  %v10911 = vunpack.c.h.b16 %v10558
  %v10912 = vunpack.c.l.b16 %v10559
  %v10913 = vunpack.c.h.b16 %v10559
  %v10914 = vunpack.c.l.b16 %v10560
  %v10915 = vunpack.c.h.b16 %v10560
  %v10916 = vunpack.c.l.b16 %v10561
  %v10917 = vunpack.c.h.b16 %v10561
  %v10918 = vunpack.c.l.b16 %v10562
  %v10919 = vunpack.c.h.b16 %v10562
  %v10920 = vunpack.c.l.b16 %v10563
  %v10921 = vunpack.c.h.b16 %v10563
  %v10922 = vunpack.c.l.b16 %v10564
  %v10923 = vunpack.c.h.b16 %v10564
  %v10924 = vunpack.c.l.b16 %v10565
  %v10925 = vunpack.c.h.b16 %v10565
  %v10926 = vunpack.c.l.b16 %v10566
  %v10927 = vunpack.c.h.b16 %v10566
  %v10928 = vunpack.c.l.b16 %v10567
  %v10929 = vunpack.c.h.b16 %v10567
  %v10930 = vunpack.c.l.b16 %v10568
  %v10931 = vunpack.c.h.b16 %v10568
  %v10932 = vunpack.c.l.b16 %v10569
  %v10933 = vunpack.c.h.b16 %v10569
  %v10934 = vunpack.c.l.b16 %v10570
  %v10935 = vunpack.c.h.b16 %v10570
  %v10936 = vunpack.c.l.b16 %v10571
  %v10937 = vunpack.c.h.b16 %v10571
  %v10938 = vunpack.c.l.b16 %v10572
  %v10939 = vunpack.c.h.b16 %v10572
  %v10940 = vunpack.c.l.b16 %v10573
  %v10941 = vunpack.c.h.b16 %v10573
  %v10942 = vunpack.c.l.b16 %v10574
  %v10943 = vunpack.c.h.b16 %v10574
  %v10944 = vunpack.c.l.b16 %v10575
  %v10945 = vunpack.c.h.b16 %v10575
  %v10946 = vunpack.c.l.b16 %v10576
  %v10947 = vunpack.c.h.b16 %v10576
  %v10948 = vunpack.c.l.b16 %v10577
  %v10949 = vunpack.c.h.b16 %v10577
  %v10950 = vunpack.c.l.b16 %v10578
  %v10951 = vunpack.c.h.b16 %v10578
  %v10952 = vunpack.c.l.b16 %v10579
  %v10953 = vunpack.c.h.b16 %v10579
  %v10954 = vunpack.c.l.b16 %v10580
  %v10955 = vunpack.c.h.b16 %v10580
  %v10956 = vunpack.c.l.b16 %v10581
  %v10957 = vunpack.c.h.b16 %v10581
  %v10958 = vunpack.c.l.b16 %v10582
  %v10959 = vunpack.c.h.b16 %v10582
  %v10960 = vunpack.c.l.b16 %v10583
  %v10961 = vunpack.c.h.b16 %v10583
  %v10962 = vunpack.c.l.b16 %v10584
  %v10963 = vunpack.c.h.b16 %v10584
  %v10964 = vunpack.c.l.b16 %v10585
  %v10965 = vunpack.c.h.b16 %v10585
  %v10966 = vunpack.c.l.b16 %v10586
  %v10967 = vunpack.c.h.b16 %v10586
  %v10968 = vunpack.c.l.b16 %v10587
  %v10969 = vunpack.c.h.b16 %v10587
  %v10970 = vunpack.c.l.b16 %v10588
  %v10971 = vunpack.c.h.b16 %v10588
  %v10972 = vunpack.c.l.b16 %v10589
  %v10973 = vunpack.c.h.b16 %v10589
  %v10974 = vunpack.c.l.b16 %v10590
  %v10975 = vunpack.c.h.b16 %v10590
  %v10976 = vunpack.c.l.b16 %v10591
  %v10977 = vunpack.c.h.b16 %v10591
  %v10978 = vunpack.c.l.b16 %v10592
  %v10979 = vunpack.c.h.b16 %v10592
  %v10980 = vunpack.c.l.b16 %v10593
  %v10981 = vunpack.c.h.b16 %v10593
  %v10982 = vunpack.c.l.b16 %v10594
  %v10983 = vunpack.c.h.b16 %v10594
  %v10984 = vunpack.c.l.b16 %v10595
  %v10985 = vunpack.c.h.b16 %v10595
  %v10986 = vunpack.c.l.b16 %v10596
  %v10987 = vunpack.c.h.b16 %v10596
  %v10988 = vunpack.c.l.b16 %v10597
  %v10989 = vunpack.c.h.b16 %v10597
  %v10990 = vunpack.c.l.b16 %v10598
  %v10991 = vunpack.c.h.b16 %v10598
  %v10992 = vunpack.c.l.b16 %v10599
  %v10993 = vunpack.c.h.b16 %v10599
  %v10994 = vunpack.c.l.b16 %v10600
  %v10995 = vunpack.c.h.b16 %v10600
  %v10996 = vunpack.c.l.b16 %v10601
  %v10997 = vunpack.c.h.b16 %v10601
  %v10998 = vunpack.c.l.b16 %v10602
  %v10999 = vunpack.c.h.b16 %v10602
  %v11000 = vunpack.c.l.b16 %v10603
  %v11001 = vunpack.c.h.b16 %v10603
  %v11002 = vunpack.c.l.b16 %v10604
  %v11003 = vunpack.c.h.b16 %v10604
  %v11004 = vunpack.c.l.b16 %v10605
  %v11005 = vunpack.c.h.b16 %v10605
  %v11006 = vunpack.c.l.b16 %v10606
  %v11007 = vunpack.c.h.b16 %v10606
  %v11008 = vunpack.c.l.b16 %v10607
  %v11009 = vunpack.c.h.b16 %v10607
  %v11010 = vunpack.c.l.b16 %v10608
  %v11011 = vunpack.c.h.b16 %v10608
  %v11012 = vunpack.c.l.b16 %v10609
  %v11013 = vunpack.c.h.b16 %v10609
  %v11014 = vunpack.c.l.b16 %v10610
  %v11015 = vunpack.c.h.b16 %v10610
  %v11016 = vunpack.c.l.b16 %v10611
  %v11017 = vunpack.c.h.b16 %v10611
  %v11018 = vpack.c.b16 %v10766, %v10762
  %v11019 = vpack.c.b16 %v10767, %v10763
  %v11020 = vpack.c.b16 %v10768, %v10764
  %v11021 = vpack.c.b16 %v10769, %v10765
  %v11022 = vpack.c.b16 %v10774, %v10770
  %v11023 = vpack.c.b16 %v10775, %v10771
  %v11024 = vpack.c.b16 %v10776, %v10772
  %v11025 = vpack.c.b16 %v10777, %v10773
  %v11026 = vpack.c.b16 %v10782, %v10778
  %v11027 = vpack.c.b16 %v10783, %v10779
  %v11028 = vpack.c.b16 %v10784, %v10780
  %v11029 = vpack.c.b16 %v10785, %v10781
  %v11030 = vpack.c.b16 %v10790, %v10786
  %v11031 = vpack.c.b16 %v10791, %v10787
  %v11032 = vpack.c.b16 %v10792, %v10788
  %v11033 = vpack.c.b16 %v10793, %v10789
  %v11034 = vpack.c.b16 %v10798, %v10794
  %v11035 = vpack.c.b16 %v10799, %v10795
  %v11036 = vpack.c.b16 %v10800, %v10796
  %v11037 = vpack.c.b16 %v10801, %v10797
  %v11038 = vpack.c.b16 %v10806, %v10802
  %v11039 = vpack.c.b16 %v10807, %v10803
  %v11040 = vpack.c.b16 %v10808, %v10804
  %v11041 = vpack.c.b16 %v10809, %v10805
  %v11042 = vpack.c.b16 %v10814, %v10810
  %v11043 = vpack.c.b16 %v10815, %v10811
  %v11044 = vpack.c.b16 %v10816, %v10812
  %v11045 = vpack.c.b16 %v10817, %v10813
  %v11046 = vpack.c.b16 %v10822, %v10818
  %v11047 = vpack.c.b16 %v10823, %v10819
  %v11048 = vpack.c.b16 %v10824, %v10820
  %v11049 = vpack.c.b16 %v10825, %v10821
  %v11050 = vpack.c.b16 %v10830, %v10826
  %v11051 = vpack.c.b16 %v10831, %v10827
  %v11052 = vpack.c.b16 %v10832, %v10828
  %v11053 = vpack.c.b16 %v10833, %v10829
  %v11054 = vpack.c.b16 %v10838, %v10834
  %v11055 = vpack.c.b16 %v10839, %v10835
  %v11056 = vpack.c.b16 %v10840, %v10836
  %v11057 = vpack.c.b16 %v10841, %v10837
  %v11058 = vpack.c.b16 %v10846, %v10842
  %v11059 = vpack.c.b16 %v10847, %v10843
  %v11060 = vpack.c.b16 %v10848, %v10844
  %v11061 = vpack.c.b16 %v10849, %v10845
  %v11062 = vpack.c.b16 %v10854, %v10850
  %v11063 = vpack.c.b16 %v10855, %v10851
  %v11064 = vpack.c.b16 %v10856, %v10852
  %v11065 = vpack.c.b16 %v10857, %v10853
  %v11066 = vpack.c.b16 %v10862, %v10858
  %v11067 = vpack.c.b16 %v10863, %v10859
  %v11068 = vpack.c.b16 %v10864, %v10860
  %v11069 = vpack.c.b16 %v10865, %v10861
  %v11070 = vpack.c.b16 %v10870, %v10866
  %v11071 = vpack.c.b16 %v10871, %v10867
  %v11072 = vpack.c.b16 %v10872, %v10868
  %v11073 = vpack.c.b16 %v10873, %v10869
  %v11074 = vpack.c.b16 %v10878, %v10874
  %v11075 = vpack.c.b16 %v10879, %v10875
  %v11076 = vpack.c.b16 %v10880, %v10876
  %v11077 = vpack.c.b16 %v10881, %v10877
  %v11078 = vpack.c.b16 %v10886, %v10882
  %v11079 = vpack.c.b16 %v10887, %v10883
  %v11080 = vpack.c.b16 %v10888, %v10884
  %v11081 = vpack.c.b16 %v10889, %v10885
  %v11082 = vpack.c.b16 %v10894, %v10890
  %v11083 = vpack.c.b16 %v10895, %v10891
  %v11084 = vpack.c.b16 %v10896, %v10892
  %v11085 = vpack.c.b16 %v10897, %v10893
  %v11086 = vpack.c.b16 %v10902, %v10898
  %v11087 = vpack.c.b16 %v10903, %v10899
  %v11088 = vpack.c.b16 %v10904, %v10900
  %v11089 = vpack.c.b16 %v10905, %v10901
  %v11090 = vpack.c.b16 %v10910, %v10906
  %v11091 = vpack.c.b16 %v10911, %v10907
  %v11092 = vpack.c.b16 %v10912, %v10908
  %v11093 = vpack.c.b16 %v10913, %v10909
  %v11094 = vpack.c.b16 %v10918, %v10914
  %v11095 = vpack.c.b16 %v10919, %v10915
  %v11096 = vpack.c.b16 %v10920, %v10916
  %v11097 = vpack.c.b16 %v10921, %v10917
  %v11098 = vpack.c.b16 %v10926, %v10922
  %v11099 = vpack.c.b16 %v10927, %v10923
  %v11100 = vpack.c.b16 %v10928, %v10924
  %v11101 = vpack.c.b16 %v10929, %v10925
  %v11102 = vpack.c.b16 %v10934, %v10930
  %v11103 = vpack.c.b16 %v10935, %v10931
  %v11104 = vpack.c.b16 %v10936, %v10932
  %v11105 = vpack.c.b16 %v10937, %v10933
  %v11106 = vpack.c.b16 %v10942, %v10938
  %v11107 = vpack.c.b16 %v10943, %v10939
  %v11108 = vpack.c.b16 %v10944, %v10940
  %v11109 = vpack.c.b16 %v10945, %v10941
  %v11110 = vpack.c.b16 %v10950, %v10946
  %v11111 = vpack.c.b16 %v10951, %v10947
  %v11112 = vpack.c.b16 %v10952, %v10948
  %v11113 = vpack.c.b16 %v10953, %v10949
  %v11114 = vpack.c.b16 %v10958, %v10954
  %v11115 = vpack.c.b16 %v10959, %v10955
  %v11116 = vpack.c.b16 %v10960, %v10956
  %v11117 = vpack.c.b16 %v10961, %v10957
  %v11118 = vpack.c.b16 %v10966, %v10962
  %v11119 = vpack.c.b16 %v10967, %v10963
  %v11120 = vpack.c.b16 %v10968, %v10964
  %v11121 = vpack.c.b16 %v10969, %v10965
  %v11122 = vpack.c.b16 %v10974, %v10970
  %v11123 = vpack.c.b16 %v10975, %v10971
  %v11124 = vpack.c.b16 %v10976, %v10972
  %v11125 = vpack.c.b16 %v10977, %v10973
  %v11126 = vpack.c.b16 %v10982, %v10978
  %v11127 = vpack.c.b16 %v10983, %v10979
  %v11128 = vpack.c.b16 %v10984, %v10980
  %v11129 = vpack.c.b16 %v10985, %v10981
  %v11130 = vpack.c.b16 %v10990, %v10986
  %v11131 = vpack.c.b16 %v10991, %v10987
  %v11132 = vpack.c.b16 %v10992, %v10988
  %v11133 = vpack.c.b16 %v10993, %v10989
  %v11134 = vpack.c.b16 %v10998, %v10994
  %v11135 = vpack.c.b16 %v10999, %v10995
  %v11136 = vpack.c.b16 %v11000, %v10996
  %v11137 = vpack.c.b16 %v11001, %v10997
  %v11138 = vpack.c.b16 %v11006, %v11002
  %v11139 = vpack.c.b16 %v11007, %v11003
  %v11140 = vpack.c.b16 %v11008, %v11004
  %v11141 = vpack.c.b16 %v11009, %v11005
  %v11142 = vpack.c.b16 %v11014, %v11010
  %v11143 = vpack.c.b16 %v11015, %v11011
  %v11144 = vpack.c.b16 %v11016, %v11012
  %v11145 = vpack.c.b16 %v11017, %v11013
  %11274 = vmatprep.subr.bf16.mxu0 %v11019
  %11275 = vmatpush1.bf16.msra.mxu0 %v11018
  %11276 = vmatprep.subr.bf16.mxu0 %v11023
  %11277 = vmatpush1.bf16.msra.mxu0 %v11022
  %11278 = vmatprep.subr.bf16.mxu0 %v11027
  %11279 = vmatpush1.bf16.msra.mxu0 %v11026
  %11280 = vmatprep.subr.bf16.mxu0 %v11031
  %11281 = vmatpush1.bf16.msra.mxu0 %v11030
  %11282 = vmatprep.subr.bf16.mxu0 %v11035
  %11283 = vmatpush1.bf16.msra.mxu0 %v11034
  %11284 = vmatprep.subr.bf16.mxu0 %v11039
  %11285 = vmatpush1.bf16.msra.mxu0 %v11038
  %11286 = vmatprep.subr.bf16.mxu0 %v11043
  %11287 = vmatpush1.bf16.msra.mxu0 %v11042
  %11288 = vmatprep.subr.bf16.mxu0 %v11047
  %11289 = vmatpush1.bf16.msra.mxu0 %v11046
  %11290 = vmatprep.subr.bf16.mxu0 %v11051
  %11291 = vmatpush1.bf16.msra.mxu0 %v11050
  %11292 = vmatprep.subr.bf16.mxu0 %v11055
  %11293 = vmatpush1.bf16.msra.mxu0 %v11054
  %11294 = vmatprep.subr.bf16.mxu0 %v11059
  %11295 = vmatpush1.bf16.msra.mxu0 %v11058
  %11296 = vmatprep.subr.bf16.mxu0 %v11063
  %11297 = vmatpush1.bf16.msra.mxu0 %v11062
  %11298 = vmatprep.subr.bf16.mxu0 %v11067
  %11299 = vmatpush1.bf16.msra.mxu0 %v11066
  %11300 = vmatprep.subr.bf16.mxu0 %v11071
  %11301 = vmatpush1.bf16.msra.mxu0 %v11070
  %11302 = vmatprep.subr.bf16.mxu0 %v11075
  %11303 = vmatpush1.bf16.msra.mxu0 %v11074
  %11304 = vmatprep.subr.bf16.mxu0 %v11079
  %11305 = vmatpush1.bf16.msra.mxu0 %v11078
  %11306 = vmatprep.mubr.bf16.mxu0 %v10481
  %11307 = vmatmul.mubr.bf16.gmra.mrb[0].mxu0 %v10480
  %v11308 = vpop.f32.mrb[0].mxu0
  %v11309 = vadd.f32 %v10617, %v11308
  %v11310 = vpop.f32.mrb[0].mxu0
  %v11311 = vadd.f32 %v10621, %v11310
  %v11312 = vpop.f32.mrb[0].mxu0
  %v11313 = vpop.f32.mrb[0].mxu0
  %11314 = vdwg.mxu0
  %11315 = vmatprep.subr.bf16.mxu0 %v11083
  %11316 = vmatpush1.bf16.msra.mxu0 %v11082
  %11317 = vmatprep.subr.bf16.mxu0 %v11087
  %11318 = vmatpush1.bf16.msra.mxu0 %v11086
  %11319 = vmatprep.subr.bf16.mxu0 %v11091
  %11320 = vmatpush1.bf16.msra.mxu0 %v11090
  %11321 = vmatprep.subr.bf16.mxu0 %v11095
  %11322 = vmatpush1.bf16.msra.mxu0 %v11094
  %11323 = vmatprep.subr.bf16.mxu0 %v11099
  %11324 = vmatpush1.bf16.msra.mxu0 %v11098
  %11325 = vmatprep.subr.bf16.mxu0 %v11103
  %11326 = vmatpush1.bf16.msra.mxu0 %v11102
  %11327 = vmatprep.subr.bf16.mxu0 %v11107
  %11328 = vmatpush1.bf16.msra.mxu0 %v11106
  %11329 = vmatprep.subr.bf16.mxu0 %v11111
  %11330 = vmatpush1.bf16.msra.mxu0 %v11110
  %11331 = vmatprep.subr.bf16.mxu0 %v11115
  %11332 = vmatpush1.bf16.msra.mxu0 %v11114
  %11333 = vmatprep.subr.bf16.mxu0 %v11119
  %11334 = vmatpush1.bf16.msra.mxu0 %v11118
  %11335 = vmatprep.subr.bf16.mxu0 %v11123
  %11336 = vmatpush1.bf16.msra.mxu0 %v11122
  %11337 = vmatprep.subr.bf16.mxu0 %v11127
  %11338 = vmatpush1.bf16.msra.mxu0 %v11126
  %11339 = vmatprep.subr.bf16.mxu0 %v11131
  %11340 = vmatpush1.bf16.msra.mxu0 %v11130
  %11341 = vmatprep.subr.bf16.mxu0 %v11135
  %11342 = vmatpush1.bf16.msra.mxu0 %v11134
  %11343 = vmatprep.subr.bf16.mxu0 %v11139
  %11344 = vmatpush1.bf16.msra.mxu0 %v11138
  %11345 = vmatprep.subr.bf16.mxu0 %v11143
  %11346 = vmatpush1.bf16.msra.mxu0 %v11142
  %11347 = vmatprep.mubr.bf16.mxu0 %v10483
  %11348 = vmatmul.mubr.bf16.gmra.mrb[0].mxu0 %v10482
  %v11349 = vpop.f32.mrb[0].mxu0
  %v11350 = vadd.f32 %v11309, %v11349
  %v11351 = vpop.f32.mrb[0].mxu0
  %v11352 = vadd.f32 %v11311, %v11351
  %v11353 = vpop.f32.mrb[0].mxu0
  %v11354 = vpop.f32.mrb[0].mxu0
  %11355 = vdwg.mxu0
  %11356 = vmatprep.subr.bf16.mxu0 %v11021
  %11357 = vmatpush1.bf16.msra.mxu0 %v11020
  %11358 = vmatprep.subr.bf16.mxu0 %v11025
  %11359 = vmatpush1.bf16.msra.mxu0 %v11024
  %11360 = vmatprep.subr.bf16.mxu0 %v11029
  %11361 = vmatpush1.bf16.msra.mxu0 %v11028
  %11362 = vmatprep.subr.bf16.mxu0 %v11033
  %11363 = vmatpush1.bf16.msra.mxu0 %v11032
  %11364 = vmatprep.subr.bf16.mxu0 %v11037
  %11365 = vmatpush1.bf16.msra.mxu0 %v11036
  %11366 = vmatprep.subr.bf16.mxu0 %v11041
  %11367 = vmatpush1.bf16.msra.mxu0 %v11040
  %11368 = vmatprep.subr.bf16.mxu0 %v11045
  %11369 = vmatpush1.bf16.msra.mxu0 %v11044
  %11370 = vmatprep.subr.bf16.mxu0 %v11049
  %11371 = vmatpush1.bf16.msra.mxu0 %v11048
  %11372 = vmatprep.subr.bf16.mxu0 %v11053
  %11373 = vmatpush1.bf16.msra.mxu0 %v11052
  %11374 = vmatprep.subr.bf16.mxu0 %v11057
  %11375 = vmatpush1.bf16.msra.mxu0 %v11056
  %11376 = vmatprep.subr.bf16.mxu0 %v11061
  %11377 = vmatpush1.bf16.msra.mxu0 %v11060
  %11378 = vmatprep.subr.bf16.mxu0 %v11065
  %11379 = vmatpush1.bf16.msra.mxu0 %v11064
  %11380 = vmatprep.subr.bf16.mxu0 %v11069
  %11381 = vmatpush1.bf16.msra.mxu0 %v11068
  %11382 = vmatprep.subr.bf16.mxu0 %v11073
  %11383 = vmatpush1.bf16.msra.mxu0 %v11072
  %11384 = vmatprep.subr.bf16.mxu0 %v11077
  %11385 = vmatpush1.bf16.msra.mxu0 %v11076
  %11386 = vmatprep.subr.bf16.mxu0 %v11081
  %11387 = vmatpush1.bf16.msra.mxu0 %v11080
  %11388 = vmatprep.mubr.bf16.mxu0 %v10481
  %11389 = vmatmul.mubr.bf16.gmra.mrb[0].mxu0 %v10480
  %v11390 = vpop.f32.mrb[0].mxu0
  %v11391 = vadd.f32 %v10625, %v11390
  %v11392 = vpop.f32.mrb[0].mxu0
  %v11393 = vadd.f32 %v10629, %v11392
  %v11394 = vpop.f32.mrb[0].mxu0
  %v11395 = vpop.f32.mrb[0].mxu0
  %11396 = vdwg.mxu0
  %11397 = vmatprep.subr.bf16.mxu0 %v11085
  %11398 = vmatpush1.bf16.msra.mxu0 %v11084
  %11399 = vmatprep.subr.bf16.mxu0 %v11089
  %11400 = vmatpush1.bf16.msra.mxu0 %v11088
  %11401 = vmatprep.subr.bf16.mxu0 %v11093
  %11402 = vmatpush1.bf16.msra.mxu0 %v11092
  %11403 = vmatprep.subr.bf16.mxu0 %v11097
  %11404 = vmatpush1.bf16.msra.mxu0 %v11096
  %11405 = vmatprep.subr.bf16.mxu0 %v11101
  %11406 = vmatpush1.bf16.msra.mxu0 %v11100
  %11407 = vmatprep.subr.bf16.mxu0 %v11105
  %11408 = vmatpush1.bf16.msra.mxu0 %v11104
  %11409 = vmatprep.subr.bf16.mxu0 %v11109
  %11410 = vmatpush1.bf16.msra.mxu0 %v11108
  %11411 = vmatprep.subr.bf16.mxu0 %v11113
  %11412 = vmatpush1.bf16.msra.mxu0 %v11112
  %11413 = vmatprep.subr.bf16.mxu0 %v11117
  %11414 = vmatpush1.bf16.msra.mxu0 %v11116
  %11415 = vmatprep.subr.bf16.mxu0 %v11121
  %11416 = vmatpush1.bf16.msra.mxu0 %v11120
  %11417 = vmatprep.subr.bf16.mxu0 %v11125
  %11418 = vmatpush1.bf16.msra.mxu0 %v11124
  %11419 = vmatprep.subr.bf16.mxu0 %v11129
  %11420 = vmatpush1.bf16.msra.mxu0 %v11128
  %11421 = vmatprep.subr.bf16.mxu0 %v11133
  %11422 = vmatpush1.bf16.msra.mxu0 %v11132
  %11423 = vmatprep.subr.bf16.mxu0 %v11137
  %11424 = vmatpush1.bf16.msra.mxu0 %v11136
  %11425 = vmatprep.subr.bf16.mxu0 %v11141
  %11426 = vmatpush1.bf16.msra.mxu0 %v11140
  %11427 = vmatprep.subr.bf16.mxu0 %v11145
  %11428 = vmatpush1.bf16.msra.mxu0 %v11144
  %11429 = vmatprep.mubr.bf16.mxu0 %v10483
  %11430 = vmatmul.mubr.bf16.gmra.mrb[0].mxu0 %v10482
  %v11431 = vpop.f32.mrb[0].mxu0
  %v11432 = vadd.f32 %v11391, %v11431
  %v11433 = vpop.f32.mrb[0].mxu0
  %v11434 = vadd.f32 %v11393, %v11433
  %v11435 = vpop.f32.mrb[0].mxu0
  %v11436 = vpop.f32.mrb[0].mxu0
  %11437 = vdwg.mxu0
  %11438 = vst [vmem:[%s9] sm:$0xff] %v11350
  %11439 = vst [vmem:[%s9 + $0x8] sm:$0xff] %v11352
  %11440 = vst [vmem:[%s9 + $0x10] sm:$0xff] %v11432
  %11441 = vst [vmem:[%s9 + $0x18] sm:$0xff] %v11434
  // Predicated region
  $region38: #{basic_cnn_forward.1} parent=0 // pred_check
    _
  $region39: #{basic_cnn_forward.1} parent=0 // pred_check_branch
    %11443 = sbr.rel (0) target = $region41
  $region40: #{basic_cnn_forward.1} parent=0 // pred_region
    _
  $region41: #{basic_cnn_forward.1} parent=0 // pred_fallthru
    _
  // Predicated region
  $region42: #{basic_cnn_forward.1} parent=0 // pred_check
    _
  $region43: #{basic_cnn_forward.1} parent=0 // pred_check_branch
    %11445 = sbr.rel (0) target = $region45
  $region44: #{basic_cnn_forward.1} parent=0 // pred_region
    _
  $region45: #{basic_cnn_forward.1} parent=0 // pred_fallthru
    _

</llo_original>
